<compile_context>
chip_gen: v5e
topology: v5e:2x2
jax: 0.10.0
libtpu: 0.0.40
codegen_flags: <defaults>
</compile_context>

<pallas_src>
import functools

import numpy as np
import jax
import jax.numpy as jnp
from jax.experimental import pallas as pl
from jax.experimental.pallas import tpu as pltpu

MODES = 16
WIDTH = 64
N_LAYERS = 4
FC1_DIM = 128


# ----------------------------------------------------------------------------
# Fused forward kernel
# ----------------------------------------------------------------------------
def fno_forward_kernel(x_ref, fc0w_ref, fc0b_ref, ffwd_ref, finv_ref,
                       wa_ref, wb_ref, convw_ref, convb_ref,
                       fc1w_ref, fc1b_ref, fc2w_ref, fc2b_ref, o_ref,
                       *, modes, width, batch, n_layers):
    f32, bf16 = jnp.float32, jnp.bfloat16
    m, c, b = modes, width, batch

    # fc0: (S, B*8) @ block-diag(B x (8, C))  ->  (S, B*C)
    h = (jnp.dot(x_ref[...].astype(bf16), fc0w_ref[...],
                 preferred_element_type=f32) + fc0b_ref[...])

    ffwd = ffwd_ref[...]                                          # (2M, S)  bf16
    finv = finv_ref[...]                                          # (S, 2M)  bf16

    for i in range(n_layers):
        hb = h.astype(bf16)

        # --- spectral path: truncated real DFT, stacked [Re; Im] -> 1 matmul
        z = jnp.dot(ffwd, hb, preferred_element_type=f32)         # (2M, B*C)
        z_r = z[:m].reshape(m, b, c).astype(bf16)                 # (M, B, C)
        z_i = z[m:].reshape(m, b, c).astype(bf16)

        # per-frequency complex channel mixing, batched over modes
        # (no Python loop, no scratch):  out2[..., :C]=Re, out2[..., C:]=Im
        out2 = (jnp.einsum('mbi,mio->mbo', z_r, wa_ref[i],
                           preferred_element_type=f32)
                + jnp.einsum('mbi,mio->mbo', z_i, wb_ref[i],
                             preferred_element_type=f32))         # (M, B, 2C)

        om = jnp.concatenate([out2[:, :, :c].reshape(m, b * c),
                              out2[:, :, c:].reshape(m, b * c)],
                             axis=0)                              # (2M, B*C)

        # truncated inverse real DFT (irfft with first `modes` bins): 1 matmul
        y1 = jnp.dot(finv, om.astype(bf16), preferred_element_type=f32)

        # --- pointwise Conv1d(width, width, 1): block-diag over batch
        y2 = (jnp.dot(hb, convw_ref[i], preferred_element_type=f32)
              + convb_ref[i])                                     # (S, B*C)

        h = y1 + y2
        if i < n_layers - 1:
            h = jnp.maximum(h, 0.0)

    # fc1 + ReLU, fc2 -- fused so the (S, B*128) intermediate stays on-chip;
    # only the tiny (S, B) result is stored.
    h = jnp.maximum(jnp.dot(h.astype(bf16), fc1w_ref[...],
                            preferred_element_type=f32) + fc1b_ref[...], 0.0)
    y = (jnp.dot(h.astype(bf16), fc2w_ref[...],
                 preferred_element_type=f32) + fc2b_ref[...])     # (S, B)
    o_ref[...] = y.astype(o_ref.dtype)


def _full_spec(shape):
    zeros = (0,) * len(shape)
    return pl.BlockSpec(shape, lambda i: zeros)


@jax.jit
def simple_block1d_forward(x, params):
    b, s, fdim = x.shape
    c, m = WIDTH, MODES

    # pack batch into lanes: (B, S, 2) -> (S, B*8), feature dim zero-padded 2 -> 8
    x_t = jnp.transpose(x, (1, 0, 2))
    x_t = jnp.pad(x_t, ((0, 0), (0, 0), (0, 8 - fdim)))
    x_in = x_t.reshape(s, b * 8)

    kernel = functools.partial(fno_forward_kernel, modes=m, width=c,
                               batch=b, n_layers=N_LAYERS)
    args = (x_in, params["fc0_w"], params["fc0_b"], params["Ffwd"], params["Finv"],
            params["spec_wa"], params["spec_wb"], params["conv_w"], params["conv_b"],
            params["fc1_w"], params["fc1_b"], params["fc2_w"], params["fc2_b"])

    out_sb = pl.pallas_call(
        kernel,
        out_shape=jax.ShapeDtypeStruct((s, b), jnp.float32),
        grid=(1,),
        in_specs=[_full_spec(a.shape) for a in args],
        out_specs=_full_spec((s, b)),
        compiler_params=pltpu.CompilerParams(
            dimension_semantics=("arbitrary",)),
    )(*args)

    return jnp.transpose(out_sb)[:, :, None]                      # (B, S, 1)


# ----------------------------------------------------------------------------
# Parameter construction (matches torch module shapes / init semantics)
# ----------------------------------------------------------------------------
def dft_matrices(s, modes):
    k = np.arange(modes)[:, None]
    n = np.arange(s)[None, :]
    ang = 2.0 * np.pi * k * n / s
    cosf = np.cos(ang)                       # forward rfft real part
    sinf = -np.sin(ang)                      # forward rfft imag part
    coef_c = np.where(k == 0, 1.0, 2.0) / s
    coef_s = np.where(k == 0, 0.0, -2.0) / s
    cmat = (coef_c * np.cos(ang)).T          # (S, M)
    smat = (coef_s * np.sin(ang)).T          # (S, M)
    ffwd = np.concatenate([cosf, sinf], axis=0)      # (2M, S)
    finv = np.concatenate([cmat, smat], axis=1)      # (S, 2M)
    return jnp.asarray(ffwd, jnp.float32), jnp.asarray(finv, jnp.float32)


def init_params(key, s, batch):
    c, m = WIDTH, MODES
    eye_b = jnp.eye(batch, dtype=jnp.float32)
    keys = jax.random.split(key, 32)
    ki = iter(keys)
    p = {}

    def bdiag(w):          # (din, dout) -> block-diag over batch (B*din, B*dout)
        return jnp.kron(eye_b, w)

    def tile_b(bias):      # (d,) -> (1, B*d), layout matches (S, B*d) activations
        return jnp.tile(bias, (batch,)).reshape(1, -1)

    # fc0: Linear(2, width); input features zero-padded 2 -> 8.
    bnd = 1.0 / np.sqrt(2.0)
    w0 = jax.random.uniform(next(ki), (2, c), minval=-bnd, maxval=bnd)
    w0p = jnp.concatenate([w0, jnp.zeros((6, c), jnp.float32)], axis=0)
    p["fc0_w"] = bdiag(w0p).astype(jnp.bfloat16)
    p["fc0_b"] = tile_b(jax.random.uniform(next(ki), (c,), minval=-bnd, maxval=bnd))

    ffwd, finv = dft_matrices(s, m)
    p["Ffwd"] = ffwd.astype(jnp.bfloat16)
    p["Finv"] = finv.astype(jnp.bfloat16)

    scale = 1.0 / (c * c)
    wa_l, wb_l, cw_l, cb_l = [], [], [], []
    for _ in range(N_LAYERS):
        # SpectralConv1d weights1: complex (in, out, modes), re/im ~ scale*U[0,1)
        wr = scale * jax.random.uniform(next(ki), (c, c, m))
        wi = scale * jax.random.uniform(next(ki), (c, c, m))
        wr_k = jnp.transpose(wr, (2, 0, 1))            # (M, Cin, Cout)
        wi_k = jnp.transpose(wi, (2, 0, 1))
        wa_l.append(jnp.concatenate([wr_k, wi_k], axis=2))     # (M, C, 2C)
        wb_l.append(jnp.concatenate([-wi_k, wr_k], axis=2))

        # Conv1d(width, width, 1): weight (out, in, 1), bias (out,)
        bnd_c = 1.0 / np.sqrt(c)
        wc = jax.random.uniform(next(ki), (c, c, 1), minval=-bnd_c, maxval=bnd_c)
        cw_l.append(bdiag(jnp.transpose(wc[:, :, 0], (1, 0))))  # (B*C, B*C)
        cb_l.append(tile_b(jax.random.uniform(next(ki), (c,),
                                              minval=-bnd_c, maxval=bnd_c)))
    p["spec_wa"] = jnp.stack(wa_l).astype(jnp.bfloat16)   # (4, M, C, 2C)
    p["spec_wb"] = jnp.stack(wb_l).astype(jnp.bfloat16)
    p["conv_w"] = jnp.stack(cw_l).astype(jnp.bfloat16)    # (4, B*C, B*C)
    p["conv_b"] = jnp.stack(cb_l)                         # (4, 1, B*C)  f32

    # TODO(synk): bn0..bn3 exist in __init__ but are never used in forward; skipped.

    bnd1 = 1.0 / np.sqrt(c)
    w1 = jax.random.uniform(next(ki), (c, FC1_DIM), minval=-bnd1, maxval=bnd1)
    p["fc1_w"] = bdiag(w1).astype(jnp.bfloat16)           # (B*C, B*128)
    p["fc1_b"] = tile_b(jax.random.uniform(next(ki), (FC1_DIM,),
                                           minval=-bnd1, maxval=bnd1))
    bnd2 = 1.0 / np.sqrt(float(FC1_DIM))
    w2 = jax.random.uniform(next(ki), (FC1_DIM, 1), minval=-bnd2, maxval=bnd2)
    p["fc2_w"] = bdiag(w2).astype(jnp.bfloat16)           # (B*128, B)
    p["fc2_b"] = tile_b(jax.random.uniform(next(ki), (1,),
                                           minval=-bnd2, maxval=bnd2))
    return p


if __name__ == "__main__":
    B, S = 2, 64                        # batch, spatial grid points
    key = jax.random.PRNGKey(0)
    k_in, k_par = jax.random.split(key)
    x = jax.random.normal(k_in, (B, S, 2), dtype=jnp.float32)   # (a(x), x)
    params = init_params(k_par, S, B)

    out = simple_block1d_forward(x, params)
    out = jax.block_until_ready(out)
    assert out.shape == (B, S, 1) and out.dtype == jnp.float32
    print("KERNEL_OK")
</pallas_src>

<mosaic_0001>
module attributes {stable_mosaic.version = 11 : i64} {
  func.func @fno_forward_kernel(%arg0: i32, %arg1: memref<64x16xf32, #tpu.memory_space<vmem>>, %arg2: memref<16x128xbf16, #tpu.memory_space<vmem>>, %arg3: memref<1x128xf32, #tpu.memory_space<vmem>>, %arg4: memref<32x64xbf16, #tpu.memory_space<vmem>>, %arg5: memref<64x32xbf16, #tpu.memory_space<vmem>>, %arg6: memref<4x16x64x128xbf16, #tpu.memory_space<vmem>>, %arg7: memref<4x16x64x128xbf16, #tpu.memory_space<vmem>>, %arg8: memref<4x128x128xbf16, #tpu.memory_space<vmem>>, %arg9: memref<4x1x128xf32, #tpu.memory_space<vmem>>, %arg10: memref<128x256xbf16, #tpu.memory_space<vmem>>, %arg11: memref<1x256xf32, #tpu.memory_space<vmem>>, %arg12: memref<256x2xbf16, #tpu.memory_space<vmem>>, %arg13: memref<1x2xf32, #tpu.memory_space<vmem>>, %arg14: memref<64x2xf32, #tpu.memory_space<vmem>>) attributes {dimension_semantics = [#tpu.dimension_semantics<arbitrary>], iteration_bounds = array<i64: 1>, scalar_prefetch = 0 : i64, scratch_operands = 0 : i64, tpu.core_type = #tpu.core_type<tc>, window_params = [{pipeline_mode = #tpu.pipeline_mode<synchronous>, transform_indices = @transform_0, window_bounds = array<i64: 64, 16>}, {pipeline_mode = #tpu.pipeline_mode<synchronous>, transform_indices = @transform_1, window_bounds = array<i64: 16, 128>}, {pipeline_mode = #tpu.pipeline_mode<synchronous>, transform_indices = @transform_2, window_bounds = array<i64: 1, 128>}, {pipeline_mode = #tpu.pipeline_mode<synchronous>, transform_indices = @transform_3, window_bounds = array<i64: 32, 64>}, {pipeline_mode = #tpu.pipeline_mode<synchronous>, transform_indices = @transform_4, window_bounds = array<i64: 64, 32>}, {pipeline_mode = #tpu.pipeline_mode<synchronous>, transform_indices = @transform_5, window_bounds = array<i64: 4, 16, 64, 128>}, {pipeline_mode = #tpu.pipeline_mode<synchronous>, transform_indices = @transform_6, window_bounds = array<i64: 4, 16, 64, 128>}, {pipeline_mode = #tpu.pipeline_mode<synchronous>, transform_indices = @transform_7, window_bounds = array<i64: 4, 128, 128>}, {pipeline_mode = #tpu.pipeline_mode<synchronous>, transform_indices = @transform_8, window_bounds = array<i64: 4, 1, 128>}, {pipeline_mode = #tpu.pipeline_mode<synchronous>, transform_indices = @transform_9, window_bounds = array<i64: 128, 256>}, {pipeline_mode = #tpu.pipeline_mode<synchronous>, transform_indices = @transform_10, window_bounds = array<i64: 1, 256>}, {pipeline_mode = #tpu.pipeline_mode<synchronous>, transform_indices = @transform_11, window_bounds = array<i64: 256, 2>}, {pipeline_mode = #tpu.pipeline_mode<synchronous>, transform_indices = @transform_12, window_bounds = array<i64: 1, 2>}, {pipeline_mode = #tpu.pipeline_mode<synchronous>, transform_indices = @transform_13, window_bounds = array<i64: 64, 2>}]} {
    %c0 = arith.constant 0 : index
    %c0_0 = arith.constant 0 : index
    %0 = vector.load %arg1[%c0, %c0_0] : memref<64x16xf32, #tpu.memory_space<vmem>>, vector<64x16xf32>
    %1 = arith.truncf %0 : vector<64x16xf32> to vector<64x16xbf16>
    %c0_1 = arith.constant 0 : index
    %c0_2 = arith.constant 0 : index
    %2 = vector.load %arg2[%c0_1, %c0_2] : memref<16x128xbf16, #tpu.memory_space<vmem>>, vector<16x128xbf16>
    %cst = arith.constant dense<0.000000e+00> : vector<64x128xf32>
    %3 = tpu.matmul %1, %2, %cst {dimension_numbers = #tpu.dot_dimension_numbers<[1], [0], [0], [1], [0, 0, 1, 1], [], []>} : vector<64x16xbf16>, vector<16x128xbf16>, vector<64x128xf32> -> vector<64x128xf32>
    %c0_3 = arith.constant 0 : index
    %c0_4 = arith.constant 0 : index
    %4 = vector.load %arg3[%c0_3, %c0_4] : memref<1x128xf32, #tpu.memory_space<vmem>>, vector<1x128xf32>
    %5 = vector.broadcast %4 : vector<1x128xf32> to vector<64x128xf32>
    %6 = arith.addf %3, %5 : vector<64x128xf32>
    %c0_5 = arith.constant 0 : index
    %c0_6 = arith.constant 0 : index
    %7 = vector.load %arg4[%c0_5, %c0_6] : memref<32x64xbf16, #tpu.memory_space<vmem>>, vector<32x64xbf16>
    %c0_7 = arith.constant 0 : index
    %c0_8 = arith.constant 0 : index
    %8 = vector.load %arg5[%c0_7, %c0_8] : memref<64x32xbf16, #tpu.memory_space<vmem>>, vector<64x32xbf16>
    %9 = arith.truncf %6 : vector<64x128xf32> to vector<64x128xbf16>
    %cst_9 = arith.constant dense<0.000000e+00> : vector<32x128xf32>
    %10 = tpu.matmul %7, %9, %cst_9 {dimension_numbers = #tpu.dot_dimension_numbers<[1], [0], [0], [1], [0, 0, 1, 1], [], []>} : vector<32x64xbf16>, vector<64x128xbf16>, vector<32x128xf32> -> vector<32x128xf32>
    %11 = vector.extract_strided_slice %10 {offsets = [0, 0], sizes = [16, 128], strides = [1, 1]} : vector<32x128xf32> to vector<16x128xf32>
    %12 = vector.shape_cast %11 : vector<16x128xf32> to vector<16x2x64xf32>
    %13 = arith.truncf %12 : vector<16x2x64xf32> to vector<16x2x64xbf16>
    %14 = vector.extract_strided_slice %10 {offsets = [16, 0], sizes = [16, 128], strides = [1, 1]} : vector<32x128xf32> to vector<16x128xf32>
    %15 = vector.shape_cast %14 : vector<16x128xf32> to vector<16x2x64xf32>
    %16 = arith.truncf %15 : vector<16x2x64xf32> to vector<16x2x64xbf16>
    %c0_10 = arith.constant 0 : index
    %c0_11 = arith.constant 0 : index
    %c0_12 = arith.constant 0 : index
    %c0_13 = arith.constant 0 : index
    %17 = vector.load %arg6[%c0_10, %c0_11, %c0_12, %c0_13] : memref<4x16x64x128xbf16, #tpu.memory_space<vmem>>, vector<1x16x64x128xbf16>
    %18 = vector.shape_cast %17 : vector<1x16x64x128xbf16> to vector<16x64x128xbf16>
    "tpu.trace_start"() <{level = 10 : i32, message = "mbi,mio->mbo"}> : () -> ()
    %cst_14 = arith.constant dense<0.000000e+00> : vector<16x2x128xf32>
    %19 = tpu.matmul %13, %18, %cst_14 {dimension_numbers = #tpu.dot_dimension_numbers<[2], [1], [1], [2], [0, 0, 0, 1, 1, 2], [0], [0]>} : vector<16x2x64xbf16>, vector<16x64x128xbf16>, vector<16x2x128xf32> -> vector<16x2x128xf32>
    "tpu.trace_stop"() : () -> ()
    %c0_15 = arith.constant 0 : index
    %c0_16 = arith.constant 0 : index
    %c0_17 = arith.constant 0 : index
    %c0_18 = arith.constant 0 : index
    %20 = vector.load %arg7[%c0_15, %c0_16, %c0_17, %c0_18] : memref<4x16x64x128xbf16, #tpu.memory_space<vmem>>, vector<1x16x64x128xbf16>
    %21 = vector.shape_cast %20 : vector<1x16x64x128xbf16> to vector<16x64x128xbf16>
    "tpu.trace_start"() <{level = 10 : i32, message = "mbi,mio->mbo"}> : () -> ()
    %cst_19 = arith.constant dense<0.000000e+00> : vector<16x2x128xf32>
    %22 = tpu.matmul %16, %21, %cst_19 {dimension_numbers = #tpu.dot_dimension_numbers<[2], [1], [1], [2], [0, 0, 0, 1, 1, 2], [0], [0]>} : vector<16x2x64xbf16>, vector<16x64x128xbf16>, vector<16x2x128xf32> -> vector<16x2x128xf32>
    "tpu.trace_stop"() : () -> ()
    %23 = arith.addf %19, %22 : vector<16x2x128xf32>
    %24 = vector.extract_strided_slice %23 {offsets = [0, 0, 0], sizes = [16, 2, 64], strides = [1, 1, 1]} : vector<16x2x128xf32> to vector<16x2x64xf32>
    %25 = vector.shape_cast %24 : vector<16x2x64xf32> to vector<16x128xf32>
    %26 = vector.extract_strided_slice %23 {offsets = [0, 0, 64], sizes = [16, 2, 64], strides = [1, 1, 1]} : vector<16x2x128xf32> to vector<16x2x64xf32>
    %27 = vector.shape_cast %26 : vector<16x2x64xf32> to vector<16x128xf32>
    %28 = tpu.concatenate %25, %27 in 0 : vector<16x128xf32>, vector<16x128xf32> -> vector<32x128xf32>
    %29 = arith.truncf %28 : vector<32x128xf32> to vector<32x128xbf16>
    %cst_20 = arith.constant dense<0.000000e+00> : vector<64x128xf32>
    %30 = tpu.matmul %8, %29, %cst_20 {dimension_numbers = #tpu.dot_dimension_numbers<[1], [0], [0], [1], [0, 0, 1, 1], [], []>} : vector<64x32xbf16>, vector<32x128xbf16>, vector<64x128xf32> -> vector<64x128xf32>
    %c0_21 = arith.constant 0 : index
    %c0_22 = arith.constant 0 : index
    %c0_23 = arith.constant 0 : index
    %31 = vector.load %arg8[%c0_21, %c0_22, %c0_23] : memref<4x128x128xbf16, #tpu.memory_space<vmem>>, vector<1x128x128xbf16>
    %32 = vector.shape_cast %31 : vector<1x128x128xbf16> to vector<128x128xbf16>
    %cst_24 = arith.constant dense<0.000000e+00> : vector<64x128xf32>
    %33 = tpu.matmul %9, %32, %cst_24 {dimension_numbers = #tpu.dot_dimension_numbers<[1], [0], [0], [1], [0, 0, 1, 1], [], []>} : vector<64x128xbf16>, vector<128x128xbf16>, vector<64x128xf32> -> vector<64x128xf32>
    %c0_25 = arith.constant 0 : index
    %c0_26 = arith.constant 0 : index
    %c0_27 = arith.constant 0 : index
    %34 = vector.load %arg9[%c0_25, %c0_26, %c0_27] : memref<4x1x128xf32, #tpu.memory_space<vmem>>, vector<1x1x128xf32>
    %35 = vector.shape_cast %34 : vector<1x1x128xf32> to vector<1x128xf32>
    %36 = vector.broadcast %35 : vector<1x128xf32> to vector<64x128xf32>
    %37 = arith.addf %33, %36 : vector<64x128xf32>
    %38 = arith.addf %30, %37 : vector<64x128xf32>
    %cst_28 = arith.constant 0.000000e+00 : f32
    %39 = vector.broadcast %cst_28 : f32 to vector<64x128xf32>
    %40 = arith.maximumf %38, %39 : vector<64x128xf32>
    %41 = arith.truncf %40 : vector<64x128xf32> to vector<64x128xbf16>
    %cst_29 = arith.constant dense<0.000000e+00> : vector<32x128xf32>
    %42 = tpu.matmul %7, %41, %cst_29 {dimension_numbers = #tpu.dot_dimension_numbers<[1], [0], [0], [1], [0, 0, 1, 1], [], []>} : vector<32x64xbf16>, vector<64x128xbf16>, vector<32x128xf32> -> vector<32x128xf32>
    %43 = vector.extract_strided_slice %42 {offsets = [0, 0], sizes = [16, 128], strides = [1, 1]} : vector<32x128xf32> to vector<16x128xf32>
    %44 = vector.shape_cast %43 : vector<16x128xf32> to vector<16x2x64xf32>
    %45 = arith.truncf %44 : vector<16x2x64xf32> to vector<16x2x64xbf16>
    %46 = vector.extract_strided_slice %42 {offsets = [16, 0], sizes = [16, 128], strides = [1, 1]} : vector<32x128xf32> to vector<16x128xf32>
    %47 = vector.shape_cast %46 : vector<16x128xf32> to vector<16x2x64xf32>
    %48 = arith.truncf %47 : vector<16x2x64xf32> to vector<16x2x64xbf16>
    %c1 = arith.constant 1 : index
    %c0_30 = arith.constant 0 : index
    %c0_31 = arith.constant 0 : index
    %c0_32 = arith.constant 0 : index
    %49 = vector.load %arg6[%c1, %c0_30, %c0_31, %c0_32] : memref<4x16x64x128xbf16, #tpu.memory_space<vmem>>, vector<1x16x64x128xbf16>
    %50 = vector.shape_cast %49 : vector<1x16x64x128xbf16> to vector<16x64x128xbf16>
    "tpu.trace_start"() <{level = 10 : i32, message = "mbi,mio->mbo"}> : () -> ()
    %cst_33 = arith.constant dense<0.000000e+00> : vector<16x2x128xf32>
    %51 = tpu.matmul %45, %50, %cst_33 {dimension_numbers = #tpu.dot_dimension_numbers<[2], [1], [1], [2], [0, 0, 0, 1, 1, 2], [0], [0]>} : vector<16x2x64xbf16>, vector<16x64x128xbf16>, vector<16x2x128xf32> -> vector<16x2x128xf32>
    "tpu.trace_stop"() : () -> ()
    %c1_34 = arith.constant 1 : index
    %c0_35 = arith.constant 0 : index
    %c0_36 = arith.constant 0 : index
    %c0_37 = arith.constant 0 : index
    %52 = vector.load %arg7[%c1_34, %c0_35, %c0_36, %c0_37] : memref<4x16x64x128xbf16, #tpu.memory_space<vmem>>, vector<1x16x64x128xbf16>
    %53 = vector.shape_cast %52 : vector<1x16x64x128xbf16> to vector<16x64x128xbf16>
    "tpu.trace_start"() <{level = 10 : i32, message = "mbi,mio->mbo"}> : () -> ()
    %cst_38 = arith.constant dense<0.000000e+00> : vector<16x2x128xf32>
    %54 = tpu.matmul %48, %53, %cst_38 {dimension_numbers = #tpu.dot_dimension_numbers<[2], [1], [1], [2], [0, 0, 0, 1, 1, 2], [0], [0]>} : vector<16x2x64xbf16>, vector<16x64x128xbf16>, vector<16x2x128xf32> -> vector<16x2x128xf32>
    "tpu.trace_stop"() : () -> ()
    %55 = arith.addf %51, %54 : vector<16x2x128xf32>
    %56 = vector.extract_strided_slice %55 {offsets = [0, 0, 0], sizes = [16, 2, 64], strides = [1, 1, 1]} : vector<16x2x128xf32> to vector<16x2x64xf32>
    %57 = vector.shape_cast %56 : vector<16x2x64xf32> to vector<16x128xf32>
    %58 = vector.extract_strided_slice %55 {offsets = [0, 0, 64], sizes = [16, 2, 64], strides = [1, 1, 1]} : vector<16x2x128xf32> to vector<16x2x64xf32>
    %59 = vector.shape_cast %58 : vector<16x2x64xf32> to vector<16x128xf32>
    %60 = tpu.concatenate %57, %59 in 0 : vector<16x128xf32>, vector<16x128xf32> -> vector<32x128xf32>
    %61 = arith.truncf %60 : vector<32x128xf32> to vector<32x128xbf16>
    %cst_39 = arith.constant dense<0.000000e+00> : vector<64x128xf32>
    %62 = tpu.matmul %8, %61, %cst_39 {dimension_numbers = #tpu.dot_dimension_numbers<[1], [0], [0], [1], [0, 0, 1, 1], [], []>} : vector<64x32xbf16>, vector<32x128xbf16>, vector<64x128xf32> -> vector<64x128xf32>
    %c1_40 = arith.constant 1 : index
    %c0_41 = arith.constant 0 : index
    %c0_42 = arith.constant 0 : index
    %63 = vector.load %arg8[%c1_40, %c0_41, %c0_42] : memref<4x128x128xbf16, #tpu.memory_space<vmem>>, vector<1x128x128xbf16>
    %64 = vector.shape_cast %63 : vector<1x128x128xbf16> to vector<128x128xbf16>
    %cst_43 = arith.constant dense<0.000000e+00> : vector<64x128xf32>
    %65 = tpu.matmul %41, %64, %cst_43 {dimension_numbers = #tpu.dot_dimension_numbers<[1], [0], [0], [1], [0, 0, 1, 1], [], []>} : vector<64x128xbf16>, vector<128x128xbf16>, vector<64x128xf32> -> vector<64x128xf32>
    %c1_44 = arith.constant 1 : index
    %c0_45 = arith.constant 0 : index
    %c0_46 = arith.constant 0 : index
    %66 = vector.load %arg9[%c1_44, %c0_45, %c0_46] : memref<4x1x128xf32, #tpu.memory_space<vmem>>, vector<1x1x128xf32>
    %67 = vector.shape_cast %66 : vector<1x1x128xf32> to vector<1x128xf32>
    %68 = vector.broadcast %67 : vector<1x128xf32> to vector<64x128xf32>
    %69 = arith.addf %65, %68 : vector<64x128xf32>
    %70 = arith.addf %62, %69 : vector<64x128xf32>
    %cst_47 = arith.constant 0.000000e+00 : f32
    %71 = vector.broadcast %cst_47 : f32 to vector<64x128xf32>
    %72 = arith.maximumf %70, %71 : vector<64x128xf32>
    %73 = arith.truncf %72 : vector<64x128xf32> to vector<64x128xbf16>
    %cst_48 = arith.constant dense<0.000000e+00> : vector<32x128xf32>
    %74 = tpu.matmul %7, %73, %cst_48 {dimension_numbers = #tpu.dot_dimension_numbers<[1], [0], [0], [1], [0, 0, 1, 1], [], []>} : vector<32x64xbf16>, vector<64x128xbf16>, vector<32x128xf32> -> vector<32x128xf32>
    %75 = vector.extract_strided_slice %74 {offsets = [0, 0], sizes = [16, 128], strides = [1, 1]} : vector<32x128xf32> to vector<16x128xf32>
    %76 = vector.shape_cast %75 : vector<16x128xf32> to vector<16x2x64xf32>
    %77 = arith.truncf %76 : vector<16x2x64xf32> to vector<16x2x64xbf16>
    %78 = vector.extract_strided_slice %74 {offsets = [16, 0], sizes = [16, 128], strides = [1, 1]} : vector<32x128xf32> to vector<16x128xf32>
    %79 = vector.shape_cast %78 : vector<16x128xf32> to vector<16x2x64xf32>
    %80 = arith.truncf %79 : vector<16x2x64xf32> to vector<16x2x64xbf16>
    %c2 = arith.constant 2 : index
    %c0_49 = arith.constant 0 : index
    %c0_50 = arith.constant 0 : index
    %c0_51 = arith.constant 0 : index
    %81 = vector.load %arg6[%c2, %c0_49, %c0_50, %c0_51] : memref<4x16x64x128xbf16, #tpu.memory_space<vmem>>, vector<1x16x64x128xbf16>
    %82 = vector.shape_cast %81 : vector<1x16x64x128xbf16> to vector<16x64x128xbf16>
    "tpu.trace_start"() <{level = 10 : i32, message = "mbi,mio->mbo"}> : () -> ()
    %cst_52 = arith.constant dense<0.000000e+00> : vector<16x2x128xf32>
    %83 = tpu.matmul %77, %82, %cst_52 {dimension_numbers = #tpu.dot_dimension_numbers<[2], [1], [1], [2], [0, 0, 0, 1, 1, 2], [0], [0]>} : vector<16x2x64xbf16>, vector<16x64x128xbf16>, vector<16x2x128xf32> -> vector<16x2x128xf32>
    "tpu.trace_stop"() : () -> ()
    %c2_53 = arith.constant 2 : index
    %c0_54 = arith.constant 0 : index
    %c0_55 = arith.constant 0 : index
    %c0_56 = arith.constant 0 : index
    %84 = vector.load %arg7[%c2_53, %c0_54, %c0_55, %c0_56] : memref<4x16x64x128xbf16, #tpu.memory_space<vmem>>, vector<1x16x64x128xbf16>
    %85 = vector.shape_cast %84 : vector<1x16x64x128xbf16> to vector<16x64x128xbf16>
    "tpu.trace_start"() <{level = 10 : i32, message = "mbi,mio->mbo"}> : () -> ()
    %cst_57 = arith.constant dense<0.000000e+00> : vector<16x2x128xf32>
    %86 = tpu.matmul %80, %85, %cst_57 {dimension_numbers = #tpu.dot_dimension_numbers<[2], [1], [1], [2], [0, 0, 0, 1, 1, 2], [0], [0]>} : vector<16x2x64xbf16>, vector<16x64x128xbf16>, vector<16x2x128xf32> -> vector<16x2x128xf32>
    "tpu.trace_stop"() : () -> ()
    %87 = arith.addf %83, %86 : vector<16x2x128xf32>
    %88 = vector.extract_strided_slice %87 {offsets = [0, 0, 0], sizes = [16, 2, 64], strides = [1, 1, 1]} : vector<16x2x128xf32> to vector<16x2x64xf32>
    %89 = vector.shape_cast %88 : vector<16x2x64xf32> to vector<16x128xf32>
    %90 = vector.extract_strided_slice %87 {offsets = [0, 0, 64], sizes = [16, 2, 64], strides = [1, 1, 1]} : vector<16x2x128xf32> to vector<16x2x64xf32>
    %91 = vector.shape_cast %90 : vector<16x2x64xf32> to vector<16x128xf32>
    %92 = tpu.concatenate %89, %91 in 0 : vector<16x128xf32>, vector<16x128xf32> -> vector<32x128xf32>
    %93 = arith.truncf %92 : vector<32x128xf32> to vector<32x128xbf16>
    %cst_58 = arith.constant dense<0.000000e+00> : vector<64x128xf32>
    %94 = tpu.matmul %8, %93, %cst_58 {dimension_numbers = #tpu.dot_dimension_numbers<[1], [0], [0], [1], [0, 0, 1, 1], [], []>} : vector<64x32xbf16>, vector<32x128xbf16>, vector<64x128xf32> -> vector<64x128xf32>
    %c2_59 = arith.constant 2 : index
    %c0_60 = arith.constant 0 : index
    %c0_61 = arith.constant 0 : index
    %95 = vector.load %arg8[%c2_59, %c0_60, %c0_61] : memref<4x128x128xbf16, #tpu.memory_space<vmem>>, vector<1x128x128xbf16>
    %96 = vector.shape_cast %95 : vector<1x128x128xbf16> to vector<128x128xbf16>
    %cst_62 = arith.constant dense<0.000000e+00> : vector<64x128xf32>
    %97 = tpu.matmul %73, %96, %cst_62 {dimension_numbers = #tpu.dot_dimension_numbers<[1], [0], [0], [1], [0, 0, 1, 1], [], []>} : vector<64x128xbf16>, vector<128x128xbf16>, vector<64x128xf32> -> vector<64x128xf32>
    %c2_63 = arith.constant 2 : index
    %c0_64 = arith.constant 0 : index
    %c0_65 = arith.constant 0 : index
    %98 = vector.load %arg9[%c2_63, %c0_64, %c0_65] : memref<4x1x128xf32, #tpu.memory_space<vmem>>, vector<1x1x128xf32>
    %99 = vector.shape_cast %98 : vector<1x1x128xf32> to vector<1x128xf32>
    %100 = vector.broadcast %99 : vector<1x128xf32> to vector<64x128xf32>
    %101 = arith.addf %97, %100 : vector<64x128xf32>
    %102 = arith.addf %94, %101 : vector<64x128xf32>
    %cst_66 = arith.constant 0.000000e+00 : f32
    %103 = vector.broadcast %cst_66 : f32 to vector<64x128xf32>
    %104 = arith.maximumf %102, %103 : vector<64x128xf32>
    %105 = arith.truncf %104 : vector<64x128xf32> to vector<64x128xbf16>
    %cst_67 = arith.constant dense<0.000000e+00> : vector<32x128xf32>
    %106 = tpu.matmul %7, %105, %cst_67 {dimension_numbers = #tpu.dot_dimension_numbers<[1], [0], [0], [1], [0, 0, 1, 1], [], []>} : vector<32x64xbf16>, vector<64x128xbf16>, vector<32x128xf32> -> vector<32x128xf32>
    %107 = vector.extract_strided_slice %106 {offsets = [0, 0], sizes = [16, 128], strides = [1, 1]} : vector<32x128xf32> to vector<16x128xf32>
    %108 = vector.shape_cast %107 : vector<16x128xf32> to vector<16x2x64xf32>
    %109 = arith.truncf %108 : vector<16x2x64xf32> to vector<16x2x64xbf16>
    %110 = vector.extract_strided_slice %106 {offsets = [16, 0], sizes = [16, 128], strides = [1, 1]} : vector<32x128xf32> to vector<16x128xf32>
    %111 = vector.shape_cast %110 : vector<16x128xf32> to vector<16x2x64xf32>
    %112 = arith.truncf %111 : vector<16x2x64xf32> to vector<16x2x64xbf16>
    %c3 = arith.constant 3 : index
    %c0_68 = arith.constant 0 : index
    %c0_69 = arith.constant 0 : index
    %c0_70 = arith.constant 0 : index
    %113 = vector.load %arg6[%c3, %c0_68, %c0_69, %c0_70] : memref<4x16x64x128xbf16, #tpu.memory_space<vmem>>, vector<1x16x64x128xbf16>
    %114 = vector.shape_cast %113 : vector<1x16x64x128xbf16> to vector<16x64x128xbf16>
    "tpu.trace_start"() <{level = 10 : i32, message = "mbi,mio->mbo"}> : () -> ()
    %cst_71 = arith.constant dense<0.000000e+00> : vector<16x2x128xf32>
    %115 = tpu.matmul %109, %114, %cst_71 {dimension_numbers = #tpu.dot_dimension_numbers<[2], [1], [1], [2], [0, 0, 0, 1, 1, 2], [0], [0]>} : vector<16x2x64xbf16>, vector<16x64x128xbf16>, vector<16x2x128xf32> -> vector<16x2x128xf32>
    "tpu.trace_stop"() : () -> ()
    %c3_72 = arith.constant 3 : index
    %c0_73 = arith.constant 0 : index
    %c0_74 = arith.constant 0 : index
    %c0_75 = arith.constant 0 : index
    %116 = vector.load %arg7[%c3_72, %c0_73, %c0_74, %c0_75] : memref<4x16x64x128xbf16, #tpu.memory_space<vmem>>, vector<1x16x64x128xbf16>
    %117 = vector.shape_cast %116 : vector<1x16x64x128xbf16> to vector<16x64x128xbf16>
    "tpu.trace_start"() <{level = 10 : i32, message = "mbi,mio->mbo"}> : () -> ()
    %cst_76 = arith.constant dense<0.000000e+00> : vector<16x2x128xf32>
    %118 = tpu.matmul %112, %117, %cst_76 {dimension_numbers = #tpu.dot_dimension_numbers<[2], [1], [1], [2], [0, 0, 0, 1, 1, 2], [0], [0]>} : vector<16x2x64xbf16>, vector<16x64x128xbf16>, vector<16x2x128xf32> -> vector<16x2x128xf32>
    "tpu.trace_stop"() : () -> ()
    %119 = arith.addf %115, %118 : vector<16x2x128xf32>
    %120 = vector.extract_strided_slice %119 {offsets = [0, 0, 0], sizes = [16, 2, 64], strides = [1, 1, 1]} : vector<16x2x128xf32> to vector<16x2x64xf32>
    %121 = vector.shape_cast %120 : vector<16x2x64xf32> to vector<16x128xf32>
    %122 = vector.extract_strided_slice %119 {offsets = [0, 0, 64], sizes = [16, 2, 64], strides = [1, 1, 1]} : vector<16x2x128xf32> to vector<16x2x64xf32>
    %123 = vector.shape_cast %122 : vector<16x2x64xf32> to vector<16x128xf32>
    %124 = tpu.concatenate %121, %123 in 0 : vector<16x128xf32>, vector<16x128xf32> -> vector<32x128xf32>
    %125 = arith.truncf %124 : vector<32x128xf32> to vector<32x128xbf16>
    %cst_77 = arith.constant dense<0.000000e+00> : vector<64x128xf32>
    %126 = tpu.matmul %8, %125, %cst_77 {dimension_numbers = #tpu.dot_dimension_numbers<[1], [0], [0], [1], [0, 0, 1, 1], [], []>} : vector<64x32xbf16>, vector<32x128xbf16>, vector<64x128xf32> -> vector<64x128xf32>
    %c3_78 = arith.constant 3 : index
    %c0_79 = arith.constant 0 : index
    %c0_80 = arith.constant 0 : index
    %127 = vector.load %arg8[%c3_78, %c0_79, %c0_80] : memref<4x128x128xbf16, #tpu.memory_space<vmem>>, vector<1x128x128xbf16>
    %128 = vector.shape_cast %127 : vector<1x128x128xbf16> to vector<128x128xbf16>
    %cst_81 = arith.constant dense<0.000000e+00> : vector<64x128xf32>
    %129 = tpu.matmul %105, %128, %cst_81 {dimension_numbers = #tpu.dot_dimension_numbers<[1], [0], [0], [1], [0, 0, 1, 1], [], []>} : vector<64x128xbf16>, vector<128x128xbf16>, vector<64x128xf32> -> vector<64x128xf32>
    %c3_82 = arith.constant 3 : index
    %c0_83 = arith.constant 0 : index
    %c0_84 = arith.constant 0 : index
    %130 = vector.load %arg9[%c3_82, %c0_83, %c0_84] : memref<4x1x128xf32, #tpu.memory_space<vmem>>, vector<1x1x128xf32>
    %131 = vector.shape_cast %130 : vector<1x1x128xf32> to vector<1x128xf32>
    %132 = vector.broadcast %131 : vector<1x128xf32> to vector<64x128xf32>
    %133 = arith.addf %129, %132 : vector<64x128xf32>
    %134 = arith.addf %126, %133 : vector<64x128xf32>
    %135 = arith.truncf %134 : vector<64x128xf32> to vector<64x128xbf16>
    %c0_85 = arith.constant 0 : index
    %c0_86 = arith.constant 0 : index
    %136 = vector.load %arg10[%c0_85, %c0_86] : memref<128x256xbf16, #tpu.memory_space<vmem>>, vector<128x256xbf16>
    %cst_87 = arith.constant dense<0.000000e+00> : vector<64x256xf32>
    %137 = tpu.matmul %135, %136, %cst_87 {dimension_numbers = #tpu.dot_dimension_numbers<[1], [0], [0], [1], [0, 0, 1, 1], [], []>} : vector<64x128xbf16>, vector<128x256xbf16>, vector<64x256xf32> -> vector<64x256xf32>
    %c0_88 = arith.constant 0 : index
    %c0_89 = arith.constant 0 : index
    %138 = vector.load %arg11[%c0_88, %c0_89] : memref<1x256xf32, #tpu.memory_space<vmem>>, vector<1x256xf32>
    %139 = vector.broadcast %138 : vector<1x256xf32> to vector<64x256xf32>
    %140 = arith.addf %137, %139 : vector<64x256xf32>
    %cst_90 = arith.constant 0.000000e+00 : f32
    %141 = vector.broadcast %cst_90 : f32 to vector<64x256xf32>
    %142 = arith.maximumf %140, %141 : vector<64x256xf32>
    %143 = arith.truncf %142 : vector<64x256xf32> to vector<64x256xbf16>
    %c0_91 = arith.constant 0 : index
    %c0_92 = arith.constant 0 : index
    %144 = vector.load %arg12[%c0_91, %c0_92] : memref<256x2xbf16, #tpu.memory_space<vmem>>, vector<256x2xbf16>
    %cst_93 = arith.constant dense<0.000000e+00> : vector<64x2xf32>
    %145 = tpu.matmul %143, %144, %cst_93 {dimension_numbers = #tpu.dot_dimension_numbers<[1], [0], [0], [1], [0, 0, 1, 1], [], []>} : vector<64x256xbf16>, vector<256x2xbf16>, vector<64x2xf32> -> vector<64x2xf32>
    %c0_94 = arith.constant 0 : index
    %c0_95 = arith.constant 0 : index
    %146 = vector.load %arg13[%c0_94, %c0_95] : memref<1x2xf32, #tpu.memory_space<vmem>>, vector<1x2xf32>
    %147 = vector.broadcast %146 : vector<1x2xf32> to vector<64x2xf32>
    %148 = arith.addf %145, %147 : vector<64x2xf32>
    %c0_96 = arith.constant 0 : index
    %c0_97 = arith.constant 0 : index
    %149 = vector.load %arg14[%c0_96, %c0_97] : memref<64x2xf32, #tpu.memory_space<vmem>>, vector<64x2xf32>
    tpu.vector_store %arg14[%c0_96, %c0_97], %148 {strides = array<i32>} : memref<64x2xf32, #tpu.memory_space<vmem>>, vector<64x2xf32>,
    return
  }
  func.func @transform_0(%arg0: i32) -> (i32, i32) {
    %c0_i32 = arith.constant 0 : i32
    %c0_i32_0 = arith.constant 0 : i32
    %c0_i32_1 = arith.constant 0 : i32
    return %c0_i32, %c0_i32_0 : i32, i32
  }
  func.func @transform_1(%arg0: i32) -> (i32, i32) {
    %c0_i32 = arith.constant 0 : i32
    %c0_i32_0 = arith.constant 0 : i32
    %c0_i32_1 = arith.constant 0 : i32
    return %c0_i32, %c0_i32_0 : i32, i32
  }
  func.func @transform_2(%arg0: i32) -> (i32, i32) {
    %c0_i32 = arith.constant 0 : i32
    %c0_i32_0 = arith.constant 0 : i32
    %c0_i32_1 = arith.constant 0 : i32
    return %c0_i32, %c0_i32_0 : i32, i32
  }
  func.func @transform_3(%arg0: i32) -> (i32, i32) {
    %c0_i32 = arith.constant 0 : i32
    %c0_i32_0 = arith.constant 0 : i32
    %c0_i32_1 = arith.constant 0 : i32
    return %c0_i32, %c0_i32_0 : i32, i32
  }
  func.func @transform_4(%arg0: i32) -> (i32, i32) {
    %c0_i32 = arith.constant 0 : i32
    %c0_i32_0 = arith.constant 0 : i32
    %c0_i32_1 = arith.constant 0 : i32
    return %c0_i32, %c0_i32_0 : i32, i32
  }
  func.func @transform_5(%arg0: i32) -> (i32, i32, i32, i32) {
    %c0_i32 = arith.constant 0 : i32
    %c0_i32_0 = arith.constant 0 : i32
    %c0_i32_1 = arith.constant 0 : i32
    %c0_i32_2 = arith.constant 0 : i32
    %c0_i32_3 = arith.constant 0 : i32
    return %c0_i32, %c0_i32_0, %c0_i32_1, %c0_i32_2 : i32, i32, i32, i32
  }
  func.func @transform_6(%arg0: i32) -> (i32, i32, i32, i32) {
    %c0_i32 = arith.constant 0 : i32
    %c0_i32_0 = arith.constant 0 : i32
    %c0_i32_1 = arith.constant 0 : i32
    %c0_i32_2 = arith.constant 0 : i32
    %c0_i32_3 = arith.constant 0 : i32
    return %c0_i32, %c0_i32_0, %c0_i32_1, %c0_i32_2 : i32, i32, i32, i32
  }
  func.func @transform_7(%arg0: i32) -> (i32, i32, i32) {
    %c0_i32 = arith.constant 0 : i32
    %c0_i32_0 = arith.constant 0 : i32
    %c0_i32_1 = arith.constant 0 : i32
    %c0_i32_2 = arith.constant 0 : i32
    return %c0_i32, %c0_i32_0, %c0_i32_1 : i32, i32, i32
  }
  func.func @transform_8(%arg0: i32) -> (i32, i32, i32) {
    %c0_i32 = arith.constant 0 : i32
    %c0_i32_0 = arith.constant 0 : i32
    %c0_i32_1 = arith.constant 0 : i32
    %c0_i32_2 = arith.constant 0 : i32
    return %c0_i32, %c0_i32_0, %c0_i32_1 : i32, i32, i32
  }
  func.func @transform_9(%arg0: i32) -> (i32, i32) {
    %c0_i32 = arith.constant 0 : i32
    %c0_i32_0 = arith.constant 0 : i32
    %c0_i32_1 = arith.constant 0 : i32
    return %c0_i32, %c0_i32_0 : i32, i32
  }
  func.func @transform_10(%arg0: i32) -> (i32, i32) {
    %c0_i32 = arith.constant 0 : i32
    %c0_i32_0 = arith.constant 0 : i32
    %c0_i32_1 = arith.constant 0 : i32
    return %c0_i32, %c0_i32_0 : i32, i32
  }
  func.func @transform_11(%arg0: i32) -> (i32, i32) {
    %c0_i32 = arith.constant 0 : i32
    %c0_i32_0 = arith.constant 0 : i32
    %c0_i32_1 = arith.constant 0 : i32
    return %c0_i32, %c0_i32_0 : i32, i32
  }
  func.func @transform_12(%arg0: i32) -> (i32, i32) {
    %c0_i32 = arith.constant 0 : i32
    %c0_i32_0 = arith.constant 0 : i32
    %c0_i32_1 = arith.constant 0 : i32
    return %c0_i32, %c0_i32_0 : i32, i32
  }
  func.func @transform_13(%arg0: i32) -> (i32, i32) {
    %c0_i32 = arith.constant 0 : i32
    %c0_i32_0 = arith.constant 0 : i32
    %c0_i32_1 = arith.constant 0 : i32
    return %c0_i32, %c0_i32_0 : i32, i32
  }
}

</mosaic_0001>

<llo_original>
// kernel: simple_block1d_forward.1
$region0: #{simple_block1d_forward.1}
  #allocation0 [shape = 'u32[]', space=smem, size = 0x4, offset = 0x4, fixed_abs, tag = 'smem constant byte address 0x4 - core index']
  #allocation1 [shape = 'u32[72,128]{1,0:T(1,128)}', space=vmem, size = 0x9000, scoped, tag = 'internal scratch']
  %s0 = inlined_call_operand.vmem [shape: f32[64,16], index: 0, kind: input, shape index: {}]
  %s1 = inlined_call_operand.vmem [shape: bf16[16,128], index: 1, kind: input, shape index: {}]
  %s2 = inlined_call_operand.vmem [shape: f32[1,128], index: 2, kind: input, shape index: {}]
  %s3 = inlined_call_operand.vmem [shape: bf16[32,64], index: 3, kind: input, shape index: {}]
  %s4 = inlined_call_operand.vmem [shape: bf16[64,32], index: 4, kind: input, shape index: {}]
  %s5 = inlined_call_operand.hbm [shape: bf16[4,16,64,128], index: 5, kind: input, shape index: {}]
  %s6 = inlined_call_operand.hbm [shape: bf16[4,16,64,128], index: 6, kind: input, shape index: {}]
  %s7 = inlined_call_operand.hbm [shape: bf16[4,128,128], index: 7, kind: input, shape index: {}]
  %s8 = inlined_call_operand.vmem [shape: f32[4,1,128], index: 8, kind: input, shape index: {}]
  %s9 = inlined_call_operand.vmem [shape: bf16[128,256], index: 9, kind: input, shape index: {}]
  %s10 = inlined_call_operand.vmem [shape: f32[1,256], index: 10, kind: input, shape index: {}]
  %s11 = inlined_call_operand.vmem [shape: bf16[256,2], index: 11, kind: input, shape index: {}]
  %s12 = inlined_call_operand.vmem [shape: f32[1,2], index: 12, kind: input, shape index: {}]
  %s13 = inlined_call_operand.vmem [shape: f32[64,2], index: 13, kind: output, shape index: {}]
  %s14 = sld [smem:[#allocation0]]
  $region74: #{simple_block1d_forward.1} parent=0
    _
  %s16 = ssub.s32 1, %s14
  %s17 = scalar_select 0, %s16, %s14
  $region1: #{simple_block1d_forward.1} parent=0
    #allocation2 [shape = 'u8[1048576]{0}', space=vmem, size = 0x100000, scoped, tag = 'input window, operand 5, single buffered']
    #allocation3 [shape = 's32[1]{0}', space=sflag, size = 0x4, scoped, tag = 'scoped memory for simple_block1d_forward.1']
    #allocation4 [shape = 'u8[1048576]{0}', space=vmem, size = 0x100000, scoped, tag = 'input window, operand 6, single buffered']
    #allocation5 [shape = 's32[1]{0}', space=sflag, size = 0x4, scoped, tag = 'scoped memory for simple_block1d_forward.1']
    #allocation6 [shape = 'u8[131072]{0}', space=vmem, size = 0x20000, scoped, tag = 'input window, operand 7, single buffered']
    %18 = vsyncpa [#allocation3], 0
    %19 = vsyncpa [#allocation5], 0
    // Predicated region
    $region2: #{simple_block1d_forward.1} parent=1 // pred_check
      _
    $region3: #{simple_block1d_forward.1} parent=1 // pred_check_branch
      %21 = sbr.rel (0) target = $region5
    $region4: #{simple_block1d_forward.1} parent=1 // pred_region
      _
    $region5: #{simple_block1d_forward.1} parent=1 // pred_fallthru
      _
    // Predicated region
    $region6: #{simple_block1d_forward.1} parent=1 // pred_check
      _
    $region7: #{simple_block1d_forward.1} parent=1 // pred_check_branch
      %23 = sbr.rel (0) target = $region9
    $region8: #{simple_block1d_forward.1} parent=1 // pred_region
      _
    $region9: #{simple_block1d_forward.1} parent=1 // pred_fallthru
      _
    // Predicated region
    $region10: #{simple_block1d_forward.1} parent=1 // pred_check
      _
    $region11: #{simple_block1d_forward.1} parent=1 // pred_check_branch
      %25 = sbr.rel (0) target = $region13
    $region12: #{simple_block1d_forward.1} parent=1 // pred_region
      _
    $region13: #{simple_block1d_forward.1} parent=1 // pred_fallthru
      _
    // Predicated region
    $region14: #{simple_block1d_forward.1} parent=1 // pred_check
      _
    $region15: #{simple_block1d_forward.1} parent=1 // pred_check_branch
      %27 = sbr.rel (0) target = $region17
    $region16: #{simple_block1d_forward.1} parent=1 // pred_region
      _
    $region17: #{simple_block1d_forward.1} parent=1 // pred_fallthru
      _
    // Predicated region
    $region18: #{simple_block1d_forward.1} parent=1 // pred_check
      _
    $region19: #{simple_block1d_forward.1} parent=1 // pred_check_branch
      %29 = sbr.rel (0) target = $region21
    $region20: #{simple_block1d_forward.1} parent=1 // pred_region
      _
    $region21: #{simple_block1d_forward.1} parent=1 // pred_fallthru
      _
    // Predicated region
    $region22: #{simple_block1d_forward.1} parent=1 // pred_check
      _
    $region23: #{simple_block1d_forward.1} parent=1 // pred_check_branch
      %31 = sbr.rel (0) target = $region25
    $region24: #{simple_block1d_forward.1} parent=1 // pred_region
      %33 = vsyncadd [#allocation3], 0
      %s34 = sshll.u32 %s5, 4
      %s35 = int_to_ptr.hbm [resolvable:$true] %s34
      %s36 = sshll.u32 [#allocation2], 4
      %s37 = int_to_ptr.vmem [resolvable:$true] %s36
      %42 = dma.hbm_to_vmem [thread:$0]  %s35, 32768, %s37, [#allocation3], 64, 64, 4
    $region25: #{simple_block1d_forward.1} parent=1 // pred_fallthru
      _
    // Predicated region
    $region26: #{simple_block1d_forward.1} parent=1 // pred_check
      _
    $region27: #{simple_block1d_forward.1} parent=1 // pred_check_branch
      %44 = sbr.rel (0) target = $region29
    $region28: #{simple_block1d_forward.1} parent=1 // pred_region
      %46 = vsyncadd [#allocation5], 0
      %s47 = sshll.u32 %s6, 4
      %s48 = int_to_ptr.hbm [resolvable:$true] %s47
      %s49 = sshll.u32 [#allocation4], 4
      %s50 = int_to_ptr.vmem [resolvable:$true] %s49
      %55 = dma.hbm_to_vmem [thread:$0]  %s48, 32768, %s50, [#allocation5], 64, 64, 4
    $region29: #{simple_block1d_forward.1} parent=1 // pred_fallthru
      _
    // Predicated region
    $region30: #{simple_block1d_forward.1} parent=1 // pred_check
      _
    $region31: #{simple_block1d_forward.1} parent=1 // pred_check_branch
      %57 = sbr.rel (0) target = $region33
    $region32: #{simple_block1d_forward.1} parent=1 // pred_region
      %59 = vsyncadd [#allocation5], 0
      %s60 = sshll.u32 %s7, 4
      %s61 = int_to_ptr.hbm [resolvable:$true] %s60
      %s62 = sshll.u32 [#allocation6], 4
      %s63 = int_to_ptr.vmem [resolvable:$true] %s62
      %68 = dma.hbm_to_vmem [thread:$0]  %s61, 4096, %s63, [#allocation5], 64, 64, 4
    $region33: #{simple_block1d_forward.1} parent=1 // pred_fallthru
      _
    // Predicated region
    $region34: #{simple_block1d_forward.1} parent=1 // pred_check
      _
    $region35: #{simple_block1d_forward.1} parent=1 // pred_check_branch
      %70 = sbr.rel (0) target = $region37
    $region36: #{simple_block1d_forward.1} parent=1 // pred_region
      _
    $region37: #{simple_block1d_forward.1} parent=1 // pred_fallthru
      _
    // Predicated region
    $region38: #{simple_block1d_forward.1} parent=1 // pred_check
      _
    $region39: #{simple_block1d_forward.1} parent=1 // pred_check_branch
      %72 = sbr.rel (0) target = $region41
    $region40: #{simple_block1d_forward.1} parent=1 // pred_region
      _
    $region41: #{simple_block1d_forward.1} parent=1 // pred_fallthru
      _
    // Predicated region
    $region42: #{simple_block1d_forward.1} parent=1 // pred_check
      _
    $region43: #{simple_block1d_forward.1} parent=1 // pred_check_branch
      %74 = sbr.rel (0) target = $region45
    $region44: #{simple_block1d_forward.1} parent=1 // pred_region
      _
    $region45: #{simple_block1d_forward.1} parent=1 // pred_fallthru
      _
    // Predicated region
    $region46: #{simple_block1d_forward.1} parent=1 // pred_check
      _
    $region47: #{simple_block1d_forward.1} parent=1 // pred_check_branch
      %76 = sbr.rel (0) target = $region49
    $region48: #{simple_block1d_forward.1} parent=1 // pred_region
      _
    $region49: #{simple_block1d_forward.1} parent=1 // pred_fallthru
      _
    // Predicated region
    $region50: #{simple_block1d_forward.1} parent=1 // pred_check
      _
    $region51: #{simple_block1d_forward.1} parent=1 // pred_check_branch
      %78 = sbr.rel (0) target = $region53
    $region52: #{simple_block1d_forward.1} parent=1 // pred_region
      _
    $region53: #{simple_block1d_forward.1} parent=1 // pred_fallthru
      _
    // Predicated region
    $region54: #{simple_block1d_forward.1} parent=1 // pred_check
      _
    $region55: #{simple_block1d_forward.1} parent=1 // pred_check_branch
      %80 = sbr.rel (0) target = $region57
    $region56: #{simple_block1d_forward.1} parent=1 // pred_region
      %82 = dma.done [#allocation3], 32768
    $region57: #{simple_block1d_forward.1} parent=1 // pred_fallthru
      _
    // Predicated region
    $region58: #{simple_block1d_forward.1} parent=1 // pred_check
      _
    $region59: #{simple_block1d_forward.1} parent=1 // pred_check_branch
      %84 = sbr.rel (0) target = $region61
    $region60: #{simple_block1d_forward.1} parent=1 // pred_region
      %86 = dma.done [#allocation5], 32768
    $region61: #{simple_block1d_forward.1} parent=1 // pred_fallthru
      _
    // Predicated region
    $region62: #{simple_block1d_forward.1} parent=1 // pred_check
      _
    $region63: #{simple_block1d_forward.1} parent=1 // pred_check_branch
      %88 = sbr.rel (0) target = $region65
    $region64: #{simple_block1d_forward.1} parent=1 // pred_region
      %90 = dma.done [#allocation5], 4096
    $region65: #{simple_block1d_forward.1} parent=1 // pred_fallthru
      _
    %v92 = vld [vmem:[%s0] sm:$0xff]
    %v93 = vld [vmem:[%s0 + $0x8] sm:$0xff]
    %v94 = vld [vmem:[%s0 + $0x10] sm:$0xff]
    %v95 = vld [vmem:[%s0 + $0x18] sm:$0xff]
    %v96 = vld [vmem:[%s0 + $0x20] sm:$0xff]
    %v97 = vld [vmem:[%s0 + $0x28] sm:$0xff]
    %v98 = vld [vmem:[%s0 + $0x30] sm:$0xff]
    %v99 = vld [vmem:[%s0 + $0x38] sm:$0xff]
    %v100 = vpack.c.bf16 %v93, %v92
    %v101 = vpack.c.bf16 %v95, %v94
    %v102 = vpack.c.bf16 %v97, %v96
    %v103 = vpack.c.bf16 %v99, %v98
    %v104 = vld [vmem:[%s1] sm:$0xf]
    %v105 = vld [vmem:[%s1 + $0x4] sm:$0xf]
    %v106 = vld [vmem:[%s2] sm:$0x1]
    %v108 = vperm.slane %v106, 0
    %v112 = vunpack.c.l.b16 %v104
    %v113 = vunpack.c.l.b16 %v105
    %v114 = vpack.c.b16 %v113, %v112
    %vm116 = vcmask 130048
    %v118 = vsel %vm116, %v100, 0
    %v121 = vsel %vm116, %v101, 0
    %v124 = vsel %vm116, %v102, 0
    %v127 = vsel %vm116, %v103, 0
    %129 = vmatpush.bf16.msra.mxu0 0
    %130 = vmatpush.bf16.msra.mxu0 0
    %131 = vmatpush.bf16.msra.mxu0 0
    %132 = vmatpush.bf16.msra.mxu0 0
    %133 = vmatpush.bf16.msra.mxu0 0
    %134 = vmatpush.bf16.msra.mxu0 0
    %135 = vmatpush.bf16.msra.mxu0 0
    %136 = vmatpush.bf16.msra.mxu0 %v114
    %137 = vmatmul.bf16.gmra.mxu0 %v118
    %v138 = vpop.f32.mrf.mxu0
    %v139 = vadd.f32 %v108, %v138
    %v140 = vpop.f32.mrf.mxu0
    %v141 = vadd.f32 %v108, %v140
    %142 = vmatmul.bf16.gmra.mxu0 %v121
    %v143 = vpop.f32.mrf.mxu0
    %v144 = vadd.f32 %v108, %v143
    %v145 = vpop.f32.mrf.mxu0
    %v146 = vadd.f32 %v108, %v145
    %147 = vmatmul.bf16.gmra.mxu0 %v124
    %v148 = vpop.f32.mrf.mxu0
    %v149 = vadd.f32 %v108, %v148
    %v150 = vpop.f32.mrf.mxu0
    %v151 = vadd.f32 %v108, %v150
    %152 = vmatmul.bf16.gmra.mxu0 %v127
    %v153 = vpop.f32.mrf.mxu0
    %v154 = vadd.f32 %v108, %v153
    %v155 = vpop.f32.mrf.mxu0
    %v156 = vadd.f32 %v108, %v155
    %157 = vdwg.mxu0
    %v158 = vld [vmem:[%s3] sm:$0xf]
    %v159 = vld [vmem:[%s3 + $0x4] sm:$0xf]
    %v160 = vld [vmem:[%s3 + $0x8] sm:$0xf]
    %v161 = vld [vmem:[%s3 + $0xc] sm:$0xf]
    %v162 = vld [vmem:[%s4] sm:$0xf]
    %v163 = vld [vmem:[%s4 + $0x4] sm:$0xf]
    %v164 = vld [vmem:[%s4 + $0x8] sm:$0xf]
    %v165 = vld [vmem:[%s4 + $0xc] sm:$0xf]
    %v166 = vld [vmem:[%s4 + $0x10] sm:$0xf]
    %v167 = vld [vmem:[%s4 + $0x14] sm:$0xf]
    %v168 = vld [vmem:[%s4 + $0x18] sm:$0xf]
    %v169 = vld [vmem:[%s4 + $0x1c] sm:$0xf]
    %v170 = vpack.c.bf16 %v141, %v139
    %v171 = vpack.c.bf16 %v146, %v144
    %v172 = vpack.c.bf16 %v151, %v149
    %v173 = vpack.c.bf16 %v156, %v154
    %v178 = vunpack.c.l.b16 %v158
    %v179 = vunpack.c.l.b16 %v159
    %v180 = vunpack.c.l.b16 %v160
    %v181 = vunpack.c.l.b16 %v161
    %v182 = vpack.c.b16 %v179, %v178
    %v183 = vpack.c.b16 %v181, %v180
    %vm184 = vcmask 523264
    %v186 = vsel %vm184, %v182, 0
    %v189 = vsel %vm184, %v183, 0
    %191 = vmatpush.bf16.msra.mxu0 0
    %192 = vmatpush.bf16.msra.mxu0 0
    %193 = vmatpush.bf16.msra.mxu0 0
    %194 = vmatpush.bf16.msra.mxu0 0
    %195 = vmatpush.bf16.msra.mxu0 %v173
    %196 = vmatpush.bf16.msra.mxu0 %v172
    %197 = vmatpush.bf16.msra.mxu0 %v171
    %198 = vmatpush.bf16.msra.mxu0 %v170
    %199 = vmatmul.bf16.gmra.mxu0 %v186
    %v200 = vpop.f32.mrf.mxu0
    %v201 = vadd.f32 0.0, %v200
    %v202 = vpop.f32.mrf.mxu0
    %v203 = vadd.f32 0.0, %v202
    %204 = vmatmul.bf16.gmra.mxu0 %v189
    %v205 = vpop.f32.mrf.mxu0
    %v206 = vadd.f32 0.0, %v205
    %v207 = vpop.f32.mrf.mxu0
    %v208 = vadd.f32 0.0, %v207
    %209 = vdwg.mxu0
    %212 = vrot.lane.b32.xlu0 %v201, 64
    %v213 = vpop.permute.xlu0 %212
    %214 = vrot.lane.b32.xlu0 %v203, 64
    %v215 = vpop.permute.xlu0 %214
    %v218 = vrot.slane %v201, 4
    %vm219 = vcmask 1047556
    %v220 = vsel %vm219, 0.0, %v218
    %v222 = vunpack.c.l.s4 1983009808
    %v223 = vunpack.c.0.s8 %v222
    %v224 = vperm.slane %v201, %v223
    %v226 = vunpack.c.l.s4 1983009808
    %v227 = vunpack.c.0.s8 %v226
    %v228 = vperm.slane %v220, %v227
    %v229 = vrot.slane %v213, 4
    %v230 = vsel %vm219, 0.0, %v229
    %v232 = vunpack.c.l.s4 1983009808
    %v233 = vunpack.c.0.s8 %v232
    %v234 = vperm.slane %v213, %v233
    %v236 = vunpack.c.l.s4 1983009808
    %v237 = vunpack.c.0.s8 %v236
    %v238 = vperm.slane %v230, %v237
    %v239 = vrot.slane %v234, 4
    %v240 = vsel %vm219, %v239, %v224
    %v241 = vrot.slane %v224, 4
    %v242 = vsel %vm219, %v234, %v241
    %v244 = vunpack.c.l.s4 1934713408
    %v245 = vunpack.c.0.s8 %v244
    %v246 = vperm.slane %v240, %v245
    %v248 = vunpack.c.l.s4 1934713408
    %v249 = vunpack.c.0.s8 %v248
    %v250 = vperm.slane %v242, %v249
    %v251 = vrot.slane %v238, 4
    %v252 = vsel %vm219, %v251, %v228
    %v253 = vrot.slane %v228, 4
    %v254 = vsel %vm219, %v238, %v253
    %v256 = vunpack.c.l.s4 1934713408
    %v257 = vunpack.c.0.s8 %v256
    %v258 = vperm.slane %v252, %v257
    %v260 = vunpack.c.l.s4 1934713408
    %v261 = vunpack.c.0.s8 %v260
    %v262 = vperm.slane %v254, %v261
    %v263 = vrot.slane %v246, 4
    %v264 = vsel %vm219, 0.0, %v263
    %v265 = vrot.slane %v250, 4
    %v266 = vsel %vm219, 0.0, %v265
    %v267 = vrot.slane %v258, 4
    %v268 = vsel %vm219, 0.0, %v267
    %v269 = vrot.slane %v262, 4
    %v270 = vsel %vm219, 0.0, %v269
    %v271 = vrot.slane %v203, 4
    %v272 = vsel %vm219, 0.0, %v271
    %v274 = vunpack.c.l.s4 1983009808
    %v275 = vunpack.c.0.s8 %v274
    %v276 = vperm.slane %v203, %v275
    %v278 = vunpack.c.l.s4 1983009808
    %v279 = vunpack.c.0.s8 %v278
    %v280 = vperm.slane %v272, %v279
    %v281 = vrot.slane %v215, 4
    %v282 = vsel %vm219, 0.0, %v281
    %v284 = vunpack.c.l.s4 1983009808
    %v285 = vunpack.c.0.s8 %v284
    %v286 = vperm.slane %v215, %v285
    %v288 = vunpack.c.l.s4 1983009808
    %v289 = vunpack.c.0.s8 %v288
    %v290 = vperm.slane %v282, %v289
    %v291 = vrot.slane %v286, 4
    %v292 = vsel %vm219, %v291, %v276
    %v293 = vrot.slane %v276, 4
    %v294 = vsel %vm219, %v286, %v293
    %v296 = vunpack.c.l.s4 1934713408
    %v297 = vunpack.c.0.s8 %v296
    %v298 = vperm.slane %v292, %v297
    %v300 = vunpack.c.l.s4 1934713408
    %v301 = vunpack.c.0.s8 %v300
    %v302 = vperm.slane %v294, %v301
    %v303 = vrot.slane %v290, 4
    %v304 = vsel %vm219, %v303, %v280
    %v305 = vrot.slane %v280, 4
    %v306 = vsel %vm219, %v290, %v305
    %v308 = vunpack.c.l.s4 1934713408
    %v309 = vunpack.c.0.s8 %v308
    %v310 = vperm.slane %v304, %v309
    %v312 = vunpack.c.l.s4 1934713408
    %v313 = vunpack.c.0.s8 %v312
    %v314 = vperm.slane %v306, %v313
    %v315 = vrot.slane %v298, 4
    %v316 = vsel %vm219, 0.0, %v315
    %v317 = vrot.slane %v302, 4
    %v318 = vsel %vm219, 0.0, %v317
    %v319 = vrot.slane %v310, 4
    %v320 = vsel %vm219, 0.0, %v319
    %v321 = vrot.slane %v314, 4
    %v322 = vsel %vm219, 0.0, %v321
    %v323 = vpack.c.bf16 %v246, %v246
    %v324 = vpack.c.bf16 %v264, %v264
    %v325 = vpack.c.bf16 %v250, %v250
    %v326 = vpack.c.bf16 %v266, %v266
    %v327 = vpack.c.bf16 %v258, %v258
    %v328 = vpack.c.bf16 %v268, %v268
    %v329 = vpack.c.bf16 %v262, %v262
    %v330 = vpack.c.bf16 %v270, %v270
    %v331 = vpack.c.bf16 %v298, %v298
    %v332 = vpack.c.bf16 %v316, %v316
    %v333 = vpack.c.bf16 %v302, %v302
    %v334 = vpack.c.bf16 %v318, %v318
    %v335 = vpack.c.bf16 %v310, %v310
    %v336 = vpack.c.bf16 %v320, %v320
    %v337 = vpack.c.bf16 %v314, %v314
    %v338 = vpack.c.bf16 %v322, %v322
    %341 = vrot.lane.b32.xlu0 %v206, 64
    %v342 = vpop.permute.xlu0 %341
    %343 = vrot.lane.b32.xlu0 %v208, 64
    %v344 = vpop.permute.xlu0 %343
    %v347 = vrot.slane %v206, 4
    %v348 = vsel %vm219, 0.0, %v347
    %v350 = vunpack.c.l.s4 1983009808
    %v351 = vunpack.c.0.s8 %v350
    %v352 = vperm.slane %v206, %v351
    %v354 = vunpack.c.l.s4 1983009808
    %v355 = vunpack.c.0.s8 %v354
    %v356 = vperm.slane %v348, %v355
    %v357 = vrot.slane %v342, 4
    %v358 = vsel %vm219, 0.0, %v357
    %v360 = vunpack.c.l.s4 1983009808
    %v361 = vunpack.c.0.s8 %v360
    %v362 = vperm.slane %v342, %v361
    %v364 = vunpack.c.l.s4 1983009808
    %v365 = vunpack.c.0.s8 %v364
    %v366 = vperm.slane %v358, %v365
    %v367 = vrot.slane %v362, 4
    %v368 = vsel %vm219, %v367, %v352
    %v369 = vrot.slane %v352, 4
    %v370 = vsel %vm219, %v362, %v369
    %v372 = vunpack.c.l.s4 1934713408
    %v373 = vunpack.c.0.s8 %v372
    %v374 = vperm.slane %v368, %v373
    %v376 = vunpack.c.l.s4 1934713408
    %v377 = vunpack.c.0.s8 %v376
    %v378 = vperm.slane %v370, %v377
    %v379 = vrot.slane %v366, 4
    %v380 = vsel %vm219, %v379, %v356
    %v381 = vrot.slane %v356, 4
    %v382 = vsel %vm219, %v366, %v381
    %v384 = vunpack.c.l.s4 1934713408
    %v385 = vunpack.c.0.s8 %v384
    %v386 = vperm.slane %v380, %v385
    %v388 = vunpack.c.l.s4 1934713408
    %v389 = vunpack.c.0.s8 %v388
    %v390 = vperm.slane %v382, %v389
    %v391 = vrot.slane %v374, 4
    %v392 = vsel %vm219, 0.0, %v391
    %v393 = vrot.slane %v378, 4
    %v394 = vsel %vm219, 0.0, %v393
    %v395 = vrot.slane %v386, 4
    %v396 = vsel %vm219, 0.0, %v395
    %v397 = vrot.slane %v390, 4
    %v398 = vsel %vm219, 0.0, %v397
    %v399 = vrot.slane %v208, 4
    %v400 = vsel %vm219, 0.0, %v399
    %v402 = vunpack.c.l.s4 1983009808
    %v403 = vunpack.c.0.s8 %v402
    %v404 = vperm.slane %v208, %v403
    %v406 = vunpack.c.l.s4 1983009808
    %v407 = vunpack.c.0.s8 %v406
    %v408 = vperm.slane %v400, %v407
    %v409 = vrot.slane %v344, 4
    %v410 = vsel %vm219, 0.0, %v409
    %v412 = vunpack.c.l.s4 1983009808
    %v413 = vunpack.c.0.s8 %v412
    %v414 = vperm.slane %v344, %v413
    %v416 = vunpack.c.l.s4 1983009808
    %v417 = vunpack.c.0.s8 %v416
    %v418 = vperm.slane %v410, %v417
    %v419 = vrot.slane %v414, 4
    %v420 = vsel %vm219, %v419, %v404
    %v421 = vrot.slane %v404, 4
    %v422 = vsel %vm219, %v414, %v421
    %v424 = vunpack.c.l.s4 1934713408
    %v425 = vunpack.c.0.s8 %v424
    %v426 = vperm.slane %v420, %v425
    %v428 = vunpack.c.l.s4 1934713408
    %v429 = vunpack.c.0.s8 %v428
    %v430 = vperm.slane %v422, %v429
    %v431 = vrot.slane %v418, 4
    %v432 = vsel %vm219, %v431, %v408
    %v433 = vrot.slane %v408, 4
    %v434 = vsel %vm219, %v418, %v433
    %v436 = vunpack.c.l.s4 1934713408
    %v437 = vunpack.c.0.s8 %v436
    %v438 = vperm.slane %v432, %v437
    %v440 = vunpack.c.l.s4 1934713408
    %v441 = vunpack.c.0.s8 %v440
    %v442 = vperm.slane %v434, %v441
    %v443 = vrot.slane %v426, 4
    %v444 = vsel %vm219, 0.0, %v443
    %v445 = vrot.slane %v430, 4
    %v446 = vsel %vm219, 0.0, %v445
    %v447 = vrot.slane %v438, 4
    %v448 = vsel %vm219, 0.0, %v447
    %v449 = vrot.slane %v442, 4
    %v450 = vsel %vm219, 0.0, %v449
    %v451 = vpack.c.bf16 %v374, %v374
    %v452 = vpack.c.bf16 %v392, %v392
    %v453 = vpack.c.bf16 %v378, %v378
    %v454 = vpack.c.bf16 %v394, %v394
    %v455 = vpack.c.bf16 %v386, %v386
    %v456 = vpack.c.bf16 %v396, %v396
    %v457 = vpack.c.bf16 %v390, %v390
    %v458 = vpack.c.bf16 %v398, %v398
    %v459 = vpack.c.bf16 %v426, %v426
    %v460 = vpack.c.bf16 %v444, %v444
    %v461 = vpack.c.bf16 %v430, %v430
    %v462 = vpack.c.bf16 %v446, %v446
    %v463 = vpack.c.bf16 %v438, %v438
    %v464 = vpack.c.bf16 %v448, %v448
    %v465 = vpack.c.bf16 %v442, %v442
    %v466 = vpack.c.bf16 %v450, %v450
    %v467 = vld [vmem:[#allocation2] sm:$0xf]
    %v468 = vld [vmem:[#allocation2 + $0x4] sm:$0xf]
    %v469 = vld [vmem:[#allocation2 + $0x8] sm:$0xf]
    %v470 = vld [vmem:[#allocation2 + $0xc] sm:$0xf]
    %v471 = vld [vmem:[#allocation2 + $0x10] sm:$0xf]
    %v472 = vld [vmem:[#allocation2 + $0x14] sm:$0xf]
    %v473 = vld [vmem:[#allocation2 + $0x18] sm:$0xf]
    %v474 = vld [vmem:[#allocation2 + $0x1c] sm:$0xf]
    %v475 = vld [vmem:[#allocation2 + $0x20] sm:$0xf]
    %v476 = vld [vmem:[#allocation2 + $0x24] sm:$0xf]
    %v477 = vld [vmem:[#allocation2 + $0x28] sm:$0xf]
    %v478 = vld [vmem:[#allocation2 + $0x2c] sm:$0xf]
    %v479 = vld [vmem:[#allocation2 + $0x30] sm:$0xf]
    %v480 = vld [vmem:[#allocation2 + $0x34] sm:$0xf]
    %v481 = vld [vmem:[#allocation2 + $0x38] sm:$0xf]
    %v482 = vld [vmem:[#allocation2 + $0x3c] sm:$0xf]
    %v483 = vld [vmem:[#allocation2 + $0x40] sm:$0xf]
    %v484 = vld [vmem:[#allocation2 + $0x44] sm:$0xf]
    %v485 = vld [vmem:[#allocation2 + $0x48] sm:$0xf]
    %v486 = vld [vmem:[#allocation2 + $0x4c] sm:$0xf]
    %v487 = vld [vmem:[#allocation2 + $0x50] sm:$0xf]
    %v488 = vld [vmem:[#allocation2 + $0x54] sm:$0xf]
    %v489 = vld [vmem:[#allocation2 + $0x58] sm:$0xf]
    %v490 = vld [vmem:[#allocation2 + $0x5c] sm:$0xf]
    %v491 = vld [vmem:[#allocation2 + $0x60] sm:$0xf]
    %v492 = vld [vmem:[#allocation2 + $0x64] sm:$0xf]
    %v493 = vld [vmem:[#allocation2 + $0x68] sm:$0xf]
    %v494 = vld [vmem:[#allocation2 + $0x6c] sm:$0xf]
    %v495 = vld [vmem:[#allocation2 + $0x70] sm:$0xf]
    %v496 = vld [vmem:[#allocation2 + $0x74] sm:$0xf]
    %v497 = vld [vmem:[#allocation2 + $0x78] sm:$0xf]
    %v498 = vld [vmem:[#allocation2 + $0x7c] sm:$0xf]
    %v499 = vld [vmem:[#allocation2 + $0x80] sm:$0xf]
    %v500 = vld [vmem:[#allocation2 + $0x84] sm:$0xf]
    %v501 = vld [vmem:[#allocation2 + $0x88] sm:$0xf]
    %v502 = vld [vmem:[#allocation2 + $0x8c] sm:$0xf]
    %v503 = vld [vmem:[#allocation2 + $0x90] sm:$0xf]
    %v504 = vld [vmem:[#allocation2 + $0x94] sm:$0xf]
    %v505 = vld [vmem:[#allocation2 + $0x98] sm:$0xf]
    %v506 = vld [vmem:[#allocation2 + $0x9c] sm:$0xf]
    %v507 = vld [vmem:[#allocation2 + $0xa0] sm:$0xf]
    %v508 = vld [vmem:[#allocation2 + $0xa4] sm:$0xf]
    %v509 = vld [vmem:[#allocation2 + $0xa8] sm:$0xf]
    %v510 = vld [vmem:[#allocation2 + $0xac] sm:$0xf]
    %v511 = vld [vmem:[#allocation2 + $0xb0] sm:$0xf]
    %v512 = vld [vmem:[#allocation2 + $0xb4] sm:$0xf]
    %v513 = vld [vmem:[#allocation2 + $0xb8] sm:$0xf]
    %v514 = vld [vmem:[#allocation2 + $0xbc] sm:$0xf]
    %v515 = vld [vmem:[#allocation2 + $0xc0] sm:$0xf]
    %v516 = vld [vmem:[#allocation2 + $0xc4] sm:$0xf]
    %v517 = vld [vmem:[#allocation2 + $0xc8] sm:$0xf]
    %v518 = vld [vmem:[#allocation2 + $0xcc] sm:$0xf]
    %v519 = vld [vmem:[#allocation2 + $0xd0] sm:$0xf]
    %v520 = vld [vmem:[#allocation2 + $0xd4] sm:$0xf]
    %v521 = vld [vmem:[#allocation2 + $0xd8] sm:$0xf]
    %v522 = vld [vmem:[#allocation2 + $0xdc] sm:$0xf]
    %v523 = vld [vmem:[#allocation2 + $0xe0] sm:$0xf]
    %v524 = vld [vmem:[#allocation2 + $0xe4] sm:$0xf]
    %v525 = vld [vmem:[#allocation2 + $0xe8] sm:$0xf]
    %v526 = vld [vmem:[#allocation2 + $0xec] sm:$0xf]
    %v527 = vld [vmem:[#allocation2 + $0xf0] sm:$0xf]
    %v528 = vld [vmem:[#allocation2 + $0xf4] sm:$0xf]
    %v529 = vld [vmem:[#allocation2 + $0xf8] sm:$0xf]
    %v530 = vld [vmem:[#allocation2 + $0xfc] sm:$0xf]
    %v531 = vld [vmem:[#allocation2 + $0x100] sm:$0xf]
    %v532 = vld [vmem:[#allocation2 + $0x104] sm:$0xf]
    %v533 = vld [vmem:[#allocation2 + $0x108] sm:$0xf]
    %v534 = vld [vmem:[#allocation2 + $0x10c] sm:$0xf]
    %v535 = vld [vmem:[#allocation2 + $0x110] sm:$0xf]
    %v536 = vld [vmem:[#allocation2 + $0x114] sm:$0xf]
    %v537 = vld [vmem:[#allocation2 + $0x118] sm:$0xf]
    %v538 = vld [vmem:[#allocation2 + $0x11c] sm:$0xf]
    %v539 = vld [vmem:[#allocation2 + $0x120] sm:$0xf]
    %v540 = vld [vmem:[#allocation2 + $0x124] sm:$0xf]
    %v541 = vld [vmem:[#allocation2 + $0x128] sm:$0xf]
    %v542 = vld [vmem:[#allocation2 + $0x12c] sm:$0xf]
    %v543 = vld [vmem:[#allocation2 + $0x130] sm:$0xf]
    %v544 = vld [vmem:[#allocation2 + $0x134] sm:$0xf]
    %v545 = vld [vmem:[#allocation2 + $0x138] sm:$0xf]
    %v546 = vld [vmem:[#allocation2 + $0x13c] sm:$0xf]
    %v547 = vld [vmem:[#allocation2 + $0x140] sm:$0xf]
    %v548 = vld [vmem:[#allocation2 + $0x144] sm:$0xf]
    %v549 = vld [vmem:[#allocation2 + $0x148] sm:$0xf]
    %v550 = vld [vmem:[#allocation2 + $0x14c] sm:$0xf]
    %v551 = vld [vmem:[#allocation2 + $0x150] sm:$0xf]
    %v552 = vld [vmem:[#allocation2 + $0x154] sm:$0xf]
    %v553 = vld [vmem:[#allocation2 + $0x158] sm:$0xf]
    %v554 = vld [vmem:[#allocation2 + $0x15c] sm:$0xf]
    %v555 = vld [vmem:[#allocation2 + $0x160] sm:$0xf]
    %v556 = vld [vmem:[#allocation2 + $0x164] sm:$0xf]
    %v557 = vld [vmem:[#allocation2 + $0x168] sm:$0xf]
    %v558 = vld [vmem:[#allocation2 + $0x16c] sm:$0xf]
    %v559 = vld [vmem:[#allocation2 + $0x170] sm:$0xf]
    %v560 = vld [vmem:[#allocation2 + $0x174] sm:$0xf]
    %v561 = vld [vmem:[#allocation2 + $0x178] sm:$0xf]
    %v562 = vld [vmem:[#allocation2 + $0x17c] sm:$0xf]
    %v563 = vld [vmem:[#allocation2 + $0x180] sm:$0xf]
    %v564 = vld [vmem:[#allocation2 + $0x184] sm:$0xf]
    %v565 = vld [vmem:[#allocation2 + $0x188] sm:$0xf]
    %v566 = vld [vmem:[#allocation2 + $0x18c] sm:$0xf]
    %v567 = vld [vmem:[#allocation2 + $0x190] sm:$0xf]
    %v568 = vld [vmem:[#allocation2 + $0x194] sm:$0xf]
    %v569 = vld [vmem:[#allocation2 + $0x198] sm:$0xf]
    %v570 = vld [vmem:[#allocation2 + $0x19c] sm:$0xf]
    %v571 = vld [vmem:[#allocation2 + $0x1a0] sm:$0xf]
    %v572 = vld [vmem:[#allocation2 + $0x1a4] sm:$0xf]
    %v573 = vld [vmem:[#allocation2 + $0x1a8] sm:$0xf]
    %v574 = vld [vmem:[#allocation2 + $0x1ac] sm:$0xf]
    %v575 = vld [vmem:[#allocation2 + $0x1b0] sm:$0xf]
    %v576 = vld [vmem:[#allocation2 + $0x1b4] sm:$0xf]
    %v577 = vld [vmem:[#allocation2 + $0x1b8] sm:$0xf]
    %v578 = vld [vmem:[#allocation2 + $0x1bc] sm:$0xf]
    %v579 = vld [vmem:[#allocation2 + $0x1c0] sm:$0xf]
    %v580 = vld [vmem:[#allocation2 + $0x1c4] sm:$0xf]
    %v581 = vld [vmem:[#allocation2 + $0x1c8] sm:$0xf]
    %v582 = vld [vmem:[#allocation2 + $0x1cc] sm:$0xf]
    %v583 = vld [vmem:[#allocation2 + $0x1d0] sm:$0xf]
    %v584 = vld [vmem:[#allocation2 + $0x1d4] sm:$0xf]
    %v585 = vld [vmem:[#allocation2 + $0x1d8] sm:$0xf]
    %v586 = vld [vmem:[#allocation2 + $0x1dc] sm:$0xf]
    %v587 = vld [vmem:[#allocation2 + $0x1e0] sm:$0xf]
    %v588 = vld [vmem:[#allocation2 + $0x1e4] sm:$0xf]
    %v589 = vld [vmem:[#allocation2 + $0x1e8] sm:$0xf]
    %v590 = vld [vmem:[#allocation2 + $0x1ec] sm:$0xf]
    %v591 = vld [vmem:[#allocation2 + $0x1f0] sm:$0xf]
    %v592 = vld [vmem:[#allocation2 + $0x1f4] sm:$0xf]
    %v593 = vld [vmem:[#allocation2 + $0x1f8] sm:$0xf]
    %v594 = vld [vmem:[#allocation2 + $0x1fc] sm:$0xf]
    %v595 = vld [vmem:[#allocation4] sm:$0xf]
    %v596 = vld [vmem:[#allocation4 + $0x4] sm:$0xf]
    %v597 = vld [vmem:[#allocation4 + $0x8] sm:$0xf]
    %v598 = vld [vmem:[#allocation4 + $0xc] sm:$0xf]
    %v599 = vld [vmem:[#allocation4 + $0x10] sm:$0xf]
    %v600 = vld [vmem:[#allocation4 + $0x14] sm:$0xf]
    %v601 = vld [vmem:[#allocation4 + $0x18] sm:$0xf]
    %v602 = vld [vmem:[#allocation4 + $0x1c] sm:$0xf]
    %v603 = vld [vmem:[#allocation4 + $0x20] sm:$0xf]
    %v604 = vld [vmem:[#allocation4 + $0x24] sm:$0xf]
    %v605 = vld [vmem:[#allocation4 + $0x28] sm:$0xf]
    %v606 = vld [vmem:[#allocation4 + $0x2c] sm:$0xf]
    %v607 = vld [vmem:[#allocation4 + $0x30] sm:$0xf]
    %v608 = vld [vmem:[#allocation4 + $0x34] sm:$0xf]
    %v609 = vld [vmem:[#allocation4 + $0x38] sm:$0xf]
    %v610 = vld [vmem:[#allocation4 + $0x3c] sm:$0xf]
    %v611 = vld [vmem:[#allocation4 + $0x40] sm:$0xf]
    %v612 = vld [vmem:[#allocation4 + $0x44] sm:$0xf]
    %v613 = vld [vmem:[#allocation4 + $0x48] sm:$0xf]
    %v614 = vld [vmem:[#allocation4 + $0x4c] sm:$0xf]
    %v615 = vld [vmem:[#allocation4 + $0x50] sm:$0xf]
    %v616 = vld [vmem:[#allocation4 + $0x54] sm:$0xf]
    %v617 = vld [vmem:[#allocation4 + $0x58] sm:$0xf]
    %v618 = vld [vmem:[#allocation4 + $0x5c] sm:$0xf]
    %v619 = vld [vmem:[#allocation4 + $0x60] sm:$0xf]
    %v620 = vld [vmem:[#allocation4 + $0x64] sm:$0xf]
    %v621 = vld [vmem:[#allocation4 + $0x68] sm:$0xf]
    %v622 = vld [vmem:[#allocation4 + $0x6c] sm:$0xf]
    %v623 = vld [vmem:[#allocation4 + $0x70] sm:$0xf]
    %v624 = vld [vmem:[#allocation4 + $0x74] sm:$0xf]
    %v625 = vld [vmem:[#allocation4 + $0x78] sm:$0xf]
    %v626 = vld [vmem:[#allocation4 + $0x7c] sm:$0xf]
    %v627 = vld [vmem:[#allocation4 + $0x80] sm:$0xf]
    %v628 = vld [vmem:[#allocation4 + $0x84] sm:$0xf]
    %v629 = vld [vmem:[#allocation4 + $0x88] sm:$0xf]
    %v630 = vld [vmem:[#allocation4 + $0x8c] sm:$0xf]
    %v631 = vld [vmem:[#allocation4 + $0x90] sm:$0xf]
    %v632 = vld [vmem:[#allocation4 + $0x94] sm:$0xf]
    %v633 = vld [vmem:[#allocation4 + $0x98] sm:$0xf]
    %v634 = vld [vmem:[#allocation4 + $0x9c] sm:$0xf]
    %v635 = vld [vmem:[#allocation4 + $0xa0] sm:$0xf]
    %v636 = vld [vmem:[#allocation4 + $0xa4] sm:$0xf]
    %v637 = vld [vmem:[#allocation4 + $0xa8] sm:$0xf]
    %v638 = vld [vmem:[#allocation4 + $0xac] sm:$0xf]
    %v639 = vld [vmem:[#allocation4 + $0xb0] sm:$0xf]
    %v640 = vld [vmem:[#allocation4 + $0xb4] sm:$0xf]
    %v641 = vld [vmem:[#allocation4 + $0xb8] sm:$0xf]
    %v642 = vld [vmem:[#allocation4 + $0xbc] sm:$0xf]
    %v643 = vld [vmem:[#allocation4 + $0xc0] sm:$0xf]
    %v644 = vld [vmem:[#allocation4 + $0xc4] sm:$0xf]
    %v645 = vld [vmem:[#allocation4 + $0xc8] sm:$0xf]
    %v646 = vld [vmem:[#allocation4 + $0xcc] sm:$0xf]
    %v647 = vld [vmem:[#allocation4 + $0xd0] sm:$0xf]
    %v648 = vld [vmem:[#allocation4 + $0xd4] sm:$0xf]
    %v649 = vld [vmem:[#allocation4 + $0xd8] sm:$0xf]
    %v650 = vld [vmem:[#allocation4 + $0xdc] sm:$0xf]
    %v651 = vld [vmem:[#allocation4 + $0xe0] sm:$0xf]
    %v652 = vld [vmem:[#allocation4 + $0xe4] sm:$0xf]
    %v653 = vld [vmem:[#allocation4 + $0xe8] sm:$0xf]
    %v654 = vld [vmem:[#allocation4 + $0xec] sm:$0xf]
    %v655 = vld [vmem:[#allocation4 + $0xf0] sm:$0xf]
    %v656 = vld [vmem:[#allocation4 + $0xf4] sm:$0xf]
    %v657 = vld [vmem:[#allocation4 + $0xf8] sm:$0xf]
    %v658 = vld [vmem:[#allocation4 + $0xfc] sm:$0xf]
    %v659 = vld [vmem:[#allocation4 + $0x100] sm:$0xf]
    %v660 = vld [vmem:[#allocation4 + $0x104] sm:$0xf]
    %v661 = vld [vmem:[#allocation4 + $0x108] sm:$0xf]
    %v662 = vld [vmem:[#allocation4 + $0x10c] sm:$0xf]
    %v663 = vld [vmem:[#allocation4 + $0x110] sm:$0xf]
    %v664 = vld [vmem:[#allocation4 + $0x114] sm:$0xf]
    %v665 = vld [vmem:[#allocation4 + $0x118] sm:$0xf]
    %v666 = vld [vmem:[#allocation4 + $0x11c] sm:$0xf]
    %v667 = vld [vmem:[#allocation4 + $0x120] sm:$0xf]
    %v668 = vld [vmem:[#allocation4 + $0x124] sm:$0xf]
    %v669 = vld [vmem:[#allocation4 + $0x128] sm:$0xf]
    %v670 = vld [vmem:[#allocation4 + $0x12c] sm:$0xf]
    %v671 = vld [vmem:[#allocation4 + $0x130] sm:$0xf]
    %v672 = vld [vmem:[#allocation4 + $0x134] sm:$0xf]
    %v673 = vld [vmem:[#allocation4 + $0x138] sm:$0xf]
    %v674 = vld [vmem:[#allocation4 + $0x13c] sm:$0xf]
    %v675 = vld [vmem:[#allocation4 + $0x140] sm:$0xf]
    %v676 = vld [vmem:[#allocation4 + $0x144] sm:$0xf]
    %v677 = vld [vmem:[#allocation4 + $0x148] sm:$0xf]
    %v678 = vld [vmem:[#allocation4 + $0x14c] sm:$0xf]
    %v679 = vld [vmem:[#allocation4 + $0x150] sm:$0xf]
    %v680 = vld [vmem:[#allocation4 + $0x154] sm:$0xf]
    %v681 = vld [vmem:[#allocation4 + $0x158] sm:$0xf]
    %v682 = vld [vmem:[#allocation4 + $0x15c] sm:$0xf]
    %v683 = vld [vmem:[#allocation4 + $0x160] sm:$0xf]
    %v684 = vld [vmem:[#allocation4 + $0x164] sm:$0xf]
    %v685 = vld [vmem:[#allocation4 + $0x168] sm:$0xf]
    %v686 = vld [vmem:[#allocation4 + $0x16c] sm:$0xf]
    %v687 = vld [vmem:[#allocation4 + $0x170] sm:$0xf]
    %v688 = vld [vmem:[#allocation4 + $0x174] sm:$0xf]
    %v689 = vld [vmem:[#allocation4 + $0x178] sm:$0xf]
    %v690 = vld [vmem:[#allocation4 + $0x17c] sm:$0xf]
    %v691 = vld [vmem:[#allocation4 + $0x180] sm:$0xf]
    %v692 = vld [vmem:[#allocation4 + $0x184] sm:$0xf]
    %v693 = vld [vmem:[#allocation4 + $0x188] sm:$0xf]
    %v694 = vld [vmem:[#allocation4 + $0x18c] sm:$0xf]
    %v695 = vld [vmem:[#allocation4 + $0x190] sm:$0xf]
    %v696 = vld [vmem:[#allocation4 + $0x194] sm:$0xf]
    %v697 = vld [vmem:[#allocation4 + $0x198] sm:$0xf]
    %v698 = vld [vmem:[#allocation4 + $0x19c] sm:$0xf]
    %v699 = vld [vmem:[#allocation4 + $0x1a0] sm:$0xf]
    %v700 = vld [vmem:[#allocation4 + $0x1a4] sm:$0xf]
    %v701 = vld [vmem:[#allocation4 + $0x1a8] sm:$0xf]
    %v702 = vld [vmem:[#allocation4 + $0x1ac] sm:$0xf]
    %v703 = vld [vmem:[#allocation4 + $0x1b0] sm:$0xf]
    %v704 = vld [vmem:[#allocation4 + $0x1b4] sm:$0xf]
    %v705 = vld [vmem:[#allocation4 + $0x1b8] sm:$0xf]
    %v706 = vld [vmem:[#allocation4 + $0x1bc] sm:$0xf]
    %v707 = vld [vmem:[#allocation4 + $0x1c0] sm:$0xf]
    %v708 = vld [vmem:[#allocation4 + $0x1c4] sm:$0xf]
    %v709 = vld [vmem:[#allocation4 + $0x1c8] sm:$0xf]
    %v710 = vld [vmem:[#allocation4 + $0x1cc] sm:$0xf]
    %v711 = vld [vmem:[#allocation4 + $0x1d0] sm:$0xf]
    %v712 = vld [vmem:[#allocation4 + $0x1d4] sm:$0xf]
    %v713 = vld [vmem:[#allocation4 + $0x1d8] sm:$0xf]
    %v714 = vld [vmem:[#allocation4 + $0x1dc] sm:$0xf]
    %v715 = vld [vmem:[#allocation4 + $0x1e0] sm:$0xf]
    %v716 = vld [vmem:[#allocation4 + $0x1e4] sm:$0xf]
    %v717 = vld [vmem:[#allocation4 + $0x1e8] sm:$0xf]
    %v718 = vld [vmem:[#allocation4 + $0x1ec] sm:$0xf]
    %v719 = vld [vmem:[#allocation4 + $0x1f0] sm:$0xf]
    %v720 = vld [vmem:[#allocation4 + $0x1f4] sm:$0xf]
    %v721 = vld [vmem:[#allocation4 + $0x1f8] sm:$0xf]
    %v722 = vld [vmem:[#allocation4 + $0x1fc] sm:$0xf]
    %v731 = vunpack.c.l.b16 %v595
    %v732 = vunpack.c.l.b16 %v596
    %v733 = vunpack.c.l.b16 %v597
    %v734 = vunpack.c.l.b16 %v598
    %v735 = vunpack.c.l.b16 %v599
    %v736 = vunpack.c.l.b16 %v600
    %v737 = vunpack.c.l.b16 %v601
    %v738 = vunpack.c.l.b16 %v602
    %v739 = vpack.c.b16 %v732, %v731
    %v740 = vpack.c.b16 %v734, %v733
    %v741 = vpack.c.b16 %v736, %v735
    %v742 = vpack.c.b16 %v738, %v737
    %v748 = vsel %vm184, %v451, 0
    %750 = vmatpush.bf16.msra.mxu0 0
    %751 = vmatpush.bf16.msra.mxu0 0
    %752 = vmatpush.bf16.msra.mxu0 0
    %753 = vmatpush.bf16.msra.mxu0 0
    %754 = vmatpush.bf16.msra.mxu0 %v742
    %755 = vmatpush.bf16.msra.mxu0 %v741
    %756 = vmatpush.bf16.msra.mxu0 %v740
    %757 = vmatpush.bf16.msra.mxu0 %v739
    %758 = vmatmul.bf16.gmra.mxu0 %v748
    %v759 = vpop.f32.mrf.mxu0
    %v760 = vadd.f32 0.0, %v759
    %v761 = vpop.f32.mrf.mxu0
    %762 = vdwg.mxu0
    %v771 = vunpack.c.l.b16 %v603
    %v772 = vunpack.c.l.b16 %v604
    %v773 = vunpack.c.l.b16 %v605
    %v774 = vunpack.c.l.b16 %v606
    %v775 = vunpack.c.l.b16 %v607
    %v776 = vunpack.c.l.b16 %v608
    %v777 = vunpack.c.l.b16 %v609
    %v778 = vunpack.c.l.b16 %v610
    %v779 = vpack.c.b16 %v772, %v771
    %v780 = vpack.c.b16 %v774, %v773
    %v781 = vpack.c.b16 %v776, %v775
    %v782 = vpack.c.b16 %v778, %v777
    %v788 = vsel %vm184, %v452, 0
    %790 = vmatpush.bf16.msra.mxu0 0
    %791 = vmatpush.bf16.msra.mxu0 0
    %792 = vmatpush.bf16.msra.mxu0 0
    %793 = vmatpush.bf16.msra.mxu0 0
    %794 = vmatpush.bf16.msra.mxu0 %v782
    %795 = vmatpush.bf16.msra.mxu0 %v781
    %796 = vmatpush.bf16.msra.mxu0 %v780
    %797 = vmatpush.bf16.msra.mxu0 %v779
    %798 = vmatmul.bf16.gmra.mxu0 %v788
    %v799 = vpop.f32.mrf.mxu0
    %v800 = vadd.f32 0.0, %v799
    %v801 = vpop.f32.mrf.mxu0
    %802 = vdwg.mxu0
    %v811 = vunpack.c.l.b16 %v611
    %v812 = vunpack.c.l.b16 %v612
    %v813 = vunpack.c.l.b16 %v613
    %v814 = vunpack.c.l.b16 %v614
    %v815 = vunpack.c.l.b16 %v615
    %v816 = vunpack.c.l.b16 %v616
    %v817 = vunpack.c.l.b16 %v617
    %v818 = vunpack.c.l.b16 %v618
    %v819 = vpack.c.b16 %v812, %v811
    %v820 = vpack.c.b16 %v814, %v813
    %v821 = vpack.c.b16 %v816, %v815
    %v822 = vpack.c.b16 %v818, %v817
    %v828 = vsel %vm184, %v453, 0
    %830 = vmatpush.bf16.msra.mxu0 0
    %831 = vmatpush.bf16.msra.mxu0 0
    %832 = vmatpush.bf16.msra.mxu0 0
    %833 = vmatpush.bf16.msra.mxu0 0
    %834 = vmatpush.bf16.msra.mxu0 %v822
    %835 = vmatpush.bf16.msra.mxu0 %v821
    %836 = vmatpush.bf16.msra.mxu0 %v820
    %837 = vmatpush.bf16.msra.mxu0 %v819
    %838 = vmatmul.bf16.gmra.mxu0 %v828
    %v839 = vpop.f32.mrf.mxu0
    %v840 = vadd.f32 0.0, %v839
    %v841 = vpop.f32.mrf.mxu0
    %842 = vdwg.mxu0
    %v851 = vunpack.c.l.b16 %v619
    %v852 = vunpack.c.l.b16 %v620
    %v853 = vunpack.c.l.b16 %v621
    %v854 = vunpack.c.l.b16 %v622
    %v855 = vunpack.c.l.b16 %v623
    %v856 = vunpack.c.l.b16 %v624
    %v857 = vunpack.c.l.b16 %v625
    %v858 = vunpack.c.l.b16 %v626
    %v859 = vpack.c.b16 %v852, %v851
    %v860 = vpack.c.b16 %v854, %v853
    %v861 = vpack.c.b16 %v856, %v855
    %v862 = vpack.c.b16 %v858, %v857
    %v868 = vsel %vm184, %v454, 0
    %870 = vmatpush.bf16.msra.mxu0 0
    %871 = vmatpush.bf16.msra.mxu0 0
    %872 = vmatpush.bf16.msra.mxu0 0
    %873 = vmatpush.bf16.msra.mxu0 0
    %874 = vmatpush.bf16.msra.mxu0 %v862
    %875 = vmatpush.bf16.msra.mxu0 %v861
    %876 = vmatpush.bf16.msra.mxu0 %v860
    %877 = vmatpush.bf16.msra.mxu0 %v859
    %878 = vmatmul.bf16.gmra.mxu0 %v868
    %v879 = vpop.f32.mrf.mxu0
    %v880 = vadd.f32 0.0, %v879
    %v881 = vpop.f32.mrf.mxu0
    %882 = vdwg.mxu0
    %v891 = vunpack.c.l.b16 %v627
    %v892 = vunpack.c.l.b16 %v628
    %v893 = vunpack.c.l.b16 %v629
    %v894 = vunpack.c.l.b16 %v630
    %v895 = vunpack.c.l.b16 %v631
    %v896 = vunpack.c.l.b16 %v632
    %v897 = vunpack.c.l.b16 %v633
    %v898 = vunpack.c.l.b16 %v634
    %v899 = vpack.c.b16 %v892, %v891
    %v900 = vpack.c.b16 %v894, %v893
    %v901 = vpack.c.b16 %v896, %v895
    %v902 = vpack.c.b16 %v898, %v897
    %v908 = vsel %vm184, %v455, 0
    %910 = vmatpush.bf16.msra.mxu0 0
    %911 = vmatpush.bf16.msra.mxu0 0
    %912 = vmatpush.bf16.msra.mxu0 0
    %913 = vmatpush.bf16.msra.mxu0 0
    %914 = vmatpush.bf16.msra.mxu0 %v902
    %915 = vmatpush.bf16.msra.mxu0 %v901
    %916 = vmatpush.bf16.msra.mxu0 %v900
    %917 = vmatpush.bf16.msra.mxu0 %v899
    %918 = vmatmul.bf16.gmra.mxu0 %v908
    %v919 = vpop.f32.mrf.mxu0
    %v920 = vadd.f32 0.0, %v919
    %v921 = vpop.f32.mrf.mxu0
    %922 = vdwg.mxu0
    %v931 = vunpack.c.l.b16 %v635
    %v932 = vunpack.c.l.b16 %v636
    %v933 = vunpack.c.l.b16 %v637
    %v934 = vunpack.c.l.b16 %v638
    %v935 = vunpack.c.l.b16 %v639
    %v936 = vunpack.c.l.b16 %v640
    %v937 = vunpack.c.l.b16 %v641
    %v938 = vunpack.c.l.b16 %v642
    %v939 = vpack.c.b16 %v932, %v931
    %v940 = vpack.c.b16 %v934, %v933
    %v941 = vpack.c.b16 %v936, %v935
    %v942 = vpack.c.b16 %v938, %v937
    %v948 = vsel %vm184, %v456, 0
    %950 = vmatpush.bf16.msra.mxu0 0
    %951 = vmatpush.bf16.msra.mxu0 0
    %952 = vmatpush.bf16.msra.mxu0 0
    %953 = vmatpush.bf16.msra.mxu0 0
    %954 = vmatpush.bf16.msra.mxu0 %v942
    %955 = vmatpush.bf16.msra.mxu0 %v941
    %956 = vmatpush.bf16.msra.mxu0 %v940
    %957 = vmatpush.bf16.msra.mxu0 %v939
    %958 = vmatmul.bf16.gmra.mxu0 %v948
    %v959 = vpop.f32.mrf.mxu0
    %v960 = vadd.f32 0.0, %v959
    %v961 = vpop.f32.mrf.mxu0
    %962 = vdwg.mxu0
    %v971 = vunpack.c.l.b16 %v643
    %v972 = vunpack.c.l.b16 %v644
    %v973 = vunpack.c.l.b16 %v645
    %v974 = vunpack.c.l.b16 %v646
    %v975 = vunpack.c.l.b16 %v647
    %v976 = vunpack.c.l.b16 %v648
    %v977 = vunpack.c.l.b16 %v649
    %v978 = vunpack.c.l.b16 %v650
    %v979 = vpack.c.b16 %v972, %v971
    %v980 = vpack.c.b16 %v974, %v973
    %v981 = vpack.c.b16 %v976, %v975
    %v982 = vpack.c.b16 %v978, %v977
    %v988 = vsel %vm184, %v457, 0
    %990 = vmatpush.bf16.msra.mxu0 0
    %991 = vmatpush.bf16.msra.mxu0 0
    %992 = vmatpush.bf16.msra.mxu0 0
    %993 = vmatpush.bf16.msra.mxu0 0
    %994 = vmatpush.bf16.msra.mxu0 %v982
    %995 = vmatpush.bf16.msra.mxu0 %v981
    %996 = vmatpush.bf16.msra.mxu0 %v980
    %997 = vmatpush.bf16.msra.mxu0 %v979
    %998 = vmatmul.bf16.gmra.mxu0 %v988
    %v999 = vpop.f32.mrf.mxu0
    %v1000 = vadd.f32 0.0, %v999
    %v1001 = vpop.f32.mrf.mxu0
    %1002 = vdwg.mxu0
    %v1011 = vunpack.c.l.b16 %v651
    %v1012 = vunpack.c.l.b16 %v652
    %v1013 = vunpack.c.l.b16 %v653
    %v1014 = vunpack.c.l.b16 %v654
    %v1015 = vunpack.c.l.b16 %v655
    %v1016 = vunpack.c.l.b16 %v656
    %v1017 = vunpack.c.l.b16 %v657
    %v1018 = vunpack.c.l.b16 %v658
    %v1019 = vpack.c.b16 %v1012, %v1011
    %v1020 = vpack.c.b16 %v1014, %v1013
    %v1021 = vpack.c.b16 %v1016, %v1015
    %v1022 = vpack.c.b16 %v1018, %v1017
    %v1028 = vsel %vm184, %v458, 0
    %1030 = vmatpush.bf16.msra.mxu0 0
    %1031 = vmatpush.bf16.msra.mxu0 0
    %1032 = vmatpush.bf16.msra.mxu0 0
    %1033 = vmatpush.bf16.msra.mxu0 0
    %1034 = vmatpush.bf16.msra.mxu0 %v1022
    %1035 = vmatpush.bf16.msra.mxu0 %v1021
    %1036 = vmatpush.bf16.msra.mxu0 %v1020
    %1037 = vmatpush.bf16.msra.mxu0 %v1019
    %1038 = vmatmul.bf16.gmra.mxu0 %v1028
    %v1039 = vpop.f32.mrf.mxu0
    %v1040 = vadd.f32 0.0, %v1039
    %v1041 = vpop.f32.mrf.mxu0
    %1042 = vdwg.mxu0
    %v1051 = vunpack.c.l.b16 %v659
    %v1052 = vunpack.c.l.b16 %v660
    %v1053 = vunpack.c.l.b16 %v661
    %v1054 = vunpack.c.l.b16 %v662
    %v1055 = vunpack.c.l.b16 %v663
    %v1056 = vunpack.c.l.b16 %v664
    %v1057 = vunpack.c.l.b16 %v665
    %v1058 = vunpack.c.l.b16 %v666
    %v1059 = vpack.c.b16 %v1052, %v1051
    %v1060 = vpack.c.b16 %v1054, %v1053
    %v1061 = vpack.c.b16 %v1056, %v1055
    %v1062 = vpack.c.b16 %v1058, %v1057
    %v1068 = vsel %vm184, %v459, 0
    %1070 = vmatpush.bf16.msra.mxu0 0
    %1071 = vmatpush.bf16.msra.mxu0 0
    %1072 = vmatpush.bf16.msra.mxu0 0
    %1073 = vmatpush.bf16.msra.mxu0 0
    %1074 = vmatpush.bf16.msra.mxu0 %v1062
    %1075 = vmatpush.bf16.msra.mxu0 %v1061
    %1076 = vmatpush.bf16.msra.mxu0 %v1060
    %1077 = vmatpush.bf16.msra.mxu0 %v1059
    %1078 = vmatmul.bf16.gmra.mxu0 %v1068
    %v1079 = vpop.f32.mrf.mxu0
    %v1080 = vadd.f32 0.0, %v1079
    %v1081 = vpop.f32.mrf.mxu0
    %1082 = vdwg.mxu0
    %v1091 = vunpack.c.l.b16 %v667
    %v1092 = vunpack.c.l.b16 %v668
    %v1093 = vunpack.c.l.b16 %v669
    %v1094 = vunpack.c.l.b16 %v670
    %v1095 = vunpack.c.l.b16 %v671
    %v1096 = vunpack.c.l.b16 %v672
    %v1097 = vunpack.c.l.b16 %v673
    %v1098 = vunpack.c.l.b16 %v674
    %v1099 = vpack.c.b16 %v1092, %v1091
    %v1100 = vpack.c.b16 %v1094, %v1093
    %v1101 = vpack.c.b16 %v1096, %v1095
    %v1102 = vpack.c.b16 %v1098, %v1097
    %v1108 = vsel %vm184, %v460, 0
    %1110 = vmatpush.bf16.msra.mxu0 0
    %1111 = vmatpush.bf16.msra.mxu0 0
    %1112 = vmatpush.bf16.msra.mxu0 0
    %1113 = vmatpush.bf16.msra.mxu0 0
    %1114 = vmatpush.bf16.msra.mxu0 %v1102
    %1115 = vmatpush.bf16.msra.mxu0 %v1101
    %1116 = vmatpush.bf16.msra.mxu0 %v1100
    %1117 = vmatpush.bf16.msra.mxu0 %v1099
    %1118 = vmatmul.bf16.gmra.mxu0 %v1108
    %v1119 = vpop.f32.mrf.mxu0
    %v1120 = vadd.f32 0.0, %v1119
    %v1121 = vpop.f32.mrf.mxu0
    %1122 = vdwg.mxu0
    %v1131 = vunpack.c.l.b16 %v675
    %v1132 = vunpack.c.l.b16 %v676
    %v1133 = vunpack.c.l.b16 %v677
    %v1134 = vunpack.c.l.b16 %v678
    %v1135 = vunpack.c.l.b16 %v679
    %v1136 = vunpack.c.l.b16 %v680
    %v1137 = vunpack.c.l.b16 %v681
    %v1138 = vunpack.c.l.b16 %v682
    %v1139 = vpack.c.b16 %v1132, %v1131
    %v1140 = vpack.c.b16 %v1134, %v1133
    %v1141 = vpack.c.b16 %v1136, %v1135
    %v1142 = vpack.c.b16 %v1138, %v1137
    %v1148 = vsel %vm184, %v461, 0
    %1150 = vmatpush.bf16.msra.mxu0 0
    %1151 = vmatpush.bf16.msra.mxu0 0
    %1152 = vmatpush.bf16.msra.mxu0 0
    %1153 = vmatpush.bf16.msra.mxu0 0
    %1154 = vmatpush.bf16.msra.mxu0 %v1142
    %1155 = vmatpush.bf16.msra.mxu0 %v1141
    %1156 = vmatpush.bf16.msra.mxu0 %v1140
    %1157 = vmatpush.bf16.msra.mxu0 %v1139
    %1158 = vmatmul.bf16.gmra.mxu0 %v1148
    %v1159 = vpop.f32.mrf.mxu0
    %v1160 = vadd.f32 0.0, %v1159
    %v1161 = vpop.f32.mrf.mxu0
    %1162 = vdwg.mxu0
    %v1171 = vunpack.c.l.b16 %v683
    %v1172 = vunpack.c.l.b16 %v684
    %v1173 = vunpack.c.l.b16 %v685
    %v1174 = vunpack.c.l.b16 %v686
    %v1175 = vunpack.c.l.b16 %v687
    %v1176 = vunpack.c.l.b16 %v688
    %v1177 = vunpack.c.l.b16 %v689
    %v1178 = vunpack.c.l.b16 %v690
    %v1179 = vpack.c.b16 %v1172, %v1171
    %v1180 = vpack.c.b16 %v1174, %v1173
    %v1181 = vpack.c.b16 %v1176, %v1175
    %v1182 = vpack.c.b16 %v1178, %v1177
    %v1188 = vsel %vm184, %v462, 0
    %1190 = vmatpush.bf16.msra.mxu0 0
    %1191 = vmatpush.bf16.msra.mxu0 0
    %1192 = vmatpush.bf16.msra.mxu0 0
    %1193 = vmatpush.bf16.msra.mxu0 0
    %1194 = vmatpush.bf16.msra.mxu0 %v1182
    %1195 = vmatpush.bf16.msra.mxu0 %v1181
    %1196 = vmatpush.bf16.msra.mxu0 %v1180
    %1197 = vmatpush.bf16.msra.mxu0 %v1179
    %1198 = vmatmul.bf16.gmra.mxu0 %v1188
    %v1199 = vpop.f32.mrf.mxu0
    %v1200 = vadd.f32 0.0, %v1199
    %v1201 = vpop.f32.mrf.mxu0
    %1202 = vdwg.mxu0
    %v1211 = vunpack.c.l.b16 %v691
    %v1212 = vunpack.c.l.b16 %v692
    %v1213 = vunpack.c.l.b16 %v693
    %v1214 = vunpack.c.l.b16 %v694
    %v1215 = vunpack.c.l.b16 %v695
    %v1216 = vunpack.c.l.b16 %v696
    %v1217 = vunpack.c.l.b16 %v697
    %v1218 = vunpack.c.l.b16 %v698
    %v1219 = vpack.c.b16 %v1212, %v1211
    %v1220 = vpack.c.b16 %v1214, %v1213
    %v1221 = vpack.c.b16 %v1216, %v1215
    %v1222 = vpack.c.b16 %v1218, %v1217
    %v1228 = vsel %vm184, %v463, 0
    %1230 = vmatpush.bf16.msra.mxu0 0
    %1231 = vmatpush.bf16.msra.mxu0 0
    %1232 = vmatpush.bf16.msra.mxu0 0
    %1233 = vmatpush.bf16.msra.mxu0 0
    %1234 = vmatpush.bf16.msra.mxu0 %v1222
    %1235 = vmatpush.bf16.msra.mxu0 %v1221
    %1236 = vmatpush.bf16.msra.mxu0 %v1220
    %1237 = vmatpush.bf16.msra.mxu0 %v1219
    %1238 = vmatmul.bf16.gmra.mxu0 %v1228
    %v1239 = vpop.f32.mrf.mxu0
    %v1240 = vadd.f32 0.0, %v1239
    %v1241 = vpop.f32.mrf.mxu0
    %1242 = vdwg.mxu0
    %v1251 = vunpack.c.l.b16 %v699
    %v1252 = vunpack.c.l.b16 %v700
    %v1253 = vunpack.c.l.b16 %v701
    %v1254 = vunpack.c.l.b16 %v702
    %v1255 = vunpack.c.l.b16 %v703
    %v1256 = vunpack.c.l.b16 %v704
    %v1257 = vunpack.c.l.b16 %v705
    %v1258 = vunpack.c.l.b16 %v706
    %v1259 = vpack.c.b16 %v1252, %v1251
    %v1260 = vpack.c.b16 %v1254, %v1253
    %v1261 = vpack.c.b16 %v1256, %v1255
    %v1262 = vpack.c.b16 %v1258, %v1257
    %v1268 = vsel %vm184, %v464, 0
    %1270 = vmatpush.bf16.msra.mxu0 0
    %1271 = vmatpush.bf16.msra.mxu0 0
    %1272 = vmatpush.bf16.msra.mxu0 0
    %1273 = vmatpush.bf16.msra.mxu0 0
    %1274 = vmatpush.bf16.msra.mxu0 %v1262
    %1275 = vmatpush.bf16.msra.mxu0 %v1261
    %1276 = vmatpush.bf16.msra.mxu0 %v1260
    %1277 = vmatpush.bf16.msra.mxu0 %v1259
    %1278 = vmatmul.bf16.gmra.mxu0 %v1268
    %v1279 = vpop.f32.mrf.mxu0
    %v1280 = vadd.f32 0.0, %v1279
    %v1281 = vpop.f32.mrf.mxu0
    %1282 = vdwg.mxu0
    %v1291 = vunpack.c.l.b16 %v707
    %v1292 = vunpack.c.l.b16 %v708
    %v1293 = vunpack.c.l.b16 %v709
    %v1294 = vunpack.c.l.b16 %v710
    %v1295 = vunpack.c.l.b16 %v711
    %v1296 = vunpack.c.l.b16 %v712
    %v1297 = vunpack.c.l.b16 %v713
    %v1298 = vunpack.c.l.b16 %v714
    %v1299 = vpack.c.b16 %v1292, %v1291
    %v1300 = vpack.c.b16 %v1294, %v1293
    %v1301 = vpack.c.b16 %v1296, %v1295
    %v1302 = vpack.c.b16 %v1298, %v1297
    %v1308 = vsel %vm184, %v465, 0
    %1310 = vmatpush.bf16.msra.mxu0 0
    %1311 = vmatpush.bf16.msra.mxu0 0
    %1312 = vmatpush.bf16.msra.mxu0 0
    %1313 = vmatpush.bf16.msra.mxu0 0
    %1314 = vmatpush.bf16.msra.mxu0 %v1302
    %1315 = vmatpush.bf16.msra.mxu0 %v1301
    %1316 = vmatpush.bf16.msra.mxu0 %v1300
    %1317 = vmatpush.bf16.msra.mxu0 %v1299
    %1318 = vmatmul.bf16.gmra.mxu0 %v1308
    %v1319 = vpop.f32.mrf.mxu0
    %v1320 = vadd.f32 0.0, %v1319
    %v1321 = vpop.f32.mrf.mxu0
    %1322 = vdwg.mxu0
    %v1331 = vunpack.c.l.b16 %v715
    %v1332 = vunpack.c.l.b16 %v716
    %v1333 = vunpack.c.l.b16 %v717
    %v1334 = vunpack.c.l.b16 %v718
    %v1335 = vunpack.c.l.b16 %v719
    %v1336 = vunpack.c.l.b16 %v720
    %v1337 = vunpack.c.l.b16 %v721
    %v1338 = vunpack.c.l.b16 %v722
    %v1339 = vpack.c.b16 %v1332, %v1331
    %v1340 = vpack.c.b16 %v1334, %v1333
    %v1341 = vpack.c.b16 %v1336, %v1335
    %v1342 = vpack.c.b16 %v1338, %v1337
    %v1348 = vsel %vm184, %v466, 0
    %1350 = vmatpush.bf16.msra.mxu0 0
    %1351 = vmatpush.bf16.msra.mxu0 0
    %1352 = vmatpush.bf16.msra.mxu0 0
    %1353 = vmatpush.bf16.msra.mxu0 0
    %1354 = vmatpush.bf16.msra.mxu0 %v1342
    %1355 = vmatpush.bf16.msra.mxu0 %v1341
    %1356 = vmatpush.bf16.msra.mxu0 %v1340
    %1357 = vmatpush.bf16.msra.mxu0 %v1339
    %1358 = vmatmul.bf16.gmra.mxu0 %v1348
    %v1359 = vpop.f32.mrf.mxu0
    %v1360 = vadd.f32 0.0, %v1359
    %v1361 = vpop.f32.mrf.mxu0
    %1362 = vdwg.mxu0
    %v1371 = vunpack.c.l.b16 %v467
    %v1372 = vunpack.c.l.b16 %v468
    %v1373 = vunpack.c.l.b16 %v469
    %v1374 = vunpack.c.l.b16 %v470
    %v1375 = vunpack.c.l.b16 %v471
    %v1376 = vunpack.c.l.b16 %v472
    %v1377 = vunpack.c.l.b16 %v473
    %v1378 = vunpack.c.l.b16 %v474
    %v1379 = vpack.c.b16 %v1372, %v1371
    %v1380 = vpack.c.b16 %v1374, %v1373
    %v1381 = vpack.c.b16 %v1376, %v1375
    %v1382 = vpack.c.b16 %v1378, %v1377
    %v1388 = vsel %vm184, %v323, 0
    %1390 = vmatpush.bf16.msra.mxu0 0
    %1391 = vmatpush.bf16.msra.mxu0 0
    %1392 = vmatpush.bf16.msra.mxu0 0
    %1393 = vmatpush.bf16.msra.mxu0 0
    %1394 = vmatpush.bf16.msra.mxu0 %v1382
    %1395 = vmatpush.bf16.msra.mxu0 %v1381
    %1396 = vmatpush.bf16.msra.mxu0 %v1380
    %1397 = vmatpush.bf16.msra.mxu0 %v1379
    %1398 = vmatmul.bf16.gmra.mxu0 %v1388
    %v1399 = vpop.f32.mrf.mxu0
    %v1400 = vadd.f32 %v760, %v1399
    %v1401 = vpop.f32.mrf.mxu0
    %1402 = vdwg.mxu0
    %v1411 = vunpack.c.l.b16 %v475
    %v1412 = vunpack.c.l.b16 %v476
    %v1413 = vunpack.c.l.b16 %v477
    %v1414 = vunpack.c.l.b16 %v478
    %v1415 = vunpack.c.l.b16 %v479
    %v1416 = vunpack.c.l.b16 %v480
    %v1417 = vunpack.c.l.b16 %v481
    %v1418 = vunpack.c.l.b16 %v482
    %v1419 = vpack.c.b16 %v1412, %v1411
    %v1420 = vpack.c.b16 %v1414, %v1413
    %v1421 = vpack.c.b16 %v1416, %v1415
    %v1422 = vpack.c.b16 %v1418, %v1417
    %v1428 = vsel %vm184, %v324, 0
    %1430 = vmatpush.bf16.msra.mxu0 0
    %1431 = vmatpush.bf16.msra.mxu0 0
    %1432 = vmatpush.bf16.msra.mxu0 0
    %1433 = vmatpush.bf16.msra.mxu0 0
    %1434 = vmatpush.bf16.msra.mxu0 %v1422
    %1435 = vmatpush.bf16.msra.mxu0 %v1421
    %1436 = vmatpush.bf16.msra.mxu0 %v1420
    %1437 = vmatpush.bf16.msra.mxu0 %v1419
    %1438 = vmatmul.bf16.gmra.mxu0 %v1428
    %v1439 = vpop.f32.mrf.mxu0
    %v1440 = vadd.f32 %v800, %v1439
    %v1441 = vpop.f32.mrf.mxu0
    %1442 = vdwg.mxu0
    %v1451 = vunpack.c.l.b16 %v483
    %v1452 = vunpack.c.l.b16 %v484
    %v1453 = vunpack.c.l.b16 %v485
    %v1454 = vunpack.c.l.b16 %v486
    %v1455 = vunpack.c.l.b16 %v487
    %v1456 = vunpack.c.l.b16 %v488
    %v1457 = vunpack.c.l.b16 %v489
    %v1458 = vunpack.c.l.b16 %v490
    %v1459 = vpack.c.b16 %v1452, %v1451
    %v1460 = vpack.c.b16 %v1454, %v1453
    %v1461 = vpack.c.b16 %v1456, %v1455
    %v1462 = vpack.c.b16 %v1458, %v1457
    %v1468 = vsel %vm184, %v325, 0
    %1470 = vmatpush.bf16.msra.mxu0 0
    %1471 = vmatpush.bf16.msra.mxu0 0
    %1472 = vmatpush.bf16.msra.mxu0 0
    %1473 = vmatpush.bf16.msra.mxu0 0
    %1474 = vmatpush.bf16.msra.mxu0 %v1462
    %1475 = vmatpush.bf16.msra.mxu0 %v1461
    %1476 = vmatpush.bf16.msra.mxu0 %v1460
    %1477 = vmatpush.bf16.msra.mxu0 %v1459
    %1478 = vmatmul.bf16.gmra.mxu0 %v1468
    %v1479 = vpop.f32.mrf.mxu0
    %v1480 = vadd.f32 %v840, %v1479
    %v1481 = vpop.f32.mrf.mxu0
    %1482 = vdwg.mxu0
    %v1491 = vunpack.c.l.b16 %v491
    %v1492 = vunpack.c.l.b16 %v492
    %v1493 = vunpack.c.l.b16 %v493
    %v1494 = vunpack.c.l.b16 %v494
    %v1495 = vunpack.c.l.b16 %v495
    %v1496 = vunpack.c.l.b16 %v496
    %v1497 = vunpack.c.l.b16 %v497
    %v1498 = vunpack.c.l.b16 %v498
    %v1499 = vpack.c.b16 %v1492, %v1491
    %v1500 = vpack.c.b16 %v1494, %v1493
    %v1501 = vpack.c.b16 %v1496, %v1495
    %v1502 = vpack.c.b16 %v1498, %v1497
    %v1508 = vsel %vm184, %v326, 0
    %1510 = vmatpush.bf16.msra.mxu0 0
    %1511 = vmatpush.bf16.msra.mxu0 0
    %1512 = vmatpush.bf16.msra.mxu0 0
    %1513 = vmatpush.bf16.msra.mxu0 0
    %1514 = vmatpush.bf16.msra.mxu0 %v1502
    %1515 = vmatpush.bf16.msra.mxu0 %v1501
    %1516 = vmatpush.bf16.msra.mxu0 %v1500
    %1517 = vmatpush.bf16.msra.mxu0 %v1499
    %1518 = vmatmul.bf16.gmra.mxu0 %v1508
    %v1519 = vpop.f32.mrf.mxu0
    %v1520 = vadd.f32 %v880, %v1519
    %v1521 = vpop.f32.mrf.mxu0
    %1522 = vdwg.mxu0
    %v1531 = vunpack.c.l.b16 %v499
    %v1532 = vunpack.c.l.b16 %v500
    %v1533 = vunpack.c.l.b16 %v501
    %v1534 = vunpack.c.l.b16 %v502
    %v1535 = vunpack.c.l.b16 %v503
    %v1536 = vunpack.c.l.b16 %v504
    %v1537 = vunpack.c.l.b16 %v505
    %v1538 = vunpack.c.l.b16 %v506
    %v1539 = vpack.c.b16 %v1532, %v1531
    %v1540 = vpack.c.b16 %v1534, %v1533
    %v1541 = vpack.c.b16 %v1536, %v1535
    %v1542 = vpack.c.b16 %v1538, %v1537
    %v1548 = vsel %vm184, %v327, 0
    %1550 = vmatpush.bf16.msra.mxu0 0
    %1551 = vmatpush.bf16.msra.mxu0 0
    %1552 = vmatpush.bf16.msra.mxu0 0
    %1553 = vmatpush.bf16.msra.mxu0 0
    %1554 = vmatpush.bf16.msra.mxu0 %v1542
    %1555 = vmatpush.bf16.msra.mxu0 %v1541
    %1556 = vmatpush.bf16.msra.mxu0 %v1540
    %1557 = vmatpush.bf16.msra.mxu0 %v1539
    %1558 = vmatmul.bf16.gmra.mxu0 %v1548
    %v1559 = vpop.f32.mrf.mxu0
    %v1560 = vadd.f32 %v920, %v1559
    %v1561 = vpop.f32.mrf.mxu0
    %1562 = vdwg.mxu0
    %v1571 = vunpack.c.l.b16 %v507
    %v1572 = vunpack.c.l.b16 %v508
    %v1573 = vunpack.c.l.b16 %v509
    %v1574 = vunpack.c.l.b16 %v510
    %v1575 = vunpack.c.l.b16 %v511
    %v1576 = vunpack.c.l.b16 %v512
    %v1577 = vunpack.c.l.b16 %v513
    %v1578 = vunpack.c.l.b16 %v514
    %v1579 = vpack.c.b16 %v1572, %v1571
    %v1580 = vpack.c.b16 %v1574, %v1573
    %v1581 = vpack.c.b16 %v1576, %v1575
    %v1582 = vpack.c.b16 %v1578, %v1577
    %v1588 = vsel %vm184, %v328, 0
    %1590 = vmatpush.bf16.msra.mxu0 0
    %1591 = vmatpush.bf16.msra.mxu0 0
    %1592 = vmatpush.bf16.msra.mxu0 0
    %1593 = vmatpush.bf16.msra.mxu0 0
    %1594 = vmatpush.bf16.msra.mxu0 %v1582
    %1595 = vmatpush.bf16.msra.mxu0 %v1581
    %1596 = vmatpush.bf16.msra.mxu0 %v1580
    %1597 = vmatpush.bf16.msra.mxu0 %v1579
    %1598 = vmatmul.bf16.gmra.mxu0 %v1588
    %v1599 = vpop.f32.mrf.mxu0
    %v1600 = vadd.f32 %v960, %v1599
    %v1601 = vpop.f32.mrf.mxu0
    %1602 = vdwg.mxu0
    %v1611 = vunpack.c.l.b16 %v515
    %v1612 = vunpack.c.l.b16 %v516
    %v1613 = vunpack.c.l.b16 %v517
    %v1614 = vunpack.c.l.b16 %v518
    %v1615 = vunpack.c.l.b16 %v519
    %v1616 = vunpack.c.l.b16 %v520
    %v1617 = vunpack.c.l.b16 %v521
    %v1618 = vunpack.c.l.b16 %v522
    %v1619 = vpack.c.b16 %v1612, %v1611
    %v1620 = vpack.c.b16 %v1614, %v1613
    %v1621 = vpack.c.b16 %v1616, %v1615
    %v1622 = vpack.c.b16 %v1618, %v1617
    %v1628 = vsel %vm184, %v329, 0
    %1630 = vmatpush.bf16.msra.mxu0 0
    %1631 = vmatpush.bf16.msra.mxu0 0
    %1632 = vmatpush.bf16.msra.mxu0 0
    %1633 = vmatpush.bf16.msra.mxu0 0
    %1634 = vmatpush.bf16.msra.mxu0 %v1622
    %1635 = vmatpush.bf16.msra.mxu0 %v1621
    %1636 = vmatpush.bf16.msra.mxu0 %v1620
    %1637 = vmatpush.bf16.msra.mxu0 %v1619
    %1638 = vmatmul.bf16.gmra.mxu0 %v1628
    %v1639 = vpop.f32.mrf.mxu0
    %v1640 = vadd.f32 %v1000, %v1639
    %v1641 = vpop.f32.mrf.mxu0
    %1642 = vdwg.mxu0
    %v1651 = vunpack.c.l.b16 %v523
    %v1652 = vunpack.c.l.b16 %v524
    %v1653 = vunpack.c.l.b16 %v525
    %v1654 = vunpack.c.l.b16 %v526
    %v1655 = vunpack.c.l.b16 %v527
    %v1656 = vunpack.c.l.b16 %v528
    %v1657 = vunpack.c.l.b16 %v529
    %v1658 = vunpack.c.l.b16 %v530
    %v1659 = vpack.c.b16 %v1652, %v1651
    %v1660 = vpack.c.b16 %v1654, %v1653
    %v1661 = vpack.c.b16 %v1656, %v1655
    %v1662 = vpack.c.b16 %v1658, %v1657
    %v1668 = vsel %vm184, %v330, 0
    %1670 = vmatpush.bf16.msra.mxu0 0
    %1671 = vmatpush.bf16.msra.mxu0 0
    %1672 = vmatpush.bf16.msra.mxu0 0
    %1673 = vmatpush.bf16.msra.mxu0 0
    %1674 = vmatpush.bf16.msra.mxu0 %v1662
    %1675 = vmatpush.bf16.msra.mxu0 %v1661
    %1676 = vmatpush.bf16.msra.mxu0 %v1660
    %1677 = vmatpush.bf16.msra.mxu0 %v1659
    %1678 = vmatmul.bf16.gmra.mxu0 %v1668
    %v1679 = vpop.f32.mrf.mxu0
    %v1680 = vadd.f32 %v1040, %v1679
    %v1681 = vpop.f32.mrf.mxu0
    %1682 = vdwg.mxu0
    %v1691 = vunpack.c.l.b16 %v531
    %v1692 = vunpack.c.l.b16 %v532
    %v1693 = vunpack.c.l.b16 %v533
    %v1694 = vunpack.c.l.b16 %v534
    %v1695 = vunpack.c.l.b16 %v535
    %v1696 = vunpack.c.l.b16 %v536
    %v1697 = vunpack.c.l.b16 %v537
    %v1698 = vunpack.c.l.b16 %v538
    %v1699 = vpack.c.b16 %v1692, %v1691
    %v1700 = vpack.c.b16 %v1694, %v1693
    %v1701 = vpack.c.b16 %v1696, %v1695
    %v1702 = vpack.c.b16 %v1698, %v1697
    %v1708 = vsel %vm184, %v331, 0
    %1710 = vmatpush.bf16.msra.mxu0 0
    %1711 = vmatpush.bf16.msra.mxu0 0
    %1712 = vmatpush.bf16.msra.mxu0 0
    %1713 = vmatpush.bf16.msra.mxu0 0
    %1714 = vmatpush.bf16.msra.mxu0 %v1702
    %1715 = vmatpush.bf16.msra.mxu0 %v1701
    %1716 = vmatpush.bf16.msra.mxu0 %v1700
    %1717 = vmatpush.bf16.msra.mxu0 %v1699
    %1718 = vmatmul.bf16.gmra.mxu0 %v1708
    %v1719 = vpop.f32.mrf.mxu0
    %v1720 = vadd.f32 %v1080, %v1719
    %v1721 = vpop.f32.mrf.mxu0
    %1722 = vdwg.mxu0
    %v1731 = vunpack.c.l.b16 %v539
    %v1732 = vunpack.c.l.b16 %v540
    %v1733 = vunpack.c.l.b16 %v541
    %v1734 = vunpack.c.l.b16 %v542
    %v1735 = vunpack.c.l.b16 %v543
    %v1736 = vunpack.c.l.b16 %v544
    %v1737 = vunpack.c.l.b16 %v545
    %v1738 = vunpack.c.l.b16 %v546
    %v1739 = vpack.c.b16 %v1732, %v1731
    %v1740 = vpack.c.b16 %v1734, %v1733
    %v1741 = vpack.c.b16 %v1736, %v1735
    %v1742 = vpack.c.b16 %v1738, %v1737
    %v1748 = vsel %vm184, %v332, 0
    %1750 = vmatpush.bf16.msra.mxu0 0
    %1751 = vmatpush.bf16.msra.mxu0 0
    %1752 = vmatpush.bf16.msra.mxu0 0
    %1753 = vmatpush.bf16.msra.mxu0 0
    %1754 = vmatpush.bf16.msra.mxu0 %v1742
    %1755 = vmatpush.bf16.msra.mxu0 %v1741
    %1756 = vmatpush.bf16.msra.mxu0 %v1740
    %1757 = vmatpush.bf16.msra.mxu0 %v1739
    %1758 = vmatmul.bf16.gmra.mxu0 %v1748
    %v1759 = vpop.f32.mrf.mxu0
    %v1760 = vadd.f32 %v1120, %v1759
    %v1761 = vpop.f32.mrf.mxu0
    %1762 = vdwg.mxu0
    %v1771 = vunpack.c.l.b16 %v547
    %v1772 = vunpack.c.l.b16 %v548
    %v1773 = vunpack.c.l.b16 %v549
    %v1774 = vunpack.c.l.b16 %v550
    %v1775 = vunpack.c.l.b16 %v551
    %v1776 = vunpack.c.l.b16 %v552
    %v1777 = vunpack.c.l.b16 %v553
    %v1778 = vunpack.c.l.b16 %v554
    %v1779 = vpack.c.b16 %v1772, %v1771
    %v1780 = vpack.c.b16 %v1774, %v1773
    %v1781 = vpack.c.b16 %v1776, %v1775
    %v1782 = vpack.c.b16 %v1778, %v1777
    %v1788 = vsel %vm184, %v333, 0
    %1790 = vmatpush.bf16.msra.mxu0 0
    %1791 = vmatpush.bf16.msra.mxu0 0
    %1792 = vmatpush.bf16.msra.mxu0 0
    %1793 = vmatpush.bf16.msra.mxu0 0
    %1794 = vmatpush.bf16.msra.mxu0 %v1782
    %1795 = vmatpush.bf16.msra.mxu0 %v1781
    %1796 = vmatpush.bf16.msra.mxu0 %v1780
    %1797 = vmatpush.bf16.msra.mxu0 %v1779
    %1798 = vmatmul.bf16.gmra.mxu0 %v1788
    %v1799 = vpop.f32.mrf.mxu0
    %v1800 = vadd.f32 %v1160, %v1799
    %v1801 = vpop.f32.mrf.mxu0
    %1802 = vdwg.mxu0
    %v1811 = vunpack.c.l.b16 %v555
    %v1812 = vunpack.c.l.b16 %v556
    %v1813 = vunpack.c.l.b16 %v557
    %v1814 = vunpack.c.l.b16 %v558
    %v1815 = vunpack.c.l.b16 %v559
    %v1816 = vunpack.c.l.b16 %v560
    %v1817 = vunpack.c.l.b16 %v561
    %v1818 = vunpack.c.l.b16 %v562
    %v1819 = vpack.c.b16 %v1812, %v1811
    %v1820 = vpack.c.b16 %v1814, %v1813
    %v1821 = vpack.c.b16 %v1816, %v1815
    %v1822 = vpack.c.b16 %v1818, %v1817
    %v1828 = vsel %vm184, %v334, 0
    %1830 = vmatpush.bf16.msra.mxu0 0
    %1831 = vmatpush.bf16.msra.mxu0 0
    %1832 = vmatpush.bf16.msra.mxu0 0
    %1833 = vmatpush.bf16.msra.mxu0 0
    %1834 = vmatpush.bf16.msra.mxu0 %v1822
    %1835 = vmatpush.bf16.msra.mxu0 %v1821
    %1836 = vmatpush.bf16.msra.mxu0 %v1820
    %1837 = vmatpush.bf16.msra.mxu0 %v1819
    %1838 = vmatmul.bf16.gmra.mxu0 %v1828
    %v1839 = vpop.f32.mrf.mxu0
    %v1840 = vadd.f32 %v1200, %v1839
    %v1841 = vpop.f32.mrf.mxu0
    %1842 = vdwg.mxu0
    %v1851 = vunpack.c.l.b16 %v563
    %v1852 = vunpack.c.l.b16 %v564
    %v1853 = vunpack.c.l.b16 %v565
    %v1854 = vunpack.c.l.b16 %v566
    %v1855 = vunpack.c.l.b16 %v567
    %v1856 = vunpack.c.l.b16 %v568
    %v1857 = vunpack.c.l.b16 %v569
    %v1858 = vunpack.c.l.b16 %v570
    %v1859 = vpack.c.b16 %v1852, %v1851
    %v1860 = vpack.c.b16 %v1854, %v1853
    %v1861 = vpack.c.b16 %v1856, %v1855
    %v1862 = vpack.c.b16 %v1858, %v1857
    %v1868 = vsel %vm184, %v335, 0
    %1870 = vmatpush.bf16.msra.mxu0 0
    %1871 = vmatpush.bf16.msra.mxu0 0
    %1872 = vmatpush.bf16.msra.mxu0 0
    %1873 = vmatpush.bf16.msra.mxu0 0
    %1874 = vmatpush.bf16.msra.mxu0 %v1862
    %1875 = vmatpush.bf16.msra.mxu0 %v1861
    %1876 = vmatpush.bf16.msra.mxu0 %v1860
    %1877 = vmatpush.bf16.msra.mxu0 %v1859
    %1878 = vmatmul.bf16.gmra.mxu0 %v1868
    %v1879 = vpop.f32.mrf.mxu0
    %v1880 = vadd.f32 %v1240, %v1879
    %v1881 = vpop.f32.mrf.mxu0
    %1882 = vdwg.mxu0
    %v1891 = vunpack.c.l.b16 %v571
    %v1892 = vunpack.c.l.b16 %v572
    %v1893 = vunpack.c.l.b16 %v573
    %v1894 = vunpack.c.l.b16 %v574
    %v1895 = vunpack.c.l.b16 %v575
    %v1896 = vunpack.c.l.b16 %v576
    %v1897 = vunpack.c.l.b16 %v577
    %v1898 = vunpack.c.l.b16 %v578
    %v1899 = vpack.c.b16 %v1892, %v1891
    %v1900 = vpack.c.b16 %v1894, %v1893
    %v1901 = vpack.c.b16 %v1896, %v1895
    %v1902 = vpack.c.b16 %v1898, %v1897
    %v1908 = vsel %vm184, %v336, 0
    %1910 = vmatpush.bf16.msra.mxu0 0
    %1911 = vmatpush.bf16.msra.mxu0 0
    %1912 = vmatpush.bf16.msra.mxu0 0
    %1913 = vmatpush.bf16.msra.mxu0 0
    %1914 = vmatpush.bf16.msra.mxu0 %v1902
    %1915 = vmatpush.bf16.msra.mxu0 %v1901
    %1916 = vmatpush.bf16.msra.mxu0 %v1900
    %1917 = vmatpush.bf16.msra.mxu0 %v1899
    %1918 = vmatmul.bf16.gmra.mxu0 %v1908
    %v1919 = vpop.f32.mrf.mxu0
    %v1920 = vadd.f32 %v1280, %v1919
    %v1921 = vpop.f32.mrf.mxu0
    %1922 = vdwg.mxu0
    %v1931 = vunpack.c.l.b16 %v579
    %v1932 = vunpack.c.l.b16 %v580
    %v1933 = vunpack.c.l.b16 %v581
    %v1934 = vunpack.c.l.b16 %v582
    %v1935 = vunpack.c.l.b16 %v583
    %v1936 = vunpack.c.l.b16 %v584
    %v1937 = vunpack.c.l.b16 %v585
    %v1938 = vunpack.c.l.b16 %v586
    %v1939 = vpack.c.b16 %v1932, %v1931
    %v1940 = vpack.c.b16 %v1934, %v1933
    %v1941 = vpack.c.b16 %v1936, %v1935
    %v1942 = vpack.c.b16 %v1938, %v1937
    %v1948 = vsel %vm184, %v337, 0
    %1950 = vmatpush.bf16.msra.mxu0 0
    %1951 = vmatpush.bf16.msra.mxu0 0
    %1952 = vmatpush.bf16.msra.mxu0 0
    %1953 = vmatpush.bf16.msra.mxu0 0
    %1954 = vmatpush.bf16.msra.mxu0 %v1942
    %1955 = vmatpush.bf16.msra.mxu0 %v1941
    %1956 = vmatpush.bf16.msra.mxu0 %v1940
    %1957 = vmatpush.bf16.msra.mxu0 %v1939
    %1958 = vmatmul.bf16.gmra.mxu0 %v1948
    %v1959 = vpop.f32.mrf.mxu0
    %v1960 = vadd.f32 %v1320, %v1959
    %v1961 = vpop.f32.mrf.mxu0
    %1962 = vdwg.mxu0
    %v1971 = vunpack.c.l.b16 %v587
    %v1972 = vunpack.c.l.b16 %v588
    %v1973 = vunpack.c.l.b16 %v589
    %v1974 = vunpack.c.l.b16 %v590
    %v1975 = vunpack.c.l.b16 %v591
    %v1976 = vunpack.c.l.b16 %v592
    %v1977 = vunpack.c.l.b16 %v593
    %v1978 = vunpack.c.l.b16 %v594
    %v1979 = vpack.c.b16 %v1972, %v1971
    %v1980 = vpack.c.b16 %v1974, %v1973
    %v1981 = vpack.c.b16 %v1976, %v1975
    %v1982 = vpack.c.b16 %v1978, %v1977
    %v1988 = vsel %vm184, %v338, 0
    %1990 = vmatpush.bf16.msra.mxu0 0
    %1991 = vmatpush.bf16.msra.mxu0 0
    %1992 = vmatpush.bf16.msra.mxu0 0
    %1993 = vmatpush.bf16.msra.mxu0 0
    %1994 = vmatpush.bf16.msra.mxu0 %v1982
    %1995 = vmatpush.bf16.msra.mxu0 %v1981
    %1996 = vmatpush.bf16.msra.mxu0 %v1980
    %1997 = vmatpush.bf16.msra.mxu0 %v1979
    %1998 = vmatmul.bf16.gmra.mxu0 %v1988
    %v1999 = vpop.f32.mrf.mxu0
    %v2000 = vadd.f32 %v1360, %v1999
    %v2001 = vpop.f32.mrf.mxu0
    %2002 = vdwg.mxu0
    %v2003 = vrot.slane %v1480, 4
    %v2004 = vsel %vm219, %v2003, %v1400
    %v2006 = vunpack.c.l.s4 1983009808
    %v2007 = vunpack.c.0.s8 %v2006
    %v2008 = vperm.slane %v2004, %v2007
    %v2009 = vrot.slane %v1520, 4
    %v2010 = vsel %vm219, %v2009, %v1440
    %v2012 = vunpack.c.l.s4 1983009808
    %v2013 = vunpack.c.0.s8 %v2012
    %v2014 = vperm.slane %v2010, %v2013
    %v2015 = vrot.slane %v1640, 4
    %v2016 = vsel %vm219, %v2015, %v1560
    %v2018 = vunpack.c.l.s4 1983009808
    %v2019 = vunpack.c.0.s8 %v2018
    %v2020 = vperm.slane %v2016, %v2019
    %v2021 = vrot.slane %v1680, 4
    %v2022 = vsel %vm219, %v2021, %v1600
    %v2024 = vunpack.c.l.s4 1983009808
    %v2025 = vunpack.c.0.s8 %v2024
    %v2026 = vperm.slane %v2022, %v2025
    %v2027 = vrot.slane %v2014, 4
    %v2028 = vsel %vm219, %v2027, %v2008
    %v2030 = vunpack.c.l.s4 1934713408
    %v2031 = vunpack.c.0.s8 %v2030
    %v2032 = vperm.slane %v2028, %v2031
    %v2033 = vrot.slane %v2026, 4
    %v2034 = vsel %vm219, %v2033, %v2020
    %v2036 = vunpack.c.l.s4 1934713408
    %v2037 = vunpack.c.0.s8 %v2036
    %v2038 = vperm.slane %v2034, %v2037
    %v2039 = vrot.slane %v2038, 4
    %v2040 = vsel %vm219, %v2039, %v2032
    %v2041 = vrot.slane %v2032, 4
    %v2042 = vsel %vm219, %v2038, %v2041
    %v2043 = vrot.slane %v1800, 4
    %v2044 = vsel %vm219, %v2043, %v1720
    %v2046 = vunpack.c.l.s4 1983009808
    %v2047 = vunpack.c.0.s8 %v2046
    %v2048 = vperm.slane %v2044, %v2047
    %v2049 = vrot.slane %v1840, 4
    %v2050 = vsel %vm219, %v2049, %v1760
    %v2052 = vunpack.c.l.s4 1983009808
    %v2053 = vunpack.c.0.s8 %v2052
    %v2054 = vperm.slane %v2050, %v2053
    %v2055 = vrot.slane %v1960, 4
    %v2056 = vsel %vm219, %v2055, %v1880
    %v2058 = vunpack.c.l.s4 1983009808
    %v2059 = vunpack.c.0.s8 %v2058
    %v2060 = vperm.slane %v2056, %v2059
    %v2061 = vrot.slane %v2000, 4
    %v2062 = vsel %vm219, %v2061, %v1920
    %v2064 = vunpack.c.l.s4 1983009808
    %v2065 = vunpack.c.0.s8 %v2064
    %v2066 = vperm.slane %v2062, %v2065
    %v2067 = vrot.slane %v2054, 4
    %v2068 = vsel %vm219, %v2067, %v2048
    %v2070 = vunpack.c.l.s4 1934713408
    %v2071 = vunpack.c.0.s8 %v2070
    %v2072 = vperm.slane %v2068, %v2071
    %v2073 = vrot.slane %v2066, 4
    %v2074 = vsel %vm219, %v2073, %v2060
    %v2076 = vunpack.c.l.s4 1934713408
    %v2077 = vunpack.c.0.s8 %v2076
    %v2078 = vperm.slane %v2074, %v2077
    %v2079 = vrot.slane %v2078, 4
    %v2080 = vsel %vm219, %v2079, %v2072
    %v2081 = vrot.slane %v2072, 4
    %v2082 = vsel %vm219, %v2078, %v2081
    %2085 = vrot.lane.b32.xlu0 %v2042, 64
    %v2086 = vpop.permute.xlu0 %2085
    %2087 = vrot.lane.b32.xlu0 %v2082, 64
    %v2088 = vpop.permute.xlu0 %2087
    %v2091 = vsel %vm184, %v2040, %v2086
    %v2092 = vsel %vm184, %v2080, %v2088
    %2109 = vrot.lane.b32.xlu0 %v1400, 64
    %v2110 = vpop.permute.xlu0 %2109
    %2111 = vrot.lane.b32.xlu0 %v1440, 64
    %v2112 = vpop.permute.xlu0 %2111
    %2113 = vrot.lane.b32.xlu0 %v1480, 64
    %v2114 = vpop.permute.xlu0 %2113
    %2115 = vrot.lane.b32.xlu0 %v1520, 64
    %v2116 = vpop.permute.xlu0 %2115
    %2117 = vrot.lane.b32.xlu0 %v1560, 64
    %v2118 = vpop.permute.xlu0 %2117
    %2119 = vrot.lane.b32.xlu0 %v1600, 64
    %v2120 = vpop.permute.xlu0 %2119
    %2121 = vrot.lane.b32.xlu0 %v1640, 64
    %v2122 = vpop.permute.xlu0 %2121
    %2123 = vrot.lane.b32.xlu0 %v1680, 64
    %v2124 = vpop.permute.xlu0 %2123
    %2125 = vrot.lane.b32.xlu0 %v1720, 64
    %v2126 = vpop.permute.xlu0 %2125
    %2127 = vrot.lane.b32.xlu0 %v1760, 64
    %v2128 = vpop.permute.xlu0 %2127
    %2129 = vrot.lane.b32.xlu0 %v1800, 64
    %v2130 = vpop.permute.xlu0 %2129
    %2131 = vrot.lane.b32.xlu0 %v1840, 64
    %v2132 = vpop.permute.xlu0 %2131
    %2133 = vrot.lane.b32.xlu0 %v1880, 64
    %v2134 = vpop.permute.xlu0 %2133
    %2135 = vrot.lane.b32.xlu0 %v1920, 64
    %v2136 = vpop.permute.xlu0 %2135
    %2137 = vrot.lane.b32.xlu0 %v1960, 64
    %v2138 = vpop.permute.xlu0 %2137
    %2139 = vrot.lane.b32.xlu0 %v2000, 64
    %v2140 = vpop.permute.xlu0 %2139
    %v2157 = vrot.slane %v2114, 4
    %v2158 = vsel %vm219, %v2157, %v2110
    %v2160 = vunpack.c.l.s4 1983009808
    %v2161 = vunpack.c.0.s8 %v2160
    %v2162 = vperm.slane %v2158, %v2161
    %v2163 = vrot.slane %v2116, 4
    %v2164 = vsel %vm219, %v2163, %v2112
    %v2166 = vunpack.c.l.s4 1983009808
    %v2167 = vunpack.c.0.s8 %v2166
    %v2168 = vperm.slane %v2164, %v2167
    %v2169 = vrot.slane %v2122, 4
    %v2170 = vsel %vm219, %v2169, %v2118
    %v2172 = vunpack.c.l.s4 1983009808
    %v2173 = vunpack.c.0.s8 %v2172
    %v2174 = vperm.slane %v2170, %v2173
    %v2175 = vrot.slane %v2124, 4
    %v2176 = vsel %vm219, %v2175, %v2120
    %v2178 = vunpack.c.l.s4 1983009808
    %v2179 = vunpack.c.0.s8 %v2178
    %v2180 = vperm.slane %v2176, %v2179
    %v2181 = vrot.slane %v2168, 4
    %v2182 = vsel %vm219, %v2181, %v2162
    %v2184 = vunpack.c.l.s4 1934713408
    %v2185 = vunpack.c.0.s8 %v2184
    %v2186 = vperm.slane %v2182, %v2185
    %v2187 = vrot.slane %v2180, 4
    %v2188 = vsel %vm219, %v2187, %v2174
    %v2190 = vunpack.c.l.s4 1934713408
    %v2191 = vunpack.c.0.s8 %v2190
    %v2192 = vperm.slane %v2188, %v2191
    %v2193 = vrot.slane %v2192, 4
    %v2194 = vsel %vm219, %v2193, %v2186
    %v2195 = vrot.slane %v2186, 4
    %v2196 = vsel %vm219, %v2192, %v2195
    %v2197 = vrot.slane %v2130, 4
    %v2198 = vsel %vm219, %v2197, %v2126
    %v2200 = vunpack.c.l.s4 1983009808
    %v2201 = vunpack.c.0.s8 %v2200
    %v2202 = vperm.slane %v2198, %v2201
    %v2203 = vrot.slane %v2132, 4
    %v2204 = vsel %vm219, %v2203, %v2128
    %v2206 = vunpack.c.l.s4 1983009808
    %v2207 = vunpack.c.0.s8 %v2206
    %v2208 = vperm.slane %v2204, %v2207
    %v2209 = vrot.slane %v2138, 4
    %v2210 = vsel %vm219, %v2209, %v2134
    %v2212 = vunpack.c.l.s4 1983009808
    %v2213 = vunpack.c.0.s8 %v2212
    %v2214 = vperm.slane %v2210, %v2213
    %v2215 = vrot.slane %v2140, 4
    %v2216 = vsel %vm219, %v2215, %v2136
    %v2218 = vunpack.c.l.s4 1983009808
    %v2219 = vunpack.c.0.s8 %v2218
    %v2220 = vperm.slane %v2216, %v2219
    %v2221 = vrot.slane %v2208, 4
    %v2222 = vsel %vm219, %v2221, %v2202
    %v2224 = vunpack.c.l.s4 1934713408
    %v2225 = vunpack.c.0.s8 %v2224
    %v2226 = vperm.slane %v2222, %v2225
    %v2227 = vrot.slane %v2220, 4
    %v2228 = vsel %vm219, %v2227, %v2214
    %v2230 = vunpack.c.l.s4 1934713408
    %v2231 = vunpack.c.0.s8 %v2230
    %v2232 = vperm.slane %v2228, %v2231
    %v2233 = vrot.slane %v2232, 4
    %v2234 = vsel %vm219, %v2233, %v2226
    %v2235 = vrot.slane %v2226, 4
    %v2236 = vsel %vm219, %v2232, %v2235
    %2239 = vrot.lane.b32.xlu0 %v2196, 64
    %v2240 = vpop.permute.xlu0 %2239
    %2241 = vrot.lane.b32.xlu0 %v2236, 64
    %v2242 = vpop.permute.xlu0 %2241
    %v2245 = vsel %vm184, %v2194, %v2240
    %v2246 = vsel %vm184, %v2234, %v2242
    %v2247 = vpack.c.bf16 %v2092, %v2091
    %v2248 = vpack.c.bf16 %v2246, %v2245
    %v2249 = vld [vmem:[#allocation6] sm:$0xf]
    %v2250 = vld [vmem:[#allocation6 + $0x4] sm:$0xf]
    %v2251 = vld [vmem:[#allocation6 + $0x8] sm:$0xf]
    %v2252 = vld [vmem:[#allocation6 + $0xc] sm:$0xf]
    %v2253 = vld [vmem:[#allocation6 + $0x10] sm:$0xf]
    %v2254 = vld [vmem:[#allocation6 + $0x14] sm:$0xf]
    %v2255 = vld [vmem:[#allocation6 + $0x18] sm:$0xf]
    %v2256 = vld [vmem:[#allocation6 + $0x1c] sm:$0xf]
    %v2257 = vld [vmem:[#allocation6 + $0x20] sm:$0xf]
    %v2258 = vld [vmem:[#allocation6 + $0x24] sm:$0xf]
    %v2259 = vld [vmem:[#allocation6 + $0x28] sm:$0xf]
    %v2260 = vld [vmem:[#allocation6 + $0x2c] sm:$0xf]
    %v2261 = vld [vmem:[#allocation6 + $0x30] sm:$0xf]
    %v2262 = vld [vmem:[#allocation6 + $0x34] sm:$0xf]
    %v2263 = vld [vmem:[#allocation6 + $0x38] sm:$0xf]
    %v2264 = vld [vmem:[#allocation6 + $0x3c] sm:$0xf]
    %v2265 = vld [vmem:[%s8] sm:$0x1]
    %v2267 = vperm.slane %v2265, 0
    %v2285 = vunpack.c.l.b16 %v2249
    %v2286 = vunpack.c.l.b16 %v2250
    %v2287 = vunpack.c.l.b16 %v2251
    %v2288 = vunpack.c.l.b16 %v2252
    %v2289 = vunpack.c.l.b16 %v2253
    %v2290 = vunpack.c.l.b16 %v2254
    %v2291 = vunpack.c.l.b16 %v2255
    %v2292 = vunpack.c.l.b16 %v2256
    %v2293 = vunpack.c.l.b16 %v2257
    %v2294 = vunpack.c.l.b16 %v2258
    %v2295 = vunpack.c.l.b16 %v2259
    %v2296 = vunpack.c.l.b16 %v2260
    %v2297 = vunpack.c.l.b16 %v2261
    %v2298 = vunpack.c.l.b16 %v2262
    %v2299 = vunpack.c.l.b16 %v2263
    %v2300 = vunpack.c.l.b16 %v2264
    %v2301 = vpack.c.b16 %v2286, %v2285
    %v2302 = vpack.c.b16 %v2288, %v2287
    %v2303 = vpack.c.b16 %v2290, %v2289
    %v2304 = vpack.c.b16 %v2292, %v2291
    %v2305 = vpack.c.b16 %v2294, %v2293
    %v2306 = vpack.c.b16 %v2296, %v2295
    %v2307 = vpack.c.b16 %v2298, %v2297
    %v2308 = vpack.c.b16 %v2300, %v2299
    %2317 = vmatpush.bf16.msra.mxu0 %v2308
    %2318 = vmatpush.bf16.msra.mxu0 %v2307
    %2319 = vmatpush.bf16.msra.mxu0 %v2306
    %2320 = vmatpush.bf16.msra.mxu0 %v2305
    %2321 = vmatpush.bf16.msra.mxu0 %v2304
    %2322 = vmatpush.bf16.msra.mxu0 %v2303
    %2323 = vmatpush.bf16.msra.mxu0 %v2302
    %2324 = vmatpush.bf16.msra.mxu0 %v2301
    %2325 = vmatmul.bf16.gmra.mxu0 %v170
    %v2326 = vpop.f32.mrf.mxu0
    %v2327 = vadd.f32 %v2267, %v2326
    %v2328 = vpop.f32.mrf.mxu0
    %v2329 = vadd.f32 %v2267, %v2328
    %2330 = vmatmul.bf16.gmra.mxu0 %v171
    %v2331 = vpop.f32.mrf.mxu0
    %v2332 = vadd.f32 %v2267, %v2331
    %v2333 = vpop.f32.mrf.mxu0
    %v2334 = vadd.f32 %v2267, %v2333
    %2335 = vmatmul.bf16.gmra.mxu0 %v172
    %v2336 = vpop.f32.mrf.mxu0
    %v2337 = vadd.f32 %v2267, %v2336
    %v2338 = vpop.f32.mrf.mxu0
    %v2339 = vadd.f32 %v2267, %v2338
    %2340 = vmatmul.bf16.gmra.mxu0 %v173
    %v2341 = vpop.f32.mrf.mxu0
    %v2342 = vadd.f32 %v2267, %v2341
    %v2343 = vpop.f32.mrf.mxu0
    %v2344 = vadd.f32 %v2267, %v2343
    %2345 = vdwg.mxu0
    %v2354 = vunpack.c.l.b16 %v162
    %v2355 = vunpack.c.l.b16 %v163
    %v2356 = vunpack.c.l.b16 %v164
    %v2357 = vunpack.c.l.b16 %v165
    %v2358 = vunpack.c.l.b16 %v166
    %v2359 = vunpack.c.l.b16 %v167
    %v2360 = vunpack.c.l.b16 %v168
    %v2361 = vunpack.c.l.b16 %v169
    %v2362 = vpack.c.b16 %v2355, %v2354
    %v2363 = vpack.c.b16 %v2357, %v2356
    %v2364 = vpack.c.b16 %v2359, %v2358
    %v2365 = vpack.c.b16 %v2361, %v2360
    %vm2366 = vcmask 261120
    %v2368 = vsel %vm2366, %v2362, 0
    %v2371 = vsel %vm2366, %v2363, 0
    %v2374 = vsel %vm2366, %v2364, 0
    %v2377 = vsel %vm2366, %v2365, 0
    %2379 = vmatpush.bf16.msra.mxu0 0
    %2380 = vmatpush.bf16.msra.mxu0 0
    %2381 = vmatpush.bf16.msra.mxu0 0
    %2382 = vmatpush.bf16.msra.mxu0 0
    %2383 = vmatpush.bf16.msra.mxu0 0
    %2384 = vmatpush.bf16.msra.mxu0 0
    %2385 = vmatpush.bf16.msra.mxu0 %v2248
    %2386 = vmatpush.bf16.msra.mxu0 %v2247
    %2387 = vmatmul.bf16.gmra.mxu0 %v2368
    %v2388 = vpop.f32.mrf.mxu0
    %v2389 = vadd.f32 %v2327, %v2388
    %v2390 = vpop.f32.mrf.mxu0
    %v2391 = vadd.f32 %v2329, %v2390
    %2392 = vmatmul.bf16.gmra.mxu0 %v2371
    %v2393 = vpop.f32.mrf.mxu0
    %v2394 = vadd.f32 %v2332, %v2393
    %v2395 = vpop.f32.mrf.mxu0
    %v2396 = vadd.f32 %v2334, %v2395
    %2397 = vmatmul.bf16.gmra.mxu0 %v2374
    %v2398 = vpop.f32.mrf.mxu0
    %v2399 = vadd.f32 %v2337, %v2398
    %v2400 = vpop.f32.mrf.mxu0
    %v2401 = vadd.f32 %v2339, %v2400
    %2402 = vmatmul.bf16.gmra.mxu0 %v2377
    %v2403 = vpop.f32.mrf.mxu0
    %v2404 = vadd.f32 %v2342, %v2403
    %v2405 = vpop.f32.mrf.mxu0
    %v2406 = vadd.f32 %v2344, %v2405
    %2407 = vdwg.mxu0
    %v2408 = vmax.f32 %v2389, 0.0
    %v2409 = vmax.f32 %v2391, 0.0
    %v2410 = vmax.f32 %v2394, 0.0
    %v2411 = vmax.f32 %v2396, 0.0
    %v2412 = vmax.f32 %v2399, 0.0
    %v2413 = vmax.f32 %v2401, 0.0
    %v2414 = vmax.f32 %v2404, 0.0
    %v2415 = vmax.f32 %v2406, 0.0
    %v2416 = vpack.c.bf16 %v2409, %v2408
    %v2417 = vpack.c.bf16 %v2411, %v2410
    %v2418 = vpack.c.bf16 %v2413, %v2412
    %v2419 = vpack.c.bf16 %v2415, %v2414
    %2420 = vmatpush.bf16.msra.mxu0 0
    %2421 = vmatpush.bf16.msra.mxu0 0
    %2422 = vmatpush.bf16.msra.mxu0 0
    %2423 = vmatpush.bf16.msra.mxu0 0
    %2424 = vmatpush.bf16.msra.mxu0 %v2419
    %2425 = vmatpush.bf16.msra.mxu0 %v2418
    %2426 = vmatpush.bf16.msra.mxu0 %v2417
    %2427 = vmatpush.bf16.msra.mxu0 %v2416
    %2428 = vmatmul.bf16.gmra.mxu0 %v186
    %v2429 = vpop.f32.mrf.mxu0
    %v2430 = vadd.f32 0.0, %v2429
    %v2431 = vpop.f32.mrf.mxu0
    %v2432 = vadd.f32 0.0, %v2431
    %2433 = vmatmul.bf16.gmra.mxu0 %v189
    %v2434 = vpop.f32.mrf.mxu0
    %v2435 = vadd.f32 0.0, %v2434
    %v2436 = vpop.f32.mrf.mxu0
    %v2437 = vadd.f32 0.0, %v2436
    %2438 = vdwg.mxu0
    %2441 = vrot.lane.b32.xlu0 %v2430, 64
    %v2442 = vpop.permute.xlu0 %2441
    %2443 = vrot.lane.b32.xlu0 %v2432, 64
    %v2444 = vpop.permute.xlu0 %2443
    %v2447 = vrot.slane %v2430, 4
    %v2448 = vsel %vm219, 0.0, %v2447
    %v2450 = vunpack.c.l.s4 1983009808
    %v2451 = vunpack.c.0.s8 %v2450
    %v2452 = vperm.slane %v2430, %v2451
    %v2454 = vunpack.c.l.s4 1983009808
    %v2455 = vunpack.c.0.s8 %v2454
    %v2456 = vperm.slane %v2448, %v2455
    %v2457 = vrot.slane %v2442, 4
    %v2458 = vsel %vm219, 0.0, %v2457
    %v2460 = vunpack.c.l.s4 1983009808
    %v2461 = vunpack.c.0.s8 %v2460
    %v2462 = vperm.slane %v2442, %v2461
    %v2464 = vunpack.c.l.s4 1983009808
    %v2465 = vunpack.c.0.s8 %v2464
    %v2466 = vperm.slane %v2458, %v2465
    %v2467 = vrot.slane %v2462, 4
    %v2468 = vsel %vm219, %v2467, %v2452
    %v2469 = vrot.slane %v2452, 4
    %v2470 = vsel %vm219, %v2462, %v2469
    %v2472 = vunpack.c.l.s4 1934713408
    %v2473 = vunpack.c.0.s8 %v2472
    %v2474 = vperm.slane %v2468, %v2473
    %v2476 = vunpack.c.l.s4 1934713408
    %v2477 = vunpack.c.0.s8 %v2476
    %v2478 = vperm.slane %v2470, %v2477
    %v2479 = vrot.slane %v2466, 4
    %v2480 = vsel %vm219, %v2479, %v2456
    %v2481 = vrot.slane %v2456, 4
    %v2482 = vsel %vm219, %v2466, %v2481
    %v2484 = vunpack.c.l.s4 1934713408
    %v2485 = vunpack.c.0.s8 %v2484
    %v2486 = vperm.slane %v2480, %v2485
    %v2488 = vunpack.c.l.s4 1934713408
    %v2489 = vunpack.c.0.s8 %v2488
    %v2490 = vperm.slane %v2482, %v2489
    %v2491 = vrot.slane %v2474, 4
    %v2492 = vsel %vm219, 0.0, %v2491
    %v2493 = vrot.slane %v2478, 4
    %v2494 = vsel %vm219, 0.0, %v2493
    %v2495 = vrot.slane %v2486, 4
    %v2496 = vsel %vm219, 0.0, %v2495
    %v2497 = vrot.slane %v2490, 4
    %v2498 = vsel %vm219, 0.0, %v2497
    %v2499 = vrot.slane %v2432, 4
    %v2500 = vsel %vm219, 0.0, %v2499
    %v2502 = vunpack.c.l.s4 1983009808
    %v2503 = vunpack.c.0.s8 %v2502
    %v2504 = vperm.slane %v2432, %v2503
    %v2506 = vunpack.c.l.s4 1983009808
    %v2507 = vunpack.c.0.s8 %v2506
    %v2508 = vperm.slane %v2500, %v2507
    %v2509 = vrot.slane %v2444, 4
    %v2510 = vsel %vm219, 0.0, %v2509
    %v2512 = vunpack.c.l.s4 1983009808
    %v2513 = vunpack.c.0.s8 %v2512
    %v2514 = vperm.slane %v2444, %v2513
    %v2516 = vunpack.c.l.s4 1983009808
    %v2517 = vunpack.c.0.s8 %v2516
    %v2518 = vperm.slane %v2510, %v2517
    %v2519 = vrot.slane %v2514, 4
    %v2520 = vsel %vm219, %v2519, %v2504
    %v2521 = vrot.slane %v2504, 4
    %v2522 = vsel %vm219, %v2514, %v2521
    %v2524 = vunpack.c.l.s4 1934713408
    %v2525 = vunpack.c.0.s8 %v2524
    %v2526 = vperm.slane %v2520, %v2525
    %v2528 = vunpack.c.l.s4 1934713408
    %v2529 = vunpack.c.0.s8 %v2528
    %v2530 = vperm.slane %v2522, %v2529
    %v2531 = vrot.slane %v2518, 4
    %v2532 = vsel %vm219, %v2531, %v2508
    %v2533 = vrot.slane %v2508, 4
    %v2534 = vsel %vm219, %v2518, %v2533
    %v2536 = vunpack.c.l.s4 1934713408
    %v2537 = vunpack.c.0.s8 %v2536
    %v2538 = vperm.slane %v2532, %v2537
    %v2540 = vunpack.c.l.s4 1934713408
    %v2541 = vunpack.c.0.s8 %v2540
    %v2542 = vperm.slane %v2534, %v2541
    %v2543 = vrot.slane %v2526, 4
    %v2544 = vsel %vm219, 0.0, %v2543
    %v2545 = vrot.slane %v2530, 4
    %v2546 = vsel %vm219, 0.0, %v2545
    %v2547 = vrot.slane %v2538, 4
    %v2548 = vsel %vm219, 0.0, %v2547
    %v2549 = vrot.slane %v2542, 4
    %v2550 = vsel %vm219, 0.0, %v2549
    %v2551 = vpack.c.bf16 %v2474, %v2474
    %v2552 = vpack.c.bf16 %v2492, %v2492
    %v2553 = vpack.c.bf16 %v2478, %v2478
    %v2554 = vpack.c.bf16 %v2494, %v2494
    %v2555 = vpack.c.bf16 %v2486, %v2486
    %v2556 = vpack.c.bf16 %v2496, %v2496
    %v2557 = vpack.c.bf16 %v2490, %v2490
    %v2558 = vpack.c.bf16 %v2498, %v2498
    %v2559 = vpack.c.bf16 %v2526, %v2526
    %v2560 = vpack.c.bf16 %v2544, %v2544
    %v2561 = vpack.c.bf16 %v2530, %v2530
    %v2562 = vpack.c.bf16 %v2546, %v2546
    %v2563 = vpack.c.bf16 %v2538, %v2538
    %v2564 = vpack.c.bf16 %v2548, %v2548
    %v2565 = vpack.c.bf16 %v2542, %v2542
    %v2566 = vpack.c.bf16 %v2550, %v2550
    %2569 = vrot.lane.b32.xlu0 %v2435, 64
    %v2570 = vpop.permute.xlu0 %2569
    %2571 = vrot.lane.b32.xlu0 %v2437, 64
    %v2572 = vpop.permute.xlu0 %2571
    %v2575 = vrot.slane %v2435, 4
    %v2576 = vsel %vm219, 0.0, %v2575
    %v2578 = vunpack.c.l.s4 1983009808
    %v2579 = vunpack.c.0.s8 %v2578
    %v2580 = vperm.slane %v2435, %v2579
    %v2582 = vunpack.c.l.s4 1983009808
    %v2583 = vunpack.c.0.s8 %v2582
    %v2584 = vperm.slane %v2576, %v2583
    %v2585 = vrot.slane %v2570, 4
    %v2586 = vsel %vm219, 0.0, %v2585
    %v2588 = vunpack.c.l.s4 1983009808
    %v2589 = vunpack.c.0.s8 %v2588
    %v2590 = vperm.slane %v2570, %v2589
    %v2592 = vunpack.c.l.s4 1983009808
    %v2593 = vunpack.c.0.s8 %v2592
    %v2594 = vperm.slane %v2586, %v2593
    %v2595 = vrot.slane %v2590, 4
    %v2596 = vsel %vm219, %v2595, %v2580
    %v2597 = vrot.slane %v2580, 4
    %v2598 = vsel %vm219, %v2590, %v2597
    %v2600 = vunpack.c.l.s4 1934713408
    %v2601 = vunpack.c.0.s8 %v2600
    %v2602 = vperm.slane %v2596, %v2601
    %v2604 = vunpack.c.l.s4 1934713408
    %v2605 = vunpack.c.0.s8 %v2604
    %v2606 = vperm.slane %v2598, %v2605
    %v2607 = vrot.slane %v2594, 4
    %v2608 = vsel %vm219, %v2607, %v2584
    %v2609 = vrot.slane %v2584, 4
    %v2610 = vsel %vm219, %v2594, %v2609
    %v2612 = vunpack.c.l.s4 1934713408
    %v2613 = vunpack.c.0.s8 %v2612
    %v2614 = vperm.slane %v2608, %v2613
    %v2616 = vunpack.c.l.s4 1934713408
    %v2617 = vunpack.c.0.s8 %v2616
    %v2618 = vperm.slane %v2610, %v2617
    %v2619 = vrot.slane %v2602, 4
    %v2620 = vsel %vm219, 0.0, %v2619
    %v2621 = vrot.slane %v2606, 4
    %v2622 = vsel %vm219, 0.0, %v2621
    %v2623 = vrot.slane %v2614, 4
    %v2624 = vsel %vm219, 0.0, %v2623
    %v2625 = vrot.slane %v2618, 4
    %v2626 = vsel %vm219, 0.0, %v2625
    %v2627 = vrot.slane %v2437, 4
    %v2628 = vsel %vm219, 0.0, %v2627
    %v2630 = vunpack.c.l.s4 1983009808
    %v2631 = vunpack.c.0.s8 %v2630
    %v2632 = vperm.slane %v2437, %v2631
    %v2634 = vunpack.c.l.s4 1983009808
    %v2635 = vunpack.c.0.s8 %v2634
    %v2636 = vperm.slane %v2628, %v2635
    %v2637 = vrot.slane %v2572, 4
    %v2638 = vsel %vm219, 0.0, %v2637
    %v2640 = vunpack.c.l.s4 1983009808
    %v2641 = vunpack.c.0.s8 %v2640
    %v2642 = vperm.slane %v2572, %v2641
    %v2644 = vunpack.c.l.s4 1983009808
    %v2645 = vunpack.c.0.s8 %v2644
    %v2646 = vperm.slane %v2638, %v2645
    %v2647 = vrot.slane %v2642, 4
    %v2648 = vsel %vm219, %v2647, %v2632
    %v2649 = vrot.slane %v2632, 4
    %v2650 = vsel %vm219, %v2642, %v2649
    %v2652 = vunpack.c.l.s4 1934713408
    %v2653 = vunpack.c.0.s8 %v2652
    %v2654 = vperm.slane %v2648, %v2653
    %v2656 = vunpack.c.l.s4 1934713408
    %v2657 = vunpack.c.0.s8 %v2656
    %v2658 = vperm.slane %v2650, %v2657
    %v2659 = vrot.slane %v2646, 4
    %v2660 = vsel %vm219, %v2659, %v2636
    %v2661 = vrot.slane %v2636, 4
    %v2662 = vsel %vm219, %v2646, %v2661
    %v2664 = vunpack.c.l.s4 1934713408
    %v2665 = vunpack.c.0.s8 %v2664
    %v2666 = vperm.slane %v2660, %v2665
    %v2668 = vunpack.c.l.s4 1934713408
    %v2669 = vunpack.c.0.s8 %v2668
    %v2670 = vperm.slane %v2662, %v2669
    %v2671 = vrot.slane %v2654, 4
    %v2672 = vsel %vm219, 0.0, %v2671
    %v2673 = vrot.slane %v2658, 4
    %v2674 = vsel %vm219, 0.0, %v2673
    %v2675 = vrot.slane %v2666, 4
    %v2676 = vsel %vm219, 0.0, %v2675
    %v2677 = vrot.slane %v2670, 4
    %v2678 = vsel %vm219, 0.0, %v2677
    %v2679 = vpack.c.bf16 %v2602, %v2602
    %v2680 = vpack.c.bf16 %v2620, %v2620
    %v2681 = vpack.c.bf16 %v2606, %v2606
    %v2682 = vpack.c.bf16 %v2622, %v2622
    %v2683 = vpack.c.bf16 %v2614, %v2614
    %v2684 = vpack.c.bf16 %v2624, %v2624
    %v2685 = vpack.c.bf16 %v2618, %v2618
    %v2686 = vpack.c.bf16 %v2626, %v2626
    %v2687 = vpack.c.bf16 %v2654, %v2654
    %v2688 = vpack.c.bf16 %v2672, %v2672
    %v2689 = vpack.c.bf16 %v2658, %v2658
    %v2690 = vpack.c.bf16 %v2674, %v2674
    %v2691 = vpack.c.bf16 %v2666, %v2666
    %v2692 = vpack.c.bf16 %v2676, %v2676
    %v2693 = vpack.c.bf16 %v2670, %v2670
    %v2694 = vpack.c.bf16 %v2678, %v2678
    %s2695 = scalar_lea.vmem [#allocation2], 512
    %v2696 = vld [vmem:[%s2695] sm:$0xf]
    %v2697 = vld [vmem:[%s2695 + $0x4] sm:$0xf]
    %v2698 = vld [vmem:[%s2695 + $0x8] sm:$0xf]
    %v2699 = vld [vmem:[%s2695 + $0xc] sm:$0xf]
    %v2700 = vld [vmem:[%s2695 + $0x10] sm:$0xf]
    %v2701 = vld [vmem:[%s2695 + $0x14] sm:$0xf]
    %v2702 = vld [vmem:[%s2695 + $0x18] sm:$0xf]
    %v2703 = vld [vmem:[%s2695 + $0x1c] sm:$0xf]
    %v2704 = vld [vmem:[%s2695 + $0x20] sm:$0xf]
    %v2705 = vld [vmem:[%s2695 + $0x24] sm:$0xf]
    %v2706 = vld [vmem:[%s2695 + $0x28] sm:$0xf]
    %v2707 = vld [vmem:[%s2695 + $0x2c] sm:$0xf]
    %v2708 = vld [vmem:[%s2695 + $0x30] sm:$0xf]
    %v2709 = vld [vmem:[%s2695 + $0x34] sm:$0xf]
    %v2710 = vld [vmem:[%s2695 + $0x38] sm:$0xf]
    %v2711 = vld [vmem:[%s2695 + $0x3c] sm:$0xf]
    %v2712 = vld [vmem:[%s2695 + $0x40] sm:$0xf]
    %v2713 = vld [vmem:[%s2695 + $0x44] sm:$0xf]
    %v2714 = vld [vmem:[%s2695 + $0x48] sm:$0xf]
    %v2715 = vld [vmem:[%s2695 + $0x4c] sm:$0xf]
    %v2716 = vld [vmem:[%s2695 + $0x50] sm:$0xf]
    %v2717 = vld [vmem:[%s2695 + $0x54] sm:$0xf]
    %v2718 = vld [vmem:[%s2695 + $0x58] sm:$0xf]
    %v2719 = vld [vmem:[%s2695 + $0x5c] sm:$0xf]
    %v2720 = vld [vmem:[%s2695 + $0x60] sm:$0xf]
    %v2721 = vld [vmem:[%s2695 + $0x64] sm:$0xf]
    %v2722 = vld [vmem:[%s2695 + $0x68] sm:$0xf]
    %v2723 = vld [vmem:[%s2695 + $0x6c] sm:$0xf]
    %v2724 = vld [vmem:[%s2695 + $0x70] sm:$0xf]
    %v2725 = vld [vmem:[%s2695 + $0x74] sm:$0xf]
    %v2726 = vld [vmem:[%s2695 + $0x78] sm:$0xf]
    %v2727 = vld [vmem:[%s2695 + $0x7c] sm:$0xf]
    %v2728 = vld [vmem:[%s2695 + $0x80] sm:$0xf]
    %v2729 = vld [vmem:[%s2695 + $0x84] sm:$0xf]
    %v2730 = vld [vmem:[%s2695 + $0x88] sm:$0xf]
    %v2731 = vld [vmem:[%s2695 + $0x8c] sm:$0xf]
    %v2732 = vld [vmem:[%s2695 + $0x90] sm:$0xf]
    %v2733 = vld [vmem:[%s2695 + $0x94] sm:$0xf]
    %v2734 = vld [vmem:[%s2695 + $0x98] sm:$0xf]
    %v2735 = vld [vmem:[%s2695 + $0x9c] sm:$0xf]
    %v2736 = vld [vmem:[%s2695 + $0xa0] sm:$0xf]
    %v2737 = vld [vmem:[%s2695 + $0xa4] sm:$0xf]
    %v2738 = vld [vmem:[%s2695 + $0xa8] sm:$0xf]
    %v2739 = vld [vmem:[%s2695 + $0xac] sm:$0xf]
    %v2740 = vld [vmem:[%s2695 + $0xb0] sm:$0xf]
    %v2741 = vld [vmem:[%s2695 + $0xb4] sm:$0xf]
    %v2742 = vld [vmem:[%s2695 + $0xb8] sm:$0xf]
    %v2743 = vld [vmem:[%s2695 + $0xbc] sm:$0xf]
    %v2744 = vld [vmem:[%s2695 + $0xc0] sm:$0xf]
    %v2745 = vld [vmem:[%s2695 + $0xc4] sm:$0xf]
    %v2746 = vld [vmem:[%s2695 + $0xc8] sm:$0xf]
    %v2747 = vld [vmem:[%s2695 + $0xcc] sm:$0xf]
    %v2748 = vld [vmem:[%s2695 + $0xd0] sm:$0xf]
    %v2749 = vld [vmem:[%s2695 + $0xd4] sm:$0xf]
    %v2750 = vld [vmem:[%s2695 + $0xd8] sm:$0xf]
    %v2751 = vld [vmem:[%s2695 + $0xdc] sm:$0xf]
    %v2752 = vld [vmem:[%s2695 + $0xe0] sm:$0xf]
    %v2753 = vld [vmem:[%s2695 + $0xe4] sm:$0xf]
    %v2754 = vld [vmem:[%s2695 + $0xe8] sm:$0xf]
    %v2755 = vld [vmem:[%s2695 + $0xec] sm:$0xf]
    %v2756 = vld [vmem:[%s2695 + $0xf0] sm:$0xf]
    %v2757 = vld [vmem:[%s2695 + $0xf4] sm:$0xf]
    %v2758 = vld [vmem:[%s2695 + $0xf8] sm:$0xf]
    %v2759 = vld [vmem:[%s2695 + $0xfc] sm:$0xf]
    %v2760 = vld [vmem:[%s2695 + $0x100] sm:$0xf]
    %v2761 = vld [vmem:[%s2695 + $0x104] sm:$0xf]
    %v2762 = vld [vmem:[%s2695 + $0x108] sm:$0xf]
    %v2763 = vld [vmem:[%s2695 + $0x10c] sm:$0xf]
    %v2764 = vld [vmem:[%s2695 + $0x110] sm:$0xf]
    %v2765 = vld [vmem:[%s2695 + $0x114] sm:$0xf]
    %v2766 = vld [vmem:[%s2695 + $0x118] sm:$0xf]
    %v2767 = vld [vmem:[%s2695 + $0x11c] sm:$0xf]
    %v2768 = vld [vmem:[%s2695 + $0x120] sm:$0xf]
    %v2769 = vld [vmem:[%s2695 + $0x124] sm:$0xf]
    %v2770 = vld [vmem:[%s2695 + $0x128] sm:$0xf]
    %v2771 = vld [vmem:[%s2695 + $0x12c] sm:$0xf]
    %v2772 = vld [vmem:[%s2695 + $0x130] sm:$0xf]
    %v2773 = vld [vmem:[%s2695 + $0x134] sm:$0xf]
    %v2774 = vld [vmem:[%s2695 + $0x138] sm:$0xf]
    %v2775 = vld [vmem:[%s2695 + $0x13c] sm:$0xf]
    %v2776 = vld [vmem:[%s2695 + $0x140] sm:$0xf]
    %v2777 = vld [vmem:[%s2695 + $0x144] sm:$0xf]
    %v2778 = vld [vmem:[%s2695 + $0x148] sm:$0xf]
    %v2779 = vld [vmem:[%s2695 + $0x14c] sm:$0xf]
    %v2780 = vld [vmem:[%s2695 + $0x150] sm:$0xf]
    %v2781 = vld [vmem:[%s2695 + $0x154] sm:$0xf]
    %v2782 = vld [vmem:[%s2695 + $0x158] sm:$0xf]
    %v2783 = vld [vmem:[%s2695 + $0x15c] sm:$0xf]
    %v2784 = vld [vmem:[%s2695 + $0x160] sm:$0xf]
    %v2785 = vld [vmem:[%s2695 + $0x164] sm:$0xf]
    %v2786 = vld [vmem:[%s2695 + $0x168] sm:$0xf]
    %v2787 = vld [vmem:[%s2695 + $0x16c] sm:$0xf]
    %v2788 = vld [vmem:[%s2695 + $0x170] sm:$0xf]
    %v2789 = vld [vmem:[%s2695 + $0x174] sm:$0xf]
    %v2790 = vld [vmem:[%s2695 + $0x178] sm:$0xf]
    %v2791 = vld [vmem:[%s2695 + $0x17c] sm:$0xf]
    %v2792 = vld [vmem:[%s2695 + $0x180] sm:$0xf]
    %v2793 = vld [vmem:[%s2695 + $0x184] sm:$0xf]
    %v2794 = vld [vmem:[%s2695 + $0x188] sm:$0xf]
    %v2795 = vld [vmem:[%s2695 + $0x18c] sm:$0xf]
    %v2796 = vld [vmem:[%s2695 + $0x190] sm:$0xf]
    %v2797 = vld [vmem:[%s2695 + $0x194] sm:$0xf]
    %v2798 = vld [vmem:[%s2695 + $0x198] sm:$0xf]
    %v2799 = vld [vmem:[%s2695 + $0x19c] sm:$0xf]
    %v2800 = vld [vmem:[%s2695 + $0x1a0] sm:$0xf]
    %v2801 = vld [vmem:[%s2695 + $0x1a4] sm:$0xf]
    %v2802 = vld [vmem:[%s2695 + $0x1a8] sm:$0xf]
    %v2803 = vld [vmem:[%s2695 + $0x1ac] sm:$0xf]
    %v2804 = vld [vmem:[%s2695 + $0x1b0] sm:$0xf]
    %v2805 = vld [vmem:[%s2695 + $0x1b4] sm:$0xf]
    %v2806 = vld [vmem:[%s2695 + $0x1b8] sm:$0xf]
    %v2807 = vld [vmem:[%s2695 + $0x1bc] sm:$0xf]
    %v2808 = vld [vmem:[%s2695 + $0x1c0] sm:$0xf]
    %v2809 = vld [vmem:[%s2695 + $0x1c4] sm:$0xf]
    %v2810 = vld [vmem:[%s2695 + $0x1c8] sm:$0xf]
    %v2811 = vld [vmem:[%s2695 + $0x1cc] sm:$0xf]
    %v2812 = vld [vmem:[%s2695 + $0x1d0] sm:$0xf]
    %v2813 = vld [vmem:[%s2695 + $0x1d4] sm:$0xf]
    %v2814 = vld [vmem:[%s2695 + $0x1d8] sm:$0xf]
    %v2815 = vld [vmem:[%s2695 + $0x1dc] sm:$0xf]
    %v2816 = vld [vmem:[%s2695 + $0x1e0] sm:$0xf]
    %v2817 = vld [vmem:[%s2695 + $0x1e4] sm:$0xf]
    %v2818 = vld [vmem:[%s2695 + $0x1e8] sm:$0xf]
    %v2819 = vld [vmem:[%s2695 + $0x1ec] sm:$0xf]
    %v2820 = vld [vmem:[%s2695 + $0x1f0] sm:$0xf]
    %v2821 = vld [vmem:[%s2695 + $0x1f4] sm:$0xf]
    %v2822 = vld [vmem:[%s2695 + $0x1f8] sm:$0xf]
    %v2823 = vld [vmem:[%s2695 + $0x1fc] sm:$0xf]
    %s2824 = scalar_lea.vmem [#allocation4], 512
    %v2825 = vld [vmem:[%s2824] sm:$0xf]
    %v2826 = vld [vmem:[%s2824 + $0x4] sm:$0xf]
    %v2827 = vld [vmem:[%s2824 + $0x8] sm:$0xf]
    %v2828 = vld [vmem:[%s2824 + $0xc] sm:$0xf]
    %v2829 = vld [vmem:[%s2824 + $0x10] sm:$0xf]
    %v2830 = vld [vmem:[%s2824 + $0x14] sm:$0xf]
    %v2831 = vld [vmem:[%s2824 + $0x18] sm:$0xf]
    %v2832 = vld [vmem:[%s2824 + $0x1c] sm:$0xf]
    %v2833 = vld [vmem:[%s2824 + $0x20] sm:$0xf]
    %v2834 = vld [vmem:[%s2824 + $0x24] sm:$0xf]
    %v2835 = vld [vmem:[%s2824 + $0x28] sm:$0xf]
    %v2836 = vld [vmem:[%s2824 + $0x2c] sm:$0xf]
    %v2837 = vld [vmem:[%s2824 + $0x30] sm:$0xf]
    %v2838 = vld [vmem:[%s2824 + $0x34] sm:$0xf]
    %v2839 = vld [vmem:[%s2824 + $0x38] sm:$0xf]
    %v2840 = vld [vmem:[%s2824 + $0x3c] sm:$0xf]
    %v2841 = vld [vmem:[%s2824 + $0x40] sm:$0xf]
    %v2842 = vld [vmem:[%s2824 + $0x44] sm:$0xf]
    %v2843 = vld [vmem:[%s2824 + $0x48] sm:$0xf]
    %v2844 = vld [vmem:[%s2824 + $0x4c] sm:$0xf]
    %v2845 = vld [vmem:[%s2824 + $0x50] sm:$0xf]
    %v2846 = vld [vmem:[%s2824 + $0x54] sm:$0xf]
    %v2847 = vld [vmem:[%s2824 + $0x58] sm:$0xf]
    %v2848 = vld [vmem:[%s2824 + $0x5c] sm:$0xf]
    %v2849 = vld [vmem:[%s2824 + $0x60] sm:$0xf]
    %v2850 = vld [vmem:[%s2824 + $0x64] sm:$0xf]
    %v2851 = vld [vmem:[%s2824 + $0x68] sm:$0xf]
    %v2852 = vld [vmem:[%s2824 + $0x6c] sm:$0xf]
    %v2853 = vld [vmem:[%s2824 + $0x70] sm:$0xf]
    %v2854 = vld [vmem:[%s2824 + $0x74] sm:$0xf]
    %v2855 = vld [vmem:[%s2824 + $0x78] sm:$0xf]
    %v2856 = vld [vmem:[%s2824 + $0x7c] sm:$0xf]
    %v2857 = vld [vmem:[%s2824 + $0x80] sm:$0xf]
    %v2858 = vld [vmem:[%s2824 + $0x84] sm:$0xf]
    %v2859 = vld [vmem:[%s2824 + $0x88] sm:$0xf]
    %v2860 = vld [vmem:[%s2824 + $0x8c] sm:$0xf]
    %v2861 = vld [vmem:[%s2824 + $0x90] sm:$0xf]
    %v2862 = vld [vmem:[%s2824 + $0x94] sm:$0xf]
    %v2863 = vld [vmem:[%s2824 + $0x98] sm:$0xf]
    %v2864 = vld [vmem:[%s2824 + $0x9c] sm:$0xf]
    %v2865 = vld [vmem:[%s2824 + $0xa0] sm:$0xf]
    %v2866 = vld [vmem:[%s2824 + $0xa4] sm:$0xf]
    %v2867 = vld [vmem:[%s2824 + $0xa8] sm:$0xf]
    %v2868 = vld [vmem:[%s2824 + $0xac] sm:$0xf]
    %v2869 = vld [vmem:[%s2824 + $0xb0] sm:$0xf]
    %v2870 = vld [vmem:[%s2824 + $0xb4] sm:$0xf]
    %v2871 = vld [vmem:[%s2824 + $0xb8] sm:$0xf]
    %v2872 = vld [vmem:[%s2824 + $0xbc] sm:$0xf]
    %v2873 = vld [vmem:[%s2824 + $0xc0] sm:$0xf]
    %v2874 = vld [vmem:[%s2824 + $0xc4] sm:$0xf]
    %v2875 = vld [vmem:[%s2824 + $0xc8] sm:$0xf]
    %v2876 = vld [vmem:[%s2824 + $0xcc] sm:$0xf]
    %v2877 = vld [vmem:[%s2824 + $0xd0] sm:$0xf]
    %v2878 = vld [vmem:[%s2824 + $0xd4] sm:$0xf]
    %v2879 = vld [vmem:[%s2824 + $0xd8] sm:$0xf]
    %v2880 = vld [vmem:[%s2824 + $0xdc] sm:$0xf]
    %v2881 = vld [vmem:[%s2824 + $0xe0] sm:$0xf]
    %v2882 = vld [vmem:[%s2824 + $0xe4] sm:$0xf]
    %v2883 = vld [vmem:[%s2824 + $0xe8] sm:$0xf]
    %v2884 = vld [vmem:[%s2824 + $0xec] sm:$0xf]
    %v2885 = vld [vmem:[%s2824 + $0xf0] sm:$0xf]
    %v2886 = vld [vmem:[%s2824 + $0xf4] sm:$0xf]
    %v2887 = vld [vmem:[%s2824 + $0xf8] sm:$0xf]
    %v2888 = vld [vmem:[%s2824 + $0xfc] sm:$0xf]
    %v2889 = vld [vmem:[%s2824 + $0x100] sm:$0xf]
    %v2890 = vld [vmem:[%s2824 + $0x104] sm:$0xf]
    %v2891 = vld [vmem:[%s2824 + $0x108] sm:$0xf]
    %v2892 = vld [vmem:[%s2824 + $0x10c] sm:$0xf]
    %v2893 = vld [vmem:[%s2824 + $0x110] sm:$0xf]
    %v2894 = vld [vmem:[%s2824 + $0x114] sm:$0xf]
    %v2895 = vld [vmem:[%s2824 + $0x118] sm:$0xf]
    %v2896 = vld [vmem:[%s2824 + $0x11c] sm:$0xf]
    %v2897 = vld [vmem:[%s2824 + $0x120] sm:$0xf]
    %v2898 = vld [vmem:[%s2824 + $0x124] sm:$0xf]
    %v2899 = vld [vmem:[%s2824 + $0x128] sm:$0xf]
    %v2900 = vld [vmem:[%s2824 + $0x12c] sm:$0xf]
    %v2901 = vld [vmem:[%s2824 + $0x130] sm:$0xf]
    %v2902 = vld [vmem:[%s2824 + $0x134] sm:$0xf]
    %v2903 = vld [vmem:[%s2824 + $0x138] sm:$0xf]
    %v2904 = vld [vmem:[%s2824 + $0x13c] sm:$0xf]
    %v2905 = vld [vmem:[%s2824 + $0x140] sm:$0xf]
    %v2906 = vld [vmem:[%s2824 + $0x144] sm:$0xf]
    %v2907 = vld [vmem:[%s2824 + $0x148] sm:$0xf]
    %v2908 = vld [vmem:[%s2824 + $0x14c] sm:$0xf]
    %v2909 = vld [vmem:[%s2824 + $0x150] sm:$0xf]
    %v2910 = vld [vmem:[%s2824 + $0x154] sm:$0xf]
    %v2911 = vld [vmem:[%s2824 + $0x158] sm:$0xf]
    %v2912 = vld [vmem:[%s2824 + $0x15c] sm:$0xf]
    %v2913 = vld [vmem:[%s2824 + $0x160] sm:$0xf]
    %v2914 = vld [vmem:[%s2824 + $0x164] sm:$0xf]
    %v2915 = vld [vmem:[%s2824 + $0x168] sm:$0xf]
    %v2916 = vld [vmem:[%s2824 + $0x16c] sm:$0xf]
    %v2917 = vld [vmem:[%s2824 + $0x170] sm:$0xf]
    %v2918 = vld [vmem:[%s2824 + $0x174] sm:$0xf]
    %v2919 = vld [vmem:[%s2824 + $0x178] sm:$0xf]
    %v2920 = vld [vmem:[%s2824 + $0x17c] sm:$0xf]
    %v2921 = vld [vmem:[%s2824 + $0x180] sm:$0xf]
    %v2922 = vld [vmem:[%s2824 + $0x184] sm:$0xf]
    %v2923 = vld [vmem:[%s2824 + $0x188] sm:$0xf]
    %v2924 = vld [vmem:[%s2824 + $0x18c] sm:$0xf]
    %v2925 = vld [vmem:[%s2824 + $0x190] sm:$0xf]
    %v2926 = vld [vmem:[%s2824 + $0x194] sm:$0xf]
    %v2927 = vld [vmem:[%s2824 + $0x198] sm:$0xf]
    %v2928 = vld [vmem:[%s2824 + $0x19c] sm:$0xf]
    %v2929 = vld [vmem:[%s2824 + $0x1a0] sm:$0xf]
    %v2930 = vld [vmem:[%s2824 + $0x1a4] sm:$0xf]
    %v2931 = vld [vmem:[%s2824 + $0x1a8] sm:$0xf]
    %v2932 = vld [vmem:[%s2824 + $0x1ac] sm:$0xf]
    %v2933 = vld [vmem:[%s2824 + $0x1b0] sm:$0xf]
    %v2934 = vld [vmem:[%s2824 + $0x1b4] sm:$0xf]
    %v2935 = vld [vmem:[%s2824 + $0x1b8] sm:$0xf]
    %v2936 = vld [vmem:[%s2824 + $0x1bc] sm:$0xf]
    %v2937 = vld [vmem:[%s2824 + $0x1c0] sm:$0xf]
    %v2938 = vld [vmem:[%s2824 + $0x1c4] sm:$0xf]
    %v2939 = vld [vmem:[%s2824 + $0x1c8] sm:$0xf]
    %v2940 = vld [vmem:[%s2824 + $0x1cc] sm:$0xf]
    %v2941 = vld [vmem:[%s2824 + $0x1d0] sm:$0xf]
    %v2942 = vld [vmem:[%s2824 + $0x1d4] sm:$0xf]
    %v2943 = vld [vmem:[%s2824 + $0x1d8] sm:$0xf]
    %v2944 = vld [vmem:[%s2824 + $0x1dc] sm:$0xf]
    %v2945 = vld [vmem:[%s2824 + $0x1e0] sm:$0xf]
    %v2946 = vld [vmem:[%s2824 + $0x1e4] sm:$0xf]
    %v2947 = vld [vmem:[%s2824 + $0x1e8] sm:$0xf]
    %v2948 = vld [vmem:[%s2824 + $0x1ec] sm:$0xf]
    %v2949 = vld [vmem:[%s2824 + $0x1f0] sm:$0xf]
    %v2950 = vld [vmem:[%s2824 + $0x1f4] sm:$0xf]
    %v2951 = vld [vmem:[%s2824 + $0x1f8] sm:$0xf]
    %v2952 = vld [vmem:[%s2824 + $0x1fc] sm:$0xf]
    %v2961 = vunpack.c.l.b16 %v2825
    %v2962 = vunpack.c.l.b16 %v2826
    %v2963 = vunpack.c.l.b16 %v2827
    %v2964 = vunpack.c.l.b16 %v2828
    %v2965 = vunpack.c.l.b16 %v2829
    %v2966 = vunpack.c.l.b16 %v2830
    %v2967 = vunpack.c.l.b16 %v2831
    %v2968 = vunpack.c.l.b16 %v2832
    %v2969 = vpack.c.b16 %v2962, %v2961
    %v2970 = vpack.c.b16 %v2964, %v2963
    %v2971 = vpack.c.b16 %v2966, %v2965
    %v2972 = vpack.c.b16 %v2968, %v2967
    %v2978 = vsel %vm184, %v2679, 0
    %2980 = vmatpush.bf16.msra.mxu0 0
    %2981 = vmatpush.bf16.msra.mxu0 0
    %2982 = vmatpush.bf16.msra.mxu0 0
    %2983 = vmatpush.bf16.msra.mxu0 0
    %2984 = vmatpush.bf16.msra.mxu0 %v2972
    %2985 = vmatpush.bf16.msra.mxu0 %v2971
    %2986 = vmatpush.bf16.msra.mxu0 %v2970
    %2987 = vmatpush.bf16.msra.mxu0 %v2969
    %2988 = vmatmul.bf16.gmra.mxu0 %v2978
    %v2989 = vpop.f32.mrf.mxu0
    %v2990 = vadd.f32 0.0, %v2989
    %v2991 = vpop.f32.mrf.mxu0
    %2992 = vdwg.mxu0
    %v3001 = vunpack.c.l.b16 %v2833
    %v3002 = vunpack.c.l.b16 %v2834
    %v3003 = vunpack.c.l.b16 %v2835
    %v3004 = vunpack.c.l.b16 %v2836
    %v3005 = vunpack.c.l.b16 %v2837
    %v3006 = vunpack.c.l.b16 %v2838
    %v3007 = vunpack.c.l.b16 %v2839
    %v3008 = vunpack.c.l.b16 %v2840
    %v3009 = vpack.c.b16 %v3002, %v3001
    %v3010 = vpack.c.b16 %v3004, %v3003
    %v3011 = vpack.c.b16 %v3006, %v3005
    %v3012 = vpack.c.b16 %v3008, %v3007
    %v3018 = vsel %vm184, %v2680, 0
    %3020 = vmatpush.bf16.msra.mxu0 0
    %3021 = vmatpush.bf16.msra.mxu0 0
    %3022 = vmatpush.bf16.msra.mxu0 0
    %3023 = vmatpush.bf16.msra.mxu0 0
    %3024 = vmatpush.bf16.msra.mxu0 %v3012
    %3025 = vmatpush.bf16.msra.mxu0 %v3011
    %3026 = vmatpush.bf16.msra.mxu0 %v3010
    %3027 = vmatpush.bf16.msra.mxu0 %v3009
    %3028 = vmatmul.bf16.gmra.mxu0 %v3018
    %v3029 = vpop.f32.mrf.mxu0
    %v3030 = vadd.f32 0.0, %v3029
    %v3031 = vpop.f32.mrf.mxu0
    %3032 = vdwg.mxu0
    %v3041 = vunpack.c.l.b16 %v2841
    %v3042 = vunpack.c.l.b16 %v2842
    %v3043 = vunpack.c.l.b16 %v2843
    %v3044 = vunpack.c.l.b16 %v2844
    %v3045 = vunpack.c.l.b16 %v2845
    %v3046 = vunpack.c.l.b16 %v2846
    %v3047 = vunpack.c.l.b16 %v2847
    %v3048 = vunpack.c.l.b16 %v2848
    %v3049 = vpack.c.b16 %v3042, %v3041
    %v3050 = vpack.c.b16 %v3044, %v3043
    %v3051 = vpack.c.b16 %v3046, %v3045
    %v3052 = vpack.c.b16 %v3048, %v3047
    %v3058 = vsel %vm184, %v2681, 0
    %3060 = vmatpush.bf16.msra.mxu0 0
    %3061 = vmatpush.bf16.msra.mxu0 0
    %3062 = vmatpush.bf16.msra.mxu0 0
    %3063 = vmatpush.bf16.msra.mxu0 0
    %3064 = vmatpush.bf16.msra.mxu0 %v3052
    %3065 = vmatpush.bf16.msra.mxu0 %v3051
    %3066 = vmatpush.bf16.msra.mxu0 %v3050
    %3067 = vmatpush.bf16.msra.mxu0 %v3049
    %3068 = vmatmul.bf16.gmra.mxu0 %v3058
    %v3069 = vpop.f32.mrf.mxu0
    %v3070 = vadd.f32 0.0, %v3069
    %v3071 = vpop.f32.mrf.mxu0
    %3072 = vdwg.mxu0
    %v3081 = vunpack.c.l.b16 %v2849
    %v3082 = vunpack.c.l.b16 %v2850
    %v3083 = vunpack.c.l.b16 %v2851
    %v3084 = vunpack.c.l.b16 %v2852
    %v3085 = vunpack.c.l.b16 %v2853
    %v3086 = vunpack.c.l.b16 %v2854
    %v3087 = vunpack.c.l.b16 %v2855
    %v3088 = vunpack.c.l.b16 %v2856
    %v3089 = vpack.c.b16 %v3082, %v3081
    %v3090 = vpack.c.b16 %v3084, %v3083
    %v3091 = vpack.c.b16 %v3086, %v3085
    %v3092 = vpack.c.b16 %v3088, %v3087
    %v3098 = vsel %vm184, %v2682, 0
    %3100 = vmatpush.bf16.msra.mxu0 0
    %3101 = vmatpush.bf16.msra.mxu0 0
    %3102 = vmatpush.bf16.msra.mxu0 0
    %3103 = vmatpush.bf16.msra.mxu0 0
    %3104 = vmatpush.bf16.msra.mxu0 %v3092
    %3105 = vmatpush.bf16.msra.mxu0 %v3091
    %3106 = vmatpush.bf16.msra.mxu0 %v3090
    %3107 = vmatpush.bf16.msra.mxu0 %v3089
    %3108 = vmatmul.bf16.gmra.mxu0 %v3098
    %v3109 = vpop.f32.mrf.mxu0
    %v3110 = vadd.f32 0.0, %v3109
    %v3111 = vpop.f32.mrf.mxu0
    %3112 = vdwg.mxu0
    %v3121 = vunpack.c.l.b16 %v2857
    %v3122 = vunpack.c.l.b16 %v2858
    %v3123 = vunpack.c.l.b16 %v2859
    %v3124 = vunpack.c.l.b16 %v2860
    %v3125 = vunpack.c.l.b16 %v2861
    %v3126 = vunpack.c.l.b16 %v2862
    %v3127 = vunpack.c.l.b16 %v2863
    %v3128 = vunpack.c.l.b16 %v2864
    %v3129 = vpack.c.b16 %v3122, %v3121
    %v3130 = vpack.c.b16 %v3124, %v3123
    %v3131 = vpack.c.b16 %v3126, %v3125
    %v3132 = vpack.c.b16 %v3128, %v3127
    %v3138 = vsel %vm184, %v2683, 0
    %3140 = vmatpush.bf16.msra.mxu0 0
    %3141 = vmatpush.bf16.msra.mxu0 0
    %3142 = vmatpush.bf16.msra.mxu0 0
    %3143 = vmatpush.bf16.msra.mxu0 0
    %3144 = vmatpush.bf16.msra.mxu0 %v3132
    %3145 = vmatpush.bf16.msra.mxu0 %v3131
    %3146 = vmatpush.bf16.msra.mxu0 %v3130
    %3147 = vmatpush.bf16.msra.mxu0 %v3129
    %3148 = vmatmul.bf16.gmra.mxu0 %v3138
    %v3149 = vpop.f32.mrf.mxu0
    %v3150 = vadd.f32 0.0, %v3149
    %v3151 = vpop.f32.mrf.mxu0
    %3152 = vdwg.mxu0
    %v3161 = vunpack.c.l.b16 %v2865
    %v3162 = vunpack.c.l.b16 %v2866
    %v3163 = vunpack.c.l.b16 %v2867
    %v3164 = vunpack.c.l.b16 %v2868
    %v3165 = vunpack.c.l.b16 %v2869
    %v3166 = vunpack.c.l.b16 %v2870
    %v3167 = vunpack.c.l.b16 %v2871
    %v3168 = vunpack.c.l.b16 %v2872
    %v3169 = vpack.c.b16 %v3162, %v3161
    %v3170 = vpack.c.b16 %v3164, %v3163
    %v3171 = vpack.c.b16 %v3166, %v3165
    %v3172 = vpack.c.b16 %v3168, %v3167
    %v3178 = vsel %vm184, %v2684, 0
    %3180 = vmatpush.bf16.msra.mxu0 0
    %3181 = vmatpush.bf16.msra.mxu0 0
    %3182 = vmatpush.bf16.msra.mxu0 0
    %3183 = vmatpush.bf16.msra.mxu0 0
    %3184 = vmatpush.bf16.msra.mxu0 %v3172
    %3185 = vmatpush.bf16.msra.mxu0 %v3171
    %3186 = vmatpush.bf16.msra.mxu0 %v3170
    %3187 = vmatpush.bf16.msra.mxu0 %v3169
    %3188 = vmatmul.bf16.gmra.mxu0 %v3178
    %v3189 = vpop.f32.mrf.mxu0
    %v3190 = vadd.f32 0.0, %v3189
    %v3191 = vpop.f32.mrf.mxu0
    %3192 = vdwg.mxu0
    %v3201 = vunpack.c.l.b16 %v2873
    %v3202 = vunpack.c.l.b16 %v2874
    %v3203 = vunpack.c.l.b16 %v2875
    %v3204 = vunpack.c.l.b16 %v2876
    %v3205 = vunpack.c.l.b16 %v2877
    %v3206 = vunpack.c.l.b16 %v2878
    %v3207 = vunpack.c.l.b16 %v2879
    %v3208 = vunpack.c.l.b16 %v2880
    %v3209 = vpack.c.b16 %v3202, %v3201
    %v3210 = vpack.c.b16 %v3204, %v3203
    %v3211 = vpack.c.b16 %v3206, %v3205
    %v3212 = vpack.c.b16 %v3208, %v3207
    %v3218 = vsel %vm184, %v2685, 0
    %3220 = vmatpush.bf16.msra.mxu0 0
    %3221 = vmatpush.bf16.msra.mxu0 0
    %3222 = vmatpush.bf16.msra.mxu0 0
    %3223 = vmatpush.bf16.msra.mxu0 0
    %3224 = vmatpush.bf16.msra.mxu0 %v3212
    %3225 = vmatpush.bf16.msra.mxu0 %v3211
    %3226 = vmatpush.bf16.msra.mxu0 %v3210
    %3227 = vmatpush.bf16.msra.mxu0 %v3209
    %3228 = vmatmul.bf16.gmra.mxu0 %v3218
    %v3229 = vpop.f32.mrf.mxu0
    %v3230 = vadd.f32 0.0, %v3229
    %v3231 = vpop.f32.mrf.mxu0
    %3232 = vdwg.mxu0
    %v3241 = vunpack.c.l.b16 %v2881
    %v3242 = vunpack.c.l.b16 %v2882
    %v3243 = vunpack.c.l.b16 %v2883
    %v3244 = vunpack.c.l.b16 %v2884
    %v3245 = vunpack.c.l.b16 %v2885
    %v3246 = vunpack.c.l.b16 %v2886
    %v3247 = vunpack.c.l.b16 %v2887
    %v3248 = vunpack.c.l.b16 %v2888
    %v3249 = vpack.c.b16 %v3242, %v3241
    %v3250 = vpack.c.b16 %v3244, %v3243
    %v3251 = vpack.c.b16 %v3246, %v3245
    %v3252 = vpack.c.b16 %v3248, %v3247
    %v3258 = vsel %vm184, %v2686, 0
    %3260 = vmatpush.bf16.msra.mxu0 0
    %3261 = vmatpush.bf16.msra.mxu0 0
    %3262 = vmatpush.bf16.msra.mxu0 0
    %3263 = vmatpush.bf16.msra.mxu0 0
    %3264 = vmatpush.bf16.msra.mxu0 %v3252
    %3265 = vmatpush.bf16.msra.mxu0 %v3251
    %3266 = vmatpush.bf16.msra.mxu0 %v3250
    %3267 = vmatpush.bf16.msra.mxu0 %v3249
    %3268 = vmatmul.bf16.gmra.mxu0 %v3258
    %v3269 = vpop.f32.mrf.mxu0
    %v3270 = vadd.f32 0.0, %v3269
    %v3271 = vpop.f32.mrf.mxu0
    %3272 = vdwg.mxu0
    %v3281 = vunpack.c.l.b16 %v2889
    %v3282 = vunpack.c.l.b16 %v2890
    %v3283 = vunpack.c.l.b16 %v2891
    %v3284 = vunpack.c.l.b16 %v2892
    %v3285 = vunpack.c.l.b16 %v2893
    %v3286 = vunpack.c.l.b16 %v2894
    %v3287 = vunpack.c.l.b16 %v2895
    %v3288 = vunpack.c.l.b16 %v2896
    %v3289 = vpack.c.b16 %v3282, %v3281
    %v3290 = vpack.c.b16 %v3284, %v3283
    %v3291 = vpack.c.b16 %v3286, %v3285
    %v3292 = vpack.c.b16 %v3288, %v3287
    %v3298 = vsel %vm184, %v2687, 0
    %3300 = vmatpush.bf16.msra.mxu0 0
    %3301 = vmatpush.bf16.msra.mxu0 0
    %3302 = vmatpush.bf16.msra.mxu0 0
    %3303 = vmatpush.bf16.msra.mxu0 0
    %3304 = vmatpush.bf16.msra.mxu0 %v3292
    %3305 = vmatpush.bf16.msra.mxu0 %v3291
    %3306 = vmatpush.bf16.msra.mxu0 %v3290
    %3307 = vmatpush.bf16.msra.mxu0 %v3289
    %3308 = vmatmul.bf16.gmra.mxu0 %v3298
    %v3309 = vpop.f32.mrf.mxu0
    %v3310 = vadd.f32 0.0, %v3309
    %v3311 = vpop.f32.mrf.mxu0
    %3312 = vdwg.mxu0
    %v3321 = vunpack.c.l.b16 %v2897
    %v3322 = vunpack.c.l.b16 %v2898
    %v3323 = vunpack.c.l.b16 %v2899
    %v3324 = vunpack.c.l.b16 %v2900
    %v3325 = vunpack.c.l.b16 %v2901
    %v3326 = vunpack.c.l.b16 %v2902
    %v3327 = vunpack.c.l.b16 %v2903
    %v3328 = vunpack.c.l.b16 %v2904
    %v3329 = vpack.c.b16 %v3322, %v3321
    %v3330 = vpack.c.b16 %v3324, %v3323
    %v3331 = vpack.c.b16 %v3326, %v3325
    %v3332 = vpack.c.b16 %v3328, %v3327
    %v3338 = vsel %vm184, %v2688, 0
    %3340 = vmatpush.bf16.msra.mxu0 0
    %3341 = vmatpush.bf16.msra.mxu0 0
    %3342 = vmatpush.bf16.msra.mxu0 0
    %3343 = vmatpush.bf16.msra.mxu0 0
    %3344 = vmatpush.bf16.msra.mxu0 %v3332
    %3345 = vmatpush.bf16.msra.mxu0 %v3331
    %3346 = vmatpush.bf16.msra.mxu0 %v3330
    %3347 = vmatpush.bf16.msra.mxu0 %v3329
    %3348 = vmatmul.bf16.gmra.mxu0 %v3338
    %v3349 = vpop.f32.mrf.mxu0
    %v3350 = vadd.f32 0.0, %v3349
    %v3351 = vpop.f32.mrf.mxu0
    %3352 = vdwg.mxu0
    %v3361 = vunpack.c.l.b16 %v2905
    %v3362 = vunpack.c.l.b16 %v2906
    %v3363 = vunpack.c.l.b16 %v2907
    %v3364 = vunpack.c.l.b16 %v2908
    %v3365 = vunpack.c.l.b16 %v2909
    %v3366 = vunpack.c.l.b16 %v2910
    %v3367 = vunpack.c.l.b16 %v2911
    %v3368 = vunpack.c.l.b16 %v2912
    %v3369 = vpack.c.b16 %v3362, %v3361
    %v3370 = vpack.c.b16 %v3364, %v3363
    %v3371 = vpack.c.b16 %v3366, %v3365
    %v3372 = vpack.c.b16 %v3368, %v3367
    %v3378 = vsel %vm184, %v2689, 0
    %3380 = vmatpush.bf16.msra.mxu0 0
    %3381 = vmatpush.bf16.msra.mxu0 0
    %3382 = vmatpush.bf16.msra.mxu0 0
    %3383 = vmatpush.bf16.msra.mxu0 0
    %3384 = vmatpush.bf16.msra.mxu0 %v3372
    %3385 = vmatpush.bf16.msra.mxu0 %v3371
    %3386 = vmatpush.bf16.msra.mxu0 %v3370
    %3387 = vmatpush.bf16.msra.mxu0 %v3369
    %3388 = vmatmul.bf16.gmra.mxu0 %v3378
    %v3389 = vpop.f32.mrf.mxu0
    %v3390 = vadd.f32 0.0, %v3389
    %v3391 = vpop.f32.mrf.mxu0
    %3392 = vdwg.mxu0
    %v3401 = vunpack.c.l.b16 %v2913
    %v3402 = vunpack.c.l.b16 %v2914
    %v3403 = vunpack.c.l.b16 %v2915
    %v3404 = vunpack.c.l.b16 %v2916
    %v3405 = vunpack.c.l.b16 %v2917
    %v3406 = vunpack.c.l.b16 %v2918
    %v3407 = vunpack.c.l.b16 %v2919
    %v3408 = vunpack.c.l.b16 %v2920
    %v3409 = vpack.c.b16 %v3402, %v3401
    %v3410 = vpack.c.b16 %v3404, %v3403
    %v3411 = vpack.c.b16 %v3406, %v3405
    %v3412 = vpack.c.b16 %v3408, %v3407
    %v3418 = vsel %vm184, %v2690, 0
    %3420 = vmatpush.bf16.msra.mxu0 0
    %3421 = vmatpush.bf16.msra.mxu0 0
    %3422 = vmatpush.bf16.msra.mxu0 0
    %3423 = vmatpush.bf16.msra.mxu0 0
    %3424 = vmatpush.bf16.msra.mxu0 %v3412
    %3425 = vmatpush.bf16.msra.mxu0 %v3411
    %3426 = vmatpush.bf16.msra.mxu0 %v3410
    %3427 = vmatpush.bf16.msra.mxu0 %v3409
    %3428 = vmatmul.bf16.gmra.mxu0 %v3418
    %v3429 = vpop.f32.mrf.mxu0
    %v3430 = vadd.f32 0.0, %v3429
    %v3431 = vpop.f32.mrf.mxu0
    %3432 = vdwg.mxu0
    %v3441 = vunpack.c.l.b16 %v2921
    %v3442 = vunpack.c.l.b16 %v2922
    %v3443 = vunpack.c.l.b16 %v2923
    %v3444 = vunpack.c.l.b16 %v2924
    %v3445 = vunpack.c.l.b16 %v2925
    %v3446 = vunpack.c.l.b16 %v2926
    %v3447 = vunpack.c.l.b16 %v2927
    %v3448 = vunpack.c.l.b16 %v2928
    %v3449 = vpack.c.b16 %v3442, %v3441
    %v3450 = vpack.c.b16 %v3444, %v3443
    %v3451 = vpack.c.b16 %v3446, %v3445
    %v3452 = vpack.c.b16 %v3448, %v3447
    %v3458 = vsel %vm184, %v2691, 0
    %3460 = vmatpush.bf16.msra.mxu0 0
    %3461 = vmatpush.bf16.msra.mxu0 0
    %3462 = vmatpush.bf16.msra.mxu0 0
    %3463 = vmatpush.bf16.msra.mxu0 0
    %3464 = vmatpush.bf16.msra.mxu0 %v3452
    %3465 = vmatpush.bf16.msra.mxu0 %v3451
    %3466 = vmatpush.bf16.msra.mxu0 %v3450
    %3467 = vmatpush.bf16.msra.mxu0 %v3449
    %3468 = vmatmul.bf16.gmra.mxu0 %v3458
    %v3469 = vpop.f32.mrf.mxu0
    %v3470 = vadd.f32 0.0, %v3469
    %v3471 = vpop.f32.mrf.mxu0
    %3472 = vdwg.mxu0
    %v3481 = vunpack.c.l.b16 %v2929
    %v3482 = vunpack.c.l.b16 %v2930
    %v3483 = vunpack.c.l.b16 %v2931
    %v3484 = vunpack.c.l.b16 %v2932
    %v3485 = vunpack.c.l.b16 %v2933
    %v3486 = vunpack.c.l.b16 %v2934
    %v3487 = vunpack.c.l.b16 %v2935
    %v3488 = vunpack.c.l.b16 %v2936
    %v3489 = vpack.c.b16 %v3482, %v3481
    %v3490 = vpack.c.b16 %v3484, %v3483
    %v3491 = vpack.c.b16 %v3486, %v3485
    %v3492 = vpack.c.b16 %v3488, %v3487
    %v3498 = vsel %vm184, %v2692, 0
    %3500 = vmatpush.bf16.msra.mxu0 0
    %3501 = vmatpush.bf16.msra.mxu0 0
    %3502 = vmatpush.bf16.msra.mxu0 0
    %3503 = vmatpush.bf16.msra.mxu0 0
    %3504 = vmatpush.bf16.msra.mxu0 %v3492
    %3505 = vmatpush.bf16.msra.mxu0 %v3491
    %3506 = vmatpush.bf16.msra.mxu0 %v3490
    %3507 = vmatpush.bf16.msra.mxu0 %v3489
    %3508 = vmatmul.bf16.gmra.mxu0 %v3498
    %v3509 = vpop.f32.mrf.mxu0
    %v3510 = vadd.f32 0.0, %v3509
    %v3511 = vpop.f32.mrf.mxu0
    %3512 = vdwg.mxu0
    %v3521 = vunpack.c.l.b16 %v2937
    %v3522 = vunpack.c.l.b16 %v2938
    %v3523 = vunpack.c.l.b16 %v2939
    %v3524 = vunpack.c.l.b16 %v2940
    %v3525 = vunpack.c.l.b16 %v2941
    %v3526 = vunpack.c.l.b16 %v2942
    %v3527 = vunpack.c.l.b16 %v2943
    %v3528 = vunpack.c.l.b16 %v2944
    %v3529 = vpack.c.b16 %v3522, %v3521
    %v3530 = vpack.c.b16 %v3524, %v3523
    %v3531 = vpack.c.b16 %v3526, %v3525
    %v3532 = vpack.c.b16 %v3528, %v3527
    %v3538 = vsel %vm184, %v2693, 0
    %3540 = vmatpush.bf16.msra.mxu0 0
    %3541 = vmatpush.bf16.msra.mxu0 0
    %3542 = vmatpush.bf16.msra.mxu0 0
    %3543 = vmatpush.bf16.msra.mxu0 0
    %3544 = vmatpush.bf16.msra.mxu0 %v3532
    %3545 = vmatpush.bf16.msra.mxu0 %v3531
    %3546 = vmatpush.bf16.msra.mxu0 %v3530
    %3547 = vmatpush.bf16.msra.mxu0 %v3529
    %3548 = vmatmul.bf16.gmra.mxu0 %v3538
    %v3549 = vpop.f32.mrf.mxu0
    %v3550 = vadd.f32 0.0, %v3549
    %v3551 = vpop.f32.mrf.mxu0
    %3552 = vdwg.mxu0
    %v3561 = vunpack.c.l.b16 %v2945
    %v3562 = vunpack.c.l.b16 %v2946
    %v3563 = vunpack.c.l.b16 %v2947
    %v3564 = vunpack.c.l.b16 %v2948
    %v3565 = vunpack.c.l.b16 %v2949
    %v3566 = vunpack.c.l.b16 %v2950
    %v3567 = vunpack.c.l.b16 %v2951
    %v3568 = vunpack.c.l.b16 %v2952
    %v3569 = vpack.c.b16 %v3562, %v3561
    %v3570 = vpack.c.b16 %v3564, %v3563
    %v3571 = vpack.c.b16 %v3566, %v3565
    %v3572 = vpack.c.b16 %v3568, %v3567
    %v3578 = vsel %vm184, %v2694, 0
    %3580 = vmatpush.bf16.msra.mxu0 0
    %3581 = vmatpush.bf16.msra.mxu0 0
    %3582 = vmatpush.bf16.msra.mxu0 0
    %3583 = vmatpush.bf16.msra.mxu0 0
    %3584 = vmatpush.bf16.msra.mxu0 %v3572
    %3585 = vmatpush.bf16.msra.mxu0 %v3571
    %3586 = vmatpush.bf16.msra.mxu0 %v3570
    %3587 = vmatpush.bf16.msra.mxu0 %v3569
    %3588 = vmatmul.bf16.gmra.mxu0 %v3578
    %v3589 = vpop.f32.mrf.mxu0
    %v3590 = vadd.f32 0.0, %v3589
    %v3591 = vpop.f32.mrf.mxu0
    %3592 = vdwg.mxu0
    %v3601 = vunpack.c.l.b16 %v2696
    %v3602 = vunpack.c.l.b16 %v2697
    %v3603 = vunpack.c.l.b16 %v2698
    %v3604 = vunpack.c.l.b16 %v2699
    %v3605 = vunpack.c.l.b16 %v2700
    %v3606 = vunpack.c.l.b16 %v2701
    %v3607 = vunpack.c.l.b16 %v2702
    %v3608 = vunpack.c.l.b16 %v2703
    %v3609 = vpack.c.b16 %v3602, %v3601
    %v3610 = vpack.c.b16 %v3604, %v3603
    %v3611 = vpack.c.b16 %v3606, %v3605
    %v3612 = vpack.c.b16 %v3608, %v3607
    %v3618 = vsel %vm184, %v2551, 0
    %3620 = vmatpush.bf16.msra.mxu0 0
    %3621 = vmatpush.bf16.msra.mxu0 0
    %3622 = vmatpush.bf16.msra.mxu0 0
    %3623 = vmatpush.bf16.msra.mxu0 0
    %3624 = vmatpush.bf16.msra.mxu0 %v3612
    %3625 = vmatpush.bf16.msra.mxu0 %v3611
    %3626 = vmatpush.bf16.msra.mxu0 %v3610
    %3627 = vmatpush.bf16.msra.mxu0 %v3609
    %3628 = vmatmul.bf16.gmra.mxu0 %v3618
    %v3629 = vpop.f32.mrf.mxu0
    %v3630 = vadd.f32 %v2990, %v3629
    %v3631 = vpop.f32.mrf.mxu0
    %3632 = vdwg.mxu0
    %v3641 = vunpack.c.l.b16 %v2704
    %v3642 = vunpack.c.l.b16 %v2705
    %v3643 = vunpack.c.l.b16 %v2706
    %v3644 = vunpack.c.l.b16 %v2707
    %v3645 = vunpack.c.l.b16 %v2708
    %v3646 = vunpack.c.l.b16 %v2709
    %v3647 = vunpack.c.l.b16 %v2710
    %v3648 = vunpack.c.l.b16 %v2711
    %v3649 = vpack.c.b16 %v3642, %v3641
    %v3650 = vpack.c.b16 %v3644, %v3643
    %v3651 = vpack.c.b16 %v3646, %v3645
    %v3652 = vpack.c.b16 %v3648, %v3647
    %v3658 = vsel %vm184, %v2552, 0
    %3660 = vmatpush.bf16.msra.mxu0 0
    %3661 = vmatpush.bf16.msra.mxu0 0
    %3662 = vmatpush.bf16.msra.mxu0 0
    %3663 = vmatpush.bf16.msra.mxu0 0
    %3664 = vmatpush.bf16.msra.mxu0 %v3652
    %3665 = vmatpush.bf16.msra.mxu0 %v3651
    %3666 = vmatpush.bf16.msra.mxu0 %v3650
    %3667 = vmatpush.bf16.msra.mxu0 %v3649
    %3668 = vmatmul.bf16.gmra.mxu0 %v3658
    %v3669 = vpop.f32.mrf.mxu0
    %v3670 = vadd.f32 %v3030, %v3669
    %v3671 = vpop.f32.mrf.mxu0
    %3672 = vdwg.mxu0
    %v3681 = vunpack.c.l.b16 %v2712
    %v3682 = vunpack.c.l.b16 %v2713
    %v3683 = vunpack.c.l.b16 %v2714
    %v3684 = vunpack.c.l.b16 %v2715
    %v3685 = vunpack.c.l.b16 %v2716
    %v3686 = vunpack.c.l.b16 %v2717
    %v3687 = vunpack.c.l.b16 %v2718
    %v3688 = vunpack.c.l.b16 %v2719
    %v3689 = vpack.c.b16 %v3682, %v3681
    %v3690 = vpack.c.b16 %v3684, %v3683
    %v3691 = vpack.c.b16 %v3686, %v3685
    %v3692 = vpack.c.b16 %v3688, %v3687
    %v3698 = vsel %vm184, %v2553, 0
    %3700 = vmatpush.bf16.msra.mxu0 0
    %3701 = vmatpush.bf16.msra.mxu0 0
    %3702 = vmatpush.bf16.msra.mxu0 0
    %3703 = vmatpush.bf16.msra.mxu0 0
    %3704 = vmatpush.bf16.msra.mxu0 %v3692
    %3705 = vmatpush.bf16.msra.mxu0 %v3691
    %3706 = vmatpush.bf16.msra.mxu0 %v3690
    %3707 = vmatpush.bf16.msra.mxu0 %v3689
    %3708 = vmatmul.bf16.gmra.mxu0 %v3698
    %v3709 = vpop.f32.mrf.mxu0
    %v3710 = vadd.f32 %v3070, %v3709
    %v3711 = vpop.f32.mrf.mxu0
    %3712 = vdwg.mxu0
    %v3721 = vunpack.c.l.b16 %v2720
    %v3722 = vunpack.c.l.b16 %v2721
    %v3723 = vunpack.c.l.b16 %v2722
    %v3724 = vunpack.c.l.b16 %v2723
    %v3725 = vunpack.c.l.b16 %v2724
    %v3726 = vunpack.c.l.b16 %v2725
    %v3727 = vunpack.c.l.b16 %v2726
    %v3728 = vunpack.c.l.b16 %v2727
    %v3729 = vpack.c.b16 %v3722, %v3721
    %v3730 = vpack.c.b16 %v3724, %v3723
    %v3731 = vpack.c.b16 %v3726, %v3725
    %v3732 = vpack.c.b16 %v3728, %v3727
    %v3738 = vsel %vm184, %v2554, 0
    %3740 = vmatpush.bf16.msra.mxu0 0
    %3741 = vmatpush.bf16.msra.mxu0 0
    %3742 = vmatpush.bf16.msra.mxu0 0
    %3743 = vmatpush.bf16.msra.mxu0 0
    %3744 = vmatpush.bf16.msra.mxu0 %v3732
    %3745 = vmatpush.bf16.msra.mxu0 %v3731
    %3746 = vmatpush.bf16.msra.mxu0 %v3730
    %3747 = vmatpush.bf16.msra.mxu0 %v3729
    %3748 = vmatmul.bf16.gmra.mxu0 %v3738
    %v3749 = vpop.f32.mrf.mxu0
    %v3750 = vadd.f32 %v3110, %v3749
    %v3751 = vpop.f32.mrf.mxu0
    %3752 = vdwg.mxu0
    %v3761 = vunpack.c.l.b16 %v2728
    %v3762 = vunpack.c.l.b16 %v2729
    %v3763 = vunpack.c.l.b16 %v2730
    %v3764 = vunpack.c.l.b16 %v2731
    %v3765 = vunpack.c.l.b16 %v2732
    %v3766 = vunpack.c.l.b16 %v2733
    %v3767 = vunpack.c.l.b16 %v2734
    %v3768 = vunpack.c.l.b16 %v2735
    %v3769 = vpack.c.b16 %v3762, %v3761
    %v3770 = vpack.c.b16 %v3764, %v3763
    %v3771 = vpack.c.b16 %v3766, %v3765
    %v3772 = vpack.c.b16 %v3768, %v3767
    %v3778 = vsel %vm184, %v2555, 0
    %3780 = vmatpush.bf16.msra.mxu0 0
    %3781 = vmatpush.bf16.msra.mxu0 0
    %3782 = vmatpush.bf16.msra.mxu0 0
    %3783 = vmatpush.bf16.msra.mxu0 0
    %3784 = vmatpush.bf16.msra.mxu0 %v3772
    %3785 = vmatpush.bf16.msra.mxu0 %v3771
    %3786 = vmatpush.bf16.msra.mxu0 %v3770
    %3787 = vmatpush.bf16.msra.mxu0 %v3769
    %3788 = vmatmul.bf16.gmra.mxu0 %v3778
    %v3789 = vpop.f32.mrf.mxu0
    %v3790 = vadd.f32 %v3150, %v3789
    %v3791 = vpop.f32.mrf.mxu0
    %3792 = vdwg.mxu0
    %v3801 = vunpack.c.l.b16 %v2736
    %v3802 = vunpack.c.l.b16 %v2737
    %v3803 = vunpack.c.l.b16 %v2738
    %v3804 = vunpack.c.l.b16 %v2739
    %v3805 = vunpack.c.l.b16 %v2740
    %v3806 = vunpack.c.l.b16 %v2741
    %v3807 = vunpack.c.l.b16 %v2742
    %v3808 = vunpack.c.l.b16 %v2743
    %v3809 = vpack.c.b16 %v3802, %v3801
    %v3810 = vpack.c.b16 %v3804, %v3803
    %v3811 = vpack.c.b16 %v3806, %v3805
    %v3812 = vpack.c.b16 %v3808, %v3807
    %v3818 = vsel %vm184, %v2556, 0
    %3820 = vmatpush.bf16.msra.mxu0 0
    %3821 = vmatpush.bf16.msra.mxu0 0
    %3822 = vmatpush.bf16.msra.mxu0 0
    %3823 = vmatpush.bf16.msra.mxu0 0
    %3824 = vmatpush.bf16.msra.mxu0 %v3812
    %3825 = vmatpush.bf16.msra.mxu0 %v3811
    %3826 = vmatpush.bf16.msra.mxu0 %v3810
    %3827 = vmatpush.bf16.msra.mxu0 %v3809
    %3828 = vmatmul.bf16.gmra.mxu0 %v3818
    %v3829 = vpop.f32.mrf.mxu0
    %v3830 = vadd.f32 %v3190, %v3829
    %v3831 = vpop.f32.mrf.mxu0
    %3832 = vdwg.mxu0
    %v3841 = vunpack.c.l.b16 %v2744
    %v3842 = vunpack.c.l.b16 %v2745
    %v3843 = vunpack.c.l.b16 %v2746
    %v3844 = vunpack.c.l.b16 %v2747
    %v3845 = vunpack.c.l.b16 %v2748
    %v3846 = vunpack.c.l.b16 %v2749
    %v3847 = vunpack.c.l.b16 %v2750
    %v3848 = vunpack.c.l.b16 %v2751
    %v3849 = vpack.c.b16 %v3842, %v3841
    %v3850 = vpack.c.b16 %v3844, %v3843
    %v3851 = vpack.c.b16 %v3846, %v3845
    %v3852 = vpack.c.b16 %v3848, %v3847
    %v3858 = vsel %vm184, %v2557, 0
    %3860 = vmatpush.bf16.msra.mxu0 0
    %3861 = vmatpush.bf16.msra.mxu0 0
    %3862 = vmatpush.bf16.msra.mxu0 0
    %3863 = vmatpush.bf16.msra.mxu0 0
    %3864 = vmatpush.bf16.msra.mxu0 %v3852
    %3865 = vmatpush.bf16.msra.mxu0 %v3851
    %3866 = vmatpush.bf16.msra.mxu0 %v3850
    %3867 = vmatpush.bf16.msra.mxu0 %v3849
    %3868 = vmatmul.bf16.gmra.mxu0 %v3858
    %v3869 = vpop.f32.mrf.mxu0
    %v3870 = vadd.f32 %v3230, %v3869
    %v3871 = vpop.f32.mrf.mxu0
    %3872 = vdwg.mxu0
    %v3881 = vunpack.c.l.b16 %v2752
    %v3882 = vunpack.c.l.b16 %v2753
    %v3883 = vunpack.c.l.b16 %v2754
    %v3884 = vunpack.c.l.b16 %v2755
    %v3885 = vunpack.c.l.b16 %v2756
    %v3886 = vunpack.c.l.b16 %v2757
    %v3887 = vunpack.c.l.b16 %v2758
    %v3888 = vunpack.c.l.b16 %v2759
    %v3889 = vpack.c.b16 %v3882, %v3881
    %v3890 = vpack.c.b16 %v3884, %v3883
    %v3891 = vpack.c.b16 %v3886, %v3885
    %v3892 = vpack.c.b16 %v3888, %v3887
    %v3898 = vsel %vm184, %v2558, 0
    %3900 = vmatpush.bf16.msra.mxu0 0
    %3901 = vmatpush.bf16.msra.mxu0 0
    %3902 = vmatpush.bf16.msra.mxu0 0
    %3903 = vmatpush.bf16.msra.mxu0 0
    %3904 = vmatpush.bf16.msra.mxu0 %v3892
    %3905 = vmatpush.bf16.msra.mxu0 %v3891
    %3906 = vmatpush.bf16.msra.mxu0 %v3890
    %3907 = vmatpush.bf16.msra.mxu0 %v3889
    %3908 = vmatmul.bf16.gmra.mxu0 %v3898
    %v3909 = vpop.f32.mrf.mxu0
    %v3910 = vadd.f32 %v3270, %v3909
    %v3911 = vpop.f32.mrf.mxu0
    %3912 = vdwg.mxu0
    %v3921 = vunpack.c.l.b16 %v2760
    %v3922 = vunpack.c.l.b16 %v2761
    %v3923 = vunpack.c.l.b16 %v2762
    %v3924 = vunpack.c.l.b16 %v2763
    %v3925 = vunpack.c.l.b16 %v2764
    %v3926 = vunpack.c.l.b16 %v2765
    %v3927 = vunpack.c.l.b16 %v2766
    %v3928 = vunpack.c.l.b16 %v2767
    %v3929 = vpack.c.b16 %v3922, %v3921
    %v3930 = vpack.c.b16 %v3924, %v3923
    %v3931 = vpack.c.b16 %v3926, %v3925
    %v3932 = vpack.c.b16 %v3928, %v3927
    %v3938 = vsel %vm184, %v2559, 0
    %3940 = vmatpush.bf16.msra.mxu0 0
    %3941 = vmatpush.bf16.msra.mxu0 0
    %3942 = vmatpush.bf16.msra.mxu0 0
    %3943 = vmatpush.bf16.msra.mxu0 0
    %3944 = vmatpush.bf16.msra.mxu0 %v3932
    %3945 = vmatpush.bf16.msra.mxu0 %v3931
    %3946 = vmatpush.bf16.msra.mxu0 %v3930
    %3947 = vmatpush.bf16.msra.mxu0 %v3929
    %3948 = vmatmul.bf16.gmra.mxu0 %v3938
    %v3949 = vpop.f32.mrf.mxu0
    %v3950 = vadd.f32 %v3310, %v3949
    %v3951 = vpop.f32.mrf.mxu0
    %3952 = vdwg.mxu0
    %v3961 = vunpack.c.l.b16 %v2768
    %v3962 = vunpack.c.l.b16 %v2769
    %v3963 = vunpack.c.l.b16 %v2770
    %v3964 = vunpack.c.l.b16 %v2771
    %v3965 = vunpack.c.l.b16 %v2772
    %v3966 = vunpack.c.l.b16 %v2773
    %v3967 = vunpack.c.l.b16 %v2774
    %v3968 = vunpack.c.l.b16 %v2775
    %v3969 = vpack.c.b16 %v3962, %v3961
    %v3970 = vpack.c.b16 %v3964, %v3963
    %v3971 = vpack.c.b16 %v3966, %v3965
    %v3972 = vpack.c.b16 %v3968, %v3967
    %v3978 = vsel %vm184, %v2560, 0
    %3980 = vmatpush.bf16.msra.mxu0 0
    %3981 = vmatpush.bf16.msra.mxu0 0
    %3982 = vmatpush.bf16.msra.mxu0 0
    %3983 = vmatpush.bf16.msra.mxu0 0
    %3984 = vmatpush.bf16.msra.mxu0 %v3972
    %3985 = vmatpush.bf16.msra.mxu0 %v3971
    %3986 = vmatpush.bf16.msra.mxu0 %v3970
    %3987 = vmatpush.bf16.msra.mxu0 %v3969
    %3988 = vmatmul.bf16.gmra.mxu0 %v3978
    %v3989 = vpop.f32.mrf.mxu0
    %v3990 = vadd.f32 %v3350, %v3989
    %v3991 = vpop.f32.mrf.mxu0
    %3992 = vdwg.mxu0
    %v4001 = vunpack.c.l.b16 %v2776
    %v4002 = vunpack.c.l.b16 %v2777
    %v4003 = vunpack.c.l.b16 %v2778
    %v4004 = vunpack.c.l.b16 %v2779
    %v4005 = vunpack.c.l.b16 %v2780
    %v4006 = vunpack.c.l.b16 %v2781
    %v4007 = vunpack.c.l.b16 %v2782
    %v4008 = vunpack.c.l.b16 %v2783
    %v4009 = vpack.c.b16 %v4002, %v4001
    %v4010 = vpack.c.b16 %v4004, %v4003
    %v4011 = vpack.c.b16 %v4006, %v4005
    %v4012 = vpack.c.b16 %v4008, %v4007
    %v4018 = vsel %vm184, %v2561, 0
    %4020 = vmatpush.bf16.msra.mxu0 0
    %4021 = vmatpush.bf16.msra.mxu0 0
    %4022 = vmatpush.bf16.msra.mxu0 0
    %4023 = vmatpush.bf16.msra.mxu0 0
    %4024 = vmatpush.bf16.msra.mxu0 %v4012
    %4025 = vmatpush.bf16.msra.mxu0 %v4011
    %4026 = vmatpush.bf16.msra.mxu0 %v4010
    %4027 = vmatpush.bf16.msra.mxu0 %v4009
    %4028 = vmatmul.bf16.gmra.mxu0 %v4018
    %v4029 = vpop.f32.mrf.mxu0
    %v4030 = vadd.f32 %v3390, %v4029
    %v4031 = vpop.f32.mrf.mxu0
    %4032 = vdwg.mxu0
    %v4041 = vunpack.c.l.b16 %v2784
    %v4042 = vunpack.c.l.b16 %v2785
    %v4043 = vunpack.c.l.b16 %v2786
    %v4044 = vunpack.c.l.b16 %v2787
    %v4045 = vunpack.c.l.b16 %v2788
    %v4046 = vunpack.c.l.b16 %v2789
    %v4047 = vunpack.c.l.b16 %v2790
    %v4048 = vunpack.c.l.b16 %v2791
    %v4049 = vpack.c.b16 %v4042, %v4041
    %v4050 = vpack.c.b16 %v4044, %v4043
    %v4051 = vpack.c.b16 %v4046, %v4045
    %v4052 = vpack.c.b16 %v4048, %v4047
    %v4058 = vsel %vm184, %v2562, 0
    %4060 = vmatpush.bf16.msra.mxu0 0
    %4061 = vmatpush.bf16.msra.mxu0 0
    %4062 = vmatpush.bf16.msra.mxu0 0
    %4063 = vmatpush.bf16.msra.mxu0 0
    %4064 = vmatpush.bf16.msra.mxu0 %v4052
    %4065 = vmatpush.bf16.msra.mxu0 %v4051
    %4066 = vmatpush.bf16.msra.mxu0 %v4050
    %4067 = vmatpush.bf16.msra.mxu0 %v4049
    %4068 = vmatmul.bf16.gmra.mxu0 %v4058
    %v4069 = vpop.f32.mrf.mxu0
    %v4070 = vadd.f32 %v3430, %v4069
    %v4071 = vpop.f32.mrf.mxu0
    %4072 = vdwg.mxu0
    %v4081 = vunpack.c.l.b16 %v2792
    %v4082 = vunpack.c.l.b16 %v2793
    %v4083 = vunpack.c.l.b16 %v2794
    %v4084 = vunpack.c.l.b16 %v2795
    %v4085 = vunpack.c.l.b16 %v2796
    %v4086 = vunpack.c.l.b16 %v2797
    %v4087 = vunpack.c.l.b16 %v2798
    %v4088 = vunpack.c.l.b16 %v2799
    %v4089 = vpack.c.b16 %v4082, %v4081
    %v4090 = vpack.c.b16 %v4084, %v4083
    %v4091 = vpack.c.b16 %v4086, %v4085
    %v4092 = vpack.c.b16 %v4088, %v4087
    %v4098 = vsel %vm184, %v2563, 0
    %4100 = vmatpush.bf16.msra.mxu0 0
    %4101 = vmatpush.bf16.msra.mxu0 0
    %4102 = vmatpush.bf16.msra.mxu0 0
    %4103 = vmatpush.bf16.msra.mxu0 0
    %4104 = vmatpush.bf16.msra.mxu0 %v4092
    %4105 = vmatpush.bf16.msra.mxu0 %v4091
    %4106 = vmatpush.bf16.msra.mxu0 %v4090
    %4107 = vmatpush.bf16.msra.mxu0 %v4089
    %4108 = vmatmul.bf16.gmra.mxu0 %v4098
    %v4109 = vpop.f32.mrf.mxu0
    %v4110 = vadd.f32 %v3470, %v4109
    %v4111 = vpop.f32.mrf.mxu0
    %4112 = vdwg.mxu0
    %v4121 = vunpack.c.l.b16 %v2800
    %v4122 = vunpack.c.l.b16 %v2801
    %v4123 = vunpack.c.l.b16 %v2802
    %v4124 = vunpack.c.l.b16 %v2803
    %v4125 = vunpack.c.l.b16 %v2804
    %v4126 = vunpack.c.l.b16 %v2805
    %v4127 = vunpack.c.l.b16 %v2806
    %v4128 = vunpack.c.l.b16 %v2807
    %v4129 = vpack.c.b16 %v4122, %v4121
    %v4130 = vpack.c.b16 %v4124, %v4123
    %v4131 = vpack.c.b16 %v4126, %v4125
    %v4132 = vpack.c.b16 %v4128, %v4127
    %v4138 = vsel %vm184, %v2564, 0
    %4140 = vmatpush.bf16.msra.mxu0 0
    %4141 = vmatpush.bf16.msra.mxu0 0
    %4142 = vmatpush.bf16.msra.mxu0 0
    %4143 = vmatpush.bf16.msra.mxu0 0
    %4144 = vmatpush.bf16.msra.mxu0 %v4132
    %4145 = vmatpush.bf16.msra.mxu0 %v4131
    %4146 = vmatpush.bf16.msra.mxu0 %v4130
    %4147 = vmatpush.bf16.msra.mxu0 %v4129
    %4148 = vmatmul.bf16.gmra.mxu0 %v4138
    %v4149 = vpop.f32.mrf.mxu0
    %v4150 = vadd.f32 %v3510, %v4149
    %v4151 = vpop.f32.mrf.mxu0
    %4152 = vdwg.mxu0
    %v4161 = vunpack.c.l.b16 %v2808
    %v4162 = vunpack.c.l.b16 %v2809
    %v4163 = vunpack.c.l.b16 %v2810
    %v4164 = vunpack.c.l.b16 %v2811
    %v4165 = vunpack.c.l.b16 %v2812
    %v4166 = vunpack.c.l.b16 %v2813
    %v4167 = vunpack.c.l.b16 %v2814
    %v4168 = vunpack.c.l.b16 %v2815
    %v4169 = vpack.c.b16 %v4162, %v4161
    %v4170 = vpack.c.b16 %v4164, %v4163
    %v4171 = vpack.c.b16 %v4166, %v4165
    %v4172 = vpack.c.b16 %v4168, %v4167
    %v4178 = vsel %vm184, %v2565, 0
    %4180 = vmatpush.bf16.msra.mxu0 0
    %4181 = vmatpush.bf16.msra.mxu0 0
    %4182 = vmatpush.bf16.msra.mxu0 0
    %4183 = vmatpush.bf16.msra.mxu0 0
    %4184 = vmatpush.bf16.msra.mxu0 %v4172
    %4185 = vmatpush.bf16.msra.mxu0 %v4171
    %4186 = vmatpush.bf16.msra.mxu0 %v4170
    %4187 = vmatpush.bf16.msra.mxu0 %v4169
    %4188 = vmatmul.bf16.gmra.mxu0 %v4178
    %v4189 = vpop.f32.mrf.mxu0
    %v4190 = vadd.f32 %v3550, %v4189
    %v4191 = vpop.f32.mrf.mxu0
    %4192 = vdwg.mxu0
    %v4201 = vunpack.c.l.b16 %v2816
    %v4202 = vunpack.c.l.b16 %v2817
    %v4203 = vunpack.c.l.b16 %v2818
    %v4204 = vunpack.c.l.b16 %v2819
    %v4205 = vunpack.c.l.b16 %v2820
    %v4206 = vunpack.c.l.b16 %v2821
    %v4207 = vunpack.c.l.b16 %v2822
    %v4208 = vunpack.c.l.b16 %v2823
    %v4209 = vpack.c.b16 %v4202, %v4201
    %v4210 = vpack.c.b16 %v4204, %v4203
    %v4211 = vpack.c.b16 %v4206, %v4205
    %v4212 = vpack.c.b16 %v4208, %v4207
    %v4218 = vsel %vm184, %v2566, 0
    %4220 = vmatpush.bf16.msra.mxu0 0
    %4221 = vmatpush.bf16.msra.mxu0 0
    %4222 = vmatpush.bf16.msra.mxu0 0
    %4223 = vmatpush.bf16.msra.mxu0 0
    %4224 = vmatpush.bf16.msra.mxu0 %v4212
    %4225 = vmatpush.bf16.msra.mxu0 %v4211
    %4226 = vmatpush.bf16.msra.mxu0 %v4210
    %4227 = vmatpush.bf16.msra.mxu0 %v4209
    %4228 = vmatmul.bf16.gmra.mxu0 %v4218
    %v4229 = vpop.f32.mrf.mxu0
    %v4230 = vadd.f32 %v3590, %v4229
    %v4231 = vpop.f32.mrf.mxu0
    %4232 = vdwg.mxu0
    %v4233 = vrot.slane %v3710, 4
    %v4234 = vsel %vm219, %v4233, %v3630
    %v4236 = vunpack.c.l.s4 1983009808
    %v4237 = vunpack.c.0.s8 %v4236
    %v4238 = vperm.slane %v4234, %v4237
    %v4239 = vrot.slane %v3750, 4
    %v4240 = vsel %vm219, %v4239, %v3670
    %v4242 = vunpack.c.l.s4 1983009808
    %v4243 = vunpack.c.0.s8 %v4242
    %v4244 = vperm.slane %v4240, %v4243
    %v4245 = vrot.slane %v3870, 4
    %v4246 = vsel %vm219, %v4245, %v3790
    %v4248 = vunpack.c.l.s4 1983009808
    %v4249 = vunpack.c.0.s8 %v4248
    %v4250 = vperm.slane %v4246, %v4249
    %v4251 = vrot.slane %v3910, 4
    %v4252 = vsel %vm219, %v4251, %v3830
    %v4254 = vunpack.c.l.s4 1983009808
    %v4255 = vunpack.c.0.s8 %v4254
    %v4256 = vperm.slane %v4252, %v4255
    %v4257 = vrot.slane %v4244, 4
    %v4258 = vsel %vm219, %v4257, %v4238
    %v4260 = vunpack.c.l.s4 1934713408
    %v4261 = vunpack.c.0.s8 %v4260
    %v4262 = vperm.slane %v4258, %v4261
    %v4263 = vrot.slane %v4256, 4
    %v4264 = vsel %vm219, %v4263, %v4250
    %v4266 = vunpack.c.l.s4 1934713408
    %v4267 = vunpack.c.0.s8 %v4266
    %v4268 = vperm.slane %v4264, %v4267
    %v4269 = vrot.slane %v4268, 4
    %v4270 = vsel %vm219, %v4269, %v4262
    %v4271 = vrot.slane %v4262, 4
    %v4272 = vsel %vm219, %v4268, %v4271
    %v4273 = vrot.slane %v4030, 4
    %v4274 = vsel %vm219, %v4273, %v3950
    %v4276 = vunpack.c.l.s4 1983009808
    %v4277 = vunpack.c.0.s8 %v4276
    %v4278 = vperm.slane %v4274, %v4277
    %v4279 = vrot.slane %v4070, 4
    %v4280 = vsel %vm219, %v4279, %v3990
    %v4282 = vunpack.c.l.s4 1983009808
    %v4283 = vunpack.c.0.s8 %v4282
    %v4284 = vperm.slane %v4280, %v4283
    %v4285 = vrot.slane %v4190, 4
    %v4286 = vsel %vm219, %v4285, %v4110
    %v4288 = vunpack.c.l.s4 1983009808
    %v4289 = vunpack.c.0.s8 %v4288
    %v4290 = vperm.slane %v4286, %v4289
    %v4291 = vrot.slane %v4230, 4
    %v4292 = vsel %vm219, %v4291, %v4150
    %v4294 = vunpack.c.l.s4 1983009808
    %v4295 = vunpack.c.0.s8 %v4294
    %v4296 = vperm.slane %v4292, %v4295
    %v4297 = vrot.slane %v4284, 4
    %v4298 = vsel %vm219, %v4297, %v4278
    %v4300 = vunpack.c.l.s4 1934713408
    %v4301 = vunpack.c.0.s8 %v4300
    %v4302 = vperm.slane %v4298, %v4301
    %v4303 = vrot.slane %v4296, 4
    %v4304 = vsel %vm219, %v4303, %v4290
    %v4306 = vunpack.c.l.s4 1934713408
    %v4307 = vunpack.c.0.s8 %v4306
    %v4308 = vperm.slane %v4304, %v4307
    %v4309 = vrot.slane %v4308, 4
    %v4310 = vsel %vm219, %v4309, %v4302
    %v4311 = vrot.slane %v4302, 4
    %v4312 = vsel %vm219, %v4308, %v4311
    %4315 = vrot.lane.b32.xlu0 %v4272, 64
    %v4316 = vpop.permute.xlu0 %4315
    %4317 = vrot.lane.b32.xlu0 %v4312, 64
    %v4318 = vpop.permute.xlu0 %4317
    %v4321 = vsel %vm184, %v4270, %v4316
    %v4322 = vsel %vm184, %v4310, %v4318
    %4339 = vrot.lane.b32.xlu0 %v3630, 64
    %v4340 = vpop.permute.xlu0 %4339
    %4341 = vrot.lane.b32.xlu0 %v3670, 64
    %v4342 = vpop.permute.xlu0 %4341
    %4343 = vrot.lane.b32.xlu0 %v3710, 64
    %v4344 = vpop.permute.xlu0 %4343
    %4345 = vrot.lane.b32.xlu0 %v3750, 64
    %v4346 = vpop.permute.xlu0 %4345
    %4347 = vrot.lane.b32.xlu0 %v3790, 64
    %v4348 = vpop.permute.xlu0 %4347
    %4349 = vrot.lane.b32.xlu0 %v3830, 64
    %v4350 = vpop.permute.xlu0 %4349
    %4351 = vrot.lane.b32.xlu0 %v3870, 64
    %v4352 = vpop.permute.xlu0 %4351
    %4353 = vrot.lane.b32.xlu0 %v3910, 64
    %v4354 = vpop.permute.xlu0 %4353
    %4355 = vrot.lane.b32.xlu0 %v3950, 64
    %v4356 = vpop.permute.xlu0 %4355
    %4357 = vrot.lane.b32.xlu0 %v3990, 64
    %v4358 = vpop.permute.xlu0 %4357
    %4359 = vrot.lane.b32.xlu0 %v4030, 64
    %v4360 = vpop.permute.xlu0 %4359
    %4361 = vrot.lane.b32.xlu0 %v4070, 64
    %v4362 = vpop.permute.xlu0 %4361
    %4363 = vrot.lane.b32.xlu0 %v4110, 64
    %v4364 = vpop.permute.xlu0 %4363
    %4365 = vrot.lane.b32.xlu0 %v4150, 64
    %v4366 = vpop.permute.xlu0 %4365
    %4367 = vrot.lane.b32.xlu0 %v4190, 64
    %v4368 = vpop.permute.xlu0 %4367
    %4369 = vrot.lane.b32.xlu0 %v4230, 64
    %v4370 = vpop.permute.xlu0 %4369
    %v4387 = vrot.slane %v4344, 4
    %v4388 = vsel %vm219, %v4387, %v4340
    %v4390 = vunpack.c.l.s4 1983009808
    %v4391 = vunpack.c.0.s8 %v4390
    %v4392 = vperm.slane %v4388, %v4391
    %v4393 = vrot.slane %v4346, 4
    %v4394 = vsel %vm219, %v4393, %v4342
    %v4396 = vunpack.c.l.s4 1983009808
    %v4397 = vunpack.c.0.s8 %v4396
    %v4398 = vperm.slane %v4394, %v4397
    %v4399 = vrot.slane %v4352, 4
    %v4400 = vsel %vm219, %v4399, %v4348
    %v4402 = vunpack.c.l.s4 1983009808
    %v4403 = vunpack.c.0.s8 %v4402
    %v4404 = vperm.slane %v4400, %v4403
    %v4405 = vrot.slane %v4354, 4
    %v4406 = vsel %vm219, %v4405, %v4350
    %v4408 = vunpack.c.l.s4 1983009808
    %v4409 = vunpack.c.0.s8 %v4408
    %v4410 = vperm.slane %v4406, %v4409
    %v4411 = vrot.slane %v4398, 4
    %v4412 = vsel %vm219, %v4411, %v4392
    %v4414 = vunpack.c.l.s4 1934713408
    %v4415 = vunpack.c.0.s8 %v4414
    %v4416 = vperm.slane %v4412, %v4415
    %v4417 = vrot.slane %v4410, 4
    %v4418 = vsel %vm219, %v4417, %v4404
    %v4420 = vunpack.c.l.s4 1934713408
    %v4421 = vunpack.c.0.s8 %v4420
    %v4422 = vperm.slane %v4418, %v4421
    %v4423 = vrot.slane %v4422, 4
    %v4424 = vsel %vm219, %v4423, %v4416
    %v4425 = vrot.slane %v4416, 4
    %v4426 = vsel %vm219, %v4422, %v4425
    %v4427 = vrot.slane %v4360, 4
    %v4428 = vsel %vm219, %v4427, %v4356
    %v4430 = vunpack.c.l.s4 1983009808
    %v4431 = vunpack.c.0.s8 %v4430
    %v4432 = vperm.slane %v4428, %v4431
    %v4433 = vrot.slane %v4362, 4
    %v4434 = vsel %vm219, %v4433, %v4358
    %v4436 = vunpack.c.l.s4 1983009808
    %v4437 = vunpack.c.0.s8 %v4436
    %v4438 = vperm.slane %v4434, %v4437
    %v4439 = vrot.slane %v4368, 4
    %v4440 = vsel %vm219, %v4439, %v4364
    %v4442 = vunpack.c.l.s4 1983009808
    %v4443 = vunpack.c.0.s8 %v4442
    %v4444 = vperm.slane %v4440, %v4443
    %v4445 = vrot.slane %v4370, 4
    %v4446 = vsel %vm219, %v4445, %v4366
    %v4448 = vunpack.c.l.s4 1983009808
    %v4449 = vunpack.c.0.s8 %v4448
    %v4450 = vperm.slane %v4446, %v4449
    %v4451 = vrot.slane %v4438, 4
    %v4452 = vsel %vm219, %v4451, %v4432
    %v4454 = vunpack.c.l.s4 1934713408
    %v4455 = vunpack.c.0.s8 %v4454
    %v4456 = vperm.slane %v4452, %v4455
    %v4457 = vrot.slane %v4450, 4
    %v4458 = vsel %vm219, %v4457, %v4444
    %v4460 = vunpack.c.l.s4 1934713408
    %v4461 = vunpack.c.0.s8 %v4460
    %v4462 = vperm.slane %v4458, %v4461
    %v4463 = vrot.slane %v4462, 4
    %v4464 = vsel %vm219, %v4463, %v4456
    %v4465 = vrot.slane %v4456, 4
    %v4466 = vsel %vm219, %v4462, %v4465
    %4469 = vrot.lane.b32.xlu0 %v4426, 64
    %v4470 = vpop.permute.xlu0 %4469
    %4471 = vrot.lane.b32.xlu0 %v4466, 64
    %v4472 = vpop.permute.xlu0 %4471
    %v4475 = vsel %vm184, %v4424, %v4470
    %v4476 = vsel %vm184, %v4464, %v4472
    %v4477 = vpack.c.bf16 %v4322, %v4321
    %v4478 = vpack.c.bf16 %v4476, %v4475
    %s4479 = scalar_lea.vmem [#allocation6], 64
    %v4480 = vld [vmem:[%s4479] sm:$0xf]
    %v4481 = vld [vmem:[%s4479 + $0x4] sm:$0xf]
    %v4482 = vld [vmem:[%s4479 + $0x8] sm:$0xf]
    %v4483 = vld [vmem:[%s4479 + $0xc] sm:$0xf]
    %v4484 = vld [vmem:[%s4479 + $0x10] sm:$0xf]
    %v4485 = vld [vmem:[%s4479 + $0x14] sm:$0xf]
    %v4486 = vld [vmem:[%s4479 + $0x18] sm:$0xf]
    %v4487 = vld [vmem:[%s4479 + $0x1c] sm:$0xf]
    %v4488 = vld [vmem:[%s4479 + $0x20] sm:$0xf]
    %v4489 = vld [vmem:[%s4479 + $0x24] sm:$0xf]
    %v4490 = vld [vmem:[%s4479 + $0x28] sm:$0xf]
    %v4491 = vld [vmem:[%s4479 + $0x2c] sm:$0xf]
    %v4492 = vld [vmem:[%s4479 + $0x30] sm:$0xf]
    %v4493 = vld [vmem:[%s4479 + $0x34] sm:$0xf]
    %v4494 = vld [vmem:[%s4479 + $0x38] sm:$0xf]
    %v4495 = vld [vmem:[%s4479 + $0x3c] sm:$0xf]
    %s4496 = scalar_lea.vmem %s8, 1
    %v4497 = vld [vmem:[%s4496] sm:$0x1]
    %v4499 = vperm.slane %v4497, 0
    %v4517 = vunpack.c.l.b16 %v4480
    %v4518 = vunpack.c.l.b16 %v4481
    %v4519 = vunpack.c.l.b16 %v4482
    %v4520 = vunpack.c.l.b16 %v4483
    %v4521 = vunpack.c.l.b16 %v4484
    %v4522 = vunpack.c.l.b16 %v4485
    %v4523 = vunpack.c.l.b16 %v4486
    %v4524 = vunpack.c.l.b16 %v4487
    %v4525 = vunpack.c.l.b16 %v4488
    %v4526 = vunpack.c.l.b16 %v4489
    %v4527 = vunpack.c.l.b16 %v4490
    %v4528 = vunpack.c.l.b16 %v4491
    %v4529 = vunpack.c.l.b16 %v4492
    %v4530 = vunpack.c.l.b16 %v4493
    %v4531 = vunpack.c.l.b16 %v4494
    %v4532 = vunpack.c.l.b16 %v4495
    %v4533 = vpack.c.b16 %v4518, %v4517
    %v4534 = vpack.c.b16 %v4520, %v4519
    %v4535 = vpack.c.b16 %v4522, %v4521
    %v4536 = vpack.c.b16 %v4524, %v4523
    %v4537 = vpack.c.b16 %v4526, %v4525
    %v4538 = vpack.c.b16 %v4528, %v4527
    %v4539 = vpack.c.b16 %v4530, %v4529
    %v4540 = vpack.c.b16 %v4532, %v4531
    %4549 = vmatpush.bf16.msra.mxu0 %v4540
    %4550 = vmatpush.bf16.msra.mxu0 %v4539
    %4551 = vmatpush.bf16.msra.mxu0 %v4538
    %4552 = vmatpush.bf16.msra.mxu0 %v4537
    %4553 = vmatpush.bf16.msra.mxu0 %v4536
    %4554 = vmatpush.bf16.msra.mxu0 %v4535
    %4555 = vmatpush.bf16.msra.mxu0 %v4534
    %4556 = vmatpush.bf16.msra.mxu0 %v4533
    %4557 = vmatmul.bf16.gmra.mxu0 %v2416
    %v4558 = vpop.f32.mrf.mxu0
    %v4559 = vadd.f32 %v4499, %v4558
    %v4560 = vpop.f32.mrf.mxu0
    %v4561 = vadd.f32 %v4499, %v4560
    %4562 = vmatmul.bf16.gmra.mxu0 %v2417
    %v4563 = vpop.f32.mrf.mxu0
    %v4564 = vadd.f32 %v4499, %v4563
    %v4565 = vpop.f32.mrf.mxu0
    %v4566 = vadd.f32 %v4499, %v4565
    %4567 = vmatmul.bf16.gmra.mxu0 %v2418
    %v4568 = vpop.f32.mrf.mxu0
    %v4569 = vadd.f32 %v4499, %v4568
    %v4570 = vpop.f32.mrf.mxu0
    %v4571 = vadd.f32 %v4499, %v4570
    %4572 = vmatmul.bf16.gmra.mxu0 %v2419
    %v4573 = vpop.f32.mrf.mxu0
    %v4574 = vadd.f32 %v4499, %v4573
    %v4575 = vpop.f32.mrf.mxu0
    %v4576 = vadd.f32 %v4499, %v4575
    %4577 = vdwg.mxu0
    %4578 = vmatpush.bf16.msra.mxu0 0
    %4579 = vmatpush.bf16.msra.mxu0 0
    %4580 = vmatpush.bf16.msra.mxu0 0
    %4581 = vmatpush.bf16.msra.mxu0 0
    %4582 = vmatpush.bf16.msra.mxu0 0
    %4583 = vmatpush.bf16.msra.mxu0 0
    %4584 = vmatpush.bf16.msra.mxu0 %v4478
    %4585 = vmatpush.bf16.msra.mxu0 %v4477
    %4586 = vmatmul.bf16.gmra.mxu0 %v2368
    %v4587 = vpop.f32.mrf.mxu0
    %v4588 = vadd.f32 %v4559, %v4587
    %v4589 = vpop.f32.mrf.mxu0
    %v4590 = vadd.f32 %v4561, %v4589
    %4591 = vmatmul.bf16.gmra.mxu0 %v2371
    %v4592 = vpop.f32.mrf.mxu0
    %v4593 = vadd.f32 %v4564, %v4592
    %v4594 = vpop.f32.mrf.mxu0
    %v4595 = vadd.f32 %v4566, %v4594
    %4596 = vmatmul.bf16.gmra.mxu0 %v2374
    %v4597 = vpop.f32.mrf.mxu0
    %v4598 = vadd.f32 %v4569, %v4597
    %v4599 = vpop.f32.mrf.mxu0
    %v4600 = vadd.f32 %v4571, %v4599
    %4601 = vmatmul.bf16.gmra.mxu0 %v2377
    %v4602 = vpop.f32.mrf.mxu0
    %v4603 = vadd.f32 %v4574, %v4602
    %v4604 = vpop.f32.mrf.mxu0
    %v4605 = vadd.f32 %v4576, %v4604
    %4606 = vdwg.mxu0
    %v4607 = vmax.f32 %v4588, 0.0
    %v4608 = vmax.f32 %v4590, 0.0
    %v4609 = vmax.f32 %v4593, 0.0
    %v4610 = vmax.f32 %v4595, 0.0
    %v4611 = vmax.f32 %v4598, 0.0
    %v4612 = vmax.f32 %v4600, 0.0
    %v4613 = vmax.f32 %v4603, 0.0
    %v4614 = vmax.f32 %v4605, 0.0
    %v4615 = vpack.c.bf16 %v4608, %v4607
    %v4616 = vpack.c.bf16 %v4610, %v4609
    %v4617 = vpack.c.bf16 %v4612, %v4611
    %v4618 = vpack.c.bf16 %v4614, %v4613
    %4619 = vmatpush.bf16.msra.mxu0 0
    %4620 = vmatpush.bf16.msra.mxu0 0
    %4621 = vmatpush.bf16.msra.mxu0 0
    %4622 = vmatpush.bf16.msra.mxu0 0
    %4623 = vmatpush.bf16.msra.mxu0 %v4618
    %4624 = vmatpush.bf16.msra.mxu0 %v4617
    %4625 = vmatpush.bf16.msra.mxu0 %v4616
    %4626 = vmatpush.bf16.msra.mxu0 %v4615
    %4627 = vmatmul.bf16.gmra.mxu0 %v186
    %v4628 = vpop.f32.mrf.mxu0
    %v4629 = vadd.f32 0.0, %v4628
    %v4630 = vpop.f32.mrf.mxu0
    %v4631 = vadd.f32 0.0, %v4630
    %4632 = vmatmul.bf16.gmra.mxu0 %v189
    %v4633 = vpop.f32.mrf.mxu0
    %v4634 = vadd.f32 0.0, %v4633
    %v4635 = vpop.f32.mrf.mxu0
    %v4636 = vadd.f32 0.0, %v4635
    %4637 = vdwg.mxu0
    %4640 = vrot.lane.b32.xlu0 %v4629, 64
    %v4641 = vpop.permute.xlu0 %4640
    %4642 = vrot.lane.b32.xlu0 %v4631, 64
    %v4643 = vpop.permute.xlu0 %4642
    %v4646 = vrot.slane %v4629, 4
    %v4647 = vsel %vm219, 0.0, %v4646
    %v4649 = vunpack.c.l.s4 1983009808
    %v4650 = vunpack.c.0.s8 %v4649
    %v4651 = vperm.slane %v4629, %v4650
    %v4653 = vunpack.c.l.s4 1983009808
    %v4654 = vunpack.c.0.s8 %v4653
    %v4655 = vperm.slane %v4647, %v4654
    %v4656 = vrot.slane %v4641, 4
    %v4657 = vsel %vm219, 0.0, %v4656
    %v4659 = vunpack.c.l.s4 1983009808
    %v4660 = vunpack.c.0.s8 %v4659
    %v4661 = vperm.slane %v4641, %v4660
    %v4663 = vunpack.c.l.s4 1983009808
    %v4664 = vunpack.c.0.s8 %v4663
    %v4665 = vperm.slane %v4657, %v4664
    %v4666 = vrot.slane %v4661, 4
    %v4667 = vsel %vm219, %v4666, %v4651
    %v4668 = vrot.slane %v4651, 4
    %v4669 = vsel %vm219, %v4661, %v4668
    %v4671 = vunpack.c.l.s4 1934713408
    %v4672 = vunpack.c.0.s8 %v4671
    %v4673 = vperm.slane %v4667, %v4672
    %v4675 = vunpack.c.l.s4 1934713408
    %v4676 = vunpack.c.0.s8 %v4675
    %v4677 = vperm.slane %v4669, %v4676
    %v4678 = vrot.slane %v4665, 4
    %v4679 = vsel %vm219, %v4678, %v4655
    %v4680 = vrot.slane %v4655, 4
    %v4681 = vsel %vm219, %v4665, %v4680
    %v4683 = vunpack.c.l.s4 1934713408
    %v4684 = vunpack.c.0.s8 %v4683
    %v4685 = vperm.slane %v4679, %v4684
    %v4687 = vunpack.c.l.s4 1934713408
    %v4688 = vunpack.c.0.s8 %v4687
    %v4689 = vperm.slane %v4681, %v4688
    %v4690 = vrot.slane %v4673, 4
    %v4691 = vsel %vm219, 0.0, %v4690
    %v4692 = vrot.slane %v4677, 4
    %v4693 = vsel %vm219, 0.0, %v4692
    %v4694 = vrot.slane %v4685, 4
    %v4695 = vsel %vm219, 0.0, %v4694
    %v4696 = vrot.slane %v4689, 4
    %v4697 = vsel %vm219, 0.0, %v4696
    %v4698 = vrot.slane %v4631, 4
    %v4699 = vsel %vm219, 0.0, %v4698
    %v4701 = vunpack.c.l.s4 1983009808
    %v4702 = vunpack.c.0.s8 %v4701
    %v4703 = vperm.slane %v4631, %v4702
    %v4705 = vunpack.c.l.s4 1983009808
    %v4706 = vunpack.c.0.s8 %v4705
    %v4707 = vperm.slane %v4699, %v4706
    %v4708 = vrot.slane %v4643, 4
    %v4709 = vsel %vm219, 0.0, %v4708
    %v4711 = vunpack.c.l.s4 1983009808
    %v4712 = vunpack.c.0.s8 %v4711
    %v4713 = vperm.slane %v4643, %v4712
    %v4715 = vunpack.c.l.s4 1983009808
    %v4716 = vunpack.c.0.s8 %v4715
    %v4717 = vperm.slane %v4709, %v4716
    %v4718 = vrot.slane %v4713, 4
    %v4719 = vsel %vm219, %v4718, %v4703
    %v4720 = vrot.slane %v4703, 4
    %v4721 = vsel %vm219, %v4713, %v4720
    %v4723 = vunpack.c.l.s4 1934713408
    %v4724 = vunpack.c.0.s8 %v4723
    %v4725 = vperm.slane %v4719, %v4724
    %v4727 = vunpack.c.l.s4 1934713408
    %v4728 = vunpack.c.0.s8 %v4727
    %v4729 = vperm.slane %v4721, %v4728
    %v4730 = vrot.slane %v4717, 4
    %v4731 = vsel %vm219, %v4730, %v4707
    %v4732 = vrot.slane %v4707, 4
    %v4733 = vsel %vm219, %v4717, %v4732
    %v4735 = vunpack.c.l.s4 1934713408
    %v4736 = vunpack.c.0.s8 %v4735
    %v4737 = vperm.slane %v4731, %v4736
    %v4739 = vunpack.c.l.s4 1934713408
    %v4740 = vunpack.c.0.s8 %v4739
    %v4741 = vperm.slane %v4733, %v4740
    %v4742 = vrot.slane %v4725, 4
    %v4743 = vsel %vm219, 0.0, %v4742
    %v4744 = vrot.slane %v4729, 4
    %v4745 = vsel %vm219, 0.0, %v4744
    %v4746 = vrot.slane %v4737, 4
    %v4747 = vsel %vm219, 0.0, %v4746
    %v4748 = vrot.slane %v4741, 4
    %v4749 = vsel %vm219, 0.0, %v4748
    %v4750 = vpack.c.bf16 %v4673, %v4673
    %v4751 = vpack.c.bf16 %v4691, %v4691
    %v4752 = vpack.c.bf16 %v4677, %v4677
    %v4753 = vpack.c.bf16 %v4693, %v4693
    %v4754 = vpack.c.bf16 %v4685, %v4685
    %v4755 = vpack.c.bf16 %v4695, %v4695
    %v4756 = vpack.c.bf16 %v4689, %v4689
    %v4757 = vpack.c.bf16 %v4697, %v4697
    %v4758 = vpack.c.bf16 %v4725, %v4725
    %v4759 = vpack.c.bf16 %v4743, %v4743
    %v4760 = vpack.c.bf16 %v4729, %v4729
    %v4761 = vpack.c.bf16 %v4745, %v4745
    %v4762 = vpack.c.bf16 %v4737, %v4737
    %v4763 = vpack.c.bf16 %v4747, %v4747
    %v4764 = vpack.c.bf16 %v4741, %v4741
    %v4765 = vpack.c.bf16 %v4749, %v4749
    %4768 = vrot.lane.b32.xlu0 %v4634, 64
    %v4769 = vpop.permute.xlu0 %4768
    %4770 = vrot.lane.b32.xlu0 %v4636, 64
    %v4771 = vpop.permute.xlu0 %4770
    %v4774 = vrot.slane %v4634, 4
    %v4775 = vsel %vm219, 0.0, %v4774
    %v4777 = vunpack.c.l.s4 1983009808
    %v4778 = vunpack.c.0.s8 %v4777
    %v4779 = vperm.slane %v4634, %v4778
    %v4781 = vunpack.c.l.s4 1983009808
    %v4782 = vunpack.c.0.s8 %v4781
    %v4783 = vperm.slane %v4775, %v4782
    %v4784 = vrot.slane %v4769, 4
    %v4785 = vsel %vm219, 0.0, %v4784
    %v4787 = vunpack.c.l.s4 1983009808
    %v4788 = vunpack.c.0.s8 %v4787
    %v4789 = vperm.slane %v4769, %v4788
    %v4791 = vunpack.c.l.s4 1983009808
    %v4792 = vunpack.c.0.s8 %v4791
    %v4793 = vperm.slane %v4785, %v4792
    %v4794 = vrot.slane %v4789, 4
    %v4795 = vsel %vm219, %v4794, %v4779
    %v4796 = vrot.slane %v4779, 4
    %v4797 = vsel %vm219, %v4789, %v4796
    %v4799 = vunpack.c.l.s4 1934713408
    %v4800 = vunpack.c.0.s8 %v4799
    %v4801 = vperm.slane %v4795, %v4800
    %v4803 = vunpack.c.l.s4 1934713408
    %v4804 = vunpack.c.0.s8 %v4803
    %v4805 = vperm.slane %v4797, %v4804
    %v4806 = vrot.slane %v4793, 4
    %v4807 = vsel %vm219, %v4806, %v4783
    %v4808 = vrot.slane %v4783, 4
    %v4809 = vsel %vm219, %v4793, %v4808
    %v4811 = vunpack.c.l.s4 1934713408
    %v4812 = vunpack.c.0.s8 %v4811
    %v4813 = vperm.slane %v4807, %v4812
    %v4815 = vunpack.c.l.s4 1934713408
    %v4816 = vunpack.c.0.s8 %v4815
    %v4817 = vperm.slane %v4809, %v4816
    %v4818 = vrot.slane %v4801, 4
    %v4819 = vsel %vm219, 0.0, %v4818
    %v4820 = vrot.slane %v4805, 4
    %v4821 = vsel %vm219, 0.0, %v4820
    %v4822 = vrot.slane %v4813, 4
    %v4823 = vsel %vm219, 0.0, %v4822
    %v4824 = vrot.slane %v4817, 4
    %v4825 = vsel %vm219, 0.0, %v4824
    %v4826 = vrot.slane %v4636, 4
    %v4827 = vsel %vm219, 0.0, %v4826
    %v4829 = vunpack.c.l.s4 1983009808
    %v4830 = vunpack.c.0.s8 %v4829
    %v4831 = vperm.slane %v4636, %v4830
    %v4833 = vunpack.c.l.s4 1983009808
    %v4834 = vunpack.c.0.s8 %v4833
    %v4835 = vperm.slane %v4827, %v4834
    %v4836 = vrot.slane %v4771, 4
    %v4837 = vsel %vm219, 0.0, %v4836
    %v4839 = vunpack.c.l.s4 1983009808
    %v4840 = vunpack.c.0.s8 %v4839
    %v4841 = vperm.slane %v4771, %v4840
    %v4843 = vunpack.c.l.s4 1983009808
    %v4844 = vunpack.c.0.s8 %v4843
    %v4845 = vperm.slane %v4837, %v4844
    %v4846 = vrot.slane %v4841, 4
    %v4847 = vsel %vm219, %v4846, %v4831
    %v4848 = vrot.slane %v4831, 4
    %v4849 = vsel %vm219, %v4841, %v4848
    %v4851 = vunpack.c.l.s4 1934713408
    %v4852 = vunpack.c.0.s8 %v4851
    %v4853 = vperm.slane %v4847, %v4852
    %v4855 = vunpack.c.l.s4 1934713408
    %v4856 = vunpack.c.0.s8 %v4855
    %v4857 = vperm.slane %v4849, %v4856
    %v4858 = vrot.slane %v4845, 4
    %v4859 = vsel %vm219, %v4858, %v4835
    %v4860 = vrot.slane %v4835, 4
    %v4861 = vsel %vm219, %v4845, %v4860
    %v4863 = vunpack.c.l.s4 1934713408
    %v4864 = vunpack.c.0.s8 %v4863
    %v4865 = vperm.slane %v4859, %v4864
    %v4867 = vunpack.c.l.s4 1934713408
    %v4868 = vunpack.c.0.s8 %v4867
    %v4869 = vperm.slane %v4861, %v4868
    %v4870 = vrot.slane %v4853, 4
    %v4871 = vsel %vm219, 0.0, %v4870
    %v4872 = vrot.slane %v4857, 4
    %v4873 = vsel %vm219, 0.0, %v4872
    %v4874 = vrot.slane %v4865, 4
    %v4875 = vsel %vm219, 0.0, %v4874
    %v4876 = vrot.slane %v4869, 4
    %v4877 = vsel %vm219, 0.0, %v4876
    %v4878 = vpack.c.bf16 %v4801, %v4801
    %v4879 = vpack.c.bf16 %v4819, %v4819
    %v4880 = vpack.c.bf16 %v4805, %v4805
    %v4881 = vpack.c.bf16 %v4821, %v4821
    %v4882 = vpack.c.bf16 %v4813, %v4813
    %v4883 = vpack.c.bf16 %v4823, %v4823
    %v4884 = vpack.c.bf16 %v4817, %v4817
    %v4885 = vpack.c.bf16 %v4825, %v4825
    %v4886 = vpack.c.bf16 %v4853, %v4853
    %v4887 = vpack.c.bf16 %v4871, %v4871
    %v4888 = vpack.c.bf16 %v4857, %v4857
    %v4889 = vpack.c.bf16 %v4873, %v4873
    %v4890 = vpack.c.bf16 %v4865, %v4865
    %v4891 = vpack.c.bf16 %v4875, %v4875
    %v4892 = vpack.c.bf16 %v4869, %v4869
    %v4893 = vpack.c.bf16 %v4877, %v4877
    %s4894 = scalar_lea.vmem [#allocation2], 1024
    %v4895 = vld [vmem:[%s4894] sm:$0xf]
    %v4896 = vld [vmem:[%s4894 + $0x4] sm:$0xf]
    %v4897 = vld [vmem:[%s4894 + $0x8] sm:$0xf]
    %v4898 = vld [vmem:[%s4894 + $0xc] sm:$0xf]
    %v4899 = vld [vmem:[%s4894 + $0x10] sm:$0xf]
    %v4900 = vld [vmem:[%s4894 + $0x14] sm:$0xf]
    %v4901 = vld [vmem:[%s4894 + $0x18] sm:$0xf]
    %v4902 = vld [vmem:[%s4894 + $0x1c] sm:$0xf]
    %v4903 = vld [vmem:[%s4894 + $0x20] sm:$0xf]
    %v4904 = vld [vmem:[%s4894 + $0x24] sm:$0xf]
    %v4905 = vld [vmem:[%s4894 + $0x28] sm:$0xf]
    %v4906 = vld [vmem:[%s4894 + $0x2c] sm:$0xf]
    %v4907 = vld [vmem:[%s4894 + $0x30] sm:$0xf]
    %v4908 = vld [vmem:[%s4894 + $0x34] sm:$0xf]
    %v4909 = vld [vmem:[%s4894 + $0x38] sm:$0xf]
    %v4910 = vld [vmem:[%s4894 + $0x3c] sm:$0xf]
    %v4911 = vld [vmem:[%s4894 + $0x40] sm:$0xf]
    %v4912 = vld [vmem:[%s4894 + $0x44] sm:$0xf]
    %v4913 = vld [vmem:[%s4894 + $0x48] sm:$0xf]
    %v4914 = vld [vmem:[%s4894 + $0x4c] sm:$0xf]
    %v4915 = vld [vmem:[%s4894 + $0x50] sm:$0xf]
    %v4916 = vld [vmem:[%s4894 + $0x54] sm:$0xf]
    %v4917 = vld [vmem:[%s4894 + $0x58] sm:$0xf]
    %v4918 = vld [vmem:[%s4894 + $0x5c] sm:$0xf]
    %v4919 = vld [vmem:[%s4894 + $0x60] sm:$0xf]
    %v4920 = vld [vmem:[%s4894 + $0x64] sm:$0xf]
    %v4921 = vld [vmem:[%s4894 + $0x68] sm:$0xf]
    %v4922 = vld [vmem:[%s4894 + $0x6c] sm:$0xf]
    %v4923 = vld [vmem:[%s4894 + $0x70] sm:$0xf]
    %v4924 = vld [vmem:[%s4894 + $0x74] sm:$0xf]
    %v4925 = vld [vmem:[%s4894 + $0x78] sm:$0xf]
    %v4926 = vld [vmem:[%s4894 + $0x7c] sm:$0xf]
    %v4927 = vld [vmem:[%s4894 + $0x80] sm:$0xf]
    %v4928 = vld [vmem:[%s4894 + $0x84] sm:$0xf]
    %v4929 = vld [vmem:[%s4894 + $0x88] sm:$0xf]
    %v4930 = vld [vmem:[%s4894 + $0x8c] sm:$0xf]
    %v4931 = vld [vmem:[%s4894 + $0x90] sm:$0xf]
    %v4932 = vld [vmem:[%s4894 + $0x94] sm:$0xf]
    %v4933 = vld [vmem:[%s4894 + $0x98] sm:$0xf]
    %v4934 = vld [vmem:[%s4894 + $0x9c] sm:$0xf]
    %v4935 = vld [vmem:[%s4894 + $0xa0] sm:$0xf]
    %v4936 = vld [vmem:[%s4894 + $0xa4] sm:$0xf]
    %v4937 = vld [vmem:[%s4894 + $0xa8] sm:$0xf]
    %v4938 = vld [vmem:[%s4894 + $0xac] sm:$0xf]
    %v4939 = vld [vmem:[%s4894 + $0xb0] sm:$0xf]
    %v4940 = vld [vmem:[%s4894 + $0xb4] sm:$0xf]
    %v4941 = vld [vmem:[%s4894 + $0xb8] sm:$0xf]
    %v4942 = vld [vmem:[%s4894 + $0xbc] sm:$0xf]
    %v4943 = vld [vmem:[%s4894 + $0xc0] sm:$0xf]
    %v4944 = vld [vmem:[%s4894 + $0xc4] sm:$0xf]
    %v4945 = vld [vmem:[%s4894 + $0xc8] sm:$0xf]
    %v4946 = vld [vmem:[%s4894 + $0xcc] sm:$0xf]
    %v4947 = vld [vmem:[%s4894 + $0xd0] sm:$0xf]
    %v4948 = vld [vmem:[%s4894 + $0xd4] sm:$0xf]
    %v4949 = vld [vmem:[%s4894 + $0xd8] sm:$0xf]
    %v4950 = vld [vmem:[%s4894 + $0xdc] sm:$0xf]
    %v4951 = vld [vmem:[%s4894 + $0xe0] sm:$0xf]
    %v4952 = vld [vmem:[%s4894 + $0xe4] sm:$0xf]
    %v4953 = vld [vmem:[%s4894 + $0xe8] sm:$0xf]
    %v4954 = vld [vmem:[%s4894 + $0xec] sm:$0xf]
    %v4955 = vld [vmem:[%s4894 + $0xf0] sm:$0xf]
    %v4956 = vld [vmem:[%s4894 + $0xf4] sm:$0xf]
    %v4957 = vld [vmem:[%s4894 + $0xf8] sm:$0xf]
    %v4958 = vld [vmem:[%s4894 + $0xfc] sm:$0xf]
    %v4959 = vld [vmem:[%s4894 + $0x100] sm:$0xf]
    %v4960 = vld [vmem:[%s4894 + $0x104] sm:$0xf]
    %v4961 = vld [vmem:[%s4894 + $0x108] sm:$0xf]
    %v4962 = vld [vmem:[%s4894 + $0x10c] sm:$0xf]
    %v4963 = vld [vmem:[%s4894 + $0x110] sm:$0xf]
    %v4964 = vld [vmem:[%s4894 + $0x114] sm:$0xf]
    %v4965 = vld [vmem:[%s4894 + $0x118] sm:$0xf]
    %v4966 = vld [vmem:[%s4894 + $0x11c] sm:$0xf]
    %v4967 = vld [vmem:[%s4894 + $0x120] sm:$0xf]
    %v4968 = vld [vmem:[%s4894 + $0x124] sm:$0xf]
    %v4969 = vld [vmem:[%s4894 + $0x128] sm:$0xf]
    %v4970 = vld [vmem:[%s4894 + $0x12c] sm:$0xf]
    %v4971 = vld [vmem:[%s4894 + $0x130] sm:$0xf]
    %v4972 = vld [vmem:[%s4894 + $0x134] sm:$0xf]
    %v4973 = vld [vmem:[%s4894 + $0x138] sm:$0xf]
    %v4974 = vld [vmem:[%s4894 + $0x13c] sm:$0xf]
    %v4975 = vld [vmem:[%s4894 + $0x140] sm:$0xf]
    %v4976 = vld [vmem:[%s4894 + $0x144] sm:$0xf]
    %v4977 = vld [vmem:[%s4894 + $0x148] sm:$0xf]
    %v4978 = vld [vmem:[%s4894 + $0x14c] sm:$0xf]
    %v4979 = vld [vmem:[%s4894 + $0x150] sm:$0xf]
    %v4980 = vld [vmem:[%s4894 + $0x154] sm:$0xf]
    %v4981 = vld [vmem:[%s4894 + $0x158] sm:$0xf]
    %v4982 = vld [vmem:[%s4894 + $0x15c] sm:$0xf]
    %v4983 = vld [vmem:[%s4894 + $0x160] sm:$0xf]
    %v4984 = vld [vmem:[%s4894 + $0x164] sm:$0xf]
    %v4985 = vld [vmem:[%s4894 + $0x168] sm:$0xf]
    %v4986 = vld [vmem:[%s4894 + $0x16c] sm:$0xf]
    %v4987 = vld [vmem:[%s4894 + $0x170] sm:$0xf]
    %v4988 = vld [vmem:[%s4894 + $0x174] sm:$0xf]
    %v4989 = vld [vmem:[%s4894 + $0x178] sm:$0xf]
    %v4990 = vld [vmem:[%s4894 + $0x17c] sm:$0xf]
    %v4991 = vld [vmem:[%s4894 + $0x180] sm:$0xf]
    %v4992 = vld [vmem:[%s4894 + $0x184] sm:$0xf]
    %v4993 = vld [vmem:[%s4894 + $0x188] sm:$0xf]
    %v4994 = vld [vmem:[%s4894 + $0x18c] sm:$0xf]
    %v4995 = vld [vmem:[%s4894 + $0x190] sm:$0xf]
    %v4996 = vld [vmem:[%s4894 + $0x194] sm:$0xf]
    %v4997 = vld [vmem:[%s4894 + $0x198] sm:$0xf]
    %v4998 = vld [vmem:[%s4894 + $0x19c] sm:$0xf]
    %v4999 = vld [vmem:[%s4894 + $0x1a0] sm:$0xf]
    %v5000 = vld [vmem:[%s4894 + $0x1a4] sm:$0xf]
    %v5001 = vld [vmem:[%s4894 + $0x1a8] sm:$0xf]
    %v5002 = vld [vmem:[%s4894 + $0x1ac] sm:$0xf]
    %v5003 = vld [vmem:[%s4894 + $0x1b0] sm:$0xf]
    %v5004 = vld [vmem:[%s4894 + $0x1b4] sm:$0xf]
    %v5005 = vld [vmem:[%s4894 + $0x1b8] sm:$0xf]
    %v5006 = vld [vmem:[%s4894 + $0x1bc] sm:$0xf]
    %v5007 = vld [vmem:[%s4894 + $0x1c0] sm:$0xf]
    %v5008 = vld [vmem:[%s4894 + $0x1c4] sm:$0xf]
    %v5009 = vld [vmem:[%s4894 + $0x1c8] sm:$0xf]
    %v5010 = vld [vmem:[%s4894 + $0x1cc] sm:$0xf]
    %v5011 = vld [vmem:[%s4894 + $0x1d0] sm:$0xf]
    %v5012 = vld [vmem:[%s4894 + $0x1d4] sm:$0xf]
    %v5013 = vld [vmem:[%s4894 + $0x1d8] sm:$0xf]
    %v5014 = vld [vmem:[%s4894 + $0x1dc] sm:$0xf]
    %v5015 = vld [vmem:[%s4894 + $0x1e0] sm:$0xf]
    %v5016 = vld [vmem:[%s4894 + $0x1e4] sm:$0xf]
    %v5017 = vld [vmem:[%s4894 + $0x1e8] sm:$0xf]
    %v5018 = vld [vmem:[%s4894 + $0x1ec] sm:$0xf]
    %v5019 = vld [vmem:[%s4894 + $0x1f0] sm:$0xf]
    %v5020 = vld [vmem:[%s4894 + $0x1f4] sm:$0xf]
    %v5021 = vld [vmem:[%s4894 + $0x1f8] sm:$0xf]
    %v5022 = vld [vmem:[%s4894 + $0x1fc] sm:$0xf]
    %s5023 = scalar_lea.vmem [#allocation4], 1024
    %v5024 = vld [vmem:[%s5023] sm:$0xf]
    %v5025 = vld [vmem:[%s5023 + $0x4] sm:$0xf]
    %v5026 = vld [vmem:[%s5023 + $0x8] sm:$0xf]
    %v5027 = vld [vmem:[%s5023 + $0xc] sm:$0xf]
    %v5028 = vld [vmem:[%s5023 + $0x10] sm:$0xf]
    %v5029 = vld [vmem:[%s5023 + $0x14] sm:$0xf]
    %v5030 = vld [vmem:[%s5023 + $0x18] sm:$0xf]
    %v5031 = vld [vmem:[%s5023 + $0x1c] sm:$0xf]
    %v5032 = vld [vmem:[%s5023 + $0x20] sm:$0xf]
    %v5033 = vld [vmem:[%s5023 + $0x24] sm:$0xf]
    %v5034 = vld [vmem:[%s5023 + $0x28] sm:$0xf]
    %v5035 = vld [vmem:[%s5023 + $0x2c] sm:$0xf]
    %v5036 = vld [vmem:[%s5023 + $0x30] sm:$0xf]
    %v5037 = vld [vmem:[%s5023 + $0x34] sm:$0xf]
    %v5038 = vld [vmem:[%s5023 + $0x38] sm:$0xf]
    %v5039 = vld [vmem:[%s5023 + $0x3c] sm:$0xf]
    %v5040 = vld [vmem:[%s5023 + $0x40] sm:$0xf]
    %v5041 = vld [vmem:[%s5023 + $0x44] sm:$0xf]
    %v5042 = vld [vmem:[%s5023 + $0x48] sm:$0xf]
    %v5043 = vld [vmem:[%s5023 + $0x4c] sm:$0xf]
    %v5044 = vld [vmem:[%s5023 + $0x50] sm:$0xf]
    %v5045 = vld [vmem:[%s5023 + $0x54] sm:$0xf]
    %v5046 = vld [vmem:[%s5023 + $0x58] sm:$0xf]
    %v5047 = vld [vmem:[%s5023 + $0x5c] sm:$0xf]
    %v5048 = vld [vmem:[%s5023 + $0x60] sm:$0xf]
    %v5049 = vld [vmem:[%s5023 + $0x64] sm:$0xf]
    %v5050 = vld [vmem:[%s5023 + $0x68] sm:$0xf]
    %v5051 = vld [vmem:[%s5023 + $0x6c] sm:$0xf]
    %v5052 = vld [vmem:[%s5023 + $0x70] sm:$0xf]
    %v5053 = vld [vmem:[%s5023 + $0x74] sm:$0xf]
    %v5054 = vld [vmem:[%s5023 + $0x78] sm:$0xf]
    %v5055 = vld [vmem:[%s5023 + $0x7c] sm:$0xf]
    %v5056 = vld [vmem:[%s5023 + $0x80] sm:$0xf]
    %v5057 = vld [vmem:[%s5023 + $0x84] sm:$0xf]
    %v5058 = vld [vmem:[%s5023 + $0x88] sm:$0xf]
    %v5059 = vld [vmem:[%s5023 + $0x8c] sm:$0xf]
    %v5060 = vld [vmem:[%s5023 + $0x90] sm:$0xf]
    %v5061 = vld [vmem:[%s5023 + $0x94] sm:$0xf]
    %v5062 = vld [vmem:[%s5023 + $0x98] sm:$0xf]
    %v5063 = vld [vmem:[%s5023 + $0x9c] sm:$0xf]
    %v5064 = vld [vmem:[%s5023 + $0xa0] sm:$0xf]
    %v5065 = vld [vmem:[%s5023 + $0xa4] sm:$0xf]
    %v5066 = vld [vmem:[%s5023 + $0xa8] sm:$0xf]
    %v5067 = vld [vmem:[%s5023 + $0xac] sm:$0xf]
    %v5068 = vld [vmem:[%s5023 + $0xb0] sm:$0xf]
    %v5069 = vld [vmem:[%s5023 + $0xb4] sm:$0xf]
    %v5070 = vld [vmem:[%s5023 + $0xb8] sm:$0xf]
    %v5071 = vld [vmem:[%s5023 + $0xbc] sm:$0xf]
    %v5072 = vld [vmem:[%s5023 + $0xc0] sm:$0xf]
    %v5073 = vld [vmem:[%s5023 + $0xc4] sm:$0xf]
    %v5074 = vld [vmem:[%s5023 + $0xc8] sm:$0xf]
    %v5075 = vld [vmem:[%s5023 + $0xcc] sm:$0xf]
    %v5076 = vld [vmem:[%s5023 + $0xd0] sm:$0xf]
    %v5077 = vld [vmem:[%s5023 + $0xd4] sm:$0xf]
    %v5078 = vld [vmem:[%s5023 + $0xd8] sm:$0xf]
    %v5079 = vld [vmem:[%s5023 + $0xdc] sm:$0xf]
    %v5080 = vld [vmem:[%s5023 + $0xe0] sm:$0xf]
    %v5081 = vld [vmem:[%s5023 + $0xe4] sm:$0xf]
    %v5082 = vld [vmem:[%s5023 + $0xe8] sm:$0xf]
    %v5083 = vld [vmem:[%s5023 + $0xec] sm:$0xf]
    %v5084 = vld [vmem:[%s5023 + $0xf0] sm:$0xf]
    %v5085 = vld [vmem:[%s5023 + $0xf4] sm:$0xf]
    %v5086 = vld [vmem:[%s5023 + $0xf8] sm:$0xf]
    %v5087 = vld [vmem:[%s5023 + $0xfc] sm:$0xf]
    %v5088 = vld [vmem:[%s5023 + $0x100] sm:$0xf]
    %v5089 = vld [vmem:[%s5023 + $0x104] sm:$0xf]
    %v5090 = vld [vmem:[%s5023 + $0x108] sm:$0xf]
    %v5091 = vld [vmem:[%s5023 + $0x10c] sm:$0xf]
    %v5092 = vld [vmem:[%s5023 + $0x110] sm:$0xf]
    %v5093 = vld [vmem:[%s5023 + $0x114] sm:$0xf]
    %v5094 = vld [vmem:[%s5023 + $0x118] sm:$0xf]
    %v5095 = vld [vmem:[%s5023 + $0x11c] sm:$0xf]
    %v5096 = vld [vmem:[%s5023 + $0x120] sm:$0xf]
    %v5097 = vld [vmem:[%s5023 + $0x124] sm:$0xf]
    %v5098 = vld [vmem:[%s5023 + $0x128] sm:$0xf]
    %v5099 = vld [vmem:[%s5023 + $0x12c] sm:$0xf]
    %v5100 = vld [vmem:[%s5023 + $0x130] sm:$0xf]
    %v5101 = vld [vmem:[%s5023 + $0x134] sm:$0xf]
    %v5102 = vld [vmem:[%s5023 + $0x138] sm:$0xf]
    %v5103 = vld [vmem:[%s5023 + $0x13c] sm:$0xf]
    %v5104 = vld [vmem:[%s5023 + $0x140] sm:$0xf]
    %v5105 = vld [vmem:[%s5023 + $0x144] sm:$0xf]
    %v5106 = vld [vmem:[%s5023 + $0x148] sm:$0xf]
    %v5107 = vld [vmem:[%s5023 + $0x14c] sm:$0xf]
    %v5108 = vld [vmem:[%s5023 + $0x150] sm:$0xf]
    %v5109 = vld [vmem:[%s5023 + $0x154] sm:$0xf]
    %v5110 = vld [vmem:[%s5023 + $0x158] sm:$0xf]
    %v5111 = vld [vmem:[%s5023 + $0x15c] sm:$0xf]
    %v5112 = vld [vmem:[%s5023 + $0x160] sm:$0xf]
    %v5113 = vld [vmem:[%s5023 + $0x164] sm:$0xf]
    %v5114 = vld [vmem:[%s5023 + $0x168] sm:$0xf]
    %v5115 = vld [vmem:[%s5023 + $0x16c] sm:$0xf]
    %v5116 = vld [vmem:[%s5023 + $0x170] sm:$0xf]
    %v5117 = vld [vmem:[%s5023 + $0x174] sm:$0xf]
    %v5118 = vld [vmem:[%s5023 + $0x178] sm:$0xf]
    %v5119 = vld [vmem:[%s5023 + $0x17c] sm:$0xf]
    %v5120 = vld [vmem:[%s5023 + $0x180] sm:$0xf]
    %v5121 = vld [vmem:[%s5023 + $0x184] sm:$0xf]
    %v5122 = vld [vmem:[%s5023 + $0x188] sm:$0xf]
    %v5123 = vld [vmem:[%s5023 + $0x18c] sm:$0xf]
    %v5124 = vld [vmem:[%s5023 + $0x190] sm:$0xf]
    %v5125 = vld [vmem:[%s5023 + $0x194] sm:$0xf]
    %v5126 = vld [vmem:[%s5023 + $0x198] sm:$0xf]
    %v5127 = vld [vmem:[%s5023 + $0x19c] sm:$0xf]
    %v5128 = vld [vmem:[%s5023 + $0x1a0] sm:$0xf]
    %v5129 = vld [vmem:[%s5023 + $0x1a4] sm:$0xf]
    %v5130 = vld [vmem:[%s5023 + $0x1a8] sm:$0xf]
    %v5131 = vld [vmem:[%s5023 + $0x1ac] sm:$0xf]
    %v5132 = vld [vmem:[%s5023 + $0x1b0] sm:$0xf]
    %v5133 = vld [vmem:[%s5023 + $0x1b4] sm:$0xf]
    %v5134 = vld [vmem:[%s5023 + $0x1b8] sm:$0xf]
    %v5135 = vld [vmem:[%s5023 + $0x1bc] sm:$0xf]
    %v5136 = vld [vmem:[%s5023 + $0x1c0] sm:$0xf]
    %v5137 = vld [vmem:[%s5023 + $0x1c4] sm:$0xf]
    %v5138 = vld [vmem:[%s5023 + $0x1c8] sm:$0xf]
    %v5139 = vld [vmem:[%s5023 + $0x1cc] sm:$0xf]
    %v5140 = vld [vmem:[%s5023 + $0x1d0] sm:$0xf]
    %v5141 = vld [vmem:[%s5023 + $0x1d4] sm:$0xf]
    %v5142 = vld [vmem:[%s5023 + $0x1d8] sm:$0xf]
    %v5143 = vld [vmem:[%s5023 + $0x1dc] sm:$0xf]
    %v5144 = vld [vmem:[%s5023 + $0x1e0] sm:$0xf]
    %v5145 = vld [vmem:[%s5023 + $0x1e4] sm:$0xf]
    %v5146 = vld [vmem:[%s5023 + $0x1e8] sm:$0xf]
    %v5147 = vld [vmem:[%s5023 + $0x1ec] sm:$0xf]
    %v5148 = vld [vmem:[%s5023 + $0x1f0] sm:$0xf]
    %v5149 = vld [vmem:[%s5023 + $0x1f4] sm:$0xf]
    %v5150 = vld [vmem:[%s5023 + $0x1f8] sm:$0xf]
    %v5151 = vld [vmem:[%s5023 + $0x1fc] sm:$0xf]
    %v5160 = vunpack.c.l.b16 %v5024
    %v5161 = vunpack.c.l.b16 %v5025
    %v5162 = vunpack.c.l.b16 %v5026
    %v5163 = vunpack.c.l.b16 %v5027
    %v5164 = vunpack.c.l.b16 %v5028
    %v5165 = vunpack.c.l.b16 %v5029
    %v5166 = vunpack.c.l.b16 %v5030
    %v5167 = vunpack.c.l.b16 %v5031
    %v5168 = vpack.c.b16 %v5161, %v5160
    %v5169 = vpack.c.b16 %v5163, %v5162
    %v5170 = vpack.c.b16 %v5165, %v5164
    %v5171 = vpack.c.b16 %v5167, %v5166
    %v5177 = vsel %vm184, %v4878, 0
    %5179 = vmatpush.bf16.msra.mxu0 0
    %5180 = vmatpush.bf16.msra.mxu0 0
    %5181 = vmatpush.bf16.msra.mxu0 0
    %5182 = vmatpush.bf16.msra.mxu0 0
    %5183 = vmatpush.bf16.msra.mxu0 %v5171
    %5184 = vmatpush.bf16.msra.mxu0 %v5170
    %5185 = vmatpush.bf16.msra.mxu0 %v5169
    %5186 = vmatpush.bf16.msra.mxu0 %v5168
    %5187 = vmatmul.bf16.gmra.mxu0 %v5177
    %v5188 = vpop.f32.mrf.mxu0
    %v5189 = vadd.f32 0.0, %v5188
    %v5190 = vpop.f32.mrf.mxu0
    %5191 = vdwg.mxu0
    %v5200 = vunpack.c.l.b16 %v5032
    %v5201 = vunpack.c.l.b16 %v5033
    %v5202 = vunpack.c.l.b16 %v5034
    %v5203 = vunpack.c.l.b16 %v5035
    %v5204 = vunpack.c.l.b16 %v5036
    %v5205 = vunpack.c.l.b16 %v5037
    %v5206 = vunpack.c.l.b16 %v5038
    %v5207 = vunpack.c.l.b16 %v5039
    %v5208 = vpack.c.b16 %v5201, %v5200
    %v5209 = vpack.c.b16 %v5203, %v5202
    %v5210 = vpack.c.b16 %v5205, %v5204
    %v5211 = vpack.c.b16 %v5207, %v5206
    %v5217 = vsel %vm184, %v4879, 0
    %5219 = vmatpush.bf16.msra.mxu0 0
    %5220 = vmatpush.bf16.msra.mxu0 0
    %5221 = vmatpush.bf16.msra.mxu0 0
    %5222 = vmatpush.bf16.msra.mxu0 0
    %5223 = vmatpush.bf16.msra.mxu0 %v5211
    %5224 = vmatpush.bf16.msra.mxu0 %v5210
    %5225 = vmatpush.bf16.msra.mxu0 %v5209
    %5226 = vmatpush.bf16.msra.mxu0 %v5208
    %5227 = vmatmul.bf16.gmra.mxu0 %v5217
    %v5228 = vpop.f32.mrf.mxu0
    %v5229 = vadd.f32 0.0, %v5228
    %v5230 = vpop.f32.mrf.mxu0
    %5231 = vdwg.mxu0
    %v5240 = vunpack.c.l.b16 %v5040
    %v5241 = vunpack.c.l.b16 %v5041
    %v5242 = vunpack.c.l.b16 %v5042
    %v5243 = vunpack.c.l.b16 %v5043
    %v5244 = vunpack.c.l.b16 %v5044
    %v5245 = vunpack.c.l.b16 %v5045
    %v5246 = vunpack.c.l.b16 %v5046
    %v5247 = vunpack.c.l.b16 %v5047
    %v5248 = vpack.c.b16 %v5241, %v5240
    %v5249 = vpack.c.b16 %v5243, %v5242
    %v5250 = vpack.c.b16 %v5245, %v5244
    %v5251 = vpack.c.b16 %v5247, %v5246
    %v5257 = vsel %vm184, %v4880, 0
    %5259 = vmatpush.bf16.msra.mxu0 0
    %5260 = vmatpush.bf16.msra.mxu0 0
    %5261 = vmatpush.bf16.msra.mxu0 0
    %5262 = vmatpush.bf16.msra.mxu0 0
    %5263 = vmatpush.bf16.msra.mxu0 %v5251
    %5264 = vmatpush.bf16.msra.mxu0 %v5250
    %5265 = vmatpush.bf16.msra.mxu0 %v5249
    %5266 = vmatpush.bf16.msra.mxu0 %v5248
    %5267 = vmatmul.bf16.gmra.mxu0 %v5257
    %v5268 = vpop.f32.mrf.mxu0
    %v5269 = vadd.f32 0.0, %v5268
    %v5270 = vpop.f32.mrf.mxu0
    %5271 = vdwg.mxu0
    %v5280 = vunpack.c.l.b16 %v5048
    %v5281 = vunpack.c.l.b16 %v5049
    %v5282 = vunpack.c.l.b16 %v5050
    %v5283 = vunpack.c.l.b16 %v5051
    %v5284 = vunpack.c.l.b16 %v5052
    %v5285 = vunpack.c.l.b16 %v5053
    %v5286 = vunpack.c.l.b16 %v5054
    %v5287 = vunpack.c.l.b16 %v5055
    %v5288 = vpack.c.b16 %v5281, %v5280
    %v5289 = vpack.c.b16 %v5283, %v5282
    %v5290 = vpack.c.b16 %v5285, %v5284
    %v5291 = vpack.c.b16 %v5287, %v5286
    %v5297 = vsel %vm184, %v4881, 0
    %5299 = vmatpush.bf16.msra.mxu0 0
    %5300 = vmatpush.bf16.msra.mxu0 0
    %5301 = vmatpush.bf16.msra.mxu0 0
    %5302 = vmatpush.bf16.msra.mxu0 0
    %5303 = vmatpush.bf16.msra.mxu0 %v5291
    %5304 = vmatpush.bf16.msra.mxu0 %v5290
    %5305 = vmatpush.bf16.msra.mxu0 %v5289
    %5306 = vmatpush.bf16.msra.mxu0 %v5288
    %5307 = vmatmul.bf16.gmra.mxu0 %v5297
    %v5308 = vpop.f32.mrf.mxu0
    %v5309 = vadd.f32 0.0, %v5308
    %v5310 = vpop.f32.mrf.mxu0
    %5311 = vdwg.mxu0
    %v5320 = vunpack.c.l.b16 %v5056
    %v5321 = vunpack.c.l.b16 %v5057
    %v5322 = vunpack.c.l.b16 %v5058
    %v5323 = vunpack.c.l.b16 %v5059
    %v5324 = vunpack.c.l.b16 %v5060
    %v5325 = vunpack.c.l.b16 %v5061
    %v5326 = vunpack.c.l.b16 %v5062
    %v5327 = vunpack.c.l.b16 %v5063
    %v5328 = vpack.c.b16 %v5321, %v5320
    %v5329 = vpack.c.b16 %v5323, %v5322
    %v5330 = vpack.c.b16 %v5325, %v5324
    %v5331 = vpack.c.b16 %v5327, %v5326
    %v5337 = vsel %vm184, %v4882, 0
    %5339 = vmatpush.bf16.msra.mxu0 0
    %5340 = vmatpush.bf16.msra.mxu0 0
    %5341 = vmatpush.bf16.msra.mxu0 0
    %5342 = vmatpush.bf16.msra.mxu0 0
    %5343 = vmatpush.bf16.msra.mxu0 %v5331
    %5344 = vmatpush.bf16.msra.mxu0 %v5330
    %5345 = vmatpush.bf16.msra.mxu0 %v5329
    %5346 = vmatpush.bf16.msra.mxu0 %v5328
    %5347 = vmatmul.bf16.gmra.mxu0 %v5337
    %v5348 = vpop.f32.mrf.mxu0
    %v5349 = vadd.f32 0.0, %v5348
    %v5350 = vpop.f32.mrf.mxu0
    %5351 = vdwg.mxu0
    %v5360 = vunpack.c.l.b16 %v5064
    %v5361 = vunpack.c.l.b16 %v5065
    %v5362 = vunpack.c.l.b16 %v5066
    %v5363 = vunpack.c.l.b16 %v5067
    %v5364 = vunpack.c.l.b16 %v5068
    %v5365 = vunpack.c.l.b16 %v5069
    %v5366 = vunpack.c.l.b16 %v5070
    %v5367 = vunpack.c.l.b16 %v5071
    %v5368 = vpack.c.b16 %v5361, %v5360
    %v5369 = vpack.c.b16 %v5363, %v5362
    %v5370 = vpack.c.b16 %v5365, %v5364
    %v5371 = vpack.c.b16 %v5367, %v5366
    %v5377 = vsel %vm184, %v4883, 0
    %5379 = vmatpush.bf16.msra.mxu0 0
    %5380 = vmatpush.bf16.msra.mxu0 0
    %5381 = vmatpush.bf16.msra.mxu0 0
    %5382 = vmatpush.bf16.msra.mxu0 0
    %5383 = vmatpush.bf16.msra.mxu0 %v5371
    %5384 = vmatpush.bf16.msra.mxu0 %v5370
    %5385 = vmatpush.bf16.msra.mxu0 %v5369
    %5386 = vmatpush.bf16.msra.mxu0 %v5368
    %5387 = vmatmul.bf16.gmra.mxu0 %v5377
    %v5388 = vpop.f32.mrf.mxu0
    %v5389 = vadd.f32 0.0, %v5388
    %v5390 = vpop.f32.mrf.mxu0
    %5391 = vdwg.mxu0
    %v5400 = vunpack.c.l.b16 %v5072
    %v5401 = vunpack.c.l.b16 %v5073
    %v5402 = vunpack.c.l.b16 %v5074
    %v5403 = vunpack.c.l.b16 %v5075
    %v5404 = vunpack.c.l.b16 %v5076
    %v5405 = vunpack.c.l.b16 %v5077
    %v5406 = vunpack.c.l.b16 %v5078
    %v5407 = vunpack.c.l.b16 %v5079
    %v5408 = vpack.c.b16 %v5401, %v5400
    %v5409 = vpack.c.b16 %v5403, %v5402
    %v5410 = vpack.c.b16 %v5405, %v5404
    %v5411 = vpack.c.b16 %v5407, %v5406
    %v5417 = vsel %vm184, %v4884, 0
    %5419 = vmatpush.bf16.msra.mxu0 0
    %5420 = vmatpush.bf16.msra.mxu0 0
    %5421 = vmatpush.bf16.msra.mxu0 0
    %5422 = vmatpush.bf16.msra.mxu0 0
    %5423 = vmatpush.bf16.msra.mxu0 %v5411
    %5424 = vmatpush.bf16.msra.mxu0 %v5410
    %5425 = vmatpush.bf16.msra.mxu0 %v5409
    %5426 = vmatpush.bf16.msra.mxu0 %v5408
    %5427 = vmatmul.bf16.gmra.mxu0 %v5417
    %v5428 = vpop.f32.mrf.mxu0
    %v5429 = vadd.f32 0.0, %v5428
    %v5430 = vpop.f32.mrf.mxu0
    %5431 = vdwg.mxu0
    %v5440 = vunpack.c.l.b16 %v5080
    %v5441 = vunpack.c.l.b16 %v5081
    %v5442 = vunpack.c.l.b16 %v5082
    %v5443 = vunpack.c.l.b16 %v5083
    %v5444 = vunpack.c.l.b16 %v5084
    %v5445 = vunpack.c.l.b16 %v5085
    %v5446 = vunpack.c.l.b16 %v5086
    %v5447 = vunpack.c.l.b16 %v5087
    %v5448 = vpack.c.b16 %v5441, %v5440
    %v5449 = vpack.c.b16 %v5443, %v5442
    %v5450 = vpack.c.b16 %v5445, %v5444
    %v5451 = vpack.c.b16 %v5447, %v5446
    %v5457 = vsel %vm184, %v4885, 0
    %5459 = vmatpush.bf16.msra.mxu0 0
    %5460 = vmatpush.bf16.msra.mxu0 0
    %5461 = vmatpush.bf16.msra.mxu0 0
    %5462 = vmatpush.bf16.msra.mxu0 0
    %5463 = vmatpush.bf16.msra.mxu0 %v5451
    %5464 = vmatpush.bf16.msra.mxu0 %v5450
    %5465 = vmatpush.bf16.msra.mxu0 %v5449
    %5466 = vmatpush.bf16.msra.mxu0 %v5448
    %5467 = vmatmul.bf16.gmra.mxu0 %v5457
    %v5468 = vpop.f32.mrf.mxu0
    %v5469 = vadd.f32 0.0, %v5468
    %v5470 = vpop.f32.mrf.mxu0
    %5471 = vdwg.mxu0
    %v5480 = vunpack.c.l.b16 %v5088
    %v5481 = vunpack.c.l.b16 %v5089
    %v5482 = vunpack.c.l.b16 %v5090
    %v5483 = vunpack.c.l.b16 %v5091
    %v5484 = vunpack.c.l.b16 %v5092
    %v5485 = vunpack.c.l.b16 %v5093
    %v5486 = vunpack.c.l.b16 %v5094
    %v5487 = vunpack.c.l.b16 %v5095
    %v5488 = vpack.c.b16 %v5481, %v5480
    %v5489 = vpack.c.b16 %v5483, %v5482
    %v5490 = vpack.c.b16 %v5485, %v5484
    %v5491 = vpack.c.b16 %v5487, %v5486
    %v5497 = vsel %vm184, %v4886, 0
    %5499 = vmatpush.bf16.msra.mxu0 0
    %5500 = vmatpush.bf16.msra.mxu0 0
    %5501 = vmatpush.bf16.msra.mxu0 0
    %5502 = vmatpush.bf16.msra.mxu0 0
    %5503 = vmatpush.bf16.msra.mxu0 %v5491
    %5504 = vmatpush.bf16.msra.mxu0 %v5490
    %5505 = vmatpush.bf16.msra.mxu0 %v5489
    %5506 = vmatpush.bf16.msra.mxu0 %v5488
    %5507 = vmatmul.bf16.gmra.mxu0 %v5497
    %v5508 = vpop.f32.mrf.mxu0
    %v5509 = vadd.f32 0.0, %v5508
    %v5510 = vpop.f32.mrf.mxu0
    %5511 = vdwg.mxu0
    %v5520 = vunpack.c.l.b16 %v5096
    %v5521 = vunpack.c.l.b16 %v5097
    %v5522 = vunpack.c.l.b16 %v5098
    %v5523 = vunpack.c.l.b16 %v5099
    %v5524 = vunpack.c.l.b16 %v5100
    %v5525 = vunpack.c.l.b16 %v5101
    %v5526 = vunpack.c.l.b16 %v5102
    %v5527 = vunpack.c.l.b16 %v5103
    %v5528 = vpack.c.b16 %v5521, %v5520
    %v5529 = vpack.c.b16 %v5523, %v5522
    %v5530 = vpack.c.b16 %v5525, %v5524
    %v5531 = vpack.c.b16 %v5527, %v5526
    %v5537 = vsel %vm184, %v4887, 0
    %5539 = vmatpush.bf16.msra.mxu0 0
    %5540 = vmatpush.bf16.msra.mxu0 0
    %5541 = vmatpush.bf16.msra.mxu0 0
    %5542 = vmatpush.bf16.msra.mxu0 0
    %5543 = vmatpush.bf16.msra.mxu0 %v5531
    %5544 = vmatpush.bf16.msra.mxu0 %v5530
    %5545 = vmatpush.bf16.msra.mxu0 %v5529
    %5546 = vmatpush.bf16.msra.mxu0 %v5528
    %5547 = vmatmul.bf16.gmra.mxu0 %v5537
    %v5548 = vpop.f32.mrf.mxu0
    %v5549 = vadd.f32 0.0, %v5548
    %v5550 = vpop.f32.mrf.mxu0
    %5551 = vdwg.mxu0
    %v5560 = vunpack.c.l.b16 %v5104
    %v5561 = vunpack.c.l.b16 %v5105
    %v5562 = vunpack.c.l.b16 %v5106
    %v5563 = vunpack.c.l.b16 %v5107
    %v5564 = vunpack.c.l.b16 %v5108
    %v5565 = vunpack.c.l.b16 %v5109
    %v5566 = vunpack.c.l.b16 %v5110
    %v5567 = vunpack.c.l.b16 %v5111
    %v5568 = vpack.c.b16 %v5561, %v5560
    %v5569 = vpack.c.b16 %v5563, %v5562
    %v5570 = vpack.c.b16 %v5565, %v5564
    %v5571 = vpack.c.b16 %v5567, %v5566
    %v5577 = vsel %vm184, %v4888, 0
    %5579 = vmatpush.bf16.msra.mxu0 0
    %5580 = vmatpush.bf16.msra.mxu0 0
    %5581 = vmatpush.bf16.msra.mxu0 0
    %5582 = vmatpush.bf16.msra.mxu0 0
    %5583 = vmatpush.bf16.msra.mxu0 %v5571
    %5584 = vmatpush.bf16.msra.mxu0 %v5570
    %5585 = vmatpush.bf16.msra.mxu0 %v5569
    %5586 = vmatpush.bf16.msra.mxu0 %v5568
    %5587 = vmatmul.bf16.gmra.mxu0 %v5577
    %v5588 = vpop.f32.mrf.mxu0
    %v5589 = vadd.f32 0.0, %v5588
    %v5590 = vpop.f32.mrf.mxu0
    %5591 = vdwg.mxu0
    %v5600 = vunpack.c.l.b16 %v5112
    %v5601 = vunpack.c.l.b16 %v5113
    %v5602 = vunpack.c.l.b16 %v5114
    %v5603 = vunpack.c.l.b16 %v5115
    %v5604 = vunpack.c.l.b16 %v5116
    %v5605 = vunpack.c.l.b16 %v5117
    %v5606 = vunpack.c.l.b16 %v5118
    %v5607 = vunpack.c.l.b16 %v5119
    %v5608 = vpack.c.b16 %v5601, %v5600
    %v5609 = vpack.c.b16 %v5603, %v5602
    %v5610 = vpack.c.b16 %v5605, %v5604
    %v5611 = vpack.c.b16 %v5607, %v5606
    %v5617 = vsel %vm184, %v4889, 0
    %5619 = vmatpush.bf16.msra.mxu0 0
    %5620 = vmatpush.bf16.msra.mxu0 0
    %5621 = vmatpush.bf16.msra.mxu0 0
    %5622 = vmatpush.bf16.msra.mxu0 0
    %5623 = vmatpush.bf16.msra.mxu0 %v5611
    %5624 = vmatpush.bf16.msra.mxu0 %v5610
    %5625 = vmatpush.bf16.msra.mxu0 %v5609
    %5626 = vmatpush.bf16.msra.mxu0 %v5608
    %5627 = vmatmul.bf16.gmra.mxu0 %v5617
    %v5628 = vpop.f32.mrf.mxu0
    %v5629 = vadd.f32 0.0, %v5628
    %v5630 = vpop.f32.mrf.mxu0
    %5631 = vdwg.mxu0
    %v5640 = vunpack.c.l.b16 %v5120
    %v5641 = vunpack.c.l.b16 %v5121
    %v5642 = vunpack.c.l.b16 %v5122
    %v5643 = vunpack.c.l.b16 %v5123
    %v5644 = vunpack.c.l.b16 %v5124
    %v5645 = vunpack.c.l.b16 %v5125
    %v5646 = vunpack.c.l.b16 %v5126
    %v5647 = vunpack.c.l.b16 %v5127
    %v5648 = vpack.c.b16 %v5641, %v5640
    %v5649 = vpack.c.b16 %v5643, %v5642
    %v5650 = vpack.c.b16 %v5645, %v5644
    %v5651 = vpack.c.b16 %v5647, %v5646
    %v5657 = vsel %vm184, %v4890, 0
    %5659 = vmatpush.bf16.msra.mxu0 0
    %5660 = vmatpush.bf16.msra.mxu0 0
    %5661 = vmatpush.bf16.msra.mxu0 0
    %5662 = vmatpush.bf16.msra.mxu0 0
    %5663 = vmatpush.bf16.msra.mxu0 %v5651
    %5664 = vmatpush.bf16.msra.mxu0 %v5650
    %5665 = vmatpush.bf16.msra.mxu0 %v5649
    %5666 = vmatpush.bf16.msra.mxu0 %v5648
    %5667 = vmatmul.bf16.gmra.mxu0 %v5657
    %v5668 = vpop.f32.mrf.mxu0
    %v5669 = vadd.f32 0.0, %v5668
    %v5670 = vpop.f32.mrf.mxu0
    %5671 = vdwg.mxu0
    %v5680 = vunpack.c.l.b16 %v5128
    %v5681 = vunpack.c.l.b16 %v5129
    %v5682 = vunpack.c.l.b16 %v5130
    %v5683 = vunpack.c.l.b16 %v5131
    %v5684 = vunpack.c.l.b16 %v5132
    %v5685 = vunpack.c.l.b16 %v5133
    %v5686 = vunpack.c.l.b16 %v5134
    %v5687 = vunpack.c.l.b16 %v5135
    %v5688 = vpack.c.b16 %v5681, %v5680
    %v5689 = vpack.c.b16 %v5683, %v5682
    %v5690 = vpack.c.b16 %v5685, %v5684
    %v5691 = vpack.c.b16 %v5687, %v5686
    %v5697 = vsel %vm184, %v4891, 0
    %5699 = vmatpush.bf16.msra.mxu0 0
    %5700 = vmatpush.bf16.msra.mxu0 0
    %5701 = vmatpush.bf16.msra.mxu0 0
    %5702 = vmatpush.bf16.msra.mxu0 0
    %5703 = vmatpush.bf16.msra.mxu0 %v5691
    %5704 = vmatpush.bf16.msra.mxu0 %v5690
    %5705 = vmatpush.bf16.msra.mxu0 %v5689
    %5706 = vmatpush.bf16.msra.mxu0 %v5688
    %5707 = vmatmul.bf16.gmra.mxu0 %v5697
    %v5708 = vpop.f32.mrf.mxu0
    %v5709 = vadd.f32 0.0, %v5708
    %v5710 = vpop.f32.mrf.mxu0
    %5711 = vdwg.mxu0
    %v5720 = vunpack.c.l.b16 %v5136
    %v5721 = vunpack.c.l.b16 %v5137
    %v5722 = vunpack.c.l.b16 %v5138
    %v5723 = vunpack.c.l.b16 %v5139
    %v5724 = vunpack.c.l.b16 %v5140
    %v5725 = vunpack.c.l.b16 %v5141
    %v5726 = vunpack.c.l.b16 %v5142
    %v5727 = vunpack.c.l.b16 %v5143
    %v5728 = vpack.c.b16 %v5721, %v5720
    %v5729 = vpack.c.b16 %v5723, %v5722
    %v5730 = vpack.c.b16 %v5725, %v5724
    %v5731 = vpack.c.b16 %v5727, %v5726
    %v5737 = vsel %vm184, %v4892, 0
    %5739 = vmatpush.bf16.msra.mxu0 0
    %5740 = vmatpush.bf16.msra.mxu0 0
    %5741 = vmatpush.bf16.msra.mxu0 0
    %5742 = vmatpush.bf16.msra.mxu0 0
    %5743 = vmatpush.bf16.msra.mxu0 %v5731
    %5744 = vmatpush.bf16.msra.mxu0 %v5730
    %5745 = vmatpush.bf16.msra.mxu0 %v5729
    %5746 = vmatpush.bf16.msra.mxu0 %v5728
    %5747 = vmatmul.bf16.gmra.mxu0 %v5737
    %v5748 = vpop.f32.mrf.mxu0
    %v5749 = vadd.f32 0.0, %v5748
    %v5750 = vpop.f32.mrf.mxu0
    %5751 = vdwg.mxu0
    %v5760 = vunpack.c.l.b16 %v5144
    %v5761 = vunpack.c.l.b16 %v5145
    %v5762 = vunpack.c.l.b16 %v5146
    %v5763 = vunpack.c.l.b16 %v5147
    %v5764 = vunpack.c.l.b16 %v5148
    %v5765 = vunpack.c.l.b16 %v5149
    %v5766 = vunpack.c.l.b16 %v5150
    %v5767 = vunpack.c.l.b16 %v5151
    %v5768 = vpack.c.b16 %v5761, %v5760
    %v5769 = vpack.c.b16 %v5763, %v5762
    %v5770 = vpack.c.b16 %v5765, %v5764
    %v5771 = vpack.c.b16 %v5767, %v5766
    %v5777 = vsel %vm184, %v4893, 0
    %5779 = vmatpush.bf16.msra.mxu0 0
    %5780 = vmatpush.bf16.msra.mxu0 0
    %5781 = vmatpush.bf16.msra.mxu0 0
    %5782 = vmatpush.bf16.msra.mxu0 0
    %5783 = vmatpush.bf16.msra.mxu0 %v5771
    %5784 = vmatpush.bf16.msra.mxu0 %v5770
    %5785 = vmatpush.bf16.msra.mxu0 %v5769
    %5786 = vmatpush.bf16.msra.mxu0 %v5768
    %5787 = vmatmul.bf16.gmra.mxu0 %v5777
    %v5788 = vpop.f32.mrf.mxu0
    %v5789 = vadd.f32 0.0, %v5788
    %v5790 = vpop.f32.mrf.mxu0
    %5791 = vdwg.mxu0
    %v5800 = vunpack.c.l.b16 %v4895
    %v5801 = vunpack.c.l.b16 %v4896
    %v5802 = vunpack.c.l.b16 %v4897
    %v5803 = vunpack.c.l.b16 %v4898
    %v5804 = vunpack.c.l.b16 %v4899
    %v5805 = vunpack.c.l.b16 %v4900
    %v5806 = vunpack.c.l.b16 %v4901
    %v5807 = vunpack.c.l.b16 %v4902
    %v5808 = vpack.c.b16 %v5801, %v5800
    %v5809 = vpack.c.b16 %v5803, %v5802
    %v5810 = vpack.c.b16 %v5805, %v5804
    %v5811 = vpack.c.b16 %v5807, %v5806
    %v5817 = vsel %vm184, %v4750, 0
    %5819 = vmatpush.bf16.msra.mxu0 0
    %5820 = vmatpush.bf16.msra.mxu0 0
    %5821 = vmatpush.bf16.msra.mxu0 0
    %5822 = vmatpush.bf16.msra.mxu0 0
    %5823 = vmatpush.bf16.msra.mxu0 %v5811
    %5824 = vmatpush.bf16.msra.mxu0 %v5810
    %5825 = vmatpush.bf16.msra.mxu0 %v5809
    %5826 = vmatpush.bf16.msra.mxu0 %v5808
    %5827 = vmatmul.bf16.gmra.mxu0 %v5817
    %v5828 = vpop.f32.mrf.mxu0
    %v5829 = vadd.f32 %v5189, %v5828
    %v5830 = vpop.f32.mrf.mxu0
    %5831 = vdwg.mxu0
    %v5840 = vunpack.c.l.b16 %v4903
    %v5841 = vunpack.c.l.b16 %v4904
    %v5842 = vunpack.c.l.b16 %v4905
    %v5843 = vunpack.c.l.b16 %v4906
    %v5844 = vunpack.c.l.b16 %v4907
    %v5845 = vunpack.c.l.b16 %v4908
    %v5846 = vunpack.c.l.b16 %v4909
    %v5847 = vunpack.c.l.b16 %v4910
    %v5848 = vpack.c.b16 %v5841, %v5840
    %v5849 = vpack.c.b16 %v5843, %v5842
    %v5850 = vpack.c.b16 %v5845, %v5844
    %v5851 = vpack.c.b16 %v5847, %v5846
    %v5857 = vsel %vm184, %v4751, 0
    %5859 = vmatpush.bf16.msra.mxu0 0
    %5860 = vmatpush.bf16.msra.mxu0 0
    %5861 = vmatpush.bf16.msra.mxu0 0
    %5862 = vmatpush.bf16.msra.mxu0 0
    %5863 = vmatpush.bf16.msra.mxu0 %v5851
    %5864 = vmatpush.bf16.msra.mxu0 %v5850
    %5865 = vmatpush.bf16.msra.mxu0 %v5849
    %5866 = vmatpush.bf16.msra.mxu0 %v5848
    %5867 = vmatmul.bf16.gmra.mxu0 %v5857
    %v5868 = vpop.f32.mrf.mxu0
    %v5869 = vadd.f32 %v5229, %v5868
    %v5870 = vpop.f32.mrf.mxu0
    %5871 = vdwg.mxu0
    %v5880 = vunpack.c.l.b16 %v4911
    %v5881 = vunpack.c.l.b16 %v4912
    %v5882 = vunpack.c.l.b16 %v4913
    %v5883 = vunpack.c.l.b16 %v4914
    %v5884 = vunpack.c.l.b16 %v4915
    %v5885 = vunpack.c.l.b16 %v4916
    %v5886 = vunpack.c.l.b16 %v4917
    %v5887 = vunpack.c.l.b16 %v4918
    %v5888 = vpack.c.b16 %v5881, %v5880
    %v5889 = vpack.c.b16 %v5883, %v5882
    %v5890 = vpack.c.b16 %v5885, %v5884
    %v5891 = vpack.c.b16 %v5887, %v5886
    %v5897 = vsel %vm184, %v4752, 0
    %5899 = vmatpush.bf16.msra.mxu0 0
    %5900 = vmatpush.bf16.msra.mxu0 0
    %5901 = vmatpush.bf16.msra.mxu0 0
    %5902 = vmatpush.bf16.msra.mxu0 0
    %5903 = vmatpush.bf16.msra.mxu0 %v5891
    %5904 = vmatpush.bf16.msra.mxu0 %v5890
    %5905 = vmatpush.bf16.msra.mxu0 %v5889
    %5906 = vmatpush.bf16.msra.mxu0 %v5888
    %5907 = vmatmul.bf16.gmra.mxu0 %v5897
    %v5908 = vpop.f32.mrf.mxu0
    %v5909 = vadd.f32 %v5269, %v5908
    %v5910 = vpop.f32.mrf.mxu0
    %5911 = vdwg.mxu0
    %v5920 = vunpack.c.l.b16 %v4919
    %v5921 = vunpack.c.l.b16 %v4920
    %v5922 = vunpack.c.l.b16 %v4921
    %v5923 = vunpack.c.l.b16 %v4922
    %v5924 = vunpack.c.l.b16 %v4923
    %v5925 = vunpack.c.l.b16 %v4924
    %v5926 = vunpack.c.l.b16 %v4925
    %v5927 = vunpack.c.l.b16 %v4926
    %v5928 = vpack.c.b16 %v5921, %v5920
    %v5929 = vpack.c.b16 %v5923, %v5922
    %v5930 = vpack.c.b16 %v5925, %v5924
    %v5931 = vpack.c.b16 %v5927, %v5926
    %v5937 = vsel %vm184, %v4753, 0
    %5939 = vmatpush.bf16.msra.mxu0 0
    %5940 = vmatpush.bf16.msra.mxu0 0
    %5941 = vmatpush.bf16.msra.mxu0 0
    %5942 = vmatpush.bf16.msra.mxu0 0
    %5943 = vmatpush.bf16.msra.mxu0 %v5931
    %5944 = vmatpush.bf16.msra.mxu0 %v5930
    %5945 = vmatpush.bf16.msra.mxu0 %v5929
    %5946 = vmatpush.bf16.msra.mxu0 %v5928
    %5947 = vmatmul.bf16.gmra.mxu0 %v5937
    %v5948 = vpop.f32.mrf.mxu0
    %v5949 = vadd.f32 %v5309, %v5948
    %v5950 = vpop.f32.mrf.mxu0
    %5951 = vdwg.mxu0
    %v5960 = vunpack.c.l.b16 %v4927
    %v5961 = vunpack.c.l.b16 %v4928
    %v5962 = vunpack.c.l.b16 %v4929
    %v5963 = vunpack.c.l.b16 %v4930
    %v5964 = vunpack.c.l.b16 %v4931
    %v5965 = vunpack.c.l.b16 %v4932
    %v5966 = vunpack.c.l.b16 %v4933
    %v5967 = vunpack.c.l.b16 %v4934
    %v5968 = vpack.c.b16 %v5961, %v5960
    %v5969 = vpack.c.b16 %v5963, %v5962
    %v5970 = vpack.c.b16 %v5965, %v5964
    %v5971 = vpack.c.b16 %v5967, %v5966
    %v5977 = vsel %vm184, %v4754, 0
    %5979 = vmatpush.bf16.msra.mxu0 0
    %5980 = vmatpush.bf16.msra.mxu0 0
    %5981 = vmatpush.bf16.msra.mxu0 0
    %5982 = vmatpush.bf16.msra.mxu0 0
    %5983 = vmatpush.bf16.msra.mxu0 %v5971
    %5984 = vmatpush.bf16.msra.mxu0 %v5970
    %5985 = vmatpush.bf16.msra.mxu0 %v5969
    %5986 = vmatpush.bf16.msra.mxu0 %v5968
    %5987 = vmatmul.bf16.gmra.mxu0 %v5977
    %v5988 = vpop.f32.mrf.mxu0
    %v5989 = vadd.f32 %v5349, %v5988
    %v5990 = vpop.f32.mrf.mxu0
    %5991 = vdwg.mxu0
    %v6000 = vunpack.c.l.b16 %v4935
    %v6001 = vunpack.c.l.b16 %v4936
    %v6002 = vunpack.c.l.b16 %v4937
    %v6003 = vunpack.c.l.b16 %v4938
    %v6004 = vunpack.c.l.b16 %v4939
    %v6005 = vunpack.c.l.b16 %v4940
    %v6006 = vunpack.c.l.b16 %v4941
    %v6007 = vunpack.c.l.b16 %v4942
    %v6008 = vpack.c.b16 %v6001, %v6000
    %v6009 = vpack.c.b16 %v6003, %v6002
    %v6010 = vpack.c.b16 %v6005, %v6004
    %v6011 = vpack.c.b16 %v6007, %v6006
    %v6017 = vsel %vm184, %v4755, 0
    %6019 = vmatpush.bf16.msra.mxu0 0
    %6020 = vmatpush.bf16.msra.mxu0 0
    %6021 = vmatpush.bf16.msra.mxu0 0
    %6022 = vmatpush.bf16.msra.mxu0 0
    %6023 = vmatpush.bf16.msra.mxu0 %v6011
    %6024 = vmatpush.bf16.msra.mxu0 %v6010
    %6025 = vmatpush.bf16.msra.mxu0 %v6009
    %6026 = vmatpush.bf16.msra.mxu0 %v6008
    %6027 = vmatmul.bf16.gmra.mxu0 %v6017
    %v6028 = vpop.f32.mrf.mxu0
    %v6029 = vadd.f32 %v5389, %v6028
    %v6030 = vpop.f32.mrf.mxu0
    %6031 = vdwg.mxu0
    %v6040 = vunpack.c.l.b16 %v4943
    %v6041 = vunpack.c.l.b16 %v4944
    %v6042 = vunpack.c.l.b16 %v4945
    %v6043 = vunpack.c.l.b16 %v4946
    %v6044 = vunpack.c.l.b16 %v4947
    %v6045 = vunpack.c.l.b16 %v4948
    %v6046 = vunpack.c.l.b16 %v4949
    %v6047 = vunpack.c.l.b16 %v4950
    %v6048 = vpack.c.b16 %v6041, %v6040
    %v6049 = vpack.c.b16 %v6043, %v6042
    %v6050 = vpack.c.b16 %v6045, %v6044
    %v6051 = vpack.c.b16 %v6047, %v6046
    %v6057 = vsel %vm184, %v4756, 0
    %6059 = vmatpush.bf16.msra.mxu0 0
    %6060 = vmatpush.bf16.msra.mxu0 0
    %6061 = vmatpush.bf16.msra.mxu0 0
    %6062 = vmatpush.bf16.msra.mxu0 0
    %6063 = vmatpush.bf16.msra.mxu0 %v6051
    %6064 = vmatpush.bf16.msra.mxu0 %v6050
    %6065 = vmatpush.bf16.msra.mxu0 %v6049
    %6066 = vmatpush.bf16.msra.mxu0 %v6048
    %6067 = vmatmul.bf16.gmra.mxu0 %v6057
    %v6068 = vpop.f32.mrf.mxu0
    %v6069 = vadd.f32 %v5429, %v6068
    %v6070 = vpop.f32.mrf.mxu0
    %6071 = vdwg.mxu0
    %v6080 = vunpack.c.l.b16 %v4951
    %v6081 = vunpack.c.l.b16 %v4952
    %v6082 = vunpack.c.l.b16 %v4953
    %v6083 = vunpack.c.l.b16 %v4954
    %v6084 = vunpack.c.l.b16 %v4955
    %v6085 = vunpack.c.l.b16 %v4956
    %v6086 = vunpack.c.l.b16 %v4957
    %v6087 = vunpack.c.l.b16 %v4958
    %v6088 = vpack.c.b16 %v6081, %v6080
    %v6089 = vpack.c.b16 %v6083, %v6082
    %v6090 = vpack.c.b16 %v6085, %v6084
    %v6091 = vpack.c.b16 %v6087, %v6086
    %v6097 = vsel %vm184, %v4757, 0
    %6099 = vmatpush.bf16.msra.mxu0 0
    %6100 = vmatpush.bf16.msra.mxu0 0
    %6101 = vmatpush.bf16.msra.mxu0 0
    %6102 = vmatpush.bf16.msra.mxu0 0
    %6103 = vmatpush.bf16.msra.mxu0 %v6091
    %6104 = vmatpush.bf16.msra.mxu0 %v6090
    %6105 = vmatpush.bf16.msra.mxu0 %v6089
    %6106 = vmatpush.bf16.msra.mxu0 %v6088
    %6107 = vmatmul.bf16.gmra.mxu0 %v6097
    %v6108 = vpop.f32.mrf.mxu0
    %v6109 = vadd.f32 %v5469, %v6108
    %v6110 = vpop.f32.mrf.mxu0
    %6111 = vdwg.mxu0
    %v6120 = vunpack.c.l.b16 %v4959
    %v6121 = vunpack.c.l.b16 %v4960
    %v6122 = vunpack.c.l.b16 %v4961
    %v6123 = vunpack.c.l.b16 %v4962
    %v6124 = vunpack.c.l.b16 %v4963
    %v6125 = vunpack.c.l.b16 %v4964
    %v6126 = vunpack.c.l.b16 %v4965
    %v6127 = vunpack.c.l.b16 %v4966
    %v6128 = vpack.c.b16 %v6121, %v6120
    %v6129 = vpack.c.b16 %v6123, %v6122
    %v6130 = vpack.c.b16 %v6125, %v6124
    %v6131 = vpack.c.b16 %v6127, %v6126
    %v6137 = vsel %vm184, %v4758, 0
    %6139 = vmatpush.bf16.msra.mxu0 0
    %6140 = vmatpush.bf16.msra.mxu0 0
    %6141 = vmatpush.bf16.msra.mxu0 0
    %6142 = vmatpush.bf16.msra.mxu0 0
    %6143 = vmatpush.bf16.msra.mxu0 %v6131
    %6144 = vmatpush.bf16.msra.mxu0 %v6130
    %6145 = vmatpush.bf16.msra.mxu0 %v6129
    %6146 = vmatpush.bf16.msra.mxu0 %v6128
    %6147 = vmatmul.bf16.gmra.mxu0 %v6137
    %v6148 = vpop.f32.mrf.mxu0
    %v6149 = vadd.f32 %v5509, %v6148
    %v6150 = vpop.f32.mrf.mxu0
    %6151 = vdwg.mxu0
    %v6160 = vunpack.c.l.b16 %v4967
    %v6161 = vunpack.c.l.b16 %v4968
    %v6162 = vunpack.c.l.b16 %v4969
    %v6163 = vunpack.c.l.b16 %v4970
    %v6164 = vunpack.c.l.b16 %v4971
    %v6165 = vunpack.c.l.b16 %v4972
    %v6166 = vunpack.c.l.b16 %v4973
    %v6167 = vunpack.c.l.b16 %v4974
    %v6168 = vpack.c.b16 %v6161, %v6160
    %v6169 = vpack.c.b16 %v6163, %v6162
    %v6170 = vpack.c.b16 %v6165, %v6164
    %v6171 = vpack.c.b16 %v6167, %v6166
    %v6177 = vsel %vm184, %v4759, 0
    %6179 = vmatpush.bf16.msra.mxu0 0
    %6180 = vmatpush.bf16.msra.mxu0 0
    %6181 = vmatpush.bf16.msra.mxu0 0
    %6182 = vmatpush.bf16.msra.mxu0 0
    %6183 = vmatpush.bf16.msra.mxu0 %v6171
    %6184 = vmatpush.bf16.msra.mxu0 %v6170
    %6185 = vmatpush.bf16.msra.mxu0 %v6169
    %6186 = vmatpush.bf16.msra.mxu0 %v6168
    %6187 = vmatmul.bf16.gmra.mxu0 %v6177
    %v6188 = vpop.f32.mrf.mxu0
    %v6189 = vadd.f32 %v5549, %v6188
    %v6190 = vpop.f32.mrf.mxu0
    %6191 = vdwg.mxu0
    %v6200 = vunpack.c.l.b16 %v4975
    %v6201 = vunpack.c.l.b16 %v4976
    %v6202 = vunpack.c.l.b16 %v4977
    %v6203 = vunpack.c.l.b16 %v4978
    %v6204 = vunpack.c.l.b16 %v4979
    %v6205 = vunpack.c.l.b16 %v4980
    %v6206 = vunpack.c.l.b16 %v4981
    %v6207 = vunpack.c.l.b16 %v4982
    %v6208 = vpack.c.b16 %v6201, %v6200
    %v6209 = vpack.c.b16 %v6203, %v6202
    %v6210 = vpack.c.b16 %v6205, %v6204
    %v6211 = vpack.c.b16 %v6207, %v6206
    %v6217 = vsel %vm184, %v4760, 0
    %6219 = vmatpush.bf16.msra.mxu0 0
    %6220 = vmatpush.bf16.msra.mxu0 0
    %6221 = vmatpush.bf16.msra.mxu0 0
    %6222 = vmatpush.bf16.msra.mxu0 0
    %6223 = vmatpush.bf16.msra.mxu0 %v6211
    %6224 = vmatpush.bf16.msra.mxu0 %v6210
    %6225 = vmatpush.bf16.msra.mxu0 %v6209
    %6226 = vmatpush.bf16.msra.mxu0 %v6208
    %6227 = vmatmul.bf16.gmra.mxu0 %v6217
    %v6228 = vpop.f32.mrf.mxu0
    %v6229 = vadd.f32 %v5589, %v6228
    %v6230 = vpop.f32.mrf.mxu0
    %6231 = vdwg.mxu0
    %v6240 = vunpack.c.l.b16 %v4983
    %v6241 = vunpack.c.l.b16 %v4984
    %v6242 = vunpack.c.l.b16 %v4985
    %v6243 = vunpack.c.l.b16 %v4986
    %v6244 = vunpack.c.l.b16 %v4987
    %v6245 = vunpack.c.l.b16 %v4988
    %v6246 = vunpack.c.l.b16 %v4989
    %v6247 = vunpack.c.l.b16 %v4990
    %v6248 = vpack.c.b16 %v6241, %v6240
    %v6249 = vpack.c.b16 %v6243, %v6242
    %v6250 = vpack.c.b16 %v6245, %v6244
    %v6251 = vpack.c.b16 %v6247, %v6246
    %v6257 = vsel %vm184, %v4761, 0
    %6259 = vmatpush.bf16.msra.mxu0 0
    %6260 = vmatpush.bf16.msra.mxu0 0
    %6261 = vmatpush.bf16.msra.mxu0 0
    %6262 = vmatpush.bf16.msra.mxu0 0
    %6263 = vmatpush.bf16.msra.mxu0 %v6251
    %6264 = vmatpush.bf16.msra.mxu0 %v6250
    %6265 = vmatpush.bf16.msra.mxu0 %v6249
    %6266 = vmatpush.bf16.msra.mxu0 %v6248
    %6267 = vmatmul.bf16.gmra.mxu0 %v6257
    %v6268 = vpop.f32.mrf.mxu0
    %v6269 = vadd.f32 %v5629, %v6268
    %v6270 = vpop.f32.mrf.mxu0
    %6271 = vdwg.mxu0
    %v6280 = vunpack.c.l.b16 %v4991
    %v6281 = vunpack.c.l.b16 %v4992
    %v6282 = vunpack.c.l.b16 %v4993
    %v6283 = vunpack.c.l.b16 %v4994
    %v6284 = vunpack.c.l.b16 %v4995
    %v6285 = vunpack.c.l.b16 %v4996
    %v6286 = vunpack.c.l.b16 %v4997
    %v6287 = vunpack.c.l.b16 %v4998
    %v6288 = vpack.c.b16 %v6281, %v6280
    %v6289 = vpack.c.b16 %v6283, %v6282
    %v6290 = vpack.c.b16 %v6285, %v6284
    %v6291 = vpack.c.b16 %v6287, %v6286
    %v6297 = vsel %vm184, %v4762, 0
    %6299 = vmatpush.bf16.msra.mxu0 0
    %6300 = vmatpush.bf16.msra.mxu0 0
    %6301 = vmatpush.bf16.msra.mxu0 0
    %6302 = vmatpush.bf16.msra.mxu0 0
    %6303 = vmatpush.bf16.msra.mxu0 %v6291
    %6304 = vmatpush.bf16.msra.mxu0 %v6290
    %6305 = vmatpush.bf16.msra.mxu0 %v6289
    %6306 = vmatpush.bf16.msra.mxu0 %v6288
    %6307 = vmatmul.bf16.gmra.mxu0 %v6297
    %v6308 = vpop.f32.mrf.mxu0
    %v6309 = vadd.f32 %v5669, %v6308
    %v6310 = vpop.f32.mrf.mxu0
    %6311 = vdwg.mxu0
    %v6320 = vunpack.c.l.b16 %v4999
    %v6321 = vunpack.c.l.b16 %v5000
    %v6322 = vunpack.c.l.b16 %v5001
    %v6323 = vunpack.c.l.b16 %v5002
    %v6324 = vunpack.c.l.b16 %v5003
    %v6325 = vunpack.c.l.b16 %v5004
    %v6326 = vunpack.c.l.b16 %v5005
    %v6327 = vunpack.c.l.b16 %v5006
    %v6328 = vpack.c.b16 %v6321, %v6320
    %v6329 = vpack.c.b16 %v6323, %v6322
    %v6330 = vpack.c.b16 %v6325, %v6324
    %v6331 = vpack.c.b16 %v6327, %v6326
    %v6337 = vsel %vm184, %v4763, 0
    %6339 = vmatpush.bf16.msra.mxu0 0
    %6340 = vmatpush.bf16.msra.mxu0 0
    %6341 = vmatpush.bf16.msra.mxu0 0
    %6342 = vmatpush.bf16.msra.mxu0 0
    %6343 = vmatpush.bf16.msra.mxu0 %v6331
    %6344 = vmatpush.bf16.msra.mxu0 %v6330
    %6345 = vmatpush.bf16.msra.mxu0 %v6329
    %6346 = vmatpush.bf16.msra.mxu0 %v6328
    %6347 = vmatmul.bf16.gmra.mxu0 %v6337
    %v6348 = vpop.f32.mrf.mxu0
    %v6349 = vadd.f32 %v5709, %v6348
    %v6350 = vpop.f32.mrf.mxu0
    %6351 = vdwg.mxu0
    %v6360 = vunpack.c.l.b16 %v5007
    %v6361 = vunpack.c.l.b16 %v5008
    %v6362 = vunpack.c.l.b16 %v5009
    %v6363 = vunpack.c.l.b16 %v5010
    %v6364 = vunpack.c.l.b16 %v5011
    %v6365 = vunpack.c.l.b16 %v5012
    %v6366 = vunpack.c.l.b16 %v5013
    %v6367 = vunpack.c.l.b16 %v5014
    %v6368 = vpack.c.b16 %v6361, %v6360
    %v6369 = vpack.c.b16 %v6363, %v6362
    %v6370 = vpack.c.b16 %v6365, %v6364
    %v6371 = vpack.c.b16 %v6367, %v6366
    %v6377 = vsel %vm184, %v4764, 0
    %6379 = vmatpush.bf16.msra.mxu0 0
    %6380 = vmatpush.bf16.msra.mxu0 0
    %6381 = vmatpush.bf16.msra.mxu0 0
    %6382 = vmatpush.bf16.msra.mxu0 0
    %6383 = vmatpush.bf16.msra.mxu0 %v6371
    %6384 = vmatpush.bf16.msra.mxu0 %v6370
    %6385 = vmatpush.bf16.msra.mxu0 %v6369
    %6386 = vmatpush.bf16.msra.mxu0 %v6368
    %6387 = vmatmul.bf16.gmra.mxu0 %v6377
    %v6388 = vpop.f32.mrf.mxu0
    %v6389 = vadd.f32 %v5749, %v6388
    %v6390 = vpop.f32.mrf.mxu0
    %6391 = vdwg.mxu0
    %v6400 = vunpack.c.l.b16 %v5015
    %v6401 = vunpack.c.l.b16 %v5016
    %v6402 = vunpack.c.l.b16 %v5017
    %v6403 = vunpack.c.l.b16 %v5018
    %v6404 = vunpack.c.l.b16 %v5019
    %v6405 = vunpack.c.l.b16 %v5020
    %v6406 = vunpack.c.l.b16 %v5021
    %v6407 = vunpack.c.l.b16 %v5022
    %v6408 = vpack.c.b16 %v6401, %v6400
    %v6409 = vpack.c.b16 %v6403, %v6402
    %v6410 = vpack.c.b16 %v6405, %v6404
    %v6411 = vpack.c.b16 %v6407, %v6406
    %v6417 = vsel %vm184, %v4765, 0
    %6419 = vmatpush.bf16.msra.mxu0 0
    %6420 = vmatpush.bf16.msra.mxu0 0
    %6421 = vmatpush.bf16.msra.mxu0 0
    %6422 = vmatpush.bf16.msra.mxu0 0
    %6423 = vmatpush.bf16.msra.mxu0 %v6411
    %6424 = vmatpush.bf16.msra.mxu0 %v6410
    %6425 = vmatpush.bf16.msra.mxu0 %v6409
    %6426 = vmatpush.bf16.msra.mxu0 %v6408
    %6427 = vmatmul.bf16.gmra.mxu0 %v6417
    %v6428 = vpop.f32.mrf.mxu0
    %v6429 = vadd.f32 %v5789, %v6428
    %v6430 = vpop.f32.mrf.mxu0
    %6431 = vdwg.mxu0
    %v6432 = vrot.slane %v5909, 4
    %v6433 = vsel %vm219, %v6432, %v5829
    %v6435 = vunpack.c.l.s4 1983009808
    %v6436 = vunpack.c.0.s8 %v6435
    %v6437 = vperm.slane %v6433, %v6436
    %v6438 = vrot.slane %v5949, 4
    %v6439 = vsel %vm219, %v6438, %v5869
    %v6441 = vunpack.c.l.s4 1983009808
    %v6442 = vunpack.c.0.s8 %v6441
    %v6443 = vperm.slane %v6439, %v6442
    %v6444 = vrot.slane %v6069, 4
    %v6445 = vsel %vm219, %v6444, %v5989
    %v6447 = vunpack.c.l.s4 1983009808
    %v6448 = vunpack.c.0.s8 %v6447
    %v6449 = vperm.slane %v6445, %v6448
    %v6450 = vrot.slane %v6109, 4
    %v6451 = vsel %vm219, %v6450, %v6029
    %v6453 = vunpack.c.l.s4 1983009808
    %v6454 = vunpack.c.0.s8 %v6453
    %v6455 = vperm.slane %v6451, %v6454
    %v6456 = vrot.slane %v6443, 4
    %v6457 = vsel %vm219, %v6456, %v6437
    %v6459 = vunpack.c.l.s4 1934713408
    %v6460 = vunpack.c.0.s8 %v6459
    %v6461 = vperm.slane %v6457, %v6460
    %v6462 = vrot.slane %v6455, 4
    %v6463 = vsel %vm219, %v6462, %v6449
    %v6465 = vunpack.c.l.s4 1934713408
    %v6466 = vunpack.c.0.s8 %v6465
    %v6467 = vperm.slane %v6463, %v6466
    %v6468 = vrot.slane %v6467, 4
    %v6469 = vsel %vm219, %v6468, %v6461
    %v6470 = vrot.slane %v6461, 4
    %v6471 = vsel %vm219, %v6467, %v6470
    %v6472 = vrot.slane %v6229, 4
    %v6473 = vsel %vm219, %v6472, %v6149
    %v6475 = vunpack.c.l.s4 1983009808
    %v6476 = vunpack.c.0.s8 %v6475
    %v6477 = vperm.slane %v6473, %v6476
    %v6478 = vrot.slane %v6269, 4
    %v6479 = vsel %vm219, %v6478, %v6189
    %v6481 = vunpack.c.l.s4 1983009808
    %v6482 = vunpack.c.0.s8 %v6481
    %v6483 = vperm.slane %v6479, %v6482
    %v6484 = vrot.slane %v6389, 4
    %v6485 = vsel %vm219, %v6484, %v6309
    %v6487 = vunpack.c.l.s4 1983009808
    %v6488 = vunpack.c.0.s8 %v6487
    %v6489 = vperm.slane %v6485, %v6488
    %v6490 = vrot.slane %v6429, 4
    %v6491 = vsel %vm219, %v6490, %v6349
    %v6493 = vunpack.c.l.s4 1983009808
    %v6494 = vunpack.c.0.s8 %v6493
    %v6495 = vperm.slane %v6491, %v6494
    %v6496 = vrot.slane %v6483, 4
    %v6497 = vsel %vm219, %v6496, %v6477
    %v6499 = vunpack.c.l.s4 1934713408
    %v6500 = vunpack.c.0.s8 %v6499
    %v6501 = vperm.slane %v6497, %v6500
    %v6502 = vrot.slane %v6495, 4
    %v6503 = vsel %vm219, %v6502, %v6489
    %v6505 = vunpack.c.l.s4 1934713408
    %v6506 = vunpack.c.0.s8 %v6505
    %v6507 = vperm.slane %v6503, %v6506
    %v6508 = vrot.slane %v6507, 4
    %v6509 = vsel %vm219, %v6508, %v6501
    %v6510 = vrot.slane %v6501, 4
    %v6511 = vsel %vm219, %v6507, %v6510
    %6514 = vrot.lane.b32.xlu0 %v6471, 64
    %v6515 = vpop.permute.xlu0 %6514
    %6516 = vrot.lane.b32.xlu0 %v6511, 64
    %v6517 = vpop.permute.xlu0 %6516
    %v6520 = vsel %vm184, %v6469, %v6515
    %v6521 = vsel %vm184, %v6509, %v6517
    %6538 = vrot.lane.b32.xlu0 %v5829, 64
    %v6539 = vpop.permute.xlu0 %6538
    %6540 = vrot.lane.b32.xlu0 %v5869, 64
    %v6541 = vpop.permute.xlu0 %6540
    %6542 = vrot.lane.b32.xlu0 %v5909, 64
    %v6543 = vpop.permute.xlu0 %6542
    %6544 = vrot.lane.b32.xlu0 %v5949, 64
    %v6545 = vpop.permute.xlu0 %6544
    %6546 = vrot.lane.b32.xlu0 %v5989, 64
    %v6547 = vpop.permute.xlu0 %6546
    %6548 = vrot.lane.b32.xlu0 %v6029, 64
    %v6549 = vpop.permute.xlu0 %6548
    %6550 = vrot.lane.b32.xlu0 %v6069, 64
    %v6551 = vpop.permute.xlu0 %6550
    %6552 = vrot.lane.b32.xlu0 %v6109, 64
    %v6553 = vpop.permute.xlu0 %6552
    %6554 = vrot.lane.b32.xlu0 %v6149, 64
    %v6555 = vpop.permute.xlu0 %6554
    %6556 = vrot.lane.b32.xlu0 %v6189, 64
    %v6557 = vpop.permute.xlu0 %6556
    %6558 = vrot.lane.b32.xlu0 %v6229, 64
    %v6559 = vpop.permute.xlu0 %6558
    %6560 = vrot.lane.b32.xlu0 %v6269, 64
    %v6561 = vpop.permute.xlu0 %6560
    %6562 = vrot.lane.b32.xlu0 %v6309, 64
    %v6563 = vpop.permute.xlu0 %6562
    %6564 = vrot.lane.b32.xlu0 %v6349, 64
    %v6565 = vpop.permute.xlu0 %6564
    %6566 = vrot.lane.b32.xlu0 %v6389, 64
    %v6567 = vpop.permute.xlu0 %6566
    %6568 = vrot.lane.b32.xlu0 %v6429, 64
    %v6569 = vpop.permute.xlu0 %6568
    %v6586 = vrot.slane %v6543, 4
    %v6587 = vsel %vm219, %v6586, %v6539
    %v6589 = vunpack.c.l.s4 1983009808
    %v6590 = vunpack.c.0.s8 %v6589
    %v6591 = vperm.slane %v6587, %v6590
    %v6592 = vrot.slane %v6545, 4
    %v6593 = vsel %vm219, %v6592, %v6541
    %v6595 = vunpack.c.l.s4 1983009808
    %v6596 = vunpack.c.0.s8 %v6595
    %v6597 = vperm.slane %v6593, %v6596
    %v6598 = vrot.slane %v6551, 4
    %v6599 = vsel %vm219, %v6598, %v6547
    %v6601 = vunpack.c.l.s4 1983009808
    %v6602 = vunpack.c.0.s8 %v6601
    %v6603 = vperm.slane %v6599, %v6602
    %v6604 = vrot.slane %v6553, 4
    %v6605 = vsel %vm219, %v6604, %v6549
    %v6607 = vunpack.c.l.s4 1983009808
    %v6608 = vunpack.c.0.s8 %v6607
    %v6609 = vperm.slane %v6605, %v6608
    %v6610 = vrot.slane %v6597, 4
    %v6611 = vsel %vm219, %v6610, %v6591
    %v6613 = vunpack.c.l.s4 1934713408
    %v6614 = vunpack.c.0.s8 %v6613
    %v6615 = vperm.slane %v6611, %v6614
    %v6616 = vrot.slane %v6609, 4
    %v6617 = vsel %vm219, %v6616, %v6603
    %v6619 = vunpack.c.l.s4 1934713408
    %v6620 = vunpack.c.0.s8 %v6619
    %v6621 = vperm.slane %v6617, %v6620
    %v6622 = vrot.slane %v6621, 4
    %v6623 = vsel %vm219, %v6622, %v6615
    %v6624 = vrot.slane %v6615, 4
    %v6625 = vsel %vm219, %v6621, %v6624
    %v6626 = vrot.slane %v6559, 4
    %v6627 = vsel %vm219, %v6626, %v6555
    %v6629 = vunpack.c.l.s4 1983009808
    %v6630 = vunpack.c.0.s8 %v6629
    %v6631 = vperm.slane %v6627, %v6630
    %v6632 = vrot.slane %v6561, 4
    %v6633 = vsel %vm219, %v6632, %v6557
    %v6635 = vunpack.c.l.s4 1983009808
    %v6636 = vunpack.c.0.s8 %v6635
    %v6637 = vperm.slane %v6633, %v6636
    %v6638 = vrot.slane %v6567, 4
    %v6639 = vsel %vm219, %v6638, %v6563
    %v6641 = vunpack.c.l.s4 1983009808
    %v6642 = vunpack.c.0.s8 %v6641
    %v6643 = vperm.slane %v6639, %v6642
    %v6644 = vrot.slane %v6569, 4
    %v6645 = vsel %vm219, %v6644, %v6565
    %v6647 = vunpack.c.l.s4 1983009808
    %v6648 = vunpack.c.0.s8 %v6647
    %v6649 = vperm.slane %v6645, %v6648
    %v6650 = vrot.slane %v6637, 4
    %v6651 = vsel %vm219, %v6650, %v6631
    %v6653 = vunpack.c.l.s4 1934713408
    %v6654 = vunpack.c.0.s8 %v6653
    %v6655 = vperm.slane %v6651, %v6654
    %v6656 = vrot.slane %v6649, 4
    %v6657 = vsel %vm219, %v6656, %v6643
    %v6659 = vunpack.c.l.s4 1934713408
    %v6660 = vunpack.c.0.s8 %v6659
    %v6661 = vperm.slane %v6657, %v6660
    %v6662 = vrot.slane %v6661, 4
    %v6663 = vsel %vm219, %v6662, %v6655
    %v6664 = vrot.slane %v6655, 4
    %v6665 = vsel %vm219, %v6661, %v6664
    %6668 = vrot.lane.b32.xlu0 %v6625, 64
    %v6669 = vpop.permute.xlu0 %6668
    %6670 = vrot.lane.b32.xlu0 %v6665, 64
    %v6671 = vpop.permute.xlu0 %6670
    %v6674 = vsel %vm184, %v6623, %v6669
    %v6675 = vsel %vm184, %v6663, %v6671
    %v6676 = vpack.c.bf16 %v6521, %v6520
    %v6677 = vpack.c.bf16 %v6675, %v6674
    %s6678 = scalar_lea.vmem [#allocation6], 128
    %v6679 = vld [vmem:[%s6678] sm:$0xf]
    %v6680 = vld [vmem:[%s6678 + $0x4] sm:$0xf]
    %v6681 = vld [vmem:[%s6678 + $0x8] sm:$0xf]
    %v6682 = vld [vmem:[%s6678 + $0xc] sm:$0xf]
    %v6683 = vld [vmem:[%s6678 + $0x10] sm:$0xf]
    %v6684 = vld [vmem:[%s6678 + $0x14] sm:$0xf]
    %v6685 = vld [vmem:[%s6678 + $0x18] sm:$0xf]
    %v6686 = vld [vmem:[%s6678 + $0x1c] sm:$0xf]
    %v6687 = vld [vmem:[%s6678 + $0x20] sm:$0xf]
    %v6688 = vld [vmem:[%s6678 + $0x24] sm:$0xf]
    %v6689 = vld [vmem:[%s6678 + $0x28] sm:$0xf]
    %v6690 = vld [vmem:[%s6678 + $0x2c] sm:$0xf]
    %v6691 = vld [vmem:[%s6678 + $0x30] sm:$0xf]
    %v6692 = vld [vmem:[%s6678 + $0x34] sm:$0xf]
    %v6693 = vld [vmem:[%s6678 + $0x38] sm:$0xf]
    %v6694 = vld [vmem:[%s6678 + $0x3c] sm:$0xf]
    %s6695 = scalar_lea.vmem %s8, 2
    %v6696 = vld [vmem:[%s6695] sm:$0x1]
    %v6698 = vperm.slane %v6696, 0
    %v6716 = vunpack.c.l.b16 %v6679
    %v6717 = vunpack.c.l.b16 %v6680
    %v6718 = vunpack.c.l.b16 %v6681
    %v6719 = vunpack.c.l.b16 %v6682
    %v6720 = vunpack.c.l.b16 %v6683
    %v6721 = vunpack.c.l.b16 %v6684
    %v6722 = vunpack.c.l.b16 %v6685
    %v6723 = vunpack.c.l.b16 %v6686
    %v6724 = vunpack.c.l.b16 %v6687
    %v6725 = vunpack.c.l.b16 %v6688
    %v6726 = vunpack.c.l.b16 %v6689
    %v6727 = vunpack.c.l.b16 %v6690
    %v6728 = vunpack.c.l.b16 %v6691
    %v6729 = vunpack.c.l.b16 %v6692
    %v6730 = vunpack.c.l.b16 %v6693
    %v6731 = vunpack.c.l.b16 %v6694
    %v6732 = vpack.c.b16 %v6717, %v6716
    %v6733 = vpack.c.b16 %v6719, %v6718
    %v6734 = vpack.c.b16 %v6721, %v6720
    %v6735 = vpack.c.b16 %v6723, %v6722
    %v6736 = vpack.c.b16 %v6725, %v6724
    %v6737 = vpack.c.b16 %v6727, %v6726
    %v6738 = vpack.c.b16 %v6729, %v6728
    %v6739 = vpack.c.b16 %v6731, %v6730
    %6748 = vmatpush.bf16.msra.mxu0 %v6739
    %6749 = vmatpush.bf16.msra.mxu0 %v6738
    %6750 = vmatpush.bf16.msra.mxu0 %v6737
    %6751 = vmatpush.bf16.msra.mxu0 %v6736
    %6752 = vmatpush.bf16.msra.mxu0 %v6735
    %6753 = vmatpush.bf16.msra.mxu0 %v6734
    %6754 = vmatpush.bf16.msra.mxu0 %v6733
    %6755 = vmatpush.bf16.msra.mxu0 %v6732
    %6756 = vmatmul.bf16.gmra.mxu0 %v4615
    %v6757 = vpop.f32.mrf.mxu0
    %v6758 = vadd.f32 %v6698, %v6757
    %v6759 = vpop.f32.mrf.mxu0
    %v6760 = vadd.f32 %v6698, %v6759
    %6761 = vmatmul.bf16.gmra.mxu0 %v4616
    %v6762 = vpop.f32.mrf.mxu0
    %v6763 = vadd.f32 %v6698, %v6762
    %v6764 = vpop.f32.mrf.mxu0
    %v6765 = vadd.f32 %v6698, %v6764
    %6766 = vmatmul.bf16.gmra.mxu0 %v4617
    %v6767 = vpop.f32.mrf.mxu0
    %v6768 = vadd.f32 %v6698, %v6767
    %v6769 = vpop.f32.mrf.mxu0
    %v6770 = vadd.f32 %v6698, %v6769
    %6771 = vmatmul.bf16.gmra.mxu0 %v4618
    %v6772 = vpop.f32.mrf.mxu0
    %v6773 = vadd.f32 %v6698, %v6772
    %v6774 = vpop.f32.mrf.mxu0
    %v6775 = vadd.f32 %v6698, %v6774
    %6776 = vdwg.mxu0
    %6777 = vmatpush.bf16.msra.mxu0 0
    %6778 = vmatpush.bf16.msra.mxu0 0
    %6779 = vmatpush.bf16.msra.mxu0 0
    %6780 = vmatpush.bf16.msra.mxu0 0
    %6781 = vmatpush.bf16.msra.mxu0 0
    %6782 = vmatpush.bf16.msra.mxu0 0
    %6783 = vmatpush.bf16.msra.mxu0 %v6677
    %6784 = vmatpush.bf16.msra.mxu0 %v6676
    %6785 = vmatmul.bf16.gmra.mxu0 %v2368
    %v6786 = vpop.f32.mrf.mxu0
    %v6787 = vadd.f32 %v6758, %v6786
    %v6788 = vpop.f32.mrf.mxu0
    %v6789 = vadd.f32 %v6760, %v6788
    %6790 = vmatmul.bf16.gmra.mxu0 %v2371
    %v6791 = vpop.f32.mrf.mxu0
    %v6792 = vadd.f32 %v6763, %v6791
    %v6793 = vpop.f32.mrf.mxu0
    %v6794 = vadd.f32 %v6765, %v6793
    %6795 = vmatmul.bf16.gmra.mxu0 %v2374
    %v6796 = vpop.f32.mrf.mxu0
    %v6797 = vadd.f32 %v6768, %v6796
    %v6798 = vpop.f32.mrf.mxu0
    %v6799 = vadd.f32 %v6770, %v6798
    %6800 = vmatmul.bf16.gmra.mxu0 %v2377
    %v6801 = vpop.f32.mrf.mxu0
    %v6802 = vadd.f32 %v6773, %v6801
    %v6803 = vpop.f32.mrf.mxu0
    %v6804 = vadd.f32 %v6775, %v6803
    %6805 = vdwg.mxu0
    %v6806 = vmax.f32 %v6787, 0.0
    %v6807 = vmax.f32 %v6789, 0.0
    %v6808 = vmax.f32 %v6792, 0.0
    %v6809 = vmax.f32 %v6794, 0.0
    %v6810 = vmax.f32 %v6797, 0.0
    %v6811 = vmax.f32 %v6799, 0.0
    %v6812 = vmax.f32 %v6802, 0.0
    %v6813 = vmax.f32 %v6804, 0.0
    %v6814 = vpack.c.bf16 %v6807, %v6806
    %v6815 = vpack.c.bf16 %v6809, %v6808
    %v6816 = vpack.c.bf16 %v6811, %v6810
    %v6817 = vpack.c.bf16 %v6813, %v6812
    %6818 = vmatpush.bf16.msra.mxu0 0
    %6819 = vmatpush.bf16.msra.mxu0 0
    %6820 = vmatpush.bf16.msra.mxu0 0
    %6821 = vmatpush.bf16.msra.mxu0 0
    %6822 = vmatpush.bf16.msra.mxu0 %v6817
    %6823 = vmatpush.bf16.msra.mxu0 %v6816
    %6824 = vmatpush.bf16.msra.mxu0 %v6815
    %6825 = vmatpush.bf16.msra.mxu0 %v6814
    %6826 = vmatmul.bf16.gmra.mxu0 %v186
    %v6827 = vpop.f32.mrf.mxu0
    %v6828 = vadd.f32 0.0, %v6827
    %v6829 = vpop.f32.mrf.mxu0
    %v6830 = vadd.f32 0.0, %v6829
    %6831 = vmatmul.bf16.gmra.mxu0 %v189
    %v6832 = vpop.f32.mrf.mxu0
    %v6833 = vadd.f32 0.0, %v6832
    %v6834 = vpop.f32.mrf.mxu0
    %v6835 = vadd.f32 0.0, %v6834
    %6836 = vdwg.mxu0
    %6839 = vrot.lane.b32.xlu0 %v6828, 64
    %v6840 = vpop.permute.xlu0 %6839
    %6841 = vrot.lane.b32.xlu0 %v6830, 64
    %v6842 = vpop.permute.xlu0 %6841
    %v6845 = vrot.slane %v6828, 4
    %v6846 = vsel %vm219, 0.0, %v6845
    %v6848 = vunpack.c.l.s4 1983009808
    %v6849 = vunpack.c.0.s8 %v6848
    %v6850 = vperm.slane %v6828, %v6849
    %v6852 = vunpack.c.l.s4 1983009808
    %v6853 = vunpack.c.0.s8 %v6852
    %v6854 = vperm.slane %v6846, %v6853
    %v6855 = vrot.slane %v6840, 4
    %v6856 = vsel %vm219, 0.0, %v6855
    %v6858 = vunpack.c.l.s4 1983009808
    %v6859 = vunpack.c.0.s8 %v6858
    %v6860 = vperm.slane %v6840, %v6859
    %v6862 = vunpack.c.l.s4 1983009808
    %v6863 = vunpack.c.0.s8 %v6862
    %v6864 = vperm.slane %v6856, %v6863
    %v6865 = vrot.slane %v6860, 4
    %v6866 = vsel %vm219, %v6865, %v6850
    %v6867 = vrot.slane %v6850, 4
    %v6868 = vsel %vm219, %v6860, %v6867
    %v6870 = vunpack.c.l.s4 1934713408
    %v6871 = vunpack.c.0.s8 %v6870
    %v6872 = vperm.slane %v6866, %v6871
    %v6874 = vunpack.c.l.s4 1934713408
    %v6875 = vunpack.c.0.s8 %v6874
    %v6876 = vperm.slane %v6868, %v6875
    %v6877 = vrot.slane %v6864, 4
    %v6878 = vsel %vm219, %v6877, %v6854
    %v6879 = vrot.slane %v6854, 4
    %v6880 = vsel %vm219, %v6864, %v6879
    %v6882 = vunpack.c.l.s4 1934713408
    %v6883 = vunpack.c.0.s8 %v6882
    %v6884 = vperm.slane %v6878, %v6883
    %v6886 = vunpack.c.l.s4 1934713408
    %v6887 = vunpack.c.0.s8 %v6886
    %v6888 = vperm.slane %v6880, %v6887
    %v6889 = vrot.slane %v6872, 4
    %v6890 = vsel %vm219, 0.0, %v6889
    %v6891 = vrot.slane %v6876, 4
    %v6892 = vsel %vm219, 0.0, %v6891
    %v6893 = vrot.slane %v6884, 4
    %v6894 = vsel %vm219, 0.0, %v6893
    %v6895 = vrot.slane %v6888, 4
    %v6896 = vsel %vm219, 0.0, %v6895
    %v6897 = vrot.slane %v6830, 4
    %v6898 = vsel %vm219, 0.0, %v6897
    %v6900 = vunpack.c.l.s4 1983009808
    %v6901 = vunpack.c.0.s8 %v6900
    %v6902 = vperm.slane %v6830, %v6901
    %v6904 = vunpack.c.l.s4 1983009808
    %v6905 = vunpack.c.0.s8 %v6904
    %v6906 = vperm.slane %v6898, %v6905
    %v6907 = vrot.slane %v6842, 4
    %v6908 = vsel %vm219, 0.0, %v6907
    %v6910 = vunpack.c.l.s4 1983009808
    %v6911 = vunpack.c.0.s8 %v6910
    %v6912 = vperm.slane %v6842, %v6911
    %v6914 = vunpack.c.l.s4 1983009808
    %v6915 = vunpack.c.0.s8 %v6914
    %v6916 = vperm.slane %v6908, %v6915
    %v6917 = vrot.slane %v6912, 4
    %v6918 = vsel %vm219, %v6917, %v6902
    %v6919 = vrot.slane %v6902, 4
    %v6920 = vsel %vm219, %v6912, %v6919
    %v6922 = vunpack.c.l.s4 1934713408
    %v6923 = vunpack.c.0.s8 %v6922
    %v6924 = vperm.slane %v6918, %v6923
    %v6926 = vunpack.c.l.s4 1934713408
    %v6927 = vunpack.c.0.s8 %v6926
    %v6928 = vperm.slane %v6920, %v6927
    %v6929 = vrot.slane %v6916, 4
    %v6930 = vsel %vm219, %v6929, %v6906
    %v6931 = vrot.slane %v6906, 4
    %v6932 = vsel %vm219, %v6916, %v6931
    %v6934 = vunpack.c.l.s4 1934713408
    %v6935 = vunpack.c.0.s8 %v6934
    %v6936 = vperm.slane %v6930, %v6935
    %v6938 = vunpack.c.l.s4 1934713408
    %v6939 = vunpack.c.0.s8 %v6938
    %v6940 = vperm.slane %v6932, %v6939
    %v6941 = vrot.slane %v6924, 4
    %v6942 = vsel %vm219, 0.0, %v6941
    %v6943 = vrot.slane %v6928, 4
    %v6944 = vsel %vm219, 0.0, %v6943
    %v6945 = vrot.slane %v6936, 4
    %v6946 = vsel %vm219, 0.0, %v6945
    %v6947 = vrot.slane %v6940, 4
    %v6948 = vsel %vm219, 0.0, %v6947
    %v6949 = vpack.c.bf16 %v6872, %v6872
    %v6950 = vpack.c.bf16 %v6890, %v6890
    %v6951 = vpack.c.bf16 %v6876, %v6876
    %v6952 = vpack.c.bf16 %v6892, %v6892
    %v6953 = vpack.c.bf16 %v6884, %v6884
    %v6954 = vpack.c.bf16 %v6894, %v6894
    %v6955 = vpack.c.bf16 %v6888, %v6888
    %v6956 = vpack.c.bf16 %v6896, %v6896
    %v6957 = vpack.c.bf16 %v6924, %v6924
    %v6958 = vpack.c.bf16 %v6942, %v6942
    %v6959 = vpack.c.bf16 %v6928, %v6928
    %v6960 = vpack.c.bf16 %v6944, %v6944
    %v6961 = vpack.c.bf16 %v6936, %v6936
    %v6962 = vpack.c.bf16 %v6946, %v6946
    %v6963 = vpack.c.bf16 %v6940, %v6940
    %v6964 = vpack.c.bf16 %v6948, %v6948
    %6967 = vrot.lane.b32.xlu0 %v6833, 64
    %v6968 = vpop.permute.xlu0 %6967
    %6969 = vrot.lane.b32.xlu0 %v6835, 64
    %v6970 = vpop.permute.xlu0 %6969
    %v6973 = vrot.slane %v6833, 4
    %v6974 = vsel %vm219, 0.0, %v6973
    %v6976 = vunpack.c.l.s4 1983009808
    %v6977 = vunpack.c.0.s8 %v6976
    %v6978 = vperm.slane %v6833, %v6977
    %v6980 = vunpack.c.l.s4 1983009808
    %v6981 = vunpack.c.0.s8 %v6980
    %v6982 = vperm.slane %v6974, %v6981
    %v6983 = vrot.slane %v6968, 4
    %v6984 = vsel %vm219, 0.0, %v6983
    %v6986 = vunpack.c.l.s4 1983009808
    %v6987 = vunpack.c.0.s8 %v6986
    %v6988 = vperm.slane %v6968, %v6987
    %v6990 = vunpack.c.l.s4 1983009808
    %v6991 = vunpack.c.0.s8 %v6990
    %v6992 = vperm.slane %v6984, %v6991
    %v6993 = vrot.slane %v6988, 4
    %v6994 = vsel %vm219, %v6993, %v6978
    %v6995 = vrot.slane %v6978, 4
    %v6996 = vsel %vm219, %v6988, %v6995
    %v6998 = vunpack.c.l.s4 1934713408
    %v6999 = vunpack.c.0.s8 %v6998
    %v7000 = vperm.slane %v6994, %v6999
    %v7002 = vunpack.c.l.s4 1934713408
    %v7003 = vunpack.c.0.s8 %v7002
    %v7004 = vperm.slane %v6996, %v7003
    %v7005 = vrot.slane %v6992, 4
    %v7006 = vsel %vm219, %v7005, %v6982
    %v7007 = vrot.slane %v6982, 4
    %v7008 = vsel %vm219, %v6992, %v7007
    %v7010 = vunpack.c.l.s4 1934713408
    %v7011 = vunpack.c.0.s8 %v7010
    %v7012 = vperm.slane %v7006, %v7011
    %v7014 = vunpack.c.l.s4 1934713408
    %v7015 = vunpack.c.0.s8 %v7014
    %v7016 = vperm.slane %v7008, %v7015
    %v7017 = vrot.slane %v7000, 4
    %v7018 = vsel %vm219, 0.0, %v7017
    %v7019 = vrot.slane %v7004, 4
    %v7020 = vsel %vm219, 0.0, %v7019
    %v7021 = vrot.slane %v7012, 4
    %v7022 = vsel %vm219, 0.0, %v7021
    %v7023 = vrot.slane %v7016, 4
    %v7024 = vsel %vm219, 0.0, %v7023
    %v7025 = vrot.slane %v6835, 4
    %v7026 = vsel %vm219, 0.0, %v7025
    %v7028 = vunpack.c.l.s4 1983009808
    %v7029 = vunpack.c.0.s8 %v7028
    %v7030 = vperm.slane %v6835, %v7029
    %v7032 = vunpack.c.l.s4 1983009808
    %v7033 = vunpack.c.0.s8 %v7032
    %v7034 = vperm.slane %v7026, %v7033
    %v7035 = vrot.slane %v6970, 4
    %v7036 = vsel %vm219, 0.0, %v7035
    %v7038 = vunpack.c.l.s4 1983009808
    %v7039 = vunpack.c.0.s8 %v7038
    %v7040 = vperm.slane %v6970, %v7039
    %v7042 = vunpack.c.l.s4 1983009808
    %v7043 = vunpack.c.0.s8 %v7042
    %v7044 = vperm.slane %v7036, %v7043
    %v7045 = vrot.slane %v7040, 4
    %v7046 = vsel %vm219, %v7045, %v7030
    %v7047 = vrot.slane %v7030, 4
    %v7048 = vsel %vm219, %v7040, %v7047
    %v7050 = vunpack.c.l.s4 1934713408
    %v7051 = vunpack.c.0.s8 %v7050
    %v7052 = vperm.slane %v7046, %v7051
    %v7054 = vunpack.c.l.s4 1934713408
    %v7055 = vunpack.c.0.s8 %v7054
    %v7056 = vperm.slane %v7048, %v7055
    %v7057 = vrot.slane %v7044, 4
    %v7058 = vsel %vm219, %v7057, %v7034
    %v7059 = vrot.slane %v7034, 4
    %v7060 = vsel %vm219, %v7044, %v7059
    %v7062 = vunpack.c.l.s4 1934713408
    %v7063 = vunpack.c.0.s8 %v7062
    %v7064 = vperm.slane %v7058, %v7063
    %v7066 = vunpack.c.l.s4 1934713408
    %v7067 = vunpack.c.0.s8 %v7066
    %v7068 = vperm.slane %v7060, %v7067
    %v7069 = vrot.slane %v7052, 4
    %v7070 = vsel %vm219, 0.0, %v7069
    %v7071 = vrot.slane %v7056, 4
    %v7072 = vsel %vm219, 0.0, %v7071
    %v7073 = vrot.slane %v7064, 4
    %v7074 = vsel %vm219, 0.0, %v7073
    %v7075 = vrot.slane %v7068, 4
    %v7076 = vsel %vm219, 0.0, %v7075
    %v7077 = vpack.c.bf16 %v7000, %v7000
    %v7078 = vpack.c.bf16 %v7018, %v7018
    %v7079 = vpack.c.bf16 %v7004, %v7004
    %v7080 = vpack.c.bf16 %v7020, %v7020
    %v7081 = vpack.c.bf16 %v7012, %v7012
    %v7082 = vpack.c.bf16 %v7022, %v7022
    %v7083 = vpack.c.bf16 %v7016, %v7016
    %v7084 = vpack.c.bf16 %v7024, %v7024
    %v7085 = vpack.c.bf16 %v7052, %v7052
    %v7086 = vpack.c.bf16 %v7070, %v7070
    %v7087 = vpack.c.bf16 %v7056, %v7056
    %v7088 = vpack.c.bf16 %v7072, %v7072
    %v7089 = vpack.c.bf16 %v7064, %v7064
    %v7090 = vpack.c.bf16 %v7074, %v7074
    %v7091 = vpack.c.bf16 %v7068, %v7068
    %v7092 = vpack.c.bf16 %v7076, %v7076
    %s7093 = scalar_lea.vmem [#allocation2], 1536
    %v7094 = vld [vmem:[%s7093] sm:$0xf]
    %v7095 = vld [vmem:[%s7093 + $0x4] sm:$0xf]
    %v7096 = vld [vmem:[%s7093 + $0x8] sm:$0xf]
    %v7097 = vld [vmem:[%s7093 + $0xc] sm:$0xf]
    %v7098 = vld [vmem:[%s7093 + $0x10] sm:$0xf]
    %v7099 = vld [vmem:[%s7093 + $0x14] sm:$0xf]
    %v7100 = vld [vmem:[%s7093 + $0x18] sm:$0xf]
    %v7101 = vld [vmem:[%s7093 + $0x1c] sm:$0xf]
    %v7102 = vld [vmem:[%s7093 + $0x20] sm:$0xf]
    %v7103 = vld [vmem:[%s7093 + $0x24] sm:$0xf]
    %v7104 = vld [vmem:[%s7093 + $0x28] sm:$0xf]
    %v7105 = vld [vmem:[%s7093 + $0x2c] sm:$0xf]
    %v7106 = vld [vmem:[%s7093 + $0x30] sm:$0xf]
    %v7107 = vld [vmem:[%s7093 + $0x34] sm:$0xf]
    %v7108 = vld [vmem:[%s7093 + $0x38] sm:$0xf]
    %v7109 = vld [vmem:[%s7093 + $0x3c] sm:$0xf]
    %v7110 = vld [vmem:[%s7093 + $0x40] sm:$0xf]
    %v7111 = vld [vmem:[%s7093 + $0x44] sm:$0xf]
    %v7112 = vld [vmem:[%s7093 + $0x48] sm:$0xf]
    %v7113 = vld [vmem:[%s7093 + $0x4c] sm:$0xf]
    %v7114 = vld [vmem:[%s7093 + $0x50] sm:$0xf]
    %v7115 = vld [vmem:[%s7093 + $0x54] sm:$0xf]
    %v7116 = vld [vmem:[%s7093 + $0x58] sm:$0xf]
    %v7117 = vld [vmem:[%s7093 + $0x5c] sm:$0xf]
    %v7118 = vld [vmem:[%s7093 + $0x60] sm:$0xf]
    %v7119 = vld [vmem:[%s7093 + $0x64] sm:$0xf]
    %v7120 = vld [vmem:[%s7093 + $0x68] sm:$0xf]
    %v7121 = vld [vmem:[%s7093 + $0x6c] sm:$0xf]
    %v7122 = vld [vmem:[%s7093 + $0x70] sm:$0xf]
    %v7123 = vld [vmem:[%s7093 + $0x74] sm:$0xf]
    %v7124 = vld [vmem:[%s7093 + $0x78] sm:$0xf]
    %v7125 = vld [vmem:[%s7093 + $0x7c] sm:$0xf]
    %v7126 = vld [vmem:[%s7093 + $0x80] sm:$0xf]
    %v7127 = vld [vmem:[%s7093 + $0x84] sm:$0xf]
    %v7128 = vld [vmem:[%s7093 + $0x88] sm:$0xf]
    %v7129 = vld [vmem:[%s7093 + $0x8c] sm:$0xf]
    %v7130 = vld [vmem:[%s7093 + $0x90] sm:$0xf]
    %v7131 = vld [vmem:[%s7093 + $0x94] sm:$0xf]
    %v7132 = vld [vmem:[%s7093 + $0x98] sm:$0xf]
    %v7133 = vld [vmem:[%s7093 + $0x9c] sm:$0xf]
    %v7134 = vld [vmem:[%s7093 + $0xa0] sm:$0xf]
    %v7135 = vld [vmem:[%s7093 + $0xa4] sm:$0xf]
    %v7136 = vld [vmem:[%s7093 + $0xa8] sm:$0xf]
    %v7137 = vld [vmem:[%s7093 + $0xac] sm:$0xf]
    %v7138 = vld [vmem:[%s7093 + $0xb0] sm:$0xf]
    %v7139 = vld [vmem:[%s7093 + $0xb4] sm:$0xf]
    %v7140 = vld [vmem:[%s7093 + $0xb8] sm:$0xf]
    %v7141 = vld [vmem:[%s7093 + $0xbc] sm:$0xf]
    %v7142 = vld [vmem:[%s7093 + $0xc0] sm:$0xf]
    %v7143 = vld [vmem:[%s7093 + $0xc4] sm:$0xf]
    %v7144 = vld [vmem:[%s7093 + $0xc8] sm:$0xf]
    %v7145 = vld [vmem:[%s7093 + $0xcc] sm:$0xf]
    %v7146 = vld [vmem:[%s7093 + $0xd0] sm:$0xf]
    %v7147 = vld [vmem:[%s7093 + $0xd4] sm:$0xf]
    %v7148 = vld [vmem:[%s7093 + $0xd8] sm:$0xf]
    %v7149 = vld [vmem:[%s7093 + $0xdc] sm:$0xf]
    %v7150 = vld [vmem:[%s7093 + $0xe0] sm:$0xf]
    %v7151 = vld [vmem:[%s7093 + $0xe4] sm:$0xf]
    %v7152 = vld [vmem:[%s7093 + $0xe8] sm:$0xf]
    %v7153 = vld [vmem:[%s7093 + $0xec] sm:$0xf]
    %v7154 = vld [vmem:[%s7093 + $0xf0] sm:$0xf]
    %v7155 = vld [vmem:[%s7093 + $0xf4] sm:$0xf]
    %v7156 = vld [vmem:[%s7093 + $0xf8] sm:$0xf]
    %v7157 = vld [vmem:[%s7093 + $0xfc] sm:$0xf]
    %v7158 = vld [vmem:[%s7093 + $0x100] sm:$0xf]
    %v7159 = vld [vmem:[%s7093 + $0x104] sm:$0xf]
    %v7160 = vld [vmem:[%s7093 + $0x108] sm:$0xf]
    %v7161 = vld [vmem:[%s7093 + $0x10c] sm:$0xf]
    %v7162 = vld [vmem:[%s7093 + $0x110] sm:$0xf]
    %v7163 = vld [vmem:[%s7093 + $0x114] sm:$0xf]
    %v7164 = vld [vmem:[%s7093 + $0x118] sm:$0xf]
    %v7165 = vld [vmem:[%s7093 + $0x11c] sm:$0xf]
    %v7166 = vld [vmem:[%s7093 + $0x120] sm:$0xf]
    %v7167 = vld [vmem:[%s7093 + $0x124] sm:$0xf]
    %v7168 = vld [vmem:[%s7093 + $0x128] sm:$0xf]
    %v7169 = vld [vmem:[%s7093 + $0x12c] sm:$0xf]
    %v7170 = vld [vmem:[%s7093 + $0x130] sm:$0xf]
    %v7171 = vld [vmem:[%s7093 + $0x134] sm:$0xf]
    %v7172 = vld [vmem:[%s7093 + $0x138] sm:$0xf]
    %v7173 = vld [vmem:[%s7093 + $0x13c] sm:$0xf]
    %v7174 = vld [vmem:[%s7093 + $0x140] sm:$0xf]
    %v7175 = vld [vmem:[%s7093 + $0x144] sm:$0xf]
    %v7176 = vld [vmem:[%s7093 + $0x148] sm:$0xf]
    %v7177 = vld [vmem:[%s7093 + $0x14c] sm:$0xf]
    %v7178 = vld [vmem:[%s7093 + $0x150] sm:$0xf]
    %v7179 = vld [vmem:[%s7093 + $0x154] sm:$0xf]
    %v7180 = vld [vmem:[%s7093 + $0x158] sm:$0xf]
    %v7181 = vld [vmem:[%s7093 + $0x15c] sm:$0xf]
    %v7182 = vld [vmem:[%s7093 + $0x160] sm:$0xf]
    %v7183 = vld [vmem:[%s7093 + $0x164] sm:$0xf]
    %v7184 = vld [vmem:[%s7093 + $0x168] sm:$0xf]
    %v7185 = vld [vmem:[%s7093 + $0x16c] sm:$0xf]
    %v7186 = vld [vmem:[%s7093 + $0x170] sm:$0xf]
    %v7187 = vld [vmem:[%s7093 + $0x174] sm:$0xf]
    %v7188 = vld [vmem:[%s7093 + $0x178] sm:$0xf]
    %v7189 = vld [vmem:[%s7093 + $0x17c] sm:$0xf]
    %v7190 = vld [vmem:[%s7093 + $0x180] sm:$0xf]
    %v7191 = vld [vmem:[%s7093 + $0x184] sm:$0xf]
    %v7192 = vld [vmem:[%s7093 + $0x188] sm:$0xf]
    %v7193 = vld [vmem:[%s7093 + $0x18c] sm:$0xf]
    %v7194 = vld [vmem:[%s7093 + $0x190] sm:$0xf]
    %v7195 = vld [vmem:[%s7093 + $0x194] sm:$0xf]
    %v7196 = vld [vmem:[%s7093 + $0x198] sm:$0xf]
    %v7197 = vld [vmem:[%s7093 + $0x19c] sm:$0xf]
    %v7198 = vld [vmem:[%s7093 + $0x1a0] sm:$0xf]
    %v7199 = vld [vmem:[%s7093 + $0x1a4] sm:$0xf]
    %v7200 = vld [vmem:[%s7093 + $0x1a8] sm:$0xf]
    %v7201 = vld [vmem:[%s7093 + $0x1ac] sm:$0xf]
    %v7202 = vld [vmem:[%s7093 + $0x1b0] sm:$0xf]
    %v7203 = vld [vmem:[%s7093 + $0x1b4] sm:$0xf]
    %v7204 = vld [vmem:[%s7093 + $0x1b8] sm:$0xf]
    %v7205 = vld [vmem:[%s7093 + $0x1bc] sm:$0xf]
    %v7206 = vld [vmem:[%s7093 + $0x1c0] sm:$0xf]
    %v7207 = vld [vmem:[%s7093 + $0x1c4] sm:$0xf]
    %v7208 = vld [vmem:[%s7093 + $0x1c8] sm:$0xf]
    %v7209 = vld [vmem:[%s7093 + $0x1cc] sm:$0xf]
    %v7210 = vld [vmem:[%s7093 + $0x1d0] sm:$0xf]
    %v7211 = vld [vmem:[%s7093 + $0x1d4] sm:$0xf]
    %v7212 = vld [vmem:[%s7093 + $0x1d8] sm:$0xf]
    %v7213 = vld [vmem:[%s7093 + $0x1dc] sm:$0xf]
    %v7214 = vld [vmem:[%s7093 + $0x1e0] sm:$0xf]
    %v7215 = vld [vmem:[%s7093 + $0x1e4] sm:$0xf]
    %v7216 = vld [vmem:[%s7093 + $0x1e8] sm:$0xf]
    %v7217 = vld [vmem:[%s7093 + $0x1ec] sm:$0xf]
    %v7218 = vld [vmem:[%s7093 + $0x1f0] sm:$0xf]
    %v7219 = vld [vmem:[%s7093 + $0x1f4] sm:$0xf]
    %v7220 = vld [vmem:[%s7093 + $0x1f8] sm:$0xf]
    %v7221 = vld [vmem:[%s7093 + $0x1fc] sm:$0xf]
    %s7222 = scalar_lea.vmem [#allocation4], 1536
    %v7223 = vld [vmem:[%s7222] sm:$0xf]
    %v7224 = vld [vmem:[%s7222 + $0x4] sm:$0xf]
    %v7225 = vld [vmem:[%s7222 + $0x8] sm:$0xf]
    %v7226 = vld [vmem:[%s7222 + $0xc] sm:$0xf]
    %v7227 = vld [vmem:[%s7222 + $0x10] sm:$0xf]
    %v7228 = vld [vmem:[%s7222 + $0x14] sm:$0xf]
    %v7229 = vld [vmem:[%s7222 + $0x18] sm:$0xf]
    %v7230 = vld [vmem:[%s7222 + $0x1c] sm:$0xf]
    %v7231 = vld [vmem:[%s7222 + $0x20] sm:$0xf]
    %v7232 = vld [vmem:[%s7222 + $0x24] sm:$0xf]
    %v7233 = vld [vmem:[%s7222 + $0x28] sm:$0xf]
    %v7234 = vld [vmem:[%s7222 + $0x2c] sm:$0xf]
    %v7235 = vld [vmem:[%s7222 + $0x30] sm:$0xf]
    %v7236 = vld [vmem:[%s7222 + $0x34] sm:$0xf]
    %v7237 = vld [vmem:[%s7222 + $0x38] sm:$0xf]
    %v7238 = vld [vmem:[%s7222 + $0x3c] sm:$0xf]
    %v7239 = vld [vmem:[%s7222 + $0x40] sm:$0xf]
    %v7240 = vld [vmem:[%s7222 + $0x44] sm:$0xf]
    %v7241 = vld [vmem:[%s7222 + $0x48] sm:$0xf]
    %v7242 = vld [vmem:[%s7222 + $0x4c] sm:$0xf]
    %v7243 = vld [vmem:[%s7222 + $0x50] sm:$0xf]
    %v7244 = vld [vmem:[%s7222 + $0x54] sm:$0xf]
    %v7245 = vld [vmem:[%s7222 + $0x58] sm:$0xf]
    %v7246 = vld [vmem:[%s7222 + $0x5c] sm:$0xf]
    %v7247 = vld [vmem:[%s7222 + $0x60] sm:$0xf]
    %v7248 = vld [vmem:[%s7222 + $0x64] sm:$0xf]
    %v7249 = vld [vmem:[%s7222 + $0x68] sm:$0xf]
    %v7250 = vld [vmem:[%s7222 + $0x6c] sm:$0xf]
    %v7251 = vld [vmem:[%s7222 + $0x70] sm:$0xf]
    %v7252 = vld [vmem:[%s7222 + $0x74] sm:$0xf]
    %v7253 = vld [vmem:[%s7222 + $0x78] sm:$0xf]
    %v7254 = vld [vmem:[%s7222 + $0x7c] sm:$0xf]
    %v7255 = vld [vmem:[%s7222 + $0x80] sm:$0xf]
    %v7256 = vld [vmem:[%s7222 + $0x84] sm:$0xf]
    %v7257 = vld [vmem:[%s7222 + $0x88] sm:$0xf]
    %v7258 = vld [vmem:[%s7222 + $0x8c] sm:$0xf]
    %v7259 = vld [vmem:[%s7222 + $0x90] sm:$0xf]
    %v7260 = vld [vmem:[%s7222 + $0x94] sm:$0xf]
    %v7261 = vld [vmem:[%s7222 + $0x98] sm:$0xf]
    %v7262 = vld [vmem:[%s7222 + $0x9c] sm:$0xf]
    %v7263 = vld [vmem:[%s7222 + $0xa0] sm:$0xf]
    %v7264 = vld [vmem:[%s7222 + $0xa4] sm:$0xf]
    %v7265 = vld [vmem:[%s7222 + $0xa8] sm:$0xf]
    %v7266 = vld [vmem:[%s7222 + $0xac] sm:$0xf]
    %v7267 = vld [vmem:[%s7222 + $0xb0] sm:$0xf]
    %v7268 = vld [vmem:[%s7222 + $0xb4] sm:$0xf]
    %v7269 = vld [vmem:[%s7222 + $0xb8] sm:$0xf]
    %v7270 = vld [vmem:[%s7222 + $0xbc] sm:$0xf]
    %v7271 = vld [vmem:[%s7222 + $0xc0] sm:$0xf]
    %v7272 = vld [vmem:[%s7222 + $0xc4] sm:$0xf]
    %v7273 = vld [vmem:[%s7222 + $0xc8] sm:$0xf]
    %v7274 = vld [vmem:[%s7222 + $0xcc] sm:$0xf]
    %v7275 = vld [vmem:[%s7222 + $0xd0] sm:$0xf]
    %v7276 = vld [vmem:[%s7222 + $0xd4] sm:$0xf]
    %v7277 = vld [vmem:[%s7222 + $0xd8] sm:$0xf]
    %v7278 = vld [vmem:[%s7222 + $0xdc] sm:$0xf]
    %v7279 = vld [vmem:[%s7222 + $0xe0] sm:$0xf]
    %v7280 = vld [vmem:[%s7222 + $0xe4] sm:$0xf]
    %v7281 = vld [vmem:[%s7222 + $0xe8] sm:$0xf]
    %v7282 = vld [vmem:[%s7222 + $0xec] sm:$0xf]
    %v7283 = vld [vmem:[%s7222 + $0xf0] sm:$0xf]
    %v7284 = vld [vmem:[%s7222 + $0xf4] sm:$0xf]
    %v7285 = vld [vmem:[%s7222 + $0xf8] sm:$0xf]
    %v7286 = vld [vmem:[%s7222 + $0xfc] sm:$0xf]
    %v7287 = vld [vmem:[%s7222 + $0x100] sm:$0xf]
    %v7288 = vld [vmem:[%s7222 + $0x104] sm:$0xf]
    %v7289 = vld [vmem:[%s7222 + $0x108] sm:$0xf]
    %v7290 = vld [vmem:[%s7222 + $0x10c] sm:$0xf]
    %v7291 = vld [vmem:[%s7222 + $0x110] sm:$0xf]
    %v7292 = vld [vmem:[%s7222 + $0x114] sm:$0xf]
    %v7293 = vld [vmem:[%s7222 + $0x118] sm:$0xf]
    %v7294 = vld [vmem:[%s7222 + $0x11c] sm:$0xf]
    %v7295 = vld [vmem:[%s7222 + $0x120] sm:$0xf]
    %v7296 = vld [vmem:[%s7222 + $0x124] sm:$0xf]
    %v7297 = vld [vmem:[%s7222 + $0x128] sm:$0xf]
    %v7298 = vld [vmem:[%s7222 + $0x12c] sm:$0xf]
    %v7299 = vld [vmem:[%s7222 + $0x130] sm:$0xf]
    %v7300 = vld [vmem:[%s7222 + $0x134] sm:$0xf]
    %v7301 = vld [vmem:[%s7222 + $0x138] sm:$0xf]
    %v7302 = vld [vmem:[%s7222 + $0x13c] sm:$0xf]
    %v7303 = vld [vmem:[%s7222 + $0x140] sm:$0xf]
    %v7304 = vld [vmem:[%s7222 + $0x144] sm:$0xf]
    %v7305 = vld [vmem:[%s7222 + $0x148] sm:$0xf]
    %v7306 = vld [vmem:[%s7222 + $0x14c] sm:$0xf]
    %v7307 = vld [vmem:[%s7222 + $0x150] sm:$0xf]
    %v7308 = vld [vmem:[%s7222 + $0x154] sm:$0xf]
    %v7309 = vld [vmem:[%s7222 + $0x158] sm:$0xf]
    %v7310 = vld [vmem:[%s7222 + $0x15c] sm:$0xf]
    %v7311 = vld [vmem:[%s7222 + $0x160] sm:$0xf]
    %v7312 = vld [vmem:[%s7222 + $0x164] sm:$0xf]
    %v7313 = vld [vmem:[%s7222 + $0x168] sm:$0xf]
    %v7314 = vld [vmem:[%s7222 + $0x16c] sm:$0xf]
    %v7315 = vld [vmem:[%s7222 + $0x170] sm:$0xf]
    %v7316 = vld [vmem:[%s7222 + $0x174] sm:$0xf]
    %v7317 = vld [vmem:[%s7222 + $0x178] sm:$0xf]
    %v7318 = vld [vmem:[%s7222 + $0x17c] sm:$0xf]
    %v7319 = vld [vmem:[%s7222 + $0x180] sm:$0xf]
    %v7320 = vld [vmem:[%s7222 + $0x184] sm:$0xf]
    %v7321 = vld [vmem:[%s7222 + $0x188] sm:$0xf]
    %v7322 = vld [vmem:[%s7222 + $0x18c] sm:$0xf]
    %v7323 = vld [vmem:[%s7222 + $0x190] sm:$0xf]
    %v7324 = vld [vmem:[%s7222 + $0x194] sm:$0xf]
    %v7325 = vld [vmem:[%s7222 + $0x198] sm:$0xf]
    %v7326 = vld [vmem:[%s7222 + $0x19c] sm:$0xf]
    %v7327 = vld [vmem:[%s7222 + $0x1a0] sm:$0xf]
    %v7328 = vld [vmem:[%s7222 + $0x1a4] sm:$0xf]
    %v7329 = vld [vmem:[%s7222 + $0x1a8] sm:$0xf]
    %v7330 = vld [vmem:[%s7222 + $0x1ac] sm:$0xf]
    %v7331 = vld [vmem:[%s7222 + $0x1b0] sm:$0xf]
    %v7332 = vld [vmem:[%s7222 + $0x1b4] sm:$0xf]
    %v7333 = vld [vmem:[%s7222 + $0x1b8] sm:$0xf]
    %v7334 = vld [vmem:[%s7222 + $0x1bc] sm:$0xf]
    %v7335 = vld [vmem:[%s7222 + $0x1c0] sm:$0xf]
    %v7336 = vld [vmem:[%s7222 + $0x1c4] sm:$0xf]
    %v7337 = vld [vmem:[%s7222 + $0x1c8] sm:$0xf]
    %v7338 = vld [vmem:[%s7222 + $0x1cc] sm:$0xf]
    %v7339 = vld [vmem:[%s7222 + $0x1d0] sm:$0xf]
    %v7340 = vld [vmem:[%s7222 + $0x1d4] sm:$0xf]
    %v7341 = vld [vmem:[%s7222 + $0x1d8] sm:$0xf]
    %v7342 = vld [vmem:[%s7222 + $0x1dc] sm:$0xf]
    %v7343 = vld [vmem:[%s7222 + $0x1e0] sm:$0xf]
    %v7344 = vld [vmem:[%s7222 + $0x1e4] sm:$0xf]
    %v7345 = vld [vmem:[%s7222 + $0x1e8] sm:$0xf]
    %v7346 = vld [vmem:[%s7222 + $0x1ec] sm:$0xf]
    %v7347 = vld [vmem:[%s7222 + $0x1f0] sm:$0xf]
    %v7348 = vld [vmem:[%s7222 + $0x1f4] sm:$0xf]
    %v7349 = vld [vmem:[%s7222 + $0x1f8] sm:$0xf]
    %v7350 = vld [vmem:[%s7222 + $0x1fc] sm:$0xf]
    %v7359 = vunpack.c.l.b16 %v7223
    %v7360 = vunpack.c.l.b16 %v7224
    %v7361 = vunpack.c.l.b16 %v7225
    %v7362 = vunpack.c.l.b16 %v7226
    %v7363 = vunpack.c.l.b16 %v7227
    %v7364 = vunpack.c.l.b16 %v7228
    %v7365 = vunpack.c.l.b16 %v7229
    %v7366 = vunpack.c.l.b16 %v7230
    %v7367 = vpack.c.b16 %v7360, %v7359
    %v7368 = vpack.c.b16 %v7362, %v7361
    %v7369 = vpack.c.b16 %v7364, %v7363
    %v7370 = vpack.c.b16 %v7366, %v7365
    %v7376 = vsel %vm184, %v7077, 0
    %7378 = vmatpush.bf16.msra.mxu0 0
    %7379 = vmatpush.bf16.msra.mxu0 0
    %7380 = vmatpush.bf16.msra.mxu0 0
    %7381 = vmatpush.bf16.msra.mxu0 0
    %7382 = vmatpush.bf16.msra.mxu0 %v7370
    %7383 = vmatpush.bf16.msra.mxu0 %v7369
    %7384 = vmatpush.bf16.msra.mxu0 %v7368
    %7385 = vmatpush.bf16.msra.mxu0 %v7367
    %7386 = vmatmul.bf16.gmra.mxu0 %v7376
    %v7387 = vpop.f32.mrf.mxu0
    %v7388 = vadd.f32 0.0, %v7387
    %v7389 = vpop.f32.mrf.mxu0
    %7390 = vdwg.mxu0
    %v7399 = vunpack.c.l.b16 %v7231
    %v7400 = vunpack.c.l.b16 %v7232
    %v7401 = vunpack.c.l.b16 %v7233
    %v7402 = vunpack.c.l.b16 %v7234
    %v7403 = vunpack.c.l.b16 %v7235
    %v7404 = vunpack.c.l.b16 %v7236
    %v7405 = vunpack.c.l.b16 %v7237
    %v7406 = vunpack.c.l.b16 %v7238
    %v7407 = vpack.c.b16 %v7400, %v7399
    %v7408 = vpack.c.b16 %v7402, %v7401
    %v7409 = vpack.c.b16 %v7404, %v7403
    %v7410 = vpack.c.b16 %v7406, %v7405
    %v7416 = vsel %vm184, %v7078, 0
    %7418 = vmatpush.bf16.msra.mxu0 0
    %7419 = vmatpush.bf16.msra.mxu0 0
    %7420 = vmatpush.bf16.msra.mxu0 0
    %7421 = vmatpush.bf16.msra.mxu0 0
    %7422 = vmatpush.bf16.msra.mxu0 %v7410
    %7423 = vmatpush.bf16.msra.mxu0 %v7409
    %7424 = vmatpush.bf16.msra.mxu0 %v7408
    %7425 = vmatpush.bf16.msra.mxu0 %v7407
    %7426 = vmatmul.bf16.gmra.mxu0 %v7416
    %v7427 = vpop.f32.mrf.mxu0
    %v7428 = vadd.f32 0.0, %v7427
    %v7429 = vpop.f32.mrf.mxu0
    %7430 = vdwg.mxu0
    %v7439 = vunpack.c.l.b16 %v7239
    %v7440 = vunpack.c.l.b16 %v7240
    %v7441 = vunpack.c.l.b16 %v7241
    %v7442 = vunpack.c.l.b16 %v7242
    %v7443 = vunpack.c.l.b16 %v7243
    %v7444 = vunpack.c.l.b16 %v7244
    %v7445 = vunpack.c.l.b16 %v7245
    %v7446 = vunpack.c.l.b16 %v7246
    %v7447 = vpack.c.b16 %v7440, %v7439
    %v7448 = vpack.c.b16 %v7442, %v7441
    %v7449 = vpack.c.b16 %v7444, %v7443
    %v7450 = vpack.c.b16 %v7446, %v7445
    %v7456 = vsel %vm184, %v7079, 0
    %7458 = vmatpush.bf16.msra.mxu0 0
    %7459 = vmatpush.bf16.msra.mxu0 0
    %7460 = vmatpush.bf16.msra.mxu0 0
    %7461 = vmatpush.bf16.msra.mxu0 0
    %7462 = vmatpush.bf16.msra.mxu0 %v7450
    %7463 = vmatpush.bf16.msra.mxu0 %v7449
    %7464 = vmatpush.bf16.msra.mxu0 %v7448
    %7465 = vmatpush.bf16.msra.mxu0 %v7447
    %7466 = vmatmul.bf16.gmra.mxu0 %v7456
    %v7467 = vpop.f32.mrf.mxu0
    %v7468 = vadd.f32 0.0, %v7467
    %v7469 = vpop.f32.mrf.mxu0
    %7470 = vdwg.mxu0
    %v7479 = vunpack.c.l.b16 %v7247
    %v7480 = vunpack.c.l.b16 %v7248
    %v7481 = vunpack.c.l.b16 %v7249
    %v7482 = vunpack.c.l.b16 %v7250
    %v7483 = vunpack.c.l.b16 %v7251
    %v7484 = vunpack.c.l.b16 %v7252
    %v7485 = vunpack.c.l.b16 %v7253
    %v7486 = vunpack.c.l.b16 %v7254
    %v7487 = vpack.c.b16 %v7480, %v7479
    %v7488 = vpack.c.b16 %v7482, %v7481
    %v7489 = vpack.c.b16 %v7484, %v7483
    %v7490 = vpack.c.b16 %v7486, %v7485
    %v7496 = vsel %vm184, %v7080, 0
    %7498 = vmatpush.bf16.msra.mxu0 0
    %7499 = vmatpush.bf16.msra.mxu0 0
    %7500 = vmatpush.bf16.msra.mxu0 0
    %7501 = vmatpush.bf16.msra.mxu0 0
    %7502 = vmatpush.bf16.msra.mxu0 %v7490
    %7503 = vmatpush.bf16.msra.mxu0 %v7489
    %7504 = vmatpush.bf16.msra.mxu0 %v7488
    %7505 = vmatpush.bf16.msra.mxu0 %v7487
    %7506 = vmatmul.bf16.gmra.mxu0 %v7496
    %v7507 = vpop.f32.mrf.mxu0
    %v7508 = vadd.f32 0.0, %v7507
    %v7509 = vpop.f32.mrf.mxu0
    %7510 = vdwg.mxu0
    %v7519 = vunpack.c.l.b16 %v7255
    %v7520 = vunpack.c.l.b16 %v7256
    %v7521 = vunpack.c.l.b16 %v7257
    %v7522 = vunpack.c.l.b16 %v7258
    %v7523 = vunpack.c.l.b16 %v7259
    %v7524 = vunpack.c.l.b16 %v7260
    %v7525 = vunpack.c.l.b16 %v7261
    %v7526 = vunpack.c.l.b16 %v7262
    %v7527 = vpack.c.b16 %v7520, %v7519
    %v7528 = vpack.c.b16 %v7522, %v7521
    %v7529 = vpack.c.b16 %v7524, %v7523
    %v7530 = vpack.c.b16 %v7526, %v7525
    %v7536 = vsel %vm184, %v7081, 0
    %7538 = vmatpush.bf16.msra.mxu0 0
    %7539 = vmatpush.bf16.msra.mxu0 0
    %7540 = vmatpush.bf16.msra.mxu0 0
    %7541 = vmatpush.bf16.msra.mxu0 0
    %7542 = vmatpush.bf16.msra.mxu0 %v7530
    %7543 = vmatpush.bf16.msra.mxu0 %v7529
    %7544 = vmatpush.bf16.msra.mxu0 %v7528
    %7545 = vmatpush.bf16.msra.mxu0 %v7527
    %7546 = vmatmul.bf16.gmra.mxu0 %v7536
    %v7547 = vpop.f32.mrf.mxu0
    %v7548 = vadd.f32 0.0, %v7547
    %v7549 = vpop.f32.mrf.mxu0
    %7550 = vdwg.mxu0
    %v7559 = vunpack.c.l.b16 %v7263
    %v7560 = vunpack.c.l.b16 %v7264
    %v7561 = vunpack.c.l.b16 %v7265
    %v7562 = vunpack.c.l.b16 %v7266
    %v7563 = vunpack.c.l.b16 %v7267
    %v7564 = vunpack.c.l.b16 %v7268
    %v7565 = vunpack.c.l.b16 %v7269
    %v7566 = vunpack.c.l.b16 %v7270
    %v7567 = vpack.c.b16 %v7560, %v7559
    %v7568 = vpack.c.b16 %v7562, %v7561
    %v7569 = vpack.c.b16 %v7564, %v7563
    %v7570 = vpack.c.b16 %v7566, %v7565
    %v7576 = vsel %vm184, %v7082, 0
    %7578 = vmatpush.bf16.msra.mxu0 0
    %7579 = vmatpush.bf16.msra.mxu0 0
    %7580 = vmatpush.bf16.msra.mxu0 0
    %7581 = vmatpush.bf16.msra.mxu0 0
    %7582 = vmatpush.bf16.msra.mxu0 %v7570
    %7583 = vmatpush.bf16.msra.mxu0 %v7569
    %7584 = vmatpush.bf16.msra.mxu0 %v7568
    %7585 = vmatpush.bf16.msra.mxu0 %v7567
    %7586 = vmatmul.bf16.gmra.mxu0 %v7576
    %v7587 = vpop.f32.mrf.mxu0
    %v7588 = vadd.f32 0.0, %v7587
    %v7589 = vpop.f32.mrf.mxu0
    %7590 = vdwg.mxu0
    %v7599 = vunpack.c.l.b16 %v7271
    %v7600 = vunpack.c.l.b16 %v7272
    %v7601 = vunpack.c.l.b16 %v7273
    %v7602 = vunpack.c.l.b16 %v7274
    %v7603 = vunpack.c.l.b16 %v7275
    %v7604 = vunpack.c.l.b16 %v7276
    %v7605 = vunpack.c.l.b16 %v7277
    %v7606 = vunpack.c.l.b16 %v7278
    %v7607 = vpack.c.b16 %v7600, %v7599
    %v7608 = vpack.c.b16 %v7602, %v7601
    %v7609 = vpack.c.b16 %v7604, %v7603
    %v7610 = vpack.c.b16 %v7606, %v7605
    %v7616 = vsel %vm184, %v7083, 0
    %7618 = vmatpush.bf16.msra.mxu0 0
    %7619 = vmatpush.bf16.msra.mxu0 0
    %7620 = vmatpush.bf16.msra.mxu0 0
    %7621 = vmatpush.bf16.msra.mxu0 0
    %7622 = vmatpush.bf16.msra.mxu0 %v7610
    %7623 = vmatpush.bf16.msra.mxu0 %v7609
    %7624 = vmatpush.bf16.msra.mxu0 %v7608
    %7625 = vmatpush.bf16.msra.mxu0 %v7607
    %7626 = vmatmul.bf16.gmra.mxu0 %v7616
    %v7627 = vpop.f32.mrf.mxu0
    %v7628 = vadd.f32 0.0, %v7627
    %v7629 = vpop.f32.mrf.mxu0
    %7630 = vdwg.mxu0
    %v7639 = vunpack.c.l.b16 %v7279
    %v7640 = vunpack.c.l.b16 %v7280
    %v7641 = vunpack.c.l.b16 %v7281
    %v7642 = vunpack.c.l.b16 %v7282
    %v7643 = vunpack.c.l.b16 %v7283
    %v7644 = vunpack.c.l.b16 %v7284
    %v7645 = vunpack.c.l.b16 %v7285
    %v7646 = vunpack.c.l.b16 %v7286
    %v7647 = vpack.c.b16 %v7640, %v7639
    %v7648 = vpack.c.b16 %v7642, %v7641
    %v7649 = vpack.c.b16 %v7644, %v7643
    %v7650 = vpack.c.b16 %v7646, %v7645
    %v7656 = vsel %vm184, %v7084, 0
    %7658 = vmatpush.bf16.msra.mxu0 0
    %7659 = vmatpush.bf16.msra.mxu0 0
    %7660 = vmatpush.bf16.msra.mxu0 0
    %7661 = vmatpush.bf16.msra.mxu0 0
    %7662 = vmatpush.bf16.msra.mxu0 %v7650
    %7663 = vmatpush.bf16.msra.mxu0 %v7649
    %7664 = vmatpush.bf16.msra.mxu0 %v7648
    %7665 = vmatpush.bf16.msra.mxu0 %v7647
    %7666 = vmatmul.bf16.gmra.mxu0 %v7656
    %v7667 = vpop.f32.mrf.mxu0
    %v7668 = vadd.f32 0.0, %v7667
    %v7669 = vpop.f32.mrf.mxu0
    %7670 = vdwg.mxu0
    %v7679 = vunpack.c.l.b16 %v7287
    %v7680 = vunpack.c.l.b16 %v7288
    %v7681 = vunpack.c.l.b16 %v7289
    %v7682 = vunpack.c.l.b16 %v7290
    %v7683 = vunpack.c.l.b16 %v7291
    %v7684 = vunpack.c.l.b16 %v7292
    %v7685 = vunpack.c.l.b16 %v7293
    %v7686 = vunpack.c.l.b16 %v7294
    %v7687 = vpack.c.b16 %v7680, %v7679
    %v7688 = vpack.c.b16 %v7682, %v7681
    %v7689 = vpack.c.b16 %v7684, %v7683
    %v7690 = vpack.c.b16 %v7686, %v7685
    %v7696 = vsel %vm184, %v7085, 0
    %7698 = vmatpush.bf16.msra.mxu0 0
    %7699 = vmatpush.bf16.msra.mxu0 0
    %7700 = vmatpush.bf16.msra.mxu0 0
    %7701 = vmatpush.bf16.msra.mxu0 0
    %7702 = vmatpush.bf16.msra.mxu0 %v7690
    %7703 = vmatpush.bf16.msra.mxu0 %v7689
    %7704 = vmatpush.bf16.msra.mxu0 %v7688
    %7705 = vmatpush.bf16.msra.mxu0 %v7687
    %7706 = vmatmul.bf16.gmra.mxu0 %v7696
    %v7707 = vpop.f32.mrf.mxu0
    %v7708 = vadd.f32 0.0, %v7707
    %v7709 = vpop.f32.mrf.mxu0
    %7710 = vdwg.mxu0
    %v7719 = vunpack.c.l.b16 %v7295
    %v7720 = vunpack.c.l.b16 %v7296
    %v7721 = vunpack.c.l.b16 %v7297
    %v7722 = vunpack.c.l.b16 %v7298
    %v7723 = vunpack.c.l.b16 %v7299
    %v7724 = vunpack.c.l.b16 %v7300
    %v7725 = vunpack.c.l.b16 %v7301
    %v7726 = vunpack.c.l.b16 %v7302
    %v7727 = vpack.c.b16 %v7720, %v7719
    %v7728 = vpack.c.b16 %v7722, %v7721
    %v7729 = vpack.c.b16 %v7724, %v7723
    %v7730 = vpack.c.b16 %v7726, %v7725
    %v7736 = vsel %vm184, %v7086, 0
    %7738 = vmatpush.bf16.msra.mxu0 0
    %7739 = vmatpush.bf16.msra.mxu0 0
    %7740 = vmatpush.bf16.msra.mxu0 0
    %7741 = vmatpush.bf16.msra.mxu0 0
    %7742 = vmatpush.bf16.msra.mxu0 %v7730
    %7743 = vmatpush.bf16.msra.mxu0 %v7729
    %7744 = vmatpush.bf16.msra.mxu0 %v7728
    %7745 = vmatpush.bf16.msra.mxu0 %v7727
    %7746 = vmatmul.bf16.gmra.mxu0 %v7736
    %v7747 = vpop.f32.mrf.mxu0
    %v7748 = vadd.f32 0.0, %v7747
    %v7749 = vpop.f32.mrf.mxu0
    %7750 = vdwg.mxu0
    %v7759 = vunpack.c.l.b16 %v7303
    %v7760 = vunpack.c.l.b16 %v7304
    %v7761 = vunpack.c.l.b16 %v7305
    %v7762 = vunpack.c.l.b16 %v7306
    %v7763 = vunpack.c.l.b16 %v7307
    %v7764 = vunpack.c.l.b16 %v7308
    %v7765 = vunpack.c.l.b16 %v7309
    %v7766 = vunpack.c.l.b16 %v7310
    %v7767 = vpack.c.b16 %v7760, %v7759
    %v7768 = vpack.c.b16 %v7762, %v7761
    %v7769 = vpack.c.b16 %v7764, %v7763
    %v7770 = vpack.c.b16 %v7766, %v7765
    %v7776 = vsel %vm184, %v7087, 0
    %7778 = vmatpush.bf16.msra.mxu0 0
    %7779 = vmatpush.bf16.msra.mxu0 0
    %7780 = vmatpush.bf16.msra.mxu0 0
    %7781 = vmatpush.bf16.msra.mxu0 0
    %7782 = vmatpush.bf16.msra.mxu0 %v7770
    %7783 = vmatpush.bf16.msra.mxu0 %v7769
    %7784 = vmatpush.bf16.msra.mxu0 %v7768
    %7785 = vmatpush.bf16.msra.mxu0 %v7767
    %7786 = vmatmul.bf16.gmra.mxu0 %v7776
    %v7787 = vpop.f32.mrf.mxu0
    %v7788 = vadd.f32 0.0, %v7787
    %v7789 = vpop.f32.mrf.mxu0
    %7790 = vdwg.mxu0
    %v7799 = vunpack.c.l.b16 %v7311
    %v7800 = vunpack.c.l.b16 %v7312
    %v7801 = vunpack.c.l.b16 %v7313
    %v7802 = vunpack.c.l.b16 %v7314
    %v7803 = vunpack.c.l.b16 %v7315
    %v7804 = vunpack.c.l.b16 %v7316
    %v7805 = vunpack.c.l.b16 %v7317
    %v7806 = vunpack.c.l.b16 %v7318
    %v7807 = vpack.c.b16 %v7800, %v7799
    %v7808 = vpack.c.b16 %v7802, %v7801
    %v7809 = vpack.c.b16 %v7804, %v7803
    %v7810 = vpack.c.b16 %v7806, %v7805
    %v7816 = vsel %vm184, %v7088, 0
    %7818 = vmatpush.bf16.msra.mxu0 0
    %7819 = vmatpush.bf16.msra.mxu0 0
    %7820 = vmatpush.bf16.msra.mxu0 0
    %7821 = vmatpush.bf16.msra.mxu0 0
    %7822 = vmatpush.bf16.msra.mxu0 %v7810
    %7823 = vmatpush.bf16.msra.mxu0 %v7809
    %7824 = vmatpush.bf16.msra.mxu0 %v7808
    %7825 = vmatpush.bf16.msra.mxu0 %v7807
    %7826 = vmatmul.bf16.gmra.mxu0 %v7816
    %v7827 = vpop.f32.mrf.mxu0
    %v7828 = vadd.f32 0.0, %v7827
    %v7829 = vpop.f32.mrf.mxu0
    %7830 = vdwg.mxu0
    %v7839 = vunpack.c.l.b16 %v7319
    %v7840 = vunpack.c.l.b16 %v7320
    %v7841 = vunpack.c.l.b16 %v7321
    %v7842 = vunpack.c.l.b16 %v7322
    %v7843 = vunpack.c.l.b16 %v7323
    %v7844 = vunpack.c.l.b16 %v7324
    %v7845 = vunpack.c.l.b16 %v7325
    %v7846 = vunpack.c.l.b16 %v7326
    %v7847 = vpack.c.b16 %v7840, %v7839
    %v7848 = vpack.c.b16 %v7842, %v7841
    %v7849 = vpack.c.b16 %v7844, %v7843
    %v7850 = vpack.c.b16 %v7846, %v7845
    %v7856 = vsel %vm184, %v7089, 0
    %7858 = vmatpush.bf16.msra.mxu0 0
    %7859 = vmatpush.bf16.msra.mxu0 0
    %7860 = vmatpush.bf16.msra.mxu0 0
    %7861 = vmatpush.bf16.msra.mxu0 0
    %7862 = vmatpush.bf16.msra.mxu0 %v7850
    %7863 = vmatpush.bf16.msra.mxu0 %v7849
    %7864 = vmatpush.bf16.msra.mxu0 %v7848
    %7865 = vmatpush.bf16.msra.mxu0 %v7847
    %7866 = vmatmul.bf16.gmra.mxu0 %v7856
    %v7867 = vpop.f32.mrf.mxu0
    %v7868 = vadd.f32 0.0, %v7867
    %v7869 = vpop.f32.mrf.mxu0
    %7870 = vdwg.mxu0
    %v7879 = vunpack.c.l.b16 %v7327
    %v7880 = vunpack.c.l.b16 %v7328
    %v7881 = vunpack.c.l.b16 %v7329
    %v7882 = vunpack.c.l.b16 %v7330
    %v7883 = vunpack.c.l.b16 %v7331
    %v7884 = vunpack.c.l.b16 %v7332
    %v7885 = vunpack.c.l.b16 %v7333
    %v7886 = vunpack.c.l.b16 %v7334
    %v7887 = vpack.c.b16 %v7880, %v7879
    %v7888 = vpack.c.b16 %v7882, %v7881
    %v7889 = vpack.c.b16 %v7884, %v7883
    %v7890 = vpack.c.b16 %v7886, %v7885
    %v7896 = vsel %vm184, %v7090, 0
    %7898 = vmatpush.bf16.msra.mxu0 0
    %7899 = vmatpush.bf16.msra.mxu0 0
    %7900 = vmatpush.bf16.msra.mxu0 0
    %7901 = vmatpush.bf16.msra.mxu0 0
    %7902 = vmatpush.bf16.msra.mxu0 %v7890
    %7903 = vmatpush.bf16.msra.mxu0 %v7889
    %7904 = vmatpush.bf16.msra.mxu0 %v7888
    %7905 = vmatpush.bf16.msra.mxu0 %v7887
    %7906 = vmatmul.bf16.gmra.mxu0 %v7896
    %v7907 = vpop.f32.mrf.mxu0
    %v7908 = vadd.f32 0.0, %v7907
    %v7909 = vpop.f32.mrf.mxu0
    %7910 = vdwg.mxu0
    %v7919 = vunpack.c.l.b16 %v7335
    %v7920 = vunpack.c.l.b16 %v7336
    %v7921 = vunpack.c.l.b16 %v7337
    %v7922 = vunpack.c.l.b16 %v7338
    %v7923 = vunpack.c.l.b16 %v7339
    %v7924 = vunpack.c.l.b16 %v7340
    %v7925 = vunpack.c.l.b16 %v7341
    %v7926 = vunpack.c.l.b16 %v7342
    %v7927 = vpack.c.b16 %v7920, %v7919
    %v7928 = vpack.c.b16 %v7922, %v7921
    %v7929 = vpack.c.b16 %v7924, %v7923
    %v7930 = vpack.c.b16 %v7926, %v7925
    %v7936 = vsel %vm184, %v7091, 0
    %7938 = vmatpush.bf16.msra.mxu0 0
    %7939 = vmatpush.bf16.msra.mxu0 0
    %7940 = vmatpush.bf16.msra.mxu0 0
    %7941 = vmatpush.bf16.msra.mxu0 0
    %7942 = vmatpush.bf16.msra.mxu0 %v7930
    %7943 = vmatpush.bf16.msra.mxu0 %v7929
    %7944 = vmatpush.bf16.msra.mxu0 %v7928
    %7945 = vmatpush.bf16.msra.mxu0 %v7927
    %7946 = vmatmul.bf16.gmra.mxu0 %v7936
    %v7947 = vpop.f32.mrf.mxu0
    %v7948 = vadd.f32 0.0, %v7947
    %v7949 = vpop.f32.mrf.mxu0
    %7950 = vdwg.mxu0
    %v7959 = vunpack.c.l.b16 %v7343
    %v7960 = vunpack.c.l.b16 %v7344
    %v7961 = vunpack.c.l.b16 %v7345
    %v7962 = vunpack.c.l.b16 %v7346
    %v7963 = vunpack.c.l.b16 %v7347
    %v7964 = vunpack.c.l.b16 %v7348
    %v7965 = vunpack.c.l.b16 %v7349
    %v7966 = vunpack.c.l.b16 %v7350
    %v7967 = vpack.c.b16 %v7960, %v7959
    %v7968 = vpack.c.b16 %v7962, %v7961
    %v7969 = vpack.c.b16 %v7964, %v7963
    %v7970 = vpack.c.b16 %v7966, %v7965
    %v7976 = vsel %vm184, %v7092, 0
    %7978 = vmatpush.bf16.msra.mxu0 0
    %7979 = vmatpush.bf16.msra.mxu0 0
    %7980 = vmatpush.bf16.msra.mxu0 0
    %7981 = vmatpush.bf16.msra.mxu0 0
    %7982 = vmatpush.bf16.msra.mxu0 %v7970
    %7983 = vmatpush.bf16.msra.mxu0 %v7969
    %7984 = vmatpush.bf16.msra.mxu0 %v7968
    %7985 = vmatpush.bf16.msra.mxu0 %v7967
    %7986 = vmatmul.bf16.gmra.mxu0 %v7976
    %v7987 = vpop.f32.mrf.mxu0
    %v7988 = vadd.f32 0.0, %v7987
    %v7989 = vpop.f32.mrf.mxu0
    %7990 = vdwg.mxu0
    %v7999 = vunpack.c.l.b16 %v7094
    %v8000 = vunpack.c.l.b16 %v7095
    %v8001 = vunpack.c.l.b16 %v7096
    %v8002 = vunpack.c.l.b16 %v7097
    %v8003 = vunpack.c.l.b16 %v7098
    %v8004 = vunpack.c.l.b16 %v7099
    %v8005 = vunpack.c.l.b16 %v7100
    %v8006 = vunpack.c.l.b16 %v7101
    %v8007 = vpack.c.b16 %v8000, %v7999
    %v8008 = vpack.c.b16 %v8002, %v8001
    %v8009 = vpack.c.b16 %v8004, %v8003
    %v8010 = vpack.c.b16 %v8006, %v8005
    %v8016 = vsel %vm184, %v6949, 0
    %8018 = vmatpush.bf16.msra.mxu0 0
    %8019 = vmatpush.bf16.msra.mxu0 0
    %8020 = vmatpush.bf16.msra.mxu0 0
    %8021 = vmatpush.bf16.msra.mxu0 0
    %8022 = vmatpush.bf16.msra.mxu0 %v8010
    %8023 = vmatpush.bf16.msra.mxu0 %v8009
    %8024 = vmatpush.bf16.msra.mxu0 %v8008
    %8025 = vmatpush.bf16.msra.mxu0 %v8007
    %8026 = vmatmul.bf16.gmra.mxu0 %v8016
    %v8027 = vpop.f32.mrf.mxu0
    %v8028 = vadd.f32 %v7388, %v8027
    %v8029 = vpop.f32.mrf.mxu0
    %8030 = vdwg.mxu0
    %v8039 = vunpack.c.l.b16 %v7102
    %v8040 = vunpack.c.l.b16 %v7103
    %v8041 = vunpack.c.l.b16 %v7104
    %v8042 = vunpack.c.l.b16 %v7105
    %v8043 = vunpack.c.l.b16 %v7106
    %v8044 = vunpack.c.l.b16 %v7107
    %v8045 = vunpack.c.l.b16 %v7108
    %v8046 = vunpack.c.l.b16 %v7109
    %v8047 = vpack.c.b16 %v8040, %v8039
    %v8048 = vpack.c.b16 %v8042, %v8041
    %v8049 = vpack.c.b16 %v8044, %v8043
    %v8050 = vpack.c.b16 %v8046, %v8045
    %v8056 = vsel %vm184, %v6950, 0
    %8058 = vmatpush.bf16.msra.mxu0 0
    %8059 = vmatpush.bf16.msra.mxu0 0
    %8060 = vmatpush.bf16.msra.mxu0 0
    %8061 = vmatpush.bf16.msra.mxu0 0
    %8062 = vmatpush.bf16.msra.mxu0 %v8050
    %8063 = vmatpush.bf16.msra.mxu0 %v8049
    %8064 = vmatpush.bf16.msra.mxu0 %v8048
    %8065 = vmatpush.bf16.msra.mxu0 %v8047
    %8066 = vmatmul.bf16.gmra.mxu0 %v8056
    %v8067 = vpop.f32.mrf.mxu0
    %v8068 = vadd.f32 %v7428, %v8067
    %v8069 = vpop.f32.mrf.mxu0
    %8070 = vdwg.mxu0
    %v8079 = vunpack.c.l.b16 %v7110
    %v8080 = vunpack.c.l.b16 %v7111
    %v8081 = vunpack.c.l.b16 %v7112
    %v8082 = vunpack.c.l.b16 %v7113
    %v8083 = vunpack.c.l.b16 %v7114
    %v8084 = vunpack.c.l.b16 %v7115
    %v8085 = vunpack.c.l.b16 %v7116
    %v8086 = vunpack.c.l.b16 %v7117
    %v8087 = vpack.c.b16 %v8080, %v8079
    %v8088 = vpack.c.b16 %v8082, %v8081
    %v8089 = vpack.c.b16 %v8084, %v8083
    %v8090 = vpack.c.b16 %v8086, %v8085
    %v8096 = vsel %vm184, %v6951, 0
    %8098 = vmatpush.bf16.msra.mxu0 0
    %8099 = vmatpush.bf16.msra.mxu0 0
    %8100 = vmatpush.bf16.msra.mxu0 0
    %8101 = vmatpush.bf16.msra.mxu0 0
    %8102 = vmatpush.bf16.msra.mxu0 %v8090
    %8103 = vmatpush.bf16.msra.mxu0 %v8089
    %8104 = vmatpush.bf16.msra.mxu0 %v8088
    %8105 = vmatpush.bf16.msra.mxu0 %v8087
    %8106 = vmatmul.bf16.gmra.mxu0 %v8096
    %v8107 = vpop.f32.mrf.mxu0
    %v8108 = vadd.f32 %v7468, %v8107
    %v8109 = vpop.f32.mrf.mxu0
    %8110 = vdwg.mxu0
    %v8119 = vunpack.c.l.b16 %v7118
    %v8120 = vunpack.c.l.b16 %v7119
    %v8121 = vunpack.c.l.b16 %v7120
    %v8122 = vunpack.c.l.b16 %v7121
    %v8123 = vunpack.c.l.b16 %v7122
    %v8124 = vunpack.c.l.b16 %v7123
    %v8125 = vunpack.c.l.b16 %v7124
    %v8126 = vunpack.c.l.b16 %v7125
    %v8127 = vpack.c.b16 %v8120, %v8119
    %v8128 = vpack.c.b16 %v8122, %v8121
    %v8129 = vpack.c.b16 %v8124, %v8123
    %v8130 = vpack.c.b16 %v8126, %v8125
    %v8136 = vsel %vm184, %v6952, 0
    %8138 = vmatpush.bf16.msra.mxu0 0
    %8139 = vmatpush.bf16.msra.mxu0 0
    %8140 = vmatpush.bf16.msra.mxu0 0
    %8141 = vmatpush.bf16.msra.mxu0 0
    %8142 = vmatpush.bf16.msra.mxu0 %v8130
    %8143 = vmatpush.bf16.msra.mxu0 %v8129
    %8144 = vmatpush.bf16.msra.mxu0 %v8128
    %8145 = vmatpush.bf16.msra.mxu0 %v8127
    %8146 = vmatmul.bf16.gmra.mxu0 %v8136
    %v8147 = vpop.f32.mrf.mxu0
    %v8148 = vadd.f32 %v7508, %v8147
    %v8149 = vpop.f32.mrf.mxu0
    %8150 = vdwg.mxu0
    %v8159 = vunpack.c.l.b16 %v7126
    %v8160 = vunpack.c.l.b16 %v7127
    %v8161 = vunpack.c.l.b16 %v7128
    %v8162 = vunpack.c.l.b16 %v7129
    %v8163 = vunpack.c.l.b16 %v7130
    %v8164 = vunpack.c.l.b16 %v7131
    %v8165 = vunpack.c.l.b16 %v7132
    %v8166 = vunpack.c.l.b16 %v7133
    %v8167 = vpack.c.b16 %v8160, %v8159
    %v8168 = vpack.c.b16 %v8162, %v8161
    %v8169 = vpack.c.b16 %v8164, %v8163
    %v8170 = vpack.c.b16 %v8166, %v8165
    %v8176 = vsel %vm184, %v6953, 0
    %8178 = vmatpush.bf16.msra.mxu0 0
    %8179 = vmatpush.bf16.msra.mxu0 0
    %8180 = vmatpush.bf16.msra.mxu0 0
    %8181 = vmatpush.bf16.msra.mxu0 0
    %8182 = vmatpush.bf16.msra.mxu0 %v8170
    %8183 = vmatpush.bf16.msra.mxu0 %v8169
    %8184 = vmatpush.bf16.msra.mxu0 %v8168
    %8185 = vmatpush.bf16.msra.mxu0 %v8167
    %8186 = vmatmul.bf16.gmra.mxu0 %v8176
    %v8187 = vpop.f32.mrf.mxu0
    %v8188 = vadd.f32 %v7548, %v8187
    %v8189 = vpop.f32.mrf.mxu0
    %8190 = vdwg.mxu0
    %v8199 = vunpack.c.l.b16 %v7134
    %v8200 = vunpack.c.l.b16 %v7135
    %v8201 = vunpack.c.l.b16 %v7136
    %v8202 = vunpack.c.l.b16 %v7137
    %v8203 = vunpack.c.l.b16 %v7138
    %v8204 = vunpack.c.l.b16 %v7139
    %v8205 = vunpack.c.l.b16 %v7140
    %v8206 = vunpack.c.l.b16 %v7141
    %v8207 = vpack.c.b16 %v8200, %v8199
    %v8208 = vpack.c.b16 %v8202, %v8201
    %v8209 = vpack.c.b16 %v8204, %v8203
    %v8210 = vpack.c.b16 %v8206, %v8205
    %v8216 = vsel %vm184, %v6954, 0
    %8218 = vmatpush.bf16.msra.mxu0 0
    %8219 = vmatpush.bf16.msra.mxu0 0
    %8220 = vmatpush.bf16.msra.mxu0 0
    %8221 = vmatpush.bf16.msra.mxu0 0
    %8222 = vmatpush.bf16.msra.mxu0 %v8210
    %8223 = vmatpush.bf16.msra.mxu0 %v8209
    %8224 = vmatpush.bf16.msra.mxu0 %v8208
    %8225 = vmatpush.bf16.msra.mxu0 %v8207
    %8226 = vmatmul.bf16.gmra.mxu0 %v8216
    %v8227 = vpop.f32.mrf.mxu0
    %v8228 = vadd.f32 %v7588, %v8227
    %v8229 = vpop.f32.mrf.mxu0
    %8230 = vdwg.mxu0
    %v8239 = vunpack.c.l.b16 %v7142
    %v8240 = vunpack.c.l.b16 %v7143
    %v8241 = vunpack.c.l.b16 %v7144
    %v8242 = vunpack.c.l.b16 %v7145
    %v8243 = vunpack.c.l.b16 %v7146
    %v8244 = vunpack.c.l.b16 %v7147
    %v8245 = vunpack.c.l.b16 %v7148
    %v8246 = vunpack.c.l.b16 %v7149
    %v8247 = vpack.c.b16 %v8240, %v8239
    %v8248 = vpack.c.b16 %v8242, %v8241
    %v8249 = vpack.c.b16 %v8244, %v8243
    %v8250 = vpack.c.b16 %v8246, %v8245
    %v8256 = vsel %vm184, %v6955, 0
    %8258 = vmatpush.bf16.msra.mxu0 0
    %8259 = vmatpush.bf16.msra.mxu0 0
    %8260 = vmatpush.bf16.msra.mxu0 0
    %8261 = vmatpush.bf16.msra.mxu0 0
    %8262 = vmatpush.bf16.msra.mxu0 %v8250
    %8263 = vmatpush.bf16.msra.mxu0 %v8249
    %8264 = vmatpush.bf16.msra.mxu0 %v8248
    %8265 = vmatpush.bf16.msra.mxu0 %v8247
    %8266 = vmatmul.bf16.gmra.mxu0 %v8256
    %v8267 = vpop.f32.mrf.mxu0
    %v8268 = vadd.f32 %v7628, %v8267
    %v8269 = vpop.f32.mrf.mxu0
    %8270 = vdwg.mxu0
    %v8279 = vunpack.c.l.b16 %v7150
    %v8280 = vunpack.c.l.b16 %v7151
    %v8281 = vunpack.c.l.b16 %v7152
    %v8282 = vunpack.c.l.b16 %v7153
    %v8283 = vunpack.c.l.b16 %v7154
    %v8284 = vunpack.c.l.b16 %v7155
    %v8285 = vunpack.c.l.b16 %v7156
    %v8286 = vunpack.c.l.b16 %v7157
    %v8287 = vpack.c.b16 %v8280, %v8279
    %v8288 = vpack.c.b16 %v8282, %v8281
    %v8289 = vpack.c.b16 %v8284, %v8283
    %v8290 = vpack.c.b16 %v8286, %v8285
    %v8296 = vsel %vm184, %v6956, 0
    %8298 = vmatpush.bf16.msra.mxu0 0
    %8299 = vmatpush.bf16.msra.mxu0 0
    %8300 = vmatpush.bf16.msra.mxu0 0
    %8301 = vmatpush.bf16.msra.mxu0 0
    %8302 = vmatpush.bf16.msra.mxu0 %v8290
    %8303 = vmatpush.bf16.msra.mxu0 %v8289
    %8304 = vmatpush.bf16.msra.mxu0 %v8288
    %8305 = vmatpush.bf16.msra.mxu0 %v8287
    %8306 = vmatmul.bf16.gmra.mxu0 %v8296
    %v8307 = vpop.f32.mrf.mxu0
    %v8308 = vadd.f32 %v7668, %v8307
    %v8309 = vpop.f32.mrf.mxu0
    %8310 = vdwg.mxu0
    %v8319 = vunpack.c.l.b16 %v7158
    %v8320 = vunpack.c.l.b16 %v7159
    %v8321 = vunpack.c.l.b16 %v7160
    %v8322 = vunpack.c.l.b16 %v7161
    %v8323 = vunpack.c.l.b16 %v7162
    %v8324 = vunpack.c.l.b16 %v7163
    %v8325 = vunpack.c.l.b16 %v7164
    %v8326 = vunpack.c.l.b16 %v7165
    %v8327 = vpack.c.b16 %v8320, %v8319
    %v8328 = vpack.c.b16 %v8322, %v8321
    %v8329 = vpack.c.b16 %v8324, %v8323
    %v8330 = vpack.c.b16 %v8326, %v8325
    %v8336 = vsel %vm184, %v6957, 0
    %8338 = vmatpush.bf16.msra.mxu0 0
    %8339 = vmatpush.bf16.msra.mxu0 0
    %8340 = vmatpush.bf16.msra.mxu0 0
    %8341 = vmatpush.bf16.msra.mxu0 0
    %8342 = vmatpush.bf16.msra.mxu0 %v8330
    %8343 = vmatpush.bf16.msra.mxu0 %v8329
    %8344 = vmatpush.bf16.msra.mxu0 %v8328
    %8345 = vmatpush.bf16.msra.mxu0 %v8327
    %8346 = vmatmul.bf16.gmra.mxu0 %v8336
    %v8347 = vpop.f32.mrf.mxu0
    %v8348 = vadd.f32 %v7708, %v8347
    %v8349 = vpop.f32.mrf.mxu0
    %8350 = vdwg.mxu0
    %v8359 = vunpack.c.l.b16 %v7166
    %v8360 = vunpack.c.l.b16 %v7167
    %v8361 = vunpack.c.l.b16 %v7168
    %v8362 = vunpack.c.l.b16 %v7169
    %v8363 = vunpack.c.l.b16 %v7170
    %v8364 = vunpack.c.l.b16 %v7171
    %v8365 = vunpack.c.l.b16 %v7172
    %v8366 = vunpack.c.l.b16 %v7173
    %v8367 = vpack.c.b16 %v8360, %v8359
    %v8368 = vpack.c.b16 %v8362, %v8361
    %v8369 = vpack.c.b16 %v8364, %v8363
    %v8370 = vpack.c.b16 %v8366, %v8365
    %v8376 = vsel %vm184, %v6958, 0
    %8378 = vmatpush.bf16.msra.mxu0 0
    %8379 = vmatpush.bf16.msra.mxu0 0
    %8380 = vmatpush.bf16.msra.mxu0 0
    %8381 = vmatpush.bf16.msra.mxu0 0
    %8382 = vmatpush.bf16.msra.mxu0 %v8370
    %8383 = vmatpush.bf16.msra.mxu0 %v8369
    %8384 = vmatpush.bf16.msra.mxu0 %v8368
    %8385 = vmatpush.bf16.msra.mxu0 %v8367
    %8386 = vmatmul.bf16.gmra.mxu0 %v8376
    %v8387 = vpop.f32.mrf.mxu0
    %v8388 = vadd.f32 %v7748, %v8387
    %v8389 = vpop.f32.mrf.mxu0
    %8390 = vdwg.mxu0
    %v8399 = vunpack.c.l.b16 %v7174
    %v8400 = vunpack.c.l.b16 %v7175
    %v8401 = vunpack.c.l.b16 %v7176
    %v8402 = vunpack.c.l.b16 %v7177
    %v8403 = vunpack.c.l.b16 %v7178
    %v8404 = vunpack.c.l.b16 %v7179
    %v8405 = vunpack.c.l.b16 %v7180
    %v8406 = vunpack.c.l.b16 %v7181
    %v8407 = vpack.c.b16 %v8400, %v8399
    %v8408 = vpack.c.b16 %v8402, %v8401
    %v8409 = vpack.c.b16 %v8404, %v8403
    %v8410 = vpack.c.b16 %v8406, %v8405
    %v8416 = vsel %vm184, %v6959, 0
    %8418 = vmatpush.bf16.msra.mxu0 0
    %8419 = vmatpush.bf16.msra.mxu0 0
    %8420 = vmatpush.bf16.msra.mxu0 0
    %8421 = vmatpush.bf16.msra.mxu0 0
    %8422 = vmatpush.bf16.msra.mxu0 %v8410
    %8423 = vmatpush.bf16.msra.mxu0 %v8409
    %8424 = vmatpush.bf16.msra.mxu0 %v8408
    %8425 = vmatpush.bf16.msra.mxu0 %v8407
    %8426 = vmatmul.bf16.gmra.mxu0 %v8416
    %v8427 = vpop.f32.mrf.mxu0
    %v8428 = vadd.f32 %v7788, %v8427
    %v8429 = vpop.f32.mrf.mxu0
    %8430 = vdwg.mxu0
    %v8439 = vunpack.c.l.b16 %v7182
    %v8440 = vunpack.c.l.b16 %v7183
    %v8441 = vunpack.c.l.b16 %v7184
    %v8442 = vunpack.c.l.b16 %v7185
    %v8443 = vunpack.c.l.b16 %v7186
    %v8444 = vunpack.c.l.b16 %v7187
    %v8445 = vunpack.c.l.b16 %v7188
    %v8446 = vunpack.c.l.b16 %v7189
    %v8447 = vpack.c.b16 %v8440, %v8439
    %v8448 = vpack.c.b16 %v8442, %v8441
    %v8449 = vpack.c.b16 %v8444, %v8443
    %v8450 = vpack.c.b16 %v8446, %v8445
    %v8456 = vsel %vm184, %v6960, 0
    %8458 = vmatpush.bf16.msra.mxu0 0
    %8459 = vmatpush.bf16.msra.mxu0 0
    %8460 = vmatpush.bf16.msra.mxu0 0
    %8461 = vmatpush.bf16.msra.mxu0 0
    %8462 = vmatpush.bf16.msra.mxu0 %v8450
    %8463 = vmatpush.bf16.msra.mxu0 %v8449
    %8464 = vmatpush.bf16.msra.mxu0 %v8448
    %8465 = vmatpush.bf16.msra.mxu0 %v8447
    %8466 = vmatmul.bf16.gmra.mxu0 %v8456
    %v8467 = vpop.f32.mrf.mxu0
    %v8468 = vadd.f32 %v7828, %v8467
    %v8469 = vpop.f32.mrf.mxu0
    %8470 = vdwg.mxu0
    %v8479 = vunpack.c.l.b16 %v7190
    %v8480 = vunpack.c.l.b16 %v7191
    %v8481 = vunpack.c.l.b16 %v7192
    %v8482 = vunpack.c.l.b16 %v7193
    %v8483 = vunpack.c.l.b16 %v7194
    %v8484 = vunpack.c.l.b16 %v7195
    %v8485 = vunpack.c.l.b16 %v7196
    %v8486 = vunpack.c.l.b16 %v7197
    %v8487 = vpack.c.b16 %v8480, %v8479
    %v8488 = vpack.c.b16 %v8482, %v8481
    %v8489 = vpack.c.b16 %v8484, %v8483
    %v8490 = vpack.c.b16 %v8486, %v8485
    %v8496 = vsel %vm184, %v6961, 0
    %8498 = vmatpush.bf16.msra.mxu0 0
    %8499 = vmatpush.bf16.msra.mxu0 0
    %8500 = vmatpush.bf16.msra.mxu0 0
    %8501 = vmatpush.bf16.msra.mxu0 0
    %8502 = vmatpush.bf16.msra.mxu0 %v8490
    %8503 = vmatpush.bf16.msra.mxu0 %v8489
    %8504 = vmatpush.bf16.msra.mxu0 %v8488
    %8505 = vmatpush.bf16.msra.mxu0 %v8487
    %8506 = vmatmul.bf16.gmra.mxu0 %v8496
    %v8507 = vpop.f32.mrf.mxu0
    %v8508 = vadd.f32 %v7868, %v8507
    %v8509 = vpop.f32.mrf.mxu0
    %8510 = vdwg.mxu0
    %v8519 = vunpack.c.l.b16 %v7198
    %v8520 = vunpack.c.l.b16 %v7199
    %v8521 = vunpack.c.l.b16 %v7200
    %v8522 = vunpack.c.l.b16 %v7201
    %v8523 = vunpack.c.l.b16 %v7202
    %v8524 = vunpack.c.l.b16 %v7203
    %v8525 = vunpack.c.l.b16 %v7204
    %v8526 = vunpack.c.l.b16 %v7205
    %v8527 = vpack.c.b16 %v8520, %v8519
    %v8528 = vpack.c.b16 %v8522, %v8521
    %v8529 = vpack.c.b16 %v8524, %v8523
    %v8530 = vpack.c.b16 %v8526, %v8525
    %v8536 = vsel %vm184, %v6962, 0
    %8538 = vmatpush.bf16.msra.mxu0 0
    %8539 = vmatpush.bf16.msra.mxu0 0
    %8540 = vmatpush.bf16.msra.mxu0 0
    %8541 = vmatpush.bf16.msra.mxu0 0
    %8542 = vmatpush.bf16.msra.mxu0 %v8530
    %8543 = vmatpush.bf16.msra.mxu0 %v8529
    %8544 = vmatpush.bf16.msra.mxu0 %v8528
    %8545 = vmatpush.bf16.msra.mxu0 %v8527
    %8546 = vmatmul.bf16.gmra.mxu0 %v8536
    %v8547 = vpop.f32.mrf.mxu0
    %v8548 = vadd.f32 %v7908, %v8547
    %v8549 = vpop.f32.mrf.mxu0
    %8550 = vdwg.mxu0
    %v8559 = vunpack.c.l.b16 %v7206
    %v8560 = vunpack.c.l.b16 %v7207
    %v8561 = vunpack.c.l.b16 %v7208
    %v8562 = vunpack.c.l.b16 %v7209
    %v8563 = vunpack.c.l.b16 %v7210
    %v8564 = vunpack.c.l.b16 %v7211
    %v8565 = vunpack.c.l.b16 %v7212
    %v8566 = vunpack.c.l.b16 %v7213
    %v8567 = vpack.c.b16 %v8560, %v8559
    %v8568 = vpack.c.b16 %v8562, %v8561
    %v8569 = vpack.c.b16 %v8564, %v8563
    %v8570 = vpack.c.b16 %v8566, %v8565
    %v8576 = vsel %vm184, %v6963, 0
    %8578 = vmatpush.bf16.msra.mxu0 0
    %8579 = vmatpush.bf16.msra.mxu0 0
    %8580 = vmatpush.bf16.msra.mxu0 0
    %8581 = vmatpush.bf16.msra.mxu0 0
    %8582 = vmatpush.bf16.msra.mxu0 %v8570
    %8583 = vmatpush.bf16.msra.mxu0 %v8569
    %8584 = vmatpush.bf16.msra.mxu0 %v8568
    %8585 = vmatpush.bf16.msra.mxu0 %v8567
    %8586 = vmatmul.bf16.gmra.mxu0 %v8576
    %v8587 = vpop.f32.mrf.mxu0
    %v8588 = vadd.f32 %v7948, %v8587
    %v8589 = vpop.f32.mrf.mxu0
    %8590 = vdwg.mxu0
    %v8599 = vunpack.c.l.b16 %v7214
    %v8600 = vunpack.c.l.b16 %v7215
    %v8601 = vunpack.c.l.b16 %v7216
    %v8602 = vunpack.c.l.b16 %v7217
    %v8603 = vunpack.c.l.b16 %v7218
    %v8604 = vunpack.c.l.b16 %v7219
    %v8605 = vunpack.c.l.b16 %v7220
    %v8606 = vunpack.c.l.b16 %v7221
    %v8607 = vpack.c.b16 %v8600, %v8599
    %v8608 = vpack.c.b16 %v8602, %v8601
    %v8609 = vpack.c.b16 %v8604, %v8603
    %v8610 = vpack.c.b16 %v8606, %v8605
    %v8616 = vsel %vm184, %v6964, 0
    %8618 = vmatpush.bf16.msra.mxu0 0
    %8619 = vmatpush.bf16.msra.mxu0 0
    %8620 = vmatpush.bf16.msra.mxu0 0
    %8621 = vmatpush.bf16.msra.mxu0 0
    %8622 = vmatpush.bf16.msra.mxu0 %v8610
    %8623 = vmatpush.bf16.msra.mxu0 %v8609
    %8624 = vmatpush.bf16.msra.mxu0 %v8608
    %8625 = vmatpush.bf16.msra.mxu0 %v8607
    %8626 = vmatmul.bf16.gmra.mxu0 %v8616
    %v8627 = vpop.f32.mrf.mxu0
    %v8628 = vadd.f32 %v7988, %v8627
    %v8629 = vpop.f32.mrf.mxu0
    %8630 = vdwg.mxu0
    %v8631 = vrot.slane %v8108, 4
    %v8632 = vsel %vm219, %v8631, %v8028
    %v8634 = vunpack.c.l.s4 1983009808
    %v8635 = vunpack.c.0.s8 %v8634
    %v8636 = vperm.slane %v8632, %v8635
    %v8637 = vrot.slane %v8148, 4
    %v8638 = vsel %vm219, %v8637, %v8068
    %v8640 = vunpack.c.l.s4 1983009808
    %v8641 = vunpack.c.0.s8 %v8640
    %v8642 = vperm.slane %v8638, %v8641
    %v8643 = vrot.slane %v8268, 4
    %v8644 = vsel %vm219, %v8643, %v8188
    %v8646 = vunpack.c.l.s4 1983009808
    %v8647 = vunpack.c.0.s8 %v8646
    %v8648 = vperm.slane %v8644, %v8647
    %v8649 = vrot.slane %v8308, 4
    %v8650 = vsel %vm219, %v8649, %v8228
    %v8652 = vunpack.c.l.s4 1983009808
    %v8653 = vunpack.c.0.s8 %v8652
    %v8654 = vperm.slane %v8650, %v8653
    %v8655 = vrot.slane %v8642, 4
    %v8656 = vsel %vm219, %v8655, %v8636
    %v8658 = vunpack.c.l.s4 1934713408
    %v8659 = vunpack.c.0.s8 %v8658
    %v8660 = vperm.slane %v8656, %v8659
    %v8661 = vrot.slane %v8654, 4
    %v8662 = vsel %vm219, %v8661, %v8648
    %v8664 = vunpack.c.l.s4 1934713408
    %v8665 = vunpack.c.0.s8 %v8664
    %v8666 = vperm.slane %v8662, %v8665
    %v8667 = vrot.slane %v8666, 4
    %v8668 = vsel %vm219, %v8667, %v8660
    %v8669 = vrot.slane %v8660, 4
    %v8670 = vsel %vm219, %v8666, %v8669
    %v8671 = vrot.slane %v8428, 4
    %v8672 = vsel %vm219, %v8671, %v8348
    %v8674 = vunpack.c.l.s4 1983009808
    %v8675 = vunpack.c.0.s8 %v8674
    %v8676 = vperm.slane %v8672, %v8675
    %v8677 = vrot.slane %v8468, 4
    %v8678 = vsel %vm219, %v8677, %v8388
    %v8680 = vunpack.c.l.s4 1983009808
    %v8681 = vunpack.c.0.s8 %v8680
    %v8682 = vperm.slane %v8678, %v8681
    %v8683 = vrot.slane %v8588, 4
    %v8684 = vsel %vm219, %v8683, %v8508
    %v8686 = vunpack.c.l.s4 1983009808
    %v8687 = vunpack.c.0.s8 %v8686
    %v8688 = vperm.slane %v8684, %v8687
    %v8689 = vrot.slane %v8628, 4
    %v8690 = vsel %vm219, %v8689, %v8548
    %v8692 = vunpack.c.l.s4 1983009808
    %v8693 = vunpack.c.0.s8 %v8692
    %v8694 = vperm.slane %v8690, %v8693
    %v8695 = vrot.slane %v8682, 4
    %v8696 = vsel %vm219, %v8695, %v8676
    %v8698 = vunpack.c.l.s4 1934713408
    %v8699 = vunpack.c.0.s8 %v8698
    %v8700 = vperm.slane %v8696, %v8699
    %v8701 = vrot.slane %v8694, 4
    %v8702 = vsel %vm219, %v8701, %v8688
    %v8704 = vunpack.c.l.s4 1934713408
    %v8705 = vunpack.c.0.s8 %v8704
    %v8706 = vperm.slane %v8702, %v8705
    %v8707 = vrot.slane %v8706, 4
    %v8708 = vsel %vm219, %v8707, %v8700
    %v8709 = vrot.slane %v8700, 4
    %v8710 = vsel %vm219, %v8706, %v8709
    %8713 = vrot.lane.b32.xlu0 %v8670, 64
    %v8714 = vpop.permute.xlu0 %8713
    %8715 = vrot.lane.b32.xlu0 %v8710, 64
    %v8716 = vpop.permute.xlu0 %8715
    %v8719 = vsel %vm184, %v8668, %v8714
    %v8720 = vsel %vm184, %v8708, %v8716
    %8737 = vrot.lane.b32.xlu0 %v8028, 64
    %v8738 = vpop.permute.xlu0 %8737
    %8739 = vrot.lane.b32.xlu0 %v8068, 64
    %v8740 = vpop.permute.xlu0 %8739
    %8741 = vrot.lane.b32.xlu0 %v8108, 64
    %v8742 = vpop.permute.xlu0 %8741
    %8743 = vrot.lane.b32.xlu0 %v8148, 64
    %v8744 = vpop.permute.xlu0 %8743
    %8745 = vrot.lane.b32.xlu0 %v8188, 64
    %v8746 = vpop.permute.xlu0 %8745
    %8747 = vrot.lane.b32.xlu0 %v8228, 64
    %v8748 = vpop.permute.xlu0 %8747
    %8749 = vrot.lane.b32.xlu0 %v8268, 64
    %v8750 = vpop.permute.xlu0 %8749
    %8751 = vrot.lane.b32.xlu0 %v8308, 64
    %v8752 = vpop.permute.xlu0 %8751
    %8753 = vrot.lane.b32.xlu0 %v8348, 64
    %v8754 = vpop.permute.xlu0 %8753
    %8755 = vrot.lane.b32.xlu0 %v8388, 64
    %v8756 = vpop.permute.xlu0 %8755
    %8757 = vrot.lane.b32.xlu0 %v8428, 64
    %v8758 = vpop.permute.xlu0 %8757
    %8759 = vrot.lane.b32.xlu0 %v8468, 64
    %v8760 = vpop.permute.xlu0 %8759
    %8761 = vrot.lane.b32.xlu0 %v8508, 64
    %v8762 = vpop.permute.xlu0 %8761
    %8763 = vrot.lane.b32.xlu0 %v8548, 64
    %v8764 = vpop.permute.xlu0 %8763
    %8765 = vrot.lane.b32.xlu0 %v8588, 64
    %v8766 = vpop.permute.xlu0 %8765
    %8767 = vrot.lane.b32.xlu0 %v8628, 64
    %v8768 = vpop.permute.xlu0 %8767
    %v8785 = vrot.slane %v8742, 4
    %v8786 = vsel %vm219, %v8785, %v8738
    %v8788 = vunpack.c.l.s4 1983009808
    %v8789 = vunpack.c.0.s8 %v8788
    %v8790 = vperm.slane %v8786, %v8789
    %v8791 = vrot.slane %v8744, 4
    %v8792 = vsel %vm219, %v8791, %v8740
    %v8794 = vunpack.c.l.s4 1983009808
    %v8795 = vunpack.c.0.s8 %v8794
    %v8796 = vperm.slane %v8792, %v8795
    %v8797 = vrot.slane %v8750, 4
    %v8798 = vsel %vm219, %v8797, %v8746
    %v8800 = vunpack.c.l.s4 1983009808
    %v8801 = vunpack.c.0.s8 %v8800
    %v8802 = vperm.slane %v8798, %v8801
    %v8803 = vrot.slane %v8752, 4
    %v8804 = vsel %vm219, %v8803, %v8748
    %v8806 = vunpack.c.l.s4 1983009808
    %v8807 = vunpack.c.0.s8 %v8806
    %v8808 = vperm.slane %v8804, %v8807
    %v8809 = vrot.slane %v8796, 4
    %v8810 = vsel %vm219, %v8809, %v8790
    %v8812 = vunpack.c.l.s4 1934713408
    %v8813 = vunpack.c.0.s8 %v8812
    %v8814 = vperm.slane %v8810, %v8813
    %v8815 = vrot.slane %v8808, 4
    %v8816 = vsel %vm219, %v8815, %v8802
    %v8818 = vunpack.c.l.s4 1934713408
    %v8819 = vunpack.c.0.s8 %v8818
    %v8820 = vperm.slane %v8816, %v8819
    %v8821 = vrot.slane %v8820, 4
    %v8822 = vsel %vm219, %v8821, %v8814
    %v8823 = vrot.slane %v8814, 4
    %v8824 = vsel %vm219, %v8820, %v8823
    %v8825 = vrot.slane %v8758, 4
    %v8826 = vsel %vm219, %v8825, %v8754
    %v8828 = vunpack.c.l.s4 1983009808
    %v8829 = vunpack.c.0.s8 %v8828
    %v8830 = vperm.slane %v8826, %v8829
    %v8831 = vrot.slane %v8760, 4
    %v8832 = vsel %vm219, %v8831, %v8756
    %v8834 = vunpack.c.l.s4 1983009808
    %v8835 = vunpack.c.0.s8 %v8834
    %v8836 = vperm.slane %v8832, %v8835
    %v8837 = vrot.slane %v8766, 4
    %v8838 = vsel %vm219, %v8837, %v8762
    %v8840 = vunpack.c.l.s4 1983009808
    %v8841 = vunpack.c.0.s8 %v8840
    %v8842 = vperm.slane %v8838, %v8841
    %v8843 = vrot.slane %v8768, 4
    %v8844 = vsel %vm219, %v8843, %v8764
    %v8846 = vunpack.c.l.s4 1983009808
    %v8847 = vunpack.c.0.s8 %v8846
    %v8848 = vperm.slane %v8844, %v8847
    %v8849 = vrot.slane %v8836, 4
    %v8850 = vsel %vm219, %v8849, %v8830
    %v8852 = vunpack.c.l.s4 1934713408
    %v8853 = vunpack.c.0.s8 %v8852
    %v8854 = vperm.slane %v8850, %v8853
    %v8855 = vrot.slane %v8848, 4
    %v8856 = vsel %vm219, %v8855, %v8842
    %v8858 = vunpack.c.l.s4 1934713408
    %v8859 = vunpack.c.0.s8 %v8858
    %v8860 = vperm.slane %v8856, %v8859
    %v8861 = vrot.slane %v8860, 4
    %v8862 = vsel %vm219, %v8861, %v8854
    %v8863 = vrot.slane %v8854, 4
    %v8864 = vsel %vm219, %v8860, %v8863
    %8867 = vrot.lane.b32.xlu0 %v8824, 64
    %v8868 = vpop.permute.xlu0 %8867
    %8869 = vrot.lane.b32.xlu0 %v8864, 64
    %v8870 = vpop.permute.xlu0 %8869
    %v8873 = vsel %vm184, %v8822, %v8868
    %v8874 = vsel %vm184, %v8862, %v8870
    %v8875 = vpack.c.bf16 %v8720, %v8719
    %v8876 = vpack.c.bf16 %v8874, %v8873
    %s8877 = scalar_lea.vmem [#allocation6], 192
    %v8878 = vld [vmem:[%s8877] sm:$0xf]
    %v8879 = vld [vmem:[%s8877 + $0x4] sm:$0xf]
    %v8880 = vld [vmem:[%s8877 + $0x8] sm:$0xf]
    %v8881 = vld [vmem:[%s8877 + $0xc] sm:$0xf]
    %v8882 = vld [vmem:[%s8877 + $0x10] sm:$0xf]
    %v8883 = vld [vmem:[%s8877 + $0x14] sm:$0xf]
    %v8884 = vld [vmem:[%s8877 + $0x18] sm:$0xf]
    %v8885 = vld [vmem:[%s8877 + $0x1c] sm:$0xf]
    %v8886 = vld [vmem:[%s8877 + $0x20] sm:$0xf]
    %v8887 = vld [vmem:[%s8877 + $0x24] sm:$0xf]
    %v8888 = vld [vmem:[%s8877 + $0x28] sm:$0xf]
    %v8889 = vld [vmem:[%s8877 + $0x2c] sm:$0xf]
    %v8890 = vld [vmem:[%s8877 + $0x30] sm:$0xf]
    %v8891 = vld [vmem:[%s8877 + $0x34] sm:$0xf]
    %v8892 = vld [vmem:[%s8877 + $0x38] sm:$0xf]
    %v8893 = vld [vmem:[%s8877 + $0x3c] sm:$0xf]
    %s8894 = scalar_lea.vmem %s8, 3
    %v8895 = vld [vmem:[%s8894] sm:$0x1]
    %v8897 = vperm.slane %v8895, 0
    %v8915 = vunpack.c.l.b16 %v8878
    %v8916 = vunpack.c.l.b16 %v8879
    %v8917 = vunpack.c.l.b16 %v8880
    %v8918 = vunpack.c.l.b16 %v8881
    %v8919 = vunpack.c.l.b16 %v8882
    %v8920 = vunpack.c.l.b16 %v8883
    %v8921 = vunpack.c.l.b16 %v8884
    %v8922 = vunpack.c.l.b16 %v8885
    %v8923 = vunpack.c.l.b16 %v8886
    %v8924 = vunpack.c.l.b16 %v8887
    %v8925 = vunpack.c.l.b16 %v8888
    %v8926 = vunpack.c.l.b16 %v8889
    %v8927 = vunpack.c.l.b16 %v8890
    %v8928 = vunpack.c.l.b16 %v8891
    %v8929 = vunpack.c.l.b16 %v8892
    %v8930 = vunpack.c.l.b16 %v8893
    %v8931 = vpack.c.b16 %v8916, %v8915
    %v8932 = vpack.c.b16 %v8918, %v8917
    %v8933 = vpack.c.b16 %v8920, %v8919
    %v8934 = vpack.c.b16 %v8922, %v8921
    %v8935 = vpack.c.b16 %v8924, %v8923
    %v8936 = vpack.c.b16 %v8926, %v8925
    %v8937 = vpack.c.b16 %v8928, %v8927
    %v8938 = vpack.c.b16 %v8930, %v8929
    %8947 = vmatpush.bf16.msra.mxu0 %v8938
    %8948 = vmatpush.bf16.msra.mxu0 %v8937
    %8949 = vmatpush.bf16.msra.mxu0 %v8936
    %8950 = vmatpush.bf16.msra.mxu0 %v8935
    %8951 = vmatpush.bf16.msra.mxu0 %v8934
    %8952 = vmatpush.bf16.msra.mxu0 %v8933
    %8953 = vmatpush.bf16.msra.mxu0 %v8932
    %8954 = vmatpush.bf16.msra.mxu0 %v8931
    %8955 = vmatmul.bf16.gmra.mxu0 %v6814
    %v8956 = vpop.f32.mrf.mxu0
    %v8957 = vadd.f32 %v8897, %v8956
    %v8958 = vpop.f32.mrf.mxu0
    %v8959 = vadd.f32 %v8897, %v8958
    %8960 = vmatmul.bf16.gmra.mxu0 %v6815
    %v8961 = vpop.f32.mrf.mxu0
    %v8962 = vadd.f32 %v8897, %v8961
    %v8963 = vpop.f32.mrf.mxu0
    %v8964 = vadd.f32 %v8897, %v8963
    %8965 = vmatmul.bf16.gmra.mxu0 %v6816
    %v8966 = vpop.f32.mrf.mxu0
    %v8967 = vadd.f32 %v8897, %v8966
    %v8968 = vpop.f32.mrf.mxu0
    %v8969 = vadd.f32 %v8897, %v8968
    %8970 = vmatmul.bf16.gmra.mxu0 %v6817
    %v8971 = vpop.f32.mrf.mxu0
    %v8972 = vadd.f32 %v8897, %v8971
    %v8973 = vpop.f32.mrf.mxu0
    %v8974 = vadd.f32 %v8897, %v8973
    %8975 = vdwg.mxu0
    %8976 = vmatpush.bf16.msra.mxu0 0
    %8977 = vmatpush.bf16.msra.mxu0 0
    %8978 = vmatpush.bf16.msra.mxu0 0
    %8979 = vmatpush.bf16.msra.mxu0 0
    %8980 = vmatpush.bf16.msra.mxu0 0
    %8981 = vmatpush.bf16.msra.mxu0 0
    %8982 = vmatpush.bf16.msra.mxu0 %v8876
    %8983 = vmatpush.bf16.msra.mxu0 %v8875
    %8984 = vmatmul.bf16.gmra.mxu0 %v2368
    %v8985 = vpop.f32.mrf.mxu0
    %v8986 = vadd.f32 %v8957, %v8985
    %v8987 = vpop.f32.mrf.mxu0
    %v8988 = vadd.f32 %v8959, %v8987
    %8989 = vmatmul.bf16.gmra.mxu0 %v2371
    %v8990 = vpop.f32.mrf.mxu0
    %v8991 = vadd.f32 %v8962, %v8990
    %v8992 = vpop.f32.mrf.mxu0
    %v8993 = vadd.f32 %v8964, %v8992
    %8994 = vmatmul.bf16.gmra.mxu0 %v2374
    %v8995 = vpop.f32.mrf.mxu0
    %v8996 = vadd.f32 %v8967, %v8995
    %v8997 = vpop.f32.mrf.mxu0
    %v8998 = vadd.f32 %v8969, %v8997
    %8999 = vmatmul.bf16.gmra.mxu0 %v2377
    %v9000 = vpop.f32.mrf.mxu0
    %v9001 = vadd.f32 %v8972, %v9000
    %v9002 = vpop.f32.mrf.mxu0
    %v9003 = vadd.f32 %v8974, %v9002
    %9004 = vdwg.mxu0
    %v9005 = vpack.c.bf16 %v8988, %v8986
    %v9006 = vpack.c.bf16 %v8993, %v8991
    %v9007 = vpack.c.bf16 %v8998, %v8996
    %v9008 = vpack.c.bf16 %v9003, %v9001
    %v9009 = vld [vmem:[%s9] sm:$0xff]
    %v9010 = vld [vmem:[%s9 + $0x8] sm:$0xff]
    %v9011 = vld [vmem:[%s9 + $0x10] sm:$0xff]
    %v9012 = vld [vmem:[%s9 + $0x18] sm:$0xff]
    %v9013 = vld [vmem:[%s9 + $0x20] sm:$0xff]
    %v9014 = vld [vmem:[%s9 + $0x28] sm:$0xff]
    %v9015 = vld [vmem:[%s9 + $0x30] sm:$0xff]
    %v9016 = vld [vmem:[%s9 + $0x38] sm:$0xff]
    %v9017 = vld [vmem:[%s9 + $0x40] sm:$0xff]
    %v9018 = vld [vmem:[%s9 + $0x48] sm:$0xff]
    %v9019 = vld [vmem:[%s9 + $0x50] sm:$0xff]
    %v9020 = vld [vmem:[%s9 + $0x58] sm:$0xff]
    %v9021 = vld [vmem:[%s9 + $0x60] sm:$0xff]
    %v9022 = vld [vmem:[%s9 + $0x68] sm:$0xff]
    %v9023 = vld [vmem:[%s9 + $0x70] sm:$0xff]
    %v9024 = vld [vmem:[%s9 + $0x78] sm:$0xff]
    %v9025 = vld [vmem:[%s10] sm:$0x3]
    %v9027 = vperm.slane %v9025, 0
    %v9028 = vperm.slane %v9025, 1
    %v9047 = vunpack.c.l.b16 %v9009
    %v9048 = vunpack.c.h.b16 %v9009
    %v9049 = vunpack.c.l.b16 %v9010
    %v9050 = vunpack.c.h.b16 %v9010
    %v9051 = vunpack.c.l.b16 %v9011
    %v9052 = vunpack.c.h.b16 %v9011
    %v9053 = vunpack.c.l.b16 %v9012
    %v9054 = vunpack.c.h.b16 %v9012
    %v9055 = vunpack.c.l.b16 %v9013
    %v9056 = vunpack.c.h.b16 %v9013
    %v9057 = vunpack.c.l.b16 %v9014
    %v9058 = vunpack.c.h.b16 %v9014
    %v9059 = vunpack.c.l.b16 %v9015
    %v9060 = vunpack.c.h.b16 %v9015
    %v9061 = vunpack.c.l.b16 %v9016
    %v9062 = vunpack.c.h.b16 %v9016
    %v9063 = vunpack.c.l.b16 %v9017
    %v9064 = vunpack.c.h.b16 %v9017
    %v9065 = vunpack.c.l.b16 %v9018
    %v9066 = vunpack.c.h.b16 %v9018
    %v9067 = vunpack.c.l.b16 %v9019
    %v9068 = vunpack.c.h.b16 %v9019
    %v9069 = vunpack.c.l.b16 %v9020
    %v9070 = vunpack.c.h.b16 %v9020
    %v9071 = vunpack.c.l.b16 %v9021
    %v9072 = vunpack.c.h.b16 %v9021
    %v9073 = vunpack.c.l.b16 %v9022
    %v9074 = vunpack.c.h.b16 %v9022
    %v9075 = vunpack.c.l.b16 %v9023
    %v9076 = vunpack.c.h.b16 %v9023
    %v9077 = vunpack.c.l.b16 %v9024
    %v9078 = vunpack.c.h.b16 %v9024
    %v9079 = vpack.c.b16 %v9049, %v9047
    %v9080 = vpack.c.b16 %v9050, %v9048
    %v9081 = vpack.c.b16 %v9053, %v9051
    %v9082 = vpack.c.b16 %v9054, %v9052
    %v9083 = vpack.c.b16 %v9057, %v9055
    %v9084 = vpack.c.b16 %v9058, %v9056
    %v9085 = vpack.c.b16 %v9061, %v9059
    %v9086 = vpack.c.b16 %v9062, %v9060
    %v9087 = vpack.c.b16 %v9065, %v9063
    %v9088 = vpack.c.b16 %v9066, %v9064
    %v9089 = vpack.c.b16 %v9069, %v9067
    %v9090 = vpack.c.b16 %v9070, %v9068
    %v9091 = vpack.c.b16 %v9073, %v9071
    %v9092 = vpack.c.b16 %v9074, %v9072
    %v9093 = vpack.c.b16 %v9077, %v9075
    %v9094 = vpack.c.b16 %v9078, %v9076
    %9111 = vmatpush.bf16.msra.mxu0 %v9093
    %9112 = vmatpush.bf16.msra.mxu0 %v9091
    %9113 = vmatpush.bf16.msra.mxu0 %v9089
    %9114 = vmatpush.bf16.msra.mxu0 %v9087
    %9115 = vmatpush.bf16.msra.mxu0 %v9085
    %9116 = vmatpush.bf16.msra.mxu0 %v9083
    %9117 = vmatpush.bf16.msra.mxu0 %v9081
    %9118 = vmatpush.bf16.msra.mxu0 %v9079
    %9119 = vmatmul.bf16.gmra.mxu0 %v9005
    %v9120 = vpop.f32.mrf.mxu0
    %v9121 = vadd.f32 %v9027, %v9120
    %v9122 = vpop.f32.mrf.mxu0
    %v9123 = vadd.f32 %v9027, %v9122
    %9124 = vmatmul.bf16.gmra.mxu0 %v9006
    %v9125 = vpop.f32.mrf.mxu0
    %v9126 = vadd.f32 %v9027, %v9125
    %v9127 = vpop.f32.mrf.mxu0
    %v9128 = vadd.f32 %v9027, %v9127
    %9129 = vmatmul.bf16.gmra.mxu0 %v9007
    %v9130 = vpop.f32.mrf.mxu0
    %v9131 = vadd.f32 %v9027, %v9130
    %v9132 = vpop.f32.mrf.mxu0
    %v9133 = vadd.f32 %v9027, %v9132
    %9134 = vmatmul.bf16.gmra.mxu0 %v9008
    %v9135 = vpop.f32.mrf.mxu0
    %v9136 = vadd.f32 %v9027, %v9135
    %v9137 = vpop.f32.mrf.mxu0
    %v9138 = vadd.f32 %v9027, %v9137
    %9139 = vdwg.mxu0
    %9140 = vmatpush.bf16.msra.mxu0 %v9094
    %9141 = vmatpush.bf16.msra.mxu0 %v9092
    %9142 = vmatpush.bf16.msra.mxu0 %v9090
    %9143 = vmatpush.bf16.msra.mxu0 %v9088
    %9144 = vmatpush.bf16.msra.mxu0 %v9086
    %9145 = vmatpush.bf16.msra.mxu0 %v9084
    %9146 = vmatpush.bf16.msra.mxu0 %v9082
    %9147 = vmatpush.bf16.msra.mxu0 %v9080
    %9148 = vmatmul.bf16.gmra.mxu0 %v9005
    %v9149 = vpop.f32.mrf.mxu0
    %v9150 = vadd.f32 %v9028, %v9149
    %v9151 = vpop.f32.mrf.mxu0
    %v9152 = vadd.f32 %v9028, %v9151
    %9153 = vmatmul.bf16.gmra.mxu0 %v9006
    %v9154 = vpop.f32.mrf.mxu0
    %v9155 = vadd.f32 %v9028, %v9154
    %v9156 = vpop.f32.mrf.mxu0
    %v9157 = vadd.f32 %v9028, %v9156
    %9158 = vmatmul.bf16.gmra.mxu0 %v9007
    %v9159 = vpop.f32.mrf.mxu0
    %v9160 = vadd.f32 %v9028, %v9159
    %v9161 = vpop.f32.mrf.mxu0
    %v9162 = vadd.f32 %v9028, %v9161
    %9163 = vmatmul.bf16.gmra.mxu0 %v9008
    %v9164 = vpop.f32.mrf.mxu0
    %v9165 = vadd.f32 %v9028, %v9164
    %v9166 = vpop.f32.mrf.mxu0
    %v9167 = vadd.f32 %v9028, %v9166
    %9168 = vdwg.mxu0
    %v9169 = vmax.f32 %v9121, 0.0
    %v9170 = vmax.f32 %v9150, 0.0
    %v9171 = vmax.f32 %v9123, 0.0
    %v9172 = vmax.f32 %v9152, 0.0
    %v9173 = vmax.f32 %v9126, 0.0
    %v9174 = vmax.f32 %v9155, 0.0
    %v9175 = vmax.f32 %v9128, 0.0
    %v9176 = vmax.f32 %v9157, 0.0
    %v9177 = vmax.f32 %v9131, 0.0
    %v9178 = vmax.f32 %v9160, 0.0
    %v9179 = vmax.f32 %v9133, 0.0
    %v9180 = vmax.f32 %v9162, 0.0
    %v9181 = vmax.f32 %v9136, 0.0
    %v9182 = vmax.f32 %v9165, 0.0
    %v9183 = vmax.f32 %v9138, 0.0
    %v9184 = vmax.f32 %v9167, 0.0
    %v9185 = vpack.c.bf16 %v9171, %v9169
    %v9186 = vpack.c.bf16 %v9172, %v9170
    %v9187 = vpack.c.bf16 %v9175, %v9173
    %v9188 = vpack.c.bf16 %v9176, %v9174
    %v9189 = vpack.c.bf16 %v9179, %v9177
    %v9190 = vpack.c.bf16 %v9180, %v9178
    %v9191 = vpack.c.bf16 %v9183, %v9181
    %v9192 = vpack.c.bf16 %v9184, %v9182
    %v9193 = vld [vmem:[%s11] sm:$0xf]
    %v9194 = vld [vmem:[%s11 + $0x4] sm:$0xf]
    %v9195 = vld [vmem:[%s11 + $0x8] sm:$0xf]
    %v9196 = vld [vmem:[%s11 + $0xc] sm:$0xf]
    %v9197 = vld [vmem:[%s11 + $0x10] sm:$0xf]
    %v9198 = vld [vmem:[%s11 + $0x14] sm:$0xf]
    %v9199 = vld [vmem:[%s11 + $0x18] sm:$0xf]
    %v9200 = vld [vmem:[%s11 + $0x1c] sm:$0xf]
    %v9201 = vld [vmem:[%s11 + $0x20] sm:$0xf]
    %v9202 = vld [vmem:[%s11 + $0x24] sm:$0xf]
    %v9203 = vld [vmem:[%s11 + $0x28] sm:$0xf]
    %v9204 = vld [vmem:[%s11 + $0x2c] sm:$0xf]
    %v9205 = vld [vmem:[%s11 + $0x30] sm:$0xf]
    %v9206 = vld [vmem:[%s11 + $0x34] sm:$0xf]
    %v9207 = vld [vmem:[%s11 + $0x38] sm:$0xf]
    %v9208 = vld [vmem:[%s11 + $0x3c] sm:$0xf]
    %v9209 = vld [vmem:[%s11 + $0x40] sm:$0xf]
    %v9210 = vld [vmem:[%s11 + $0x44] sm:$0xf]
    %v9211 = vld [vmem:[%s11 + $0x48] sm:$0xf]
    %v9212 = vld [vmem:[%s11 + $0x4c] sm:$0xf]
    %v9213 = vld [vmem:[%s11 + $0x50] sm:$0xf]
    %v9214 = vld [vmem:[%s11 + $0x54] sm:$0xf]
    %v9215 = vld [vmem:[%s11 + $0x58] sm:$0xf]
    %v9216 = vld [vmem:[%s11 + $0x5c] sm:$0xf]
    %v9217 = vld [vmem:[%s11 + $0x60] sm:$0xf]
    %v9218 = vld [vmem:[%s11 + $0x64] sm:$0xf]
    %v9219 = vld [vmem:[%s11 + $0x68] sm:$0xf]
    %v9220 = vld [vmem:[%s11 + $0x6c] sm:$0xf]
    %v9221 = vld [vmem:[%s11 + $0x70] sm:$0xf]
    %v9222 = vld [vmem:[%s11 + $0x74] sm:$0xf]
    %v9223 = vld [vmem:[%s11 + $0x78] sm:$0xf]
    %v9224 = vld [vmem:[%s11 + $0x7c] sm:$0xf]
    %v9225 = vld [vmem:[%s12] sm:$0x1]
    %v9227 = vperm.slane %v9225, 0
    %v9261 = vunpack.c.l.b16 %v9193
    %v9262 = vunpack.c.l.b16 %v9194
    %v9263 = vunpack.c.l.b16 %v9195
    %v9264 = vunpack.c.l.b16 %v9196
    %v9265 = vunpack.c.l.b16 %v9197
    %v9266 = vunpack.c.l.b16 %v9198
    %v9267 = vunpack.c.l.b16 %v9199
    %v9268 = vunpack.c.l.b16 %v9200
    %v9269 = vunpack.c.l.b16 %v9201
    %v9270 = vunpack.c.l.b16 %v9202
    %v9271 = vunpack.c.l.b16 %v9203
    %v9272 = vunpack.c.l.b16 %v9204
    %v9273 = vunpack.c.l.b16 %v9205
    %v9274 = vunpack.c.l.b16 %v9206
    %v9275 = vunpack.c.l.b16 %v9207
    %v9276 = vunpack.c.l.b16 %v9208
    %v9277 = vunpack.c.l.b16 %v9209
    %v9278 = vunpack.c.l.b16 %v9210
    %v9279 = vunpack.c.l.b16 %v9211
    %v9280 = vunpack.c.l.b16 %v9212
    %v9281 = vunpack.c.l.b16 %v9213
    %v9282 = vunpack.c.l.b16 %v9214
    %v9283 = vunpack.c.l.b16 %v9215
    %v9284 = vunpack.c.l.b16 %v9216
    %v9285 = vunpack.c.l.b16 %v9217
    %v9286 = vunpack.c.l.b16 %v9218
    %v9287 = vunpack.c.l.b16 %v9219
    %v9288 = vunpack.c.l.b16 %v9220
    %v9289 = vunpack.c.l.b16 %v9221
    %v9290 = vunpack.c.l.b16 %v9222
    %v9291 = vunpack.c.l.b16 %v9223
    %v9292 = vunpack.c.l.b16 %v9224
    %v9293 = vpack.c.b16 %v9262, %v9261
    %v9294 = vpack.c.b16 %v9264, %v9263
    %v9295 = vpack.c.b16 %v9266, %v9265
    %v9296 = vpack.c.b16 %v9268, %v9267
    %v9297 = vpack.c.b16 %v9270, %v9269
    %v9298 = vpack.c.b16 %v9272, %v9271
    %v9299 = vpack.c.b16 %v9274, %v9273
    %v9300 = vpack.c.b16 %v9276, %v9275
    %v9301 = vpack.c.b16 %v9278, %v9277
    %v9302 = vpack.c.b16 %v9280, %v9279
    %v9303 = vpack.c.b16 %v9282, %v9281
    %v9304 = vpack.c.b16 %v9284, %v9283
    %v9305 = vpack.c.b16 %v9286, %v9285
    %v9306 = vpack.c.b16 %v9288, %v9287
    %v9307 = vpack.c.b16 %v9290, %v9289
    %v9308 = vpack.c.b16 %v9292, %v9291
    %9325 = vmatpush.bf16.msra.mxu0 %v9300
    %9326 = vmatpush.bf16.msra.mxu0 %v9299
    %9327 = vmatpush.bf16.msra.mxu0 %v9298
    %9328 = vmatpush.bf16.msra.mxu0 %v9297
    %9329 = vmatpush.bf16.msra.mxu0 %v9296
    %9330 = vmatpush.bf16.msra.mxu0 %v9295
    %9331 = vmatpush.bf16.msra.mxu0 %v9294
    %9332 = vmatpush.bf16.msra.mxu0 %v9293
    %9333 = vmatmul.bf16.gmra.mxu0 %v9185
    %v9334 = vpop.f32.mrf.mxu0
    %v9335 = vadd.f32 %v9227, %v9334
    %v9336 = vpop.f32.mrf.mxu0
    %v9337 = vadd.f32 %v9227, %v9336
    %9338 = vmatmul.bf16.gmra.mxu0 %v9187
    %v9339 = vpop.f32.mrf.mxu0
    %v9340 = vadd.f32 %v9227, %v9339
    %v9341 = vpop.f32.mrf.mxu0
    %v9342 = vadd.f32 %v9227, %v9341
    %9343 = vmatmul.bf16.gmra.mxu0 %v9189
    %v9344 = vpop.f32.mrf.mxu0
    %v9345 = vadd.f32 %v9227, %v9344
    %v9346 = vpop.f32.mrf.mxu0
    %v9347 = vadd.f32 %v9227, %v9346
    %9348 = vmatmul.bf16.gmra.mxu0 %v9191
    %v9349 = vpop.f32.mrf.mxu0
    %v9350 = vadd.f32 %v9227, %v9349
    %v9351 = vpop.f32.mrf.mxu0
    %v9352 = vadd.f32 %v9227, %v9351
    %9353 = vdwg.mxu0
    %9354 = vmatpush.bf16.msra.mxu0 %v9308
    %9355 = vmatpush.bf16.msra.mxu0 %v9307
    %9356 = vmatpush.bf16.msra.mxu0 %v9306
    %9357 = vmatpush.bf16.msra.mxu0 %v9305
    %9358 = vmatpush.bf16.msra.mxu0 %v9304
    %9359 = vmatpush.bf16.msra.mxu0 %v9303
    %9360 = vmatpush.bf16.msra.mxu0 %v9302
    %9361 = vmatpush.bf16.msra.mxu0 %v9301
    %9362 = vmatmul.bf16.gmra.mxu0 %v9186
    %v9363 = vpop.f32.mrf.mxu0
    %v9364 = vadd.f32 %v9335, %v9363
    %v9365 = vpop.f32.mrf.mxu0
    %v9366 = vadd.f32 %v9337, %v9365
    %9367 = vmatmul.bf16.gmra.mxu0 %v9188
    %v9368 = vpop.f32.mrf.mxu0
    %v9369 = vadd.f32 %v9340, %v9368
    %v9370 = vpop.f32.mrf.mxu0
    %v9371 = vadd.f32 %v9342, %v9370
    %9372 = vmatmul.bf16.gmra.mxu0 %v9190
    %v9373 = vpop.f32.mrf.mxu0
    %v9374 = vadd.f32 %v9345, %v9373
    %v9375 = vpop.f32.mrf.mxu0
    %v9376 = vadd.f32 %v9347, %v9375
    %9377 = vmatmul.bf16.gmra.mxu0 %v9192
    %v9378 = vpop.f32.mrf.mxu0
    %v9379 = vadd.f32 %v9350, %v9378
    %v9380 = vpop.f32.mrf.mxu0
    %v9381 = vadd.f32 %v9352, %v9380
    %9382 = vdwg.mxu0
    %vm9383 = vcmask 15360
    %9384 = vst.msk [vmem:[%s13] sm:$0xff] %vm9383, %v9364
    %9385 = vst.msk [vmem:[%s13 + $0x8] sm:$0xff] %vm9383, %v9366
    %9386 = vst.msk [vmem:[%s13 + $0x10] sm:$0xff] %vm9383, %v9369
    %9387 = vst.msk [vmem:[%s13 + $0x18] sm:$0xff] %vm9383, %v9371
    %9388 = vst.msk [vmem:[%s13 + $0x20] sm:$0xff] %vm9383, %v9374
    %9389 = vst.msk [vmem:[%s13 + $0x28] sm:$0xff] %vm9383, %v9376
    %9390 = vst.msk [vmem:[%s13 + $0x30] sm:$0xff] %vm9383, %v9379
    %9391 = vst.msk [vmem:[%s13 + $0x38] sm:$0xff] %vm9383, %v9381
    // Predicated region
    $region66: #{simple_block1d_forward.1} parent=1 // pred_check
      _
    $region67: #{simple_block1d_forward.1} parent=1 // pred_check_branch
      %9393 = sbr.rel (0) target = $region69
    $region68: #{simple_block1d_forward.1} parent=1 // pred_region
      _
    $region69: #{simple_block1d_forward.1} parent=1 // pred_fallthru
      _
    // Predicated region
    $region70: #{simple_block1d_forward.1} parent=1 // pred_check
      _
    $region71: #{simple_block1d_forward.1} parent=1 // pred_check_branch
      %9395 = sbr.rel (0) target = $region73
    $region72: #{simple_block1d_forward.1} parent=1 // pred_region
      _
    $region73: #{simple_block1d_forward.1} parent=1 // pred_fallthru
      _
    %9396 = vsyncpa [#allocation3], 1
    %9397 = vsyncpa [#allocation5], 1

</llo_original>
